<compile_context>
chip_gen: v6e
topology: v6e:2x2x1
jax: 0.10.0
libtpu: 0.0.40
codegen_flags: <defaults>
</compile_context>

<pallas_src>
import functools

import numpy as np

import jax
import jax.numpy as jnp
from jax.experimental import pallas as pl
from jax.experimental.pallas import tpu as pltpu


NEG_SLOPE = 0.1          # nn.LeakyReLU(0.1)
LN_EPS = 1e-5            # nn.LayerNorm default


def _adaptive_pool_matrix(H, W, G):
    """PyTorch AdaptiveAvgPool2d((G,G)) as a (G*G, H*W) averaging matrix."""
    def edges(n, g):
        return [(int(np.floor(i * n / g)), int(np.ceil((i + 1) * n / g)))
                for i in range(g)]
    eh, ew = edges(H, G), edges(W, G)
    m = np.zeros((G * G, H * W), np.float32)
    for gh, (h0, h1) in enumerate(eh):
        for gw, (w0, w1) in enumerate(ew):
            r = gh * G + gw
            inv = 1.0 / ((h1 - h0) * (w1 - w0))
            for hh in range(h0, h1):
                for ww in range(w0, w1):
                    m[r, hh * W + ww] = inv
    return jnp.asarray(m)


def _pack_rows(mats, width, dtype, align):
    """Row-stack 2-D matrices into one zero-padded (rows, width) slab.

    Returns (slab, starting-row offset of each matrix).  Sections are padded
    to `align` rows so in-kernel static slices start on tile-aligned rows."""
    pieces, offs, row = [], [], 0
    for m in mats:
        r, c = m.shape
        pr = (-r) % align
        pieces.append(jnp.pad(m.astype(jnp.float32),
                              ((0, pr), (0, width - c))))
        offs.append(row)
        row += r + pr
    return jnp.concatenate(pieces, axis=0).astype(dtype), offs


# ----------------------------------------------------------------------------
# Full forward (matches latent_encoder_lrelu.forward) — one fused Pallas kernel.
# ----------------------------------------------------------------------------
def latent_encoder_forward(inp_img, params, group, gt=None):
    x = inp_img if gt is None else jnp.concatenate([gt, inp_img], axis=1)  # NCHW
    B, C, Hin, Win = x.shape
    H, W = Hin // 2, Win // 2
    HW = H * W
    C4 = 4 * C

    E = params["c1b"].shape[0]
    G = group
    P = G * G
    Pm = params["pw1"].shape[0]
    Cm = params["cw1"].shape[1]
    bn = len(params["blocks"])
    nconv = 2 * bn + 2

    # ---- PixelUnshuffle(2) with PyTorch channel ordering, NCHW -> NHWC ------
    x = x.reshape(B, C, H, 2, W, 2).transpose(0, 1, 3, 5, 2, 4).reshape(B, C4, H, W)
    x = x.transpose(0, 2, 3, 1).astype(jnp.float32)                       # (B,H,W,4C)

    # ---- hoisted im2col for conv1 (free XLA layout work, outside the kernel)
    xp = jnp.pad(x, ((0, 0), (1, 1), (1, 1), (0, 0)))
    patches0 = jnp.concatenate(
        [xp[:, kh:kh + H, kw:kw + W, :] for kh in range(3) for kw in range(3)],
        axis=-1).reshape(B * HW, 9 * C4).astype(jnp.bfloat16)             # (B*HW, 9*4C)

    # ---- pack conv-trunk weights / biases -----------------------------------
    conv_ws = [params["c1w"].reshape(-1, E)]
    conv_bs = [params["c1b"]]
    for (wa, ba, wb, bb) in params["blocks"]:
        conv_ws += [wa.reshape(-1, E), wb.reshape(-1, E)]
        conv_bs += [ba, bb]
    conv_ws.append(params["c2w"].reshape(-1, E))
    conv_bs.append(params["c2b"])
    convw_slab, conv_offs = _pack_rows(conv_ws, E, jnp.bfloat16, align=16)

    # ---- pack small matmul weights (mixer / end) ----------------------------
    sm_mats = [params["pw1"], params["pw2"], params["cw1"], params["cw2"],
               params["ew"]]
    smw_width = int(max(m.shape[1] for m in sm_mats))
    smw_slab, sm_offs = _pack_rows(sm_mats, smw_width, jnp.bfloat16, align=16)
    off_pw1, off_pw2, off_cw1, off_cw2, off_ew = sm_offs

    # ---- pack f32 rows: pool matrix, conv biases, LN params, mixer biases ---
    pool = _adaptive_pool_matrix(H, W, G)                                 # (P, HW)
    f32_mats = ([pool]
                + [b.reshape(1, -1) for b in conv_bs]
                + [params["n1g"].reshape(1, -1), params["n1b"].reshape(1, -1),
                   params["n2g"].reshape(1, -1), params["n2b"].reshape(1, -1),
                   jnp.tile(params["pb1"][:, None], (1, E)),              # (Pm,E)
                   jnp.tile(params["pb2"][:, None], (1, E)),              # (P, E)
                   params["cb1"].reshape(1, -1),
                   params["cb2"].reshape(1, -1),
                   params["eb"].reshape(1, -1)])
    f32_width = int(max(m.shape[1] for m in f32_mats))
    f32_slab, f32_offs = _pack_rows(f32_mats, f32_width, jnp.float32, align=8)
    o_pool = f32_offs[0]
    o_cb = f32_offs[1:1 + nconv]
    (o_n1g, o_n1b, o_n2g, o_n2b,
     o_pmb1, o_pmb2, o_cb1, o_cb2, o_eb) = f32_offs[1 + nconv:]

    # -------------------------- the fused kernel -----------------------------
    def kernel(p0_ref, cw_ref, sw_ref, fs_ref, o_ref):

        def lrelu(v):
            return jnp.where(v >= 0, v, NEG_SLOPE * v)

        def gelu(v):
            # exact-erf GELU via Abramowitz-Stegun 7.1.26 (|err| ~1e-7).
            # TODO(synk): lax.erf has no guaranteed Mosaic lowering, hence the
            #             polynomial; the divide runs on the EUP (approx vrcp).
            z = v * 0.7071067811865476
            a = jnp.abs(z)
            t = pl.reciprocal(1.0 + 0.3275911 * a, approx=True)
            poly = t * (0.254829592 + t * (-0.284496736 + t * (1.421413741
                       + t * (-1.453152027 + t * 1.061405429))))
            erf = jnp.where(z >= 0, 1.0, -1.0) * (1.0 - poly * jnp.exp(-a * a))
            return 0.5 * v * (1.0 + erf)

        def layernorm(v, g, b):
            mu = jnp.mean(v, axis=-1, keepdims=True)
            d = v - mu
            var = jnp.mean(d * d, axis=-1, keepdims=True)
            return d * jax.lax.rsqrt(var + LN_EPS) * g + b

        # ---- boundary masks for the shifted-tap convs (built once) ----------
        ridx = jax.lax.broadcasted_iota(jnp.int32, (HW, E), 0)
        if (W & (W - 1)) == 0:                  # power of two: shifts / ands only
            hidx = ridx >> (W.bit_length() - 1)
            widx = ridx & (W - 1)
        else:
            hidx = ridx // W
            widx = ridx - hidx * W
        masks = []
        for kh in range(3):
            for kw in range(3):
                oh, ow = kh - 1, kw - 1
                conds = []
                if oh < 0:
                    conds.append(hidx >= -oh)
                if oh > 0:
                    conds.append(hidx < H - oh)
                if ow < 0:
                    conds.append(widx >= -ow)
                if ow > 0:
                    conds.append(widx < W - ow)
                m = None
                for c in conds:
                    m = c if m is None else jnp.logical_and(m, c)
                masks.append(m)                 # None for the centre tap

        def conv3x3(h, w_off, b_off):
            """3x3 / pad-1 conv (E->E) as a sum of 9 shifted matmuls.

            slab[r] = h[r + oh*W + ow] (pltpu.roll == jnp.roll semantics),
            zeroed at image borders by the precomputed masks; no concats, no
            reshapes, bf16 MXU operands with f32 accumulation."""
            acc = None
            for kh in range(3):
                for kw in range(3):
                    t = kh * 3 + kw
                    delta = (kh - 1) * W + (kw - 1)
                    slab = h if delta == 0 else pltpu.roll(
                        h, shift=(-delta) % HW, axis=0)
                    if masks[t] is not None:
                        slab = jnp.where(masks[t], slab, 0.0)
                    wt = cw_ref[w_off + t * E: w_off + (t + 1) * E, :]
                    p = jnp.dot(slab.astype(jnp.bfloat16), wt,
                                preferred_element_type=jnp.float32)
                    acc = p if acc is None else acc + p
            return acc + fs_ref[b_off:b_off + 1, 0:E]

        # ---- conv1: single K = 9*4C matmul on wrapper-built patches ---------
        h = lrelu(jnp.dot(p0_ref[...],
                          cw_ref[conv_offs[0]:conv_offs[0] + 9 * C4, :],
                          preferred_element_type=jnp.float32)
                  + fs_ref[o_cb[0]:o_cb[0] + 1, 0:E])                     # (HW, E)

        # ---- residual blocks + conv2 (activations stay in vregs/VMEM) -------
        for blk in range(bn):
            t1 = lrelu(conv3x3(h, conv_offs[1 + 2 * blk], o_cb[1 + 2 * blk]))
            h = h + conv3x3(t1, conv_offs[2 + 2 * blk], o_cb[2 + 2 * blk])
        h = conv3x3(h, conv_offs[1 + 2 * bn], o_cb[1 + 2 * bn])           # conv2

        # ---- AdaptiveAvgPool2d((G,G)) as one (f32, exact-weights) matmul ----
        z = jnp.dot(fs_ref[o_pool:o_pool + P, 0:HW], h,
                    preferred_element_type=jnp.float32)                   # (P, E)

        # ---- MLP mixer (transpose-free patch mixer) -------------------------
        z1 = layernorm(z, fs_ref[o_n1g:o_n1g + 1, 0:E],
                       fs_ref[o_n1b:o_n1b + 1, 0:E])
        u = jnp.dot(sw_ref[off_pw1:off_pw1 + Pm, 0:P], z1.astype(jnp.bfloat16),
                    preferred_element_type=jnp.float32) \
            + fs_ref[o_pmb1:o_pmb1 + Pm, 0:E]                             # (Pm, E)
        v = jnp.dot(sw_ref[off_pw2:off_pw2 + P, 0:Pm],
                    gelu(u).astype(jnp.bfloat16),
                    preferred_element_type=jnp.float32) \
            + fs_ref[o_pmb2:o_pmb2 + P, 0:E]                              # (P, E)
        x1 = z + v
        z2 = layernorm(x1, fs_ref[o_n2g:o_n2g + 1, 0:E],
                       fs_ref[o_n2b:o_n2b + 1, 0:E])
        hh = jnp.dot(z2.astype(jnp.bfloat16), sw_ref[off_cw1:off_cw1 + E, 0:Cm],
                     preferred_element_type=jnp.float32) \
            + fs_ref[o_cb1:o_cb1 + 1, 0:Cm]                               # (P, Cm)
        hh = jnp.dot(gelu(hh).astype(jnp.bfloat16),
                     sw_ref[off_cw2:off_cw2 + Cm, 0:E],
                     preferred_element_type=jnp.float32) \
            + fs_ref[o_cb2:o_cb2 + 1, 0:E]                                # (P, E)
        x2 = x1 + hh

        # ---- end: Linear(E -> 2E) + LeakyReLU(0.1) ---------------------------
        y = jnp.dot(x2.astype(jnp.bfloat16), sw_ref[off_ew:off_ew + E, 0:2 * E],
                    preferred_element_type=jnp.float32) \
            + fs_ref[o_eb:o_eb + 1, 0:2 * E]                              # (P, 2E)
        o_ref[...] = lrelu(y)

    args = (patches0, convw_slab, smw_slab, f32_slab)

    out_flat = pl.pallas_call(
        kernel,
        out_shape=jax.ShapeDtypeStruct((B * P, 2 * E), jnp.float32),
        grid=(B,),                                    # batch -> grid (2 TCs on v7x)
        in_specs=[
            pl.BlockSpec((HW, 9 * C4), lambda b: (b, 0)),      # per-batch patches
            pl.BlockSpec(convw_slab.shape, lambda b: (0, 0)),  # resident weights
            pl.BlockSpec(smw_slab.shape, lambda b: (0, 0)),
            pl.BlockSpec(f32_slab.shape, lambda b: (0, 0)),
        ],
        out_specs=pl.BlockSpec((P, 2 * E), lambda b: (b, 0)),
        compiler_params=pltpu.CompilerParams(
            dimension_semantics=("parallel",)),
    )(*args)

    return out_flat.reshape(B, P, 2 * E)


# ----------------------------------------------------------------------------
# Parameter init (deterministic, synthetic). Conv weights stored (kh,kw,Cin,Cout),
# Linear weights stored (in, out).
# ----------------------------------------------------------------------------
def init_params(key, in_chans, embed_dim, block_num, group,
                patch_expansion, channel_expansion):
    E = embed_dim
    P = group * group
    Pm = int(patch_expansion * P)
    Cm = int(channel_expansion * E)
    keys = iter(jax.random.split(key, 64))

    def w(shape, scale=0.1):
        return scale * jax.random.normal(next(keys), shape, jnp.float32)

    p = {}
    p["c1w"] = w((3, 3, in_chans * 4, E)); p["c1b"] = w((E,), 0.02)
    p["blocks"] = []
    for _ in range(block_num):
        p["blocks"].append((w((3, 3, E, E)), w((E,), 0.02),
                            w((3, 3, E, E)), w((E,), 0.02)))
    p["c2w"] = w((3, 3, E, E)); p["c2b"] = w((E,), 0.02)
    p["n1g"] = 1.0 + w((E,), 0.01); p["n1b"] = w((E,), 0.01)
    p["n2g"] = 1.0 + w((E,), 0.01); p["n2b"] = w((E,), 0.01)
    p["pw1"] = w((Pm, P)); p["pb1"] = w((Pm,), 0.02)
    p["pw2"] = w((P, Pm)); p["pb2"] = w((P,), 0.02)
    p["cw1"] = w((E, Cm)); p["cb1"] = w((Cm,), 0.02)
    p["cw2"] = w((Cm, E)); p["cb2"] = w((E,), 0.02)
    p["ew"] = w((E, 2 * E)); p["eb"] = w((2 * E,), 0.02)
    return p


if __name__ == "__main__":
    in_chans, embed_dim, block_num, group = 4, 32, 2, 4
    patch_expansion, channel_expansion = 0.5, 2

    key = jax.random.PRNGKey(0)
    k_in, k_p = jax.random.split(key)
    inp_img = jax.random.normal(k_in, (2, in_chans, 16, 16), jnp.float32)   # NCHW
    params = init_params(k_p, in_chans, embed_dim, block_num, group,
                         patch_expansion, channel_expansion)

    fwd = jax.jit(functools.partial(latent_encoder_forward, group=group))
    out = jax.block_until_ready(fwd(inp_img, params))
    assert out.shape == (2, group * group, 2 * embed_dim), out.shape
    assert bool(jnp.all(jnp.isfinite(out)))
    print("KERNEL_OK")
</pallas_src>

<mosaic_0001>
module attributes {stable_mosaic.version = 11 : i64} {
  func.func @kernel(%arg0: i32, %arg1: memref<64x144xbf16, #tpu.memory_space<vmem>>, %arg2: memref<1584x32xbf16, #tpu.memory_space<vmem>>, %arg3: memref<160x64xbf16, #tpu.memory_space<vmem>>, %arg4: memref<144x64xf32, #tpu.memory_space<vmem>>, %arg5: memref<16x64xf32, #tpu.memory_space<vmem>>) attributes {dimension_semantics = [#tpu.dimension_semantics<parallel>], iteration_bounds = array<i64: 2>, scalar_prefetch = 0 : i64, scratch_operands = 0 : i64, tpu.core_type = #tpu.core_type<tc>, window_params = [{transform_indices = @transform_0, window_bounds = array<i64: 64, 144>}, {pipeline_mode = #tpu.pipeline_mode<synchronous>, transform_indices = @transform_1, window_bounds = array<i64: 1584, 32>}, {pipeline_mode = #tpu.pipeline_mode<synchronous>, transform_indices = @transform_2, window_bounds = array<i64: 160, 64>}, {pipeline_mode = #tpu.pipeline_mode<synchronous>, transform_indices = @transform_3, window_bounds = array<i64: 144, 64>}, {transform_indices = @transform_4, window_bounds = array<i64: 16, 64>}]} {
    %0 = tpu.iota {dimensions = array<i32: 0>} : vector<64x32xi32>
    %c3_i32 = arith.constant 3 : i32
    %1 = vector.broadcast %c3_i32 : i32 to vector<64x32xi32>
    %2 = arith.shrsi %0, %1 : vector<64x32xi32>
    %c7_i32 = arith.constant 7 : i32
    %3 = vector.broadcast %c7_i32 : i32 to vector<64x32xi32>
    %4 = arith.andi %0, %3 : vector<64x32xi32>
    %c1_i32 = arith.constant 1 : i32
    %5 = vector.broadcast %c1_i32 : i32 to vector<64x32xi32>
    %6 = arith.cmpi sge, %2, %5 : vector<64x32xi32>
    %c1_i32_0 = arith.constant 1 : i32
    %7 = vector.broadcast %c1_i32_0 : i32 to vector<64x32xi32>
    %8 = arith.cmpi sge, %4, %7 : vector<64x32xi32>
    %9 = arith.andi %6, %8 : vector<64x32xi1>
    %c1_i32_1 = arith.constant 1 : i32
    %10 = vector.broadcast %c1_i32_1 : i32 to vector<64x32xi32>
    %11 = arith.cmpi sge, %2, %10 : vector<64x32xi32>
    %c1_i32_2 = arith.constant 1 : i32
    %12 = vector.broadcast %c1_i32_2 : i32 to vector<64x32xi32>
    %13 = arith.cmpi sge, %2, %12 : vector<64x32xi32>
    %c7_i32_3 = arith.constant 7 : i32
    %14 = vector.broadcast %c7_i32_3 : i32 to vector<64x32xi32>
    %15 = arith.cmpi slt, %4, %14 : vector<64x32xi32>
    %16 = arith.andi %13, %15 : vector<64x32xi1>
    %c1_i32_4 = arith.constant 1 : i32
    %17 = vector.broadcast %c1_i32_4 : i32 to vector<64x32xi32>
    %18 = arith.cmpi sge, %4, %17 : vector<64x32xi32>
    %c7_i32_5 = arith.constant 7 : i32
    %19 = vector.broadcast %c7_i32_5 : i32 to vector<64x32xi32>
    %20 = arith.cmpi slt, %4, %19 : vector<64x32xi32>
    %c7_i32_6 = arith.constant 7 : i32
    %21 = vector.broadcast %c7_i32_6 : i32 to vector<64x32xi32>
    %22 = arith.cmpi slt, %2, %21 : vector<64x32xi32>
    %c1_i32_7 = arith.constant 1 : i32
    %23 = vector.broadcast %c1_i32_7 : i32 to vector<64x32xi32>
    %24 = arith.cmpi sge, %4, %23 : vector<64x32xi32>
    %25 = arith.andi %22, %24 : vector<64x32xi1>
    %c7_i32_8 = arith.constant 7 : i32
    %26 = vector.broadcast %c7_i32_8 : i32 to vector<64x32xi32>
    %27 = arith.cmpi slt, %2, %26 : vector<64x32xi32>
    %c7_i32_9 = arith.constant 7 : i32
    %28 = vector.broadcast %c7_i32_9 : i32 to vector<64x32xi32>
    %29 = arith.cmpi slt, %2, %28 : vector<64x32xi32>
    %c7_i32_10 = arith.constant 7 : i32
    %30 = vector.broadcast %c7_i32_10 : i32 to vector<64x32xi32>
    %31 = arith.cmpi slt, %4, %30 : vector<64x32xi32>
    %32 = arith.andi %29, %31 : vector<64x32xi1>
    %c0 = arith.constant 0 : index
    %c0_11 = arith.constant 0 : index
    %33 = vector.load %arg1[%c0, %c0_11] : memref<64x144xbf16, #tpu.memory_space<vmem>>, vector<64x144xbf16>
    %c0_12 = arith.constant 0 : index
    %c0_13 = arith.constant 0 : index
    %34 = vector.load %arg2[%c0_12, %c0_13] : memref<1584x32xbf16, #tpu.memory_space<vmem>>, vector<144x32xbf16>
    %cst = arith.constant dense<0.000000e+00> : vector<64x32xf32>
    %35 = tpu.matmul %33, %34, %cst {dimension_numbers = #tpu.dot_dimension_numbers<[1], [0], [0], [1], [0, 0, 1, 1], [], []>} : vector<64x144xbf16>, vector<144x32xbf16>, vector<64x32xf32> -> vector<64x32xf32>
    %c16 = arith.constant 16 : index
    %c0_14 = arith.constant 0 : index
    %36 = vector.load %arg4[%c16, %c0_14] : memref<144x64xf32, #tpu.memory_space<vmem>>, vector<1x32xf32>
    %37 = vector.broadcast %36 : vector<1x32xf32> to vector<64x32xf32>
    %38 = arith.addf %35, %37 : vector<64x32xf32>
    %cst_15 = arith.constant 0.000000e+00 : f32
    %39 = vector.broadcast %cst_15 : f32 to vector<64x32xf32>
    %40 = arith.cmpf oge, %38, %39 : vector<64x32xf32>
    %cst_16 = arith.constant 1.000000e-01 : f32
    %41 = vector.broadcast %cst_16 : f32 to vector<64x32xf32>
    %42 = arith.mulf %41, %38 : vector<64x32xf32>
    %43 = arith.select %40, %38, %42 : vector<64x32xi1>, vector<64x32xf32>
    %c9_i32 = arith.constant 9 : i32
    %44 = tpu.dynamic_rotate %43 by %c9_i32 dim 0 : vector<64x32xf32>, i32 -> vector<64x32xf32>
    %cst_17 = arith.constant 0.000000e+00 : f32
    %45 = vector.broadcast %cst_17 : f32 to vector<64x32xf32>
    %46 = arith.select %9, %44, %45 : vector<64x32xi1>, vector<64x32xf32>
    %c144 = arith.constant 144 : index
    %c0_18 = arith.constant 0 : index
    %47 = vector.load %arg2[%c144, %c0_18] : memref<1584x32xbf16, #tpu.memory_space<vmem>>, vector<32x32xbf16>
    %48 = arith.truncf %46 : vector<64x32xf32> to vector<64x32xbf16>
    %cst_19 = arith.constant dense<0.000000e+00> : vector<64x32xf32>
    %49 = tpu.matmul %48, %47, %cst_19 {dimension_numbers = #tpu.dot_dimension_numbers<[1], [0], [0], [1], [0, 0, 1, 1], [], []>} : vector<64x32xbf16>, vector<32x32xbf16>, vector<64x32xf32> -> vector<64x32xf32>
    %c8_i32 = arith.constant 8 : i32
    %50 = tpu.dynamic_rotate %43 by %c8_i32 dim 0 : vector<64x32xf32>, i32 -> vector<64x32xf32>
    %cst_20 = arith.constant 0.000000e+00 : f32
    %51 = vector.broadcast %cst_20 : f32 to vector<64x32xf32>
    %52 = arith.select %11, %50, %51 : vector<64x32xi1>, vector<64x32xf32>
    %c176 = arith.constant 176 : index
    %c0_21 = arith.constant 0 : index
    %53 = vector.load %arg2[%c176, %c0_21] : memref<1584x32xbf16, #tpu.memory_space<vmem>>, vector<32x32xbf16>
    %54 = arith.truncf %52 : vector<64x32xf32> to vector<64x32xbf16>
    %cst_22 = arith.constant dense<0.000000e+00> : vector<64x32xf32>
    %55 = tpu.matmul %54, %53, %cst_22 {dimension_numbers = #tpu.dot_dimension_numbers<[1], [0], [0], [1], [0, 0, 1, 1], [], []>} : vector<64x32xbf16>, vector<32x32xbf16>, vector<64x32xf32> -> vector<64x32xf32>
    %56 = arith.addf %49, %55 : vector<64x32xf32>
    %c7_i32_23 = arith.constant 7 : i32
    %57 = tpu.dynamic_rotate %43 by %c7_i32_23 dim 0 : vector<64x32xf32>, i32 -> vector<64x32xf32>
    %cst_24 = arith.constant 0.000000e+00 : f32
    %58 = vector.broadcast %cst_24 : f32 to vector<64x32xf32>
    %59 = arith.select %16, %57, %58 : vector<64x32xi1>, vector<64x32xf32>
    %c208 = arith.constant 208 : index
    %c0_25 = arith.constant 0 : index
    %60 = vector.load %arg2[%c208, %c0_25] : memref<1584x32xbf16, #tpu.memory_space<vmem>>, vector<32x32xbf16>
    %61 = arith.truncf %59 : vector<64x32xf32> to vector<64x32xbf16>
    %cst_26 = arith.constant dense<0.000000e+00> : vector<64x32xf32>
    %62 = tpu.matmul %61, %60, %cst_26 {dimension_numbers = #tpu.dot_dimension_numbers<[1], [0], [0], [1], [0, 0, 1, 1], [], []>} : vector<64x32xbf16>, vector<32x32xbf16>, vector<64x32xf32> -> vector<64x32xf32>
    %63 = arith.addf %56, %62 : vector<64x32xf32>
    %c1_i32_27 = arith.constant 1 : i32
    %64 = tpu.dynamic_rotate %43 by %c1_i32_27 dim 0 : vector<64x32xf32>, i32 -> vector<64x32xf32>
    %cst_28 = arith.constant 0.000000e+00 : f32
    %65 = vector.broadcast %cst_28 : f32 to vector<64x32xf32>
    %66 = arith.select %18, %64, %65 : vector<64x32xi1>, vector<64x32xf32>
    %c240 = arith.constant 240 : index
    %c0_29 = arith.constant 0 : index
    %67 = vector.load %arg2[%c240, %c0_29] : memref<1584x32xbf16, #tpu.memory_space<vmem>>, vector<32x32xbf16>
    %68 = arith.truncf %66 : vector<64x32xf32> to vector<64x32xbf16>
    %cst_30 = arith.constant dense<0.000000e+00> : vector<64x32xf32>
    %69 = tpu.matmul %68, %67, %cst_30 {dimension_numbers = #tpu.dot_dimension_numbers<[1], [0], [0], [1], [0, 0, 1, 1], [], []>} : vector<64x32xbf16>, vector<32x32xbf16>, vector<64x32xf32> -> vector<64x32xf32>
    %70 = arith.addf %63, %69 : vector<64x32xf32>
    %c272 = arith.constant 272 : index
    %c0_31 = arith.constant 0 : index
    %71 = vector.load %arg2[%c272, %c0_31] : memref<1584x32xbf16, #tpu.memory_space<vmem>>, vector<32x32xbf16>
    %72 = arith.truncf %43 : vector<64x32xf32> to vector<64x32xbf16>
    %cst_32 = arith.constant dense<0.000000e+00> : vector<64x32xf32>
    %73 = tpu.matmul %72, %71, %cst_32 {dimension_numbers = #tpu.dot_dimension_numbers<[1], [0], [0], [1], [0, 0, 1, 1], [], []>} : vector<64x32xbf16>, vector<32x32xbf16>, vector<64x32xf32> -> vector<64x32xf32>
    %74 = arith.addf %70, %73 : vector<64x32xf32>
    %c63_i32 = arith.constant 63 : i32
    %75 = tpu.dynamic_rotate %43 by %c63_i32 dim 0 : vector<64x32xf32>, i32 -> vector<64x32xf32>
    %cst_33 = arith.constant 0.000000e+00 : f32
    %76 = vector.broadcast %cst_33 : f32 to vector<64x32xf32>
    %77 = arith.select %20, %75, %76 : vector<64x32xi1>, vector<64x32xf32>
    %c304 = arith.constant 304 : index
    %c0_34 = arith.constant 0 : index
    %78 = vector.load %arg2[%c304, %c0_34] : memref<1584x32xbf16, #tpu.memory_space<vmem>>, vector<32x32xbf16>
    %79 = arith.truncf %77 : vector<64x32xf32> to vector<64x32xbf16>
    %cst_35 = arith.constant dense<0.000000e+00> : vector<64x32xf32>
    %80 = tpu.matmul %79, %78, %cst_35 {dimension_numbers = #tpu.dot_dimension_numbers<[1], [0], [0], [1], [0, 0, 1, 1], [], []>} : vector<64x32xbf16>, vector<32x32xbf16>, vector<64x32xf32> -> vector<64x32xf32>
    %81 = arith.addf %74, %80 : vector<64x32xf32>
    %c57_i32 = arith.constant 57 : i32
    %82 = tpu.dynamic_rotate %43 by %c57_i32 dim 0 : vector<64x32xf32>, i32 -> vector<64x32xf32>
    %cst_36 = arith.constant 0.000000e+00 : f32
    %83 = vector.broadcast %cst_36 : f32 to vector<64x32xf32>
    %84 = arith.select %25, %82, %83 : vector<64x32xi1>, vector<64x32xf32>
    %c336 = arith.constant 336 : index
    %c0_37 = arith.constant 0 : index
    %85 = vector.load %arg2[%c336, %c0_37] : memref<1584x32xbf16, #tpu.memory_space<vmem>>, vector<32x32xbf16>
    %86 = arith.truncf %84 : vector<64x32xf32> to vector<64x32xbf16>
    %cst_38 = arith.constant dense<0.000000e+00> : vector<64x32xf32>
    %87 = tpu.matmul %86, %85, %cst_38 {dimension_numbers = #tpu.dot_dimension_numbers<[1], [0], [0], [1], [0, 0, 1, 1], [], []>} : vector<64x32xbf16>, vector<32x32xbf16>, vector<64x32xf32> -> vector<64x32xf32>
    %88 = arith.addf %81, %87 : vector<64x32xf32>
    %c56_i32 = arith.constant 56 : i32
    %89 = tpu.dynamic_rotate %43 by %c56_i32 dim 0 : vector<64x32xf32>, i32 -> vector<64x32xf32>
    %cst_39 = arith.constant 0.000000e+00 : f32
    %90 = vector.broadcast %cst_39 : f32 to vector<64x32xf32>
    %91 = arith.select %27, %89, %90 : vector<64x32xi1>, vector<64x32xf32>
    %c368 = arith.constant 368 : index
    %c0_40 = arith.constant 0 : index
    %92 = vector.load %arg2[%c368, %c0_40] : memref<1584x32xbf16, #tpu.memory_space<vmem>>, vector<32x32xbf16>
    %93 = arith.truncf %91 : vector<64x32xf32> to vector<64x32xbf16>
    %cst_41 = arith.constant dense<0.000000e+00> : vector<64x32xf32>
    %94 = tpu.matmul %93, %92, %cst_41 {dimension_numbers = #tpu.dot_dimension_numbers<[1], [0], [0], [1], [0, 0, 1, 1], [], []>} : vector<64x32xbf16>, vector<32x32xbf16>, vector<64x32xf32> -> vector<64x32xf32>
    %95 = arith.addf %88, %94 : vector<64x32xf32>
    %c55_i32 = arith.constant 55 : i32
    %96 = tpu.dynamic_rotate %43 by %c55_i32 dim 0 : vector<64x32xf32>, i32 -> vector<64x32xf32>
    %cst_42 = arith.constant 0.000000e+00 : f32
    %97 = vector.broadcast %cst_42 : f32 to vector<64x32xf32>
    %98 = arith.select %32, %96, %97 : vector<64x32xi1>, vector<64x32xf32>
    %c400 = arith.constant 400 : index
    %c0_43 = arith.constant 0 : index
    %99 = vector.load %arg2[%c400, %c0_43] : memref<1584x32xbf16, #tpu.memory_space<vmem>>, vector<32x32xbf16>
    %100 = arith.truncf %98 : vector<64x32xf32> to vector<64x32xbf16>
    %cst_44 = arith.constant dense<0.000000e+00> : vector<64x32xf32>
    %101 = tpu.matmul %100, %99, %cst_44 {dimension_numbers = #tpu.dot_dimension_numbers<[1], [0], [0], [1], [0, 0, 1, 1], [], []>} : vector<64x32xbf16>, vector<32x32xbf16>, vector<64x32xf32> -> vector<64x32xf32>
    %102 = arith.addf %95, %101 : vector<64x32xf32>
    %c24 = arith.constant 24 : index
    %c0_45 = arith.constant 0 : index
    %103 = vector.load %arg4[%c24, %c0_45] : memref<144x64xf32, #tpu.memory_space<vmem>>, vector<1x32xf32>
    %104 = vector.broadcast %103 : vector<1x32xf32> to vector<64x32xf32>
    %105 = arith.addf %102, %104 : vector<64x32xf32>
    %cst_46 = arith.constant 0.000000e+00 : f32
    %106 = vector.broadcast %cst_46 : f32 to vector<64x32xf32>
    %107 = arith.cmpf oge, %105, %106 : vector<64x32xf32>
    %cst_47 = arith.constant 1.000000e-01 : f32
    %108 = vector.broadcast %cst_47 : f32 to vector<64x32xf32>
    %109 = arith.mulf %108, %105 : vector<64x32xf32>
    %110 = arith.select %107, %105, %109 : vector<64x32xi1>, vector<64x32xf32>
    %c9_i32_48 = arith.constant 9 : i32
    %111 = tpu.dynamic_rotate %110 by %c9_i32_48 dim 0 : vector<64x32xf32>, i32 -> vector<64x32xf32>
    %cst_49 = arith.constant 0.000000e+00 : f32
    %112 = vector.broadcast %cst_49 : f32 to vector<64x32xf32>
    %113 = arith.select %9, %111, %112 : vector<64x32xi1>, vector<64x32xf32>
    %c432 = arith.constant 432 : index
    %c0_50 = arith.constant 0 : index
    %114 = vector.load %arg2[%c432, %c0_50] : memref<1584x32xbf16, #tpu.memory_space<vmem>>, vector<32x32xbf16>
    %115 = arith.truncf %113 : vector<64x32xf32> to vector<64x32xbf16>
    %cst_51 = arith.constant dense<0.000000e+00> : vector<64x32xf32>
    %116 = tpu.matmul %115, %114, %cst_51 {dimension_numbers = #tpu.dot_dimension_numbers<[1], [0], [0], [1], [0, 0, 1, 1], [], []>} : vector<64x32xbf16>, vector<32x32xbf16>, vector<64x32xf32> -> vector<64x32xf32>
    %c8_i32_52 = arith.constant 8 : i32
    %117 = tpu.dynamic_rotate %110 by %c8_i32_52 dim 0 : vector<64x32xf32>, i32 -> vector<64x32xf32>
    %cst_53 = arith.constant 0.000000e+00 : f32
    %118 = vector.broadcast %cst_53 : f32 to vector<64x32xf32>
    %119 = arith.select %11, %117, %118 : vector<64x32xi1>, vector<64x32xf32>
    %c464 = arith.constant 464 : index
    %c0_54 = arith.constant 0 : index
    %120 = vector.load %arg2[%c464, %c0_54] : memref<1584x32xbf16, #tpu.memory_space<vmem>>, vector<32x32xbf16>
    %121 = arith.truncf %119 : vector<64x32xf32> to vector<64x32xbf16>
    %cst_55 = arith.constant dense<0.000000e+00> : vector<64x32xf32>
    %122 = tpu.matmul %121, %120, %cst_55 {dimension_numbers = #tpu.dot_dimension_numbers<[1], [0], [0], [1], [0, 0, 1, 1], [], []>} : vector<64x32xbf16>, vector<32x32xbf16>, vector<64x32xf32> -> vector<64x32xf32>
    %123 = arith.addf %116, %122 : vector<64x32xf32>
    %c7_i32_56 = arith.constant 7 : i32
    %124 = tpu.dynamic_rotate %110 by %c7_i32_56 dim 0 : vector<64x32xf32>, i32 -> vector<64x32xf32>
    %cst_57 = arith.constant 0.000000e+00 : f32
    %125 = vector.broadcast %cst_57 : f32 to vector<64x32xf32>
    %126 = arith.select %16, %124, %125 : vector<64x32xi1>, vector<64x32xf32>
    %c496 = arith.constant 496 : index
    %c0_58 = arith.constant 0 : index
    %127 = vector.load %arg2[%c496, %c0_58] : memref<1584x32xbf16, #tpu.memory_space<vmem>>, vector<32x32xbf16>
    %128 = arith.truncf %126 : vector<64x32xf32> to vector<64x32xbf16>
    %cst_59 = arith.constant dense<0.000000e+00> : vector<64x32xf32>
    %129 = tpu.matmul %128, %127, %cst_59 {dimension_numbers = #tpu.dot_dimension_numbers<[1], [0], [0], [1], [0, 0, 1, 1], [], []>} : vector<64x32xbf16>, vector<32x32xbf16>, vector<64x32xf32> -> vector<64x32xf32>
    %130 = arith.addf %123, %129 : vector<64x32xf32>
    %c1_i32_60 = arith.constant 1 : i32
    %131 = tpu.dynamic_rotate %110 by %c1_i32_60 dim 0 : vector<64x32xf32>, i32 -> vector<64x32xf32>
    %cst_61 = arith.constant 0.000000e+00 : f32
    %132 = vector.broadcast %cst_61 : f32 to vector<64x32xf32>
    %133 = arith.select %18, %131, %132 : vector<64x32xi1>, vector<64x32xf32>
    %c528 = arith.constant 528 : index
    %c0_62 = arith.constant 0 : index
    %134 = vector.load %arg2[%c528, %c0_62] : memref<1584x32xbf16, #tpu.memory_space<vmem>>, vector<32x32xbf16>
    %135 = arith.truncf %133 : vector<64x32xf32> to vector<64x32xbf16>
    %cst_63 = arith.constant dense<0.000000e+00> : vector<64x32xf32>
    %136 = tpu.matmul %135, %134, %cst_63 {dimension_numbers = #tpu.dot_dimension_numbers<[1], [0], [0], [1], [0, 0, 1, 1], [], []>} : vector<64x32xbf16>, vector<32x32xbf16>, vector<64x32xf32> -> vector<64x32xf32>
    %137 = arith.addf %130, %136 : vector<64x32xf32>
    %c560 = arith.constant 560 : index
    %c0_64 = arith.constant 0 : index
    %138 = vector.load %arg2[%c560, %c0_64] : memref<1584x32xbf16, #tpu.memory_space<vmem>>, vector<32x32xbf16>
    %139 = arith.truncf %110 : vector<64x32xf32> to vector<64x32xbf16>
    %cst_65 = arith.constant dense<0.000000e+00> : vector<64x32xf32>
    %140 = tpu.matmul %139, %138, %cst_65 {dimension_numbers = #tpu.dot_dimension_numbers<[1], [0], [0], [1], [0, 0, 1, 1], [], []>} : vector<64x32xbf16>, vector<32x32xbf16>, vector<64x32xf32> -> vector<64x32xf32>
    %141 = arith.addf %137, %140 : vector<64x32xf32>
    %c63_i32_66 = arith.constant 63 : i32
    %142 = tpu.dynamic_rotate %110 by %c63_i32_66 dim 0 : vector<64x32xf32>, i32 -> vector<64x32xf32>
    %cst_67 = arith.constant 0.000000e+00 : f32
    %143 = vector.broadcast %cst_67 : f32 to vector<64x32xf32>
    %144 = arith.select %20, %142, %143 : vector<64x32xi1>, vector<64x32xf32>
    %c592 = arith.constant 592 : index
    %c0_68 = arith.constant 0 : index
    %145 = vector.load %arg2[%c592, %c0_68] : memref<1584x32xbf16, #tpu.memory_space<vmem>>, vector<32x32xbf16>
    %146 = arith.truncf %144 : vector<64x32xf32> to vector<64x32xbf16>
    %cst_69 = arith.constant dense<0.000000e+00> : vector<64x32xf32>
    %147 = tpu.matmul %146, %145, %cst_69 {dimension_numbers = #tpu.dot_dimension_numbers<[1], [0], [0], [1], [0, 0, 1, 1], [], []>} : vector<64x32xbf16>, vector<32x32xbf16>, vector<64x32xf32> -> vector<64x32xf32>
    %148 = arith.addf %141, %147 : vector<64x32xf32>
    %c57_i32_70 = arith.constant 57 : i32
    %149 = tpu.dynamic_rotate %110 by %c57_i32_70 dim 0 : vector<64x32xf32>, i32 -> vector<64x32xf32>
    %cst_71 = arith.constant 0.000000e+00 : f32
    %150 = vector.broadcast %cst_71 : f32 to vector<64x32xf32>
    %151 = arith.select %25, %149, %150 : vector<64x32xi1>, vector<64x32xf32>
    %c624 = arith.constant 624 : index
    %c0_72 = arith.constant 0 : index
    %152 = vector.load %arg2[%c624, %c0_72] : memref<1584x32xbf16, #tpu.memory_space<vmem>>, vector<32x32xbf16>
    %153 = arith.truncf %151 : vector<64x32xf32> to vector<64x32xbf16>
    %cst_73 = arith.constant dense<0.000000e+00> : vector<64x32xf32>
    %154 = tpu.matmul %153, %152, %cst_73 {dimension_numbers = #tpu.dot_dimension_numbers<[1], [0], [0], [1], [0, 0, 1, 1], [], []>} : vector<64x32xbf16>, vector<32x32xbf16>, vector<64x32xf32> -> vector<64x32xf32>
    %155 = arith.addf %148, %154 : vector<64x32xf32>
    %c56_i32_74 = arith.constant 56 : i32
    %156 = tpu.dynamic_rotate %110 by %c56_i32_74 dim 0 : vector<64x32xf32>, i32 -> vector<64x32xf32>
    %cst_75 = arith.constant 0.000000e+00 : f32
    %157 = vector.broadcast %cst_75 : f32 to vector<64x32xf32>
    %158 = arith.select %27, %156, %157 : vector<64x32xi1>, vector<64x32xf32>
    %c656 = arith.constant 656 : index
    %c0_76 = arith.constant 0 : index
    %159 = vector.load %arg2[%c656, %c0_76] : memref<1584x32xbf16, #tpu.memory_space<vmem>>, vector<32x32xbf16>
    %160 = arith.truncf %158 : vector<64x32xf32> to vector<64x32xbf16>
    %cst_77 = arith.constant dense<0.000000e+00> : vector<64x32xf32>
    %161 = tpu.matmul %160, %159, %cst_77 {dimension_numbers = #tpu.dot_dimension_numbers<[1], [0], [0], [1], [0, 0, 1, 1], [], []>} : vector<64x32xbf16>, vector<32x32xbf16>, vector<64x32xf32> -> vector<64x32xf32>
    %162 = arith.addf %155, %161 : vector<64x32xf32>
    %c55_i32_78 = arith.constant 55 : i32
    %163 = tpu.dynamic_rotate %110 by %c55_i32_78 dim 0 : vector<64x32xf32>, i32 -> vector<64x32xf32>
    %cst_79 = arith.constant 0.000000e+00 : f32
    %164 = vector.broadcast %cst_79 : f32 to vector<64x32xf32>
    %165 = arith.select %32, %163, %164 : vector<64x32xi1>, vector<64x32xf32>
    %c688 = arith.constant 688 : index
    %c0_80 = arith.constant 0 : index
    %166 = vector.load %arg2[%c688, %c0_80] : memref<1584x32xbf16, #tpu.memory_space<vmem>>, vector<32x32xbf16>
    %167 = arith.truncf %165 : vector<64x32xf32> to vector<64x32xbf16>
    %cst_81 = arith.constant dense<0.000000e+00> : vector<64x32xf32>
    %168 = tpu.matmul %167, %166, %cst_81 {dimension_numbers = #tpu.dot_dimension_numbers<[1], [0], [0], [1], [0, 0, 1, 1], [], []>} : vector<64x32xbf16>, vector<32x32xbf16>, vector<64x32xf32> -> vector<64x32xf32>
    %169 = arith.addf %162, %168 : vector<64x32xf32>
    %c32 = arith.constant 32 : index
    %c0_82 = arith.constant 0 : index
    %170 = vector.load %arg4[%c32, %c0_82] : memref<144x64xf32, #tpu.memory_space<vmem>>, vector<1x32xf32>
    %171 = vector.broadcast %170 : vector<1x32xf32> to vector<64x32xf32>
    %172 = arith.addf %169, %171 : vector<64x32xf32>
    %173 = arith.addf %43, %172 : vector<64x32xf32>
    %c9_i32_83 = arith.constant 9 : i32
    %174 = tpu.dynamic_rotate %173 by %c9_i32_83 dim 0 : vector<64x32xf32>, i32 -> vector<64x32xf32>
    %cst_84 = arith.constant 0.000000e+00 : f32
    %175 = vector.broadcast %cst_84 : f32 to vector<64x32xf32>
    %176 = arith.select %9, %174, %175 : vector<64x32xi1>, vector<64x32xf32>
    %c720 = arith.constant 720 : index
    %c0_85 = arith.constant 0 : index
    %177 = vector.load %arg2[%c720, %c0_85] : memref<1584x32xbf16, #tpu.memory_space<vmem>>, vector<32x32xbf16>
    %178 = arith.truncf %176 : vector<64x32xf32> to vector<64x32xbf16>
    %cst_86 = arith.constant dense<0.000000e+00> : vector<64x32xf32>
    %179 = tpu.matmul %178, %177, %cst_86 {dimension_numbers = #tpu.dot_dimension_numbers<[1], [0], [0], [1], [0, 0, 1, 1], [], []>} : vector<64x32xbf16>, vector<32x32xbf16>, vector<64x32xf32> -> vector<64x32xf32>
    %c8_i32_87 = arith.constant 8 : i32
    %180 = tpu.dynamic_rotate %173 by %c8_i32_87 dim 0 : vector<64x32xf32>, i32 -> vector<64x32xf32>
    %cst_88 = arith.constant 0.000000e+00 : f32
    %181 = vector.broadcast %cst_88 : f32 to vector<64x32xf32>
    %182 = arith.select %11, %180, %181 : vector<64x32xi1>, vector<64x32xf32>
    %c752 = arith.constant 752 : index
    %c0_89 = arith.constant 0 : index
    %183 = vector.load %arg2[%c752, %c0_89] : memref<1584x32xbf16, #tpu.memory_space<vmem>>, vector<32x32xbf16>
    %184 = arith.truncf %182 : vector<64x32xf32> to vector<64x32xbf16>
    %cst_90 = arith.constant dense<0.000000e+00> : vector<64x32xf32>
    %185 = tpu.matmul %184, %183, %cst_90 {dimension_numbers = #tpu.dot_dimension_numbers<[1], [0], [0], [1], [0, 0, 1, 1], [], []>} : vector<64x32xbf16>, vector<32x32xbf16>, vector<64x32xf32> -> vector<64x32xf32>
    %186 = arith.addf %179, %185 : vector<64x32xf32>
    %c7_i32_91 = arith.constant 7 : i32
    %187 = tpu.dynamic_rotate %173 by %c7_i32_91 dim 0 : vector<64x32xf32>, i32 -> vector<64x32xf32>
    %cst_92 = arith.constant 0.000000e+00 : f32
    %188 = vector.broadcast %cst_92 : f32 to vector<64x32xf32>
    %189 = arith.select %16, %187, %188 : vector<64x32xi1>, vector<64x32xf32>
    %c784 = arith.constant 784 : index
    %c0_93 = arith.constant 0 : index
    %190 = vector.load %arg2[%c784, %c0_93] : memref<1584x32xbf16, #tpu.memory_space<vmem>>, vector<32x32xbf16>
    %191 = arith.truncf %189 : vector<64x32xf32> to vector<64x32xbf16>
    %cst_94 = arith.constant dense<0.000000e+00> : vector<64x32xf32>
    %192 = tpu.matmul %191, %190, %cst_94 {dimension_numbers = #tpu.dot_dimension_numbers<[1], [0], [0], [1], [0, 0, 1, 1], [], []>} : vector<64x32xbf16>, vector<32x32xbf16>, vector<64x32xf32> -> vector<64x32xf32>
    %193 = arith.addf %186, %192 : vector<64x32xf32>
    %c1_i32_95 = arith.constant 1 : i32
    %194 = tpu.dynamic_rotate %173 by %c1_i32_95 dim 0 : vector<64x32xf32>, i32 -> vector<64x32xf32>
    %cst_96 = arith.constant 0.000000e+00 : f32
    %195 = vector.broadcast %cst_96 : f32 to vector<64x32xf32>
    %196 = arith.select %18, %194, %195 : vector<64x32xi1>, vector<64x32xf32>
    %c816 = arith.constant 816 : index
    %c0_97 = arith.constant 0 : index
    %197 = vector.load %arg2[%c816, %c0_97] : memref<1584x32xbf16, #tpu.memory_space<vmem>>, vector<32x32xbf16>
    %198 = arith.truncf %196 : vector<64x32xf32> to vector<64x32xbf16>
    %cst_98 = arith.constant dense<0.000000e+00> : vector<64x32xf32>
    %199 = tpu.matmul %198, %197, %cst_98 {dimension_numbers = #tpu.dot_dimension_numbers<[1], [0], [0], [1], [0, 0, 1, 1], [], []>} : vector<64x32xbf16>, vector<32x32xbf16>, vector<64x32xf32> -> vector<64x32xf32>
    %200 = arith.addf %193, %199 : vector<64x32xf32>
    %c848 = arith.constant 848 : index
    %c0_99 = arith.constant 0 : index
    %201 = vector.load %arg2[%c848, %c0_99] : memref<1584x32xbf16, #tpu.memory_space<vmem>>, vector<32x32xbf16>
    %202 = arith.truncf %173 : vector<64x32xf32> to vector<64x32xbf16>
    %cst_100 = arith.constant dense<0.000000e+00> : vector<64x32xf32>
    %203 = tpu.matmul %202, %201, %cst_100 {dimension_numbers = #tpu.dot_dimension_numbers<[1], [0], [0], [1], [0, 0, 1, 1], [], []>} : vector<64x32xbf16>, vector<32x32xbf16>, vector<64x32xf32> -> vector<64x32xf32>
    %204 = arith.addf %200, %203 : vector<64x32xf32>
    %c63_i32_101 = arith.constant 63 : i32
    %205 = tpu.dynamic_rotate %173 by %c63_i32_101 dim 0 : vector<64x32xf32>, i32 -> vector<64x32xf32>
    %cst_102 = arith.constant 0.000000e+00 : f32
    %206 = vector.broadcast %cst_102 : f32 to vector<64x32xf32>
    %207 = arith.select %20, %205, %206 : vector<64x32xi1>, vector<64x32xf32>
    %c880 = arith.constant 880 : index
    %c0_103 = arith.constant 0 : index
    %208 = vector.load %arg2[%c880, %c0_103] : memref<1584x32xbf16, #tpu.memory_space<vmem>>, vector<32x32xbf16>
    %209 = arith.truncf %207 : vector<64x32xf32> to vector<64x32xbf16>
    %cst_104 = arith.constant dense<0.000000e+00> : vector<64x32xf32>
    %210 = tpu.matmul %209, %208, %cst_104 {dimension_numbers = #tpu.dot_dimension_numbers<[1], [0], [0], [1], [0, 0, 1, 1], [], []>} : vector<64x32xbf16>, vector<32x32xbf16>, vector<64x32xf32> -> vector<64x32xf32>
    %211 = arith.addf %204, %210 : vector<64x32xf32>
    %c57_i32_105 = arith.constant 57 : i32
    %212 = tpu.dynamic_rotate %173 by %c57_i32_105 dim 0 : vector<64x32xf32>, i32 -> vector<64x32xf32>
    %cst_106 = arith.constant 0.000000e+00 : f32
    %213 = vector.broadcast %cst_106 : f32 to vector<64x32xf32>
    %214 = arith.select %25, %212, %213 : vector<64x32xi1>, vector<64x32xf32>
    %c912 = arith.constant 912 : index
    %c0_107 = arith.constant 0 : index
    %215 = vector.load %arg2[%c912, %c0_107] : memref<1584x32xbf16, #tpu.memory_space<vmem>>, vector<32x32xbf16>
    %216 = arith.truncf %214 : vector<64x32xf32> to vector<64x32xbf16>
    %cst_108 = arith.constant dense<0.000000e+00> : vector<64x32xf32>
    %217 = tpu.matmul %216, %215, %cst_108 {dimension_numbers = #tpu.dot_dimension_numbers<[1], [0], [0], [1], [0, 0, 1, 1], [], []>} : vector<64x32xbf16>, vector<32x32xbf16>, vector<64x32xf32> -> vector<64x32xf32>
    %218 = arith.addf %211, %217 : vector<64x32xf32>
    %c56_i32_109 = arith.constant 56 : i32
    %219 = tpu.dynamic_rotate %173 by %c56_i32_109 dim 0 : vector<64x32xf32>, i32 -> vector<64x32xf32>
    %cst_110 = arith.constant 0.000000e+00 : f32
    %220 = vector.broadcast %cst_110 : f32 to vector<64x32xf32>
    %221 = arith.select %27, %219, %220 : vector<64x32xi1>, vector<64x32xf32>
    %c944 = arith.constant 944 : index
    %c0_111 = arith.constant 0 : index
    %222 = vector.load %arg2[%c944, %c0_111] : memref<1584x32xbf16, #tpu.memory_space<vmem>>, vector<32x32xbf16>
    %223 = arith.truncf %221 : vector<64x32xf32> to vector<64x32xbf16>
    %cst_112 = arith.constant dense<0.000000e+00> : vector<64x32xf32>
    %224 = tpu.matmul %223, %222, %cst_112 {dimension_numbers = #tpu.dot_dimension_numbers<[1], [0], [0], [1], [0, 0, 1, 1], [], []>} : vector<64x32xbf16>, vector<32x32xbf16>, vector<64x32xf32> -> vector<64x32xf32>
    %225 = arith.addf %218, %224 : vector<64x32xf32>
    %c55_i32_113 = arith.constant 55 : i32
    %226 = tpu.dynamic_rotate %173 by %c55_i32_113 dim 0 : vector<64x32xf32>, i32 -> vector<64x32xf32>
    %cst_114 = arith.constant 0.000000e+00 : f32
    %227 = vector.broadcast %cst_114 : f32 to vector<64x32xf32>
    %228 = arith.select %32, %226, %227 : vector<64x32xi1>, vector<64x32xf32>
    %c976 = arith.constant 976 : index
    %c0_115 = arith.constant 0 : index
    %229 = vector.load %arg2[%c976, %c0_115] : memref<1584x32xbf16, #tpu.memory_space<vmem>>, vector<32x32xbf16>
    %230 = arith.truncf %228 : vector<64x32xf32> to vector<64x32xbf16>
    %cst_116 = arith.constant dense<0.000000e+00> : vector<64x32xf32>
    %231 = tpu.matmul %230, %229, %cst_116 {dimension_numbers = #tpu.dot_dimension_numbers<[1], [0], [0], [1], [0, 0, 1, 1], [], []>} : vector<64x32xbf16>, vector<32x32xbf16>, vector<64x32xf32> -> vector<64x32xf32>
    %232 = arith.addf %225, %231 : vector<64x32xf32>
    %c40 = arith.constant 40 : index
    %c0_117 = arith.constant 0 : index
    %233 = vector.load %arg4[%c40, %c0_117] : memref<144x64xf32, #tpu.memory_space<vmem>>, vector<1x32xf32>
    %234 = vector.broadcast %233 : vector<1x32xf32> to vector<64x32xf32>
    %235 = arith.addf %232, %234 : vector<64x32xf32>
    %cst_118 = arith.constant 0.000000e+00 : f32
    %236 = vector.broadcast %cst_118 : f32 to vector<64x32xf32>
    %237 = arith.cmpf oge, %235, %236 : vector<64x32xf32>
    %cst_119 = arith.constant 1.000000e-01 : f32
    %238 = vector.broadcast %cst_119 : f32 to vector<64x32xf32>
    %239 = arith.mulf %238, %235 : vector<64x32xf32>
    %240 = arith.select %237, %235, %239 : vector<64x32xi1>, vector<64x32xf32>
    %c9_i32_120 = arith.constant 9 : i32
    %241 = tpu.dynamic_rotate %240 by %c9_i32_120 dim 0 : vector<64x32xf32>, i32 -> vector<64x32xf32>
    %cst_121 = arith.constant 0.000000e+00 : f32
    %242 = vector.broadcast %cst_121 : f32 to vector<64x32xf32>
    %243 = arith.select %9, %241, %242 : vector<64x32xi1>, vector<64x32xf32>
    %c1008 = arith.constant 1008 : index
    %c0_122 = arith.constant 0 : index
    %244 = vector.load %arg2[%c1008, %c0_122] : memref<1584x32xbf16, #tpu.memory_space<vmem>>, vector<32x32xbf16>
    %245 = arith.truncf %243 : vector<64x32xf32> to vector<64x32xbf16>
    %cst_123 = arith.constant dense<0.000000e+00> : vector<64x32xf32>
    %246 = tpu.matmul %245, %244, %cst_123 {dimension_numbers = #tpu.dot_dimension_numbers<[1], [0], [0], [1], [0, 0, 1, 1], [], []>} : vector<64x32xbf16>, vector<32x32xbf16>, vector<64x32xf32> -> vector<64x32xf32>
    %c8_i32_124 = arith.constant 8 : i32
    %247 = tpu.dynamic_rotate %240 by %c8_i32_124 dim 0 : vector<64x32xf32>, i32 -> vector<64x32xf32>
    %cst_125 = arith.constant 0.000000e+00 : f32
    %248 = vector.broadcast %cst_125 : f32 to vector<64x32xf32>
    %249 = arith.select %11, %247, %248 : vector<64x32xi1>, vector<64x32xf32>
    %c1040 = arith.constant 1040 : index
    %c0_126 = arith.constant 0 : index
    %250 = vector.load %arg2[%c1040, %c0_126] : memref<1584x32xbf16, #tpu.memory_space<vmem>>, vector<32x32xbf16>
    %251 = arith.truncf %249 : vector<64x32xf32> to vector<64x32xbf16>
    %cst_127 = arith.constant dense<0.000000e+00> : vector<64x32xf32>
    %252 = tpu.matmul %251, %250, %cst_127 {dimension_numbers = #tpu.dot_dimension_numbers<[1], [0], [0], [1], [0, 0, 1, 1], [], []>} : vector<64x32xbf16>, vector<32x32xbf16>, vector<64x32xf32> -> vector<64x32xf32>
    %253 = arith.addf %246, %252 : vector<64x32xf32>
    %c7_i32_128 = arith.constant 7 : i32
    %254 = tpu.dynamic_rotate %240 by %c7_i32_128 dim 0 : vector<64x32xf32>, i32 -> vector<64x32xf32>
    %cst_129 = arith.constant 0.000000e+00 : f32
    %255 = vector.broadcast %cst_129 : f32 to vector<64x32xf32>
    %256 = arith.select %16, %254, %255 : vector<64x32xi1>, vector<64x32xf32>
    %c1072 = arith.constant 1072 : index
    %c0_130 = arith.constant 0 : index
    %257 = vector.load %arg2[%c1072, %c0_130] : memref<1584x32xbf16, #tpu.memory_space<vmem>>, vector<32x32xbf16>
    %258 = arith.truncf %256 : vector<64x32xf32> to vector<64x32xbf16>
    %cst_131 = arith.constant dense<0.000000e+00> : vector<64x32xf32>
    %259 = tpu.matmul %258, %257, %cst_131 {dimension_numbers = #tpu.dot_dimension_numbers<[1], [0], [0], [1], [0, 0, 1, 1], [], []>} : vector<64x32xbf16>, vector<32x32xbf16>, vector<64x32xf32> -> vector<64x32xf32>
    %260 = arith.addf %253, %259 : vector<64x32xf32>
    %c1_i32_132 = arith.constant 1 : i32
    %261 = tpu.dynamic_rotate %240 by %c1_i32_132 dim 0 : vector<64x32xf32>, i32 -> vector<64x32xf32>
    %cst_133 = arith.constant 0.000000e+00 : f32
    %262 = vector.broadcast %cst_133 : f32 to vector<64x32xf32>
    %263 = arith.select %18, %261, %262 : vector<64x32xi1>, vector<64x32xf32>
    %c1104 = arith.constant 1104 : index
    %c0_134 = arith.constant 0 : index
    %264 = vector.load %arg2[%c1104, %c0_134] : memref<1584x32xbf16, #tpu.memory_space<vmem>>, vector<32x32xbf16>
    %265 = arith.truncf %263 : vector<64x32xf32> to vector<64x32xbf16>
    %cst_135 = arith.constant dense<0.000000e+00> : vector<64x32xf32>
    %266 = tpu.matmul %265, %264, %cst_135 {dimension_numbers = #tpu.dot_dimension_numbers<[1], [0], [0], [1], [0, 0, 1, 1], [], []>} : vector<64x32xbf16>, vector<32x32xbf16>, vector<64x32xf32> -> vector<64x32xf32>
    %267 = arith.addf %260, %266 : vector<64x32xf32>
    %c1136 = arith.constant 1136 : index
    %c0_136 = arith.constant 0 : index
    %268 = vector.load %arg2[%c1136, %c0_136] : memref<1584x32xbf16, #tpu.memory_space<vmem>>, vector<32x32xbf16>
    %269 = arith.truncf %240 : vector<64x32xf32> to vector<64x32xbf16>
    %cst_137 = arith.constant dense<0.000000e+00> : vector<64x32xf32>
    %270 = tpu.matmul %269, %268, %cst_137 {dimension_numbers = #tpu.dot_dimension_numbers<[1], [0], [0], [1], [0, 0, 1, 1], [], []>} : vector<64x32xbf16>, vector<32x32xbf16>, vector<64x32xf32> -> vector<64x32xf32>
    %271 = arith.addf %267, %270 : vector<64x32xf32>
    %c63_i32_138 = arith.constant 63 : i32
    %272 = tpu.dynamic_rotate %240 by %c63_i32_138 dim 0 : vector<64x32xf32>, i32 -> vector<64x32xf32>
    %cst_139 = arith.constant 0.000000e+00 : f32
    %273 = vector.broadcast %cst_139 : f32 to vector<64x32xf32>
    %274 = arith.select %20, %272, %273 : vector<64x32xi1>, vector<64x32xf32>
    %c1168 = arith.constant 1168 : index
    %c0_140 = arith.constant 0 : index
    %275 = vector.load %arg2[%c1168, %c0_140] : memref<1584x32xbf16, #tpu.memory_space<vmem>>, vector<32x32xbf16>
    %276 = arith.truncf %274 : vector<64x32xf32> to vector<64x32xbf16>
    %cst_141 = arith.constant dense<0.000000e+00> : vector<64x32xf32>
    %277 = tpu.matmul %276, %275, %cst_141 {dimension_numbers = #tpu.dot_dimension_numbers<[1], [0], [0], [1], [0, 0, 1, 1], [], []>} : vector<64x32xbf16>, vector<32x32xbf16>, vector<64x32xf32> -> vector<64x32xf32>
    %278 = arith.addf %271, %277 : vector<64x32xf32>
    %c57_i32_142 = arith.constant 57 : i32
    %279 = tpu.dynamic_rotate %240 by %c57_i32_142 dim 0 : vector<64x32xf32>, i32 -> vector<64x32xf32>
    %cst_143 = arith.constant 0.000000e+00 : f32
    %280 = vector.broadcast %cst_143 : f32 to vector<64x32xf32>
    %281 = arith.select %25, %279, %280 : vector<64x32xi1>, vector<64x32xf32>
    %c1200 = arith.constant 1200 : index
    %c0_144 = arith.constant 0 : index
    %282 = vector.load %arg2[%c1200, %c0_144] : memref<1584x32xbf16, #tpu.memory_space<vmem>>, vector<32x32xbf16>
    %283 = arith.truncf %281 : vector<64x32xf32> to vector<64x32xbf16>
    %cst_145 = arith.constant dense<0.000000e+00> : vector<64x32xf32>
    %284 = tpu.matmul %283, %282, %cst_145 {dimension_numbers = #tpu.dot_dimension_numbers<[1], [0], [0], [1], [0, 0, 1, 1], [], []>} : vector<64x32xbf16>, vector<32x32xbf16>, vector<64x32xf32> -> vector<64x32xf32>
    %285 = arith.addf %278, %284 : vector<64x32xf32>
    %c56_i32_146 = arith.constant 56 : i32
    %286 = tpu.dynamic_rotate %240 by %c56_i32_146 dim 0 : vector<64x32xf32>, i32 -> vector<64x32xf32>
    %cst_147 = arith.constant 0.000000e+00 : f32
    %287 = vector.broadcast %cst_147 : f32 to vector<64x32xf32>
    %288 = arith.select %27, %286, %287 : vector<64x32xi1>, vector<64x32xf32>
    %c1232 = arith.constant 1232 : index
    %c0_148 = arith.constant 0 : index
    %289 = vector.load %arg2[%c1232, %c0_148] : memref<1584x32xbf16, #tpu.memory_space<vmem>>, vector<32x32xbf16>
    %290 = arith.truncf %288 : vector<64x32xf32> to vector<64x32xbf16>
    %cst_149 = arith.constant dense<0.000000e+00> : vector<64x32xf32>
    %291 = tpu.matmul %290, %289, %cst_149 {dimension_numbers = #tpu.dot_dimension_numbers<[1], [0], [0], [1], [0, 0, 1, 1], [], []>} : vector<64x32xbf16>, vector<32x32xbf16>, vector<64x32xf32> -> vector<64x32xf32>
    %292 = arith.addf %285, %291 : vector<64x32xf32>
    %c55_i32_150 = arith.constant 55 : i32
    %293 = tpu.dynamic_rotate %240 by %c55_i32_150 dim 0 : vector<64x32xf32>, i32 -> vector<64x32xf32>
    %cst_151 = arith.constant 0.000000e+00 : f32
    %294 = vector.broadcast %cst_151 : f32 to vector<64x32xf32>
    %295 = arith.select %32, %293, %294 : vector<64x32xi1>, vector<64x32xf32>
    %c1264 = arith.constant 1264 : index
    %c0_152 = arith.constant 0 : index
    %296 = vector.load %arg2[%c1264, %c0_152] : memref<1584x32xbf16, #tpu.memory_space<vmem>>, vector<32x32xbf16>
    %297 = arith.truncf %295 : vector<64x32xf32> to vector<64x32xbf16>
    %cst_153 = arith.constant dense<0.000000e+00> : vector<64x32xf32>
    %298 = tpu.matmul %297, %296, %cst_153 {dimension_numbers = #tpu.dot_dimension_numbers<[1], [0], [0], [1], [0, 0, 1, 1], [], []>} : vector<64x32xbf16>, vector<32x32xbf16>, vector<64x32xf32> -> vector<64x32xf32>
    %299 = arith.addf %292, %298 : vector<64x32xf32>
    %c48 = arith.constant 48 : index
    %c0_154 = arith.constant 0 : index
    %300 = vector.load %arg4[%c48, %c0_154] : memref<144x64xf32, #tpu.memory_space<vmem>>, vector<1x32xf32>
    %301 = vector.broadcast %300 : vector<1x32xf32> to vector<64x32xf32>
    %302 = arith.addf %299, %301 : vector<64x32xf32>
    %303 = arith.addf %173, %302 : vector<64x32xf32>
    %c9_i32_155 = arith.constant 9 : i32
    %304 = tpu.dynamic_rotate %303 by %c9_i32_155 dim 0 : vector<64x32xf32>, i32 -> vector<64x32xf32>
    %cst_156 = arith.constant 0.000000e+00 : f32
    %305 = vector.broadcast %cst_156 : f32 to vector<64x32xf32>
    %306 = arith.select %9, %304, %305 : vector<64x32xi1>, vector<64x32xf32>
    %c1296 = arith.constant 1296 : index
    %c0_157 = arith.constant 0 : index
    %307 = vector.load %arg2[%c1296, %c0_157] : memref<1584x32xbf16, #tpu.memory_space<vmem>>, vector<32x32xbf16>
    %308 = arith.truncf %306 : vector<64x32xf32> to vector<64x32xbf16>
    %cst_158 = arith.constant dense<0.000000e+00> : vector<64x32xf32>
    %309 = tpu.matmul %308, %307, %cst_158 {dimension_numbers = #tpu.dot_dimension_numbers<[1], [0], [0], [1], [0, 0, 1, 1], [], []>} : vector<64x32xbf16>, vector<32x32xbf16>, vector<64x32xf32> -> vector<64x32xf32>
    %c8_i32_159 = arith.constant 8 : i32
    %310 = tpu.dynamic_rotate %303 by %c8_i32_159 dim 0 : vector<64x32xf32>, i32 -> vector<64x32xf32>
    %cst_160 = arith.constant 0.000000e+00 : f32
    %311 = vector.broadcast %cst_160 : f32 to vector<64x32xf32>
    %312 = arith.select %11, %310, %311 : vector<64x32xi1>, vector<64x32xf32>
    %c1328 = arith.constant 1328 : index
    %c0_161 = arith.constant 0 : index
    %313 = vector.load %arg2[%c1328, %c0_161] : memref<1584x32xbf16, #tpu.memory_space<vmem>>, vector<32x32xbf16>
    %314 = arith.truncf %312 : vector<64x32xf32> to vector<64x32xbf16>
    %cst_162 = arith.constant dense<0.000000e+00> : vector<64x32xf32>
    %315 = tpu.matmul %314, %313, %cst_162 {dimension_numbers = #tpu.dot_dimension_numbers<[1], [0], [0], [1], [0, 0, 1, 1], [], []>} : vector<64x32xbf16>, vector<32x32xbf16>, vector<64x32xf32> -> vector<64x32xf32>
    %316 = arith.addf %309, %315 : vector<64x32xf32>
    %c7_i32_163 = arith.constant 7 : i32
    %317 = tpu.dynamic_rotate %303 by %c7_i32_163 dim 0 : vector<64x32xf32>, i32 -> vector<64x32xf32>
    %cst_164 = arith.constant 0.000000e+00 : f32
    %318 = vector.broadcast %cst_164 : f32 to vector<64x32xf32>
    %319 = arith.select %16, %317, %318 : vector<64x32xi1>, vector<64x32xf32>
    %c1360 = arith.constant 1360 : index
    %c0_165 = arith.constant 0 : index
    %320 = vector.load %arg2[%c1360, %c0_165] : memref<1584x32xbf16, #tpu.memory_space<vmem>>, vector<32x32xbf16>
    %321 = arith.truncf %319 : vector<64x32xf32> to vector<64x32xbf16>
    %cst_166 = arith.constant dense<0.000000e+00> : vector<64x32xf32>
    %322 = tpu.matmul %321, %320, %cst_166 {dimension_numbers = #tpu.dot_dimension_numbers<[1], [0], [0], [1], [0, 0, 1, 1], [], []>} : vector<64x32xbf16>, vector<32x32xbf16>, vector<64x32xf32> -> vector<64x32xf32>
    %323 = arith.addf %316, %322 : vector<64x32xf32>
    %c1_i32_167 = arith.constant 1 : i32
    %324 = tpu.dynamic_rotate %303 by %c1_i32_167 dim 0 : vector<64x32xf32>, i32 -> vector<64x32xf32>
    %cst_168 = arith.constant 0.000000e+00 : f32
    %325 = vector.broadcast %cst_168 : f32 to vector<64x32xf32>
    %326 = arith.select %18, %324, %325 : vector<64x32xi1>, vector<64x32xf32>
    %c1392 = arith.constant 1392 : index
    %c0_169 = arith.constant 0 : index
    %327 = vector.load %arg2[%c1392, %c0_169] : memref<1584x32xbf16, #tpu.memory_space<vmem>>, vector<32x32xbf16>
    %328 = arith.truncf %326 : vector<64x32xf32> to vector<64x32xbf16>
    %cst_170 = arith.constant dense<0.000000e+00> : vector<64x32xf32>
    %329 = tpu.matmul %328, %327, %cst_170 {dimension_numbers = #tpu.dot_dimension_numbers<[1], [0], [0], [1], [0, 0, 1, 1], [], []>} : vector<64x32xbf16>, vector<32x32xbf16>, vector<64x32xf32> -> vector<64x32xf32>
    %330 = arith.addf %323, %329 : vector<64x32xf32>
    %c1424 = arith.constant 1424 : index
    %c0_171 = arith.constant 0 : index
    %331 = vector.load %arg2[%c1424, %c0_171] : memref<1584x32xbf16, #tpu.memory_space<vmem>>, vector<32x32xbf16>
    %332 = arith.truncf %303 : vector<64x32xf32> to vector<64x32xbf16>
    %cst_172 = arith.constant dense<0.000000e+00> : vector<64x32xf32>
    %333 = tpu.matmul %332, %331, %cst_172 {dimension_numbers = #tpu.dot_dimension_numbers<[1], [0], [0], [1], [0, 0, 1, 1], [], []>} : vector<64x32xbf16>, vector<32x32xbf16>, vector<64x32xf32> -> vector<64x32xf32>
    %334 = arith.addf %330, %333 : vector<64x32xf32>
    %c63_i32_173 = arith.constant 63 : i32
    %335 = tpu.dynamic_rotate %303 by %c63_i32_173 dim 0 : vector<64x32xf32>, i32 -> vector<64x32xf32>
    %cst_174 = arith.constant 0.000000e+00 : f32
    %336 = vector.broadcast %cst_174 : f32 to vector<64x32xf32>
    %337 = arith.select %20, %335, %336 : vector<64x32xi1>, vector<64x32xf32>
    %c1456 = arith.constant 1456 : index
    %c0_175 = arith.constant 0 : index
    %338 = vector.load %arg2[%c1456, %c0_175] : memref<1584x32xbf16, #tpu.memory_space<vmem>>, vector<32x32xbf16>
    %339 = arith.truncf %337 : vector<64x32xf32> to vector<64x32xbf16>
    %cst_176 = arith.constant dense<0.000000e+00> : vector<64x32xf32>
    %340 = tpu.matmul %339, %338, %cst_176 {dimension_numbers = #tpu.dot_dimension_numbers<[1], [0], [0], [1], [0, 0, 1, 1], [], []>} : vector<64x32xbf16>, vector<32x32xbf16>, vector<64x32xf32> -> vector<64x32xf32>
    %341 = arith.addf %334, %340 : vector<64x32xf32>
    %c57_i32_177 = arith.constant 57 : i32
    %342 = tpu.dynamic_rotate %303 by %c57_i32_177 dim 0 : vector<64x32xf32>, i32 -> vector<64x32xf32>
    %cst_178 = arith.constant 0.000000e+00 : f32
    %343 = vector.broadcast %cst_178 : f32 to vector<64x32xf32>
    %344 = arith.select %25, %342, %343 : vector<64x32xi1>, vector<64x32xf32>
    %c1488 = arith.constant 1488 : index
    %c0_179 = arith.constant 0 : index
    %345 = vector.load %arg2[%c1488, %c0_179] : memref<1584x32xbf16, #tpu.memory_space<vmem>>, vector<32x32xbf16>
    %346 = arith.truncf %344 : vector<64x32xf32> to vector<64x32xbf16>
    %cst_180 = arith.constant dense<0.000000e+00> : vector<64x32xf32>
    %347 = tpu.matmul %346, %345, %cst_180 {dimension_numbers = #tpu.dot_dimension_numbers<[1], [0], [0], [1], [0, 0, 1, 1], [], []>} : vector<64x32xbf16>, vector<32x32xbf16>, vector<64x32xf32> -> vector<64x32xf32>
    %348 = arith.addf %341, %347 : vector<64x32xf32>
    %c56_i32_181 = arith.constant 56 : i32
    %349 = tpu.dynamic_rotate %303 by %c56_i32_181 dim 0 : vector<64x32xf32>, i32 -> vector<64x32xf32>
    %cst_182 = arith.constant 0.000000e+00 : f32
    %350 = vector.broadcast %cst_182 : f32 to vector<64x32xf32>
    %351 = arith.select %27, %349, %350 : vector<64x32xi1>, vector<64x32xf32>
    %c1520 = arith.constant 1520 : index
    %c0_183 = arith.constant 0 : index
    %352 = vector.load %arg2[%c1520, %c0_183] : memref<1584x32xbf16, #tpu.memory_space<vmem>>, vector<32x32xbf16>
    %353 = arith.truncf %351 : vector<64x32xf32> to vector<64x32xbf16>
    %cst_184 = arith.constant dense<0.000000e+00> : vector<64x32xf32>
    %354 = tpu.matmul %353, %352, %cst_184 {dimension_numbers = #tpu.dot_dimension_numbers<[1], [0], [0], [1], [0, 0, 1, 1], [], []>} : vector<64x32xbf16>, vector<32x32xbf16>, vector<64x32xf32> -> vector<64x32xf32>
    %355 = arith.addf %348, %354 : vector<64x32xf32>
    %c55_i32_185 = arith.constant 55 : i32
    %356 = tpu.dynamic_rotate %303 by %c55_i32_185 dim 0 : vector<64x32xf32>, i32 -> vector<64x32xf32>
    %cst_186 = arith.constant 0.000000e+00 : f32
    %357 = vector.broadcast %cst_186 : f32 to vector<64x32xf32>
    %358 = arith.select %32, %356, %357 : vector<64x32xi1>, vector<64x32xf32>
    %c1552 = arith.constant 1552 : index
    %c0_187 = arith.constant 0 : index
    %359 = vector.load %arg2[%c1552, %c0_187] : memref<1584x32xbf16, #tpu.memory_space<vmem>>, vector<32x32xbf16>
    %360 = arith.truncf %358 : vector<64x32xf32> to vector<64x32xbf16>
    %cst_188 = arith.constant dense<0.000000e+00> : vector<64x32xf32>
    %361 = tpu.matmul %360, %359, %cst_188 {dimension_numbers = #tpu.dot_dimension_numbers<[1], [0], [0], [1], [0, 0, 1, 1], [], []>} : vector<64x32xbf16>, vector<32x32xbf16>, vector<64x32xf32> -> vector<64x32xf32>
    %362 = arith.addf %355, %361 : vector<64x32xf32>
    %c56 = arith.constant 56 : index
    %c0_189 = arith.constant 0 : index
    %363 = vector.load %arg4[%c56, %c0_189] : memref<144x64xf32, #tpu.memory_space<vmem>>, vector<1x32xf32>
    %364 = vector.broadcast %363 : vector<1x32xf32> to vector<64x32xf32>
    %365 = arith.addf %362, %364 : vector<64x32xf32>
    %c0_190 = arith.constant 0 : index
    %c0_191 = arith.constant 0 : index
    %366 = vector.load %arg4[%c0_190, %c0_191] : memref<144x64xf32, #tpu.memory_space<vmem>>, vector<16x64xf32>
    %cst_192 = arith.constant dense<0.000000e+00> : vector<16x32xf32>
    %367 = tpu.matmul %366, %365, %cst_192 {dimension_numbers = #tpu.dot_dimension_numbers<[1], [0], [0], [1], [0, 0, 1, 1], [], []>} : vector<16x64xf32>, vector<64x32xf32>, vector<16x32xf32> -> vector<16x32xf32>
    %c64 = arith.constant 64 : index
    %c0_193 = arith.constant 0 : index
    %368 = vector.load %arg4[%c64, %c0_193] : memref<144x64xf32, #tpu.memory_space<vmem>>, vector<1x32xf32>
    %c72 = arith.constant 72 : index
    %c0_194 = arith.constant 0 : index
    %369 = vector.load %arg4[%c72, %c0_194] : memref<144x64xf32, #tpu.memory_space<vmem>>, vector<1x32xf32>
    %cst_195 = arith.constant dense<0.000000e+00> : vector<16xf32>
    %370 = vector.multi_reduction <add>, %367, %cst_195 [1] : vector<16x32xf32> to vector<16xf32>
    %371 = vector.shape_cast %370 : vector<16xf32> to vector<16x1xf32>
    %cst_196 = arith.constant 3.200000e+01 : f32
    %372 = vector.broadcast %cst_196 : f32 to vector<16x1xf32>
    %373 = arith.divf %371, %372 : vector<16x1xf32>
    %374 = vector.broadcast %373 : vector<16x1xf32> to vector<16x32xf32>
    %375 = arith.subf %367, %374 : vector<16x32xf32>
    %376 = arith.mulf %375, %375 : vector<16x32xf32>
    %cst_197 = arith.constant dense<0.000000e+00> : vector<16xf32>
    %377 = vector.multi_reduction <add>, %376, %cst_197 [1] : vector<16x32xf32> to vector<16xf32>
    %378 = vector.shape_cast %377 : vector<16xf32> to vector<16x1xf32>
    %cst_198 = arith.constant 3.200000e+01 : f32
    %379 = vector.broadcast %cst_198 : f32 to vector<16x1xf32>
    %380 = arith.divf %378, %379 : vector<16x1xf32>
    %cst_199 = arith.constant 9.99999974E-6 : f32
    %381 = vector.broadcast %cst_199 : f32 to vector<16x1xf32>
    %382 = arith.addf %380, %381 : vector<16x1xf32>
    %383 = math.rsqrt %382 : vector<16x1xf32>
    %384 = vector.broadcast %383 : vector<16x1xf32> to vector<16x32xf32>
    %385 = arith.mulf %375, %384 : vector<16x32xf32>
    %386 = vector.broadcast %368 : vector<1x32xf32> to vector<16x32xf32>
    %387 = arith.mulf %385, %386 : vector<16x32xf32>
    %388 = vector.broadcast %369 : vector<1x32xf32> to vector<16x32xf32>
    %389 = arith.addf %387, %388 : vector<16x32xf32>
    %c0_200 = arith.constant 0 : index
    %c0_201 = arith.constant 0 : index
    %390 = vector.load %arg3[%c0_200, %c0_201] : memref<160x64xbf16, #tpu.memory_space<vmem>>, vector<8x16xbf16>
    %391 = arith.truncf %389 : vector<16x32xf32> to vector<16x32xbf16>
    %cst_202 = arith.constant dense<0.000000e+00> : vector<8x32xf32>
    %392 = tpu.matmul %390, %391, %cst_202 {dimension_numbers = #tpu.dot_dimension_numbers<[1], [0], [0], [1], [0, 0, 1, 1], [], []>} : vector<8x16xbf16>, vector<16x32xbf16>, vector<8x32xf32> -> vector<8x32xf32>
    %c96 = arith.constant 96 : index
    %c0_203 = arith.constant 0 : index
    %393 = vector.load %arg4[%c96, %c0_203] : memref<144x64xf32, #tpu.memory_space<vmem>>, vector<8x32xf32>
    %394 = arith.addf %392, %393 : vector<8x32xf32>
    %c16_204 = arith.constant 16 : index
    %c0_205 = arith.constant 0 : index
    %395 = vector.load %arg3[%c16_204, %c0_205] : memref<160x64xbf16, #tpu.memory_space<vmem>>, vector<16x8xbf16>
    %cst_206 = arith.constant 0.707106769 : f32
    %396 = vector.broadcast %cst_206 : f32 to vector<8x32xf32>
    %397 = arith.mulf %394, %396 : vector<8x32xf32>
    %398 = math.absf %397 : vector<8x32xf32>
    %cst_207 = arith.constant 0.327591091 : f32
    %399 = vector.broadcast %cst_207 : f32 to vector<8x32xf32>
    %400 = arith.mulf %399, %398 : vector<8x32xf32>
    %cst_208 = arith.constant 1.000000e+00 : f32
    %401 = vector.broadcast %cst_208 : f32 to vector<8x32xf32>
    %402 = arith.addf %401, %400 : vector<8x32xf32>
    %403 = tpu.reciprocal %402 {approx = true} : vector<8x32xf32> -> vector<8x32xf32>
    %cst_209 = arith.constant 1.06140542 : f32
    %404 = vector.broadcast %cst_209 : f32 to vector<8x32xf32>
    %405 = arith.mulf %403, %404 : vector<8x32xf32>
    %cst_210 = arith.constant -1.45315206 : f32
    %406 = vector.broadcast %cst_210 : f32 to vector<8x32xf32>
    %407 = arith.addf %406, %405 : vector<8x32xf32>
    %408 = arith.mulf %403, %407 : vector<8x32xf32>
    %cst_211 = arith.constant 1.42141378 : f32
    %409 = vector.broadcast %cst_211 : f32 to vector<8x32xf32>
    %410 = arith.addf %409, %408 : vector<8x32xf32>
    %411 = arith.mulf %403, %410 : vector<8x32xf32>
    %cst_212 = arith.constant -0.284496725 : f32
    %412 = vector.broadcast %cst_212 : f32 to vector<8x32xf32>
    %413 = arith.addf %412, %411 : vector<8x32xf32>
    %414 = arith.mulf %403, %413 : vector<8x32xf32>
    %cst_213 = arith.constant 0.254829586 : f32
    %415 = vector.broadcast %cst_213 : f32 to vector<8x32xf32>
    %416 = arith.addf %415, %414 : vector<8x32xf32>
    %417 = arith.mulf %403, %416 : vector<8x32xf32>
    %cst_214 = arith.constant 0.000000e+00 : f32
    %418 = vector.broadcast %cst_214 : f32 to vector<8x32xf32>
    %419 = arith.cmpf oge, %397, %418 : vector<8x32xf32>
    %cst_215 = arith.constant 1.000000e+00 : f32
    %cst_216 = arith.constant -1.000000e+00 : f32
    %420 = vector.broadcast %cst_215 : f32 to vector<8x32xf32>
    %421 = vector.broadcast %cst_216 : f32 to vector<8x32xf32>
    %422 = arith.select %419, %420, %421 : vector<8x32xi1>, vector<8x32xf32>
    %cst_217 = arith.constant 0.000000e+00 : f32
    %423 = vector.broadcast %cst_217 : f32 to vector<8x32xf32>
    %424 = arith.subf %423, %398 : vector<8x32xf32>
    %425 = arith.mulf %424, %398 : vector<8x32xf32>
    %426 = math.exp %425 : vector<8x32xf32>
    %427 = arith.mulf %417, %426 : vector<8x32xf32>
    %cst_218 = arith.constant 1.000000e+00 : f32
    %428 = vector.broadcast %cst_218 : f32 to vector<8x32xf32>
    %429 = arith.subf %428, %427 : vector<8x32xf32>
    %430 = arith.mulf %422, %429 : vector<8x32xf32>
    %cst_219 = arith.constant 5.000000e-01 : f32
    %431 = vector.broadcast %cst_219 : f32 to vector<8x32xf32>
    %432 = arith.mulf %431, %394 : vector<8x32xf32>
    %cst_220 = arith.constant 1.000000e+00 : f32
    %433 = vector.broadcast %cst_220 : f32 to vector<8x32xf32>
    %434 = arith.addf %433, %430 : vector<8x32xf32>
    %435 = arith.mulf %432, %434 : vector<8x32xf32>
    %436 = arith.truncf %435 : vector<8x32xf32> to vector<8x32xbf16>
    %cst_221 = arith.constant dense<0.000000e+00> : vector<16x32xf32>
    %437 = tpu.matmul %395, %436, %cst_221 {dimension_numbers = #tpu.dot_dimension_numbers<[1], [0], [0], [1], [0, 0, 1, 1], [], []>} : vector<16x8xbf16>, vector<8x32xbf16>, vector<16x32xf32> -> vector<16x32xf32>
    %c104 = arith.constant 104 : index
    %c0_222 = arith.constant 0 : index
    %438 = vector.load %arg4[%c104, %c0_222] : memref<144x64xf32, #tpu.memory_space<vmem>>, vector<16x32xf32>
    %439 = arith.addf %437, %438 : vector<16x32xf32>
    %440 = arith.addf %367, %439 : vector<16x32xf32>
    %c80 = arith.constant 80 : index
    %c0_223 = arith.constant 0 : index
    %441 = vector.load %arg4[%c80, %c0_223] : memref<144x64xf32, #tpu.memory_space<vmem>>, vector<1x32xf32>
    %c88 = arith.constant 88 : index
    %c0_224 = arith.constant 0 : index
    %442 = vector.load %arg4[%c88, %c0_224] : memref<144x64xf32, #tpu.memory_space<vmem>>, vector<1x32xf32>
    %cst_225 = arith.constant dense<0.000000e+00> : vector<16xf32>
    %443 = vector.multi_reduction <add>, %440, %cst_225 [1] : vector<16x32xf32> to vector<16xf32>
    %444 = vector.shape_cast %443 : vector<16xf32> to vector<16x1xf32>
    %cst_226 = arith.constant 3.200000e+01 : f32
    %445 = vector.broadcast %cst_226 : f32 to vector<16x1xf32>
    %446 = arith.divf %444, %445 : vector<16x1xf32>
    %447 = vector.broadcast %446 : vector<16x1xf32> to vector<16x32xf32>
    %448 = arith.subf %440, %447 : vector<16x32xf32>
    %449 = arith.mulf %448, %448 : vector<16x32xf32>
    %cst_227 = arith.constant dense<0.000000e+00> : vector<16xf32>
    %450 = vector.multi_reduction <add>, %449, %cst_227 [1] : vector<16x32xf32> to vector<16xf32>
    %451 = vector.shape_cast %450 : vector<16xf32> to vector<16x1xf32>
    %cst_228 = arith.constant 3.200000e+01 : f32
    %452 = vector.broadcast %cst_228 : f32 to vector<16x1xf32>
    %453 = arith.divf %451, %452 : vector<16x1xf32>
    %cst_229 = arith.constant 9.99999974E-6 : f32
    %454 = vector.broadcast %cst_229 : f32 to vector<16x1xf32>
    %455 = arith.addf %453, %454 : vector<16x1xf32>
    %456 = math.rsqrt %455 : vector<16x1xf32>
    %457 = vector.broadcast %456 : vector<16x1xf32> to vector<16x32xf32>
    %458 = arith.mulf %448, %457 : vector<16x32xf32>
    %459 = vector.broadcast %441 : vector<1x32xf32> to vector<16x32xf32>
    %460 = arith.mulf %458, %459 : vector<16x32xf32>
    %461 = vector.broadcast %442 : vector<1x32xf32> to vector<16x32xf32>
    %462 = arith.addf %460, %461 : vector<16x32xf32>
    %463 = arith.truncf %462 : vector<16x32xf32> to vector<16x32xbf16>
    %c32_230 = arith.constant 32 : index
    %c0_231 = arith.constant 0 : index
    %464 = vector.load %arg3[%c32_230, %c0_231] : memref<160x64xbf16, #tpu.memory_space<vmem>>, vector<32x64xbf16>
    %cst_232 = arith.constant dense<0.000000e+00> : vector<16x64xf32>
    %465 = tpu.matmul %463, %464, %cst_232 {dimension_numbers = #tpu.dot_dimension_numbers<[1], [0], [0], [1], [0, 0, 1, 1], [], []>} : vector<16x32xbf16>, vector<32x64xbf16>, vector<16x64xf32> -> vector<16x64xf32>
    %c120 = arith.constant 120 : index
    %c0_233 = arith.constant 0 : index
    %466 = vector.load %arg4[%c120, %c0_233] : memref<144x64xf32, #tpu.memory_space<vmem>>, vector<1x64xf32>
    %467 = vector.broadcast %466 : vector<1x64xf32> to vector<16x64xf32>
    %468 = arith.addf %465, %467 : vector<16x64xf32>
    %cst_234 = arith.constant 0.707106769 : f32
    %469 = vector.broadcast %cst_234 : f32 to vector<16x64xf32>
    %470 = arith.mulf %468, %469 : vector<16x64xf32>
    %471 = math.absf %470 : vector<16x64xf32>
    %cst_235 = arith.constant 0.327591091 : f32
    %472 = vector.broadcast %cst_235 : f32 to vector<16x64xf32>
    %473 = arith.mulf %472, %471 : vector<16x64xf32>
    %cst_236 = arith.constant 1.000000e+00 : f32
    %474 = vector.broadcast %cst_236 : f32 to vector<16x64xf32>
    %475 = arith.addf %474, %473 : vector<16x64xf32>
    %476 = tpu.reciprocal %475 {approx = true} : vector<16x64xf32> -> vector<16x64xf32>
    %cst_237 = arith.constant 1.06140542 : f32
    %477 = vector.broadcast %cst_237 : f32 to vector<16x64xf32>
    %478 = arith.mulf %476, %477 : vector<16x64xf32>
    %cst_238 = arith.constant -1.45315206 : f32
    %479 = vector.broadcast %cst_238 : f32 to vector<16x64xf32>
    %480 = arith.addf %479, %478 : vector<16x64xf32>
    %481 = arith.mulf %476, %480 : vector<16x64xf32>
    %cst_239 = arith.constant 1.42141378 : f32
    %482 = vector.broadcast %cst_239 : f32 to vector<16x64xf32>
    %483 = arith.addf %482, %481 : vector<16x64xf32>
    %484 = arith.mulf %476, %483 : vector<16x64xf32>
    %cst_240 = arith.constant -0.284496725 : f32
    %485 = vector.broadcast %cst_240 : f32 to vector<16x64xf32>
    %486 = arith.addf %485, %484 : vector<16x64xf32>
    %487 = arith.mulf %476, %486 : vector<16x64xf32>
    %cst_241 = arith.constant 0.254829586 : f32
    %488 = vector.broadcast %cst_241 : f32 to vector<16x64xf32>
    %489 = arith.addf %488, %487 : vector<16x64xf32>
    %490 = arith.mulf %476, %489 : vector<16x64xf32>
    %cst_242 = arith.constant 0.000000e+00 : f32
    %491 = vector.broadcast %cst_242 : f32 to vector<16x64xf32>
    %492 = arith.cmpf oge, %470, %491 : vector<16x64xf32>
    %cst_243 = arith.constant 1.000000e+00 : f32
    %cst_244 = arith.constant -1.000000e+00 : f32
    %493 = vector.broadcast %cst_243 : f32 to vector<16x64xf32>
    %494 = vector.broadcast %cst_244 : f32 to vector<16x64xf32>
    %495 = arith.select %492, %493, %494 : vector<16x64xi1>, vector<16x64xf32>
    %cst_245 = arith.constant 0.000000e+00 : f32
    %496 = vector.broadcast %cst_245 : f32 to vector<16x64xf32>
    %497 = arith.subf %496, %471 : vector<16x64xf32>
    %498 = arith.mulf %497, %471 : vector<16x64xf32>
    %499 = math.exp %498 : vector<16x64xf32>
    %500 = arith.mulf %490, %499 : vector<16x64xf32>
    %cst_246 = arith.constant 1.000000e+00 : f32
    %501 = vector.broadcast %cst_246 : f32 to vector<16x64xf32>
    %502 = arith.subf %501, %500 : vector<16x64xf32>
    %503 = arith.mulf %495, %502 : vector<16x64xf32>
    %cst_247 = arith.constant 5.000000e-01 : f32
    %504 = vector.broadcast %cst_247 : f32 to vector<16x64xf32>
    %505 = arith.mulf %504, %468 : vector<16x64xf32>
    %cst_248 = arith.constant 1.000000e+00 : f32
    %506 = vector.broadcast %cst_248 : f32 to vector<16x64xf32>
    %507 = arith.addf %506, %503 : vector<16x64xf32>
    %508 = arith.mulf %505, %507 : vector<16x64xf32>
    %509 = arith.truncf %508 : vector<16x64xf32> to vector<16x64xbf16>
    %c64_249 = arith.constant 64 : index
    %c0_250 = arith.constant 0 : index
    %510 = vector.load %arg3[%c64_249, %c0_250] : memref<160x64xbf16, #tpu.memory_space<vmem>>, vector<64x32xbf16>
    %cst_251 = arith.constant dense<0.000000e+00> : vector<16x32xf32>
    %511 = tpu.matmul %509, %510, %cst_251 {dimension_numbers = #tpu.dot_dimension_numbers<[1], [0], [0], [1], [0, 0, 1, 1], [], []>} : vector<16x64xbf16>, vector<64x32xbf16>, vector<16x32xf32> -> vector<16x32xf32>
    %c128 = arith.constant 128 : index
    %c0_252 = arith.constant 0 : index
    %512 = vector.load %arg4[%c128, %c0_252] : memref<144x64xf32, #tpu.memory_space<vmem>>, vector<1x32xf32>
    %513 = vector.broadcast %512 : vector<1x32xf32> to vector<16x32xf32>
    %514 = arith.addf %511, %513 : vector<16x32xf32>
    %515 = arith.addf %440, %514 : vector<16x32xf32>
    %516 = arith.truncf %515 : vector<16x32xf32> to vector<16x32xbf16>
    %c128_253 = arith.constant 128 : index
    %c0_254 = arith.constant 0 : index
    %517 = vector.load %arg3[%c128_253, %c0_254] : memref<160x64xbf16, #tpu.memory_space<vmem>>, vector<32x64xbf16>
    %cst_255 = arith.constant dense<0.000000e+00> : vector<16x64xf32>
    %518 = tpu.matmul %516, %517, %cst_255 {dimension_numbers = #tpu.dot_dimension_numbers<[1], [0], [0], [1], [0, 0, 1, 1], [], []>} : vector<16x32xbf16>, vector<32x64xbf16>, vector<16x64xf32> -> vector<16x64xf32>
    %c136 = arith.constant 136 : index
    %c0_256 = arith.constant 0 : index
    %519 = vector.load %arg4[%c136, %c0_256] : memref<144x64xf32, #tpu.memory_space<vmem>>, vector<1x64xf32>
    %520 = vector.broadcast %519 : vector<1x64xf32> to vector<16x64xf32>
    %521 = arith.addf %518, %520 : vector<16x64xf32>
    %cst_257 = arith.constant 0.000000e+00 : f32
    %522 = vector.broadcast %cst_257 : f32 to vector<16x64xf32>
    %523 = arith.cmpf oge, %521, %522 : vector<16x64xf32>
    %cst_258 = arith.constant 1.000000e-01 : f32
    %524 = vector.broadcast %cst_258 : f32 to vector<16x64xf32>
    %525 = arith.mulf %524, %521 : vector<16x64xf32>
    %526 = arith.select %523, %521, %525 : vector<16x64xi1>, vector<16x64xf32>
    %c0_259 = arith.constant 0 : index
    %c0_260 = arith.constant 0 : index
    %527 = vector.load %arg5[%c0_259, %c0_260] : memref<16x64xf32, #tpu.memory_space<vmem>>, vector<16x64xf32>
    tpu.vector_store %arg5[%c0_259, %c0_260], %526 {strides = array<i32>} : memref<16x64xf32, #tpu.memory_space<vmem>>, vector<16x64xf32>,
    return
  }
  func.func @transform_0(%arg0: i32) -> (i32, i32) {
    %c0_i32 = arith.constant 0 : i32
    %c0_i32_0 = arith.constant 0 : i32
    return %arg0, %c0_i32 : i32, i32
  }
  func.func @transform_1(%arg0: i32) -> (i32, i32) {
    %c0_i32 = arith.constant 0 : i32
    %c0_i32_0 = arith.constant 0 : i32
    %c0_i32_1 = arith.constant 0 : i32
    return %c0_i32, %c0_i32_0 : i32, i32
  }
  func.func @transform_2(%arg0: i32) -> (i32, i32) {
    %c0_i32 = arith.constant 0 : i32
    %c0_i32_0 = arith.constant 0 : i32
    %c0_i32_1 = arith.constant 0 : i32
    return %c0_i32, %c0_i32_0 : i32, i32
  }
  func.func @transform_3(%arg0: i32) -> (i32, i32) {
    %c0_i32 = arith.constant 0 : i32
    %c0_i32_0 = arith.constant 0 : i32
    %c0_i32_1 = arith.constant 0 : i32
    return %c0_i32, %c0_i32_0 : i32, i32
  }
  func.func @transform_4(%arg0: i32) -> (i32, i32) {
    %c0_i32 = arith.constant 0 : i32
    %c0_i32_0 = arith.constant 0 : i32
    return %arg0, %c0_i32 : i32, i32
  }
}

</mosaic_0001>

<llo_original>
// kernel: latent_encoder_forward.1
$region0: #{latent_encoder_forward.1}
  #allocation0 [shape = 'u32[]', space=smem, size = 0x4, offset = 0x4, fixed_abs, tag = 'smem constant byte address 0x4 - core index']
  #allocation1 [shape = 'u32[144,128]{1,0:T(1,128)}', space=vmem, size = 0x12000, scoped, tag = 'internal scratch']
  %s0 = inlined_call_operand.vmem [shape: bf16[128,144], index: 0, kind: input, shape index: {}]
  %s1 = inlined_call_operand.vmem [shape: bf16[1584,32], index: 1, kind: input, shape index: {}]
  %s2 = inlined_call_operand.vmem [shape: bf16[160,64], index: 2, kind: input, shape index: {}]
  %s3 = inlined_call_operand.vmem [shape: f32[144,64], index: 3, kind: input, shape index: {}]
  %s4 = inlined_call_operand.hbm [shape: f32[32,64], index: 4, kind: output, shape index: {}]
  %s5 = sld [smem:[#allocation0]]
  $region49: #{latent_encoder_forward.1} parent=0
    _
  %s7 = ssub.s32 1, %s5
  %s8 = scalar_select 0, %s7, %s5
  $region1: #{latent_encoder_forward.1} parent=0
    #allocation2 [shape = 'u8[16384]{0}', space=vmem, size = 0x4000, scoped, tag = 'output window, operand 0']
    #allocation3 [shape = 's32[2]{0}', space=sflag, size = 0x8, scoped, tag = 'scoped memory for latent_encoder_forward.1']
    %9 = vsyncpa [#allocation3], 0
    %s10 = scalar_lea.sflag [#allocation3], 1
    %11 = vsyncpa %s10, 0
    loop: start=0, step=1, limit=4
    $region2: #{latent_encoder_forward.1} parent=1 // loop_pre_header
      _
    $region3: #{latent_encoder_forward.1} parent=1 // loop_header
      %s13 = sphi 0, %s17
      %p14 = scmp.ge.s32.totalorder %s13, 4
      %s23 = sphi 0, %s25
      %s26 = sphi 0, %s23
      %s27 = sphi 0, %s26
      %s43 = sphi 0, %s27
      %s47 = sphi 0, %s47
      %s49 = sphi 0, %s47
      %s50 = sphi 0, %s49
      %s64 = sphi 0, %s50
      %s68 = sphi 0, %s68
      %s70 = sphi 0, %s68
      %s71 = sphi 0, %s70
      %s85 = sphi 0, %s71
      %s89 = sphi 0, %s89
      %s91 = sphi 0, %s89
      %s92 = sphi 0, %s91
      %s106 = sphi 0, %s92
      %s112 = sphi 0, %s114
      %s115 = sphi 0, %s112
      %s116 = sphi 0, %s115
      %s132 = sphi 0, %s116
    $region4: #{latent_encoder_forward.1} parent=1 // loop_header_branch
      %16 = sbr.rel (%p14) target = $region8
    $region5: #{latent_encoder_forward.1} parent=1 // loop_body
      %s18 = ssub.s32 %s13, 1
      %s19 = ssub.s32 %s13, 2
      %s20 = sadd.s32 %s13, 1
      %s21 = ssub.s32 %s13, %s20
      %p22 = scmp.eq.s32.totalorder %s21, 0
      %s24 = sadd.s32 %s23, 1
      %s25 = scalar_select %p22, %s23, %s24
      %p28 = pneg %p22
      %p29 = scmp.eq.s32.totalorder %s13, 1
      %p30 = por %p28, %p29
      %p31 = scmp.ne.s32.totalorder %s23, %s26
      %p32 = scmp.eq.s32.totalorder %s13, 0
      %p33 = por %p31, %p32
      %p34 = scmp.ne.s32.totalorder %s23, %s26
      %p35 = scmp.eq.s32.totalorder %s18, 1
      %p36 = por %p34, %p35
      %p37 = scmp.ne.s32.totalorder %s26, %s27
      %p38 = scmp.eq.s32.totalorder %s18, 0
      %p39 = por %p37, %p38
      %p40 = scmp.ne.s32.totalorder %s26, %s27
      %p41 = scmp.eq.s32.totalorder %s19, 1
      %p42 = por %p40, %p41
      %p44 = scmp.ne.s32.totalorder %s27, %s43
      %p45 = scmp.eq.s32.totalorder %s19, 0
      %p46 = por %p44, %p45
      %s48 = sadd.s32 %s47, 1
      %p51 = scmp.eq.s32.totalorder %s13, 1
      %p52 = scmp.ne.s32.totalorder %s47, %s49
      %p53 = scmp.eq.s32.totalorder %s13, 0
      %p54 = por %p52, %p53
      %p55 = scmp.ne.s32.totalorder %s47, %s49
      %p56 = scmp.eq.s32.totalorder %s18, 1
      %p57 = por %p55, %p56
      %p58 = scmp.ne.s32.totalorder %s49, %s50
      %p59 = scmp.eq.s32.totalorder %s18, 0
      %p60 = por %p58, %p59
      %p61 = scmp.ne.s32.totalorder %s49, %s50
      %p62 = scmp.eq.s32.totalorder %s19, 1
      %p63 = por %p61, %p62
      %p65 = scmp.ne.s32.totalorder %s50, %s64
      %p66 = scmp.eq.s32.totalorder %s19, 0
      %p67 = por %p65, %p66
      %s69 = sadd.s32 %s68, 1
      %p72 = scmp.eq.s32.totalorder %s13, 1
      %p73 = scmp.ne.s32.totalorder %s68, %s70
      %p74 = scmp.eq.s32.totalorder %s13, 0
      %p75 = por %p73, %p74
      %p76 = scmp.ne.s32.totalorder %s68, %s70
      %p77 = scmp.eq.s32.totalorder %s18, 1
      %p78 = por %p76, %p77
      %p79 = scmp.ne.s32.totalorder %s70, %s71
      %p80 = scmp.eq.s32.totalorder %s18, 0
      %p81 = por %p79, %p80
      %p82 = scmp.ne.s32.totalorder %s70, %s71
      %p83 = scmp.eq.s32.totalorder %s19, 1
      %p84 = por %p82, %p83
      %p86 = scmp.ne.s32.totalorder %s71, %s85
      %p87 = scmp.eq.s32.totalorder %s19, 0
      %p88 = por %p86, %p87
      %s90 = sadd.s32 %s89, 1
      %p93 = scmp.eq.s32.totalorder %s13, 1
      %p94 = scmp.ne.s32.totalorder %s89, %s91
      %p95 = scmp.eq.s32.totalorder %s13, 0
      %p96 = por %p94, %p95
      %p97 = scmp.ne.s32.totalorder %s89, %s91
      %p98 = scmp.eq.s32.totalorder %s18, 1
      %p99 = por %p97, %p98
      %p100 = scmp.ne.s32.totalorder %s91, %s92
      %p101 = scmp.eq.s32.totalorder %s18, 0
      %p102 = por %p100, %p101
      %p103 = scmp.ne.s32.totalorder %s91, %s92
      %p104 = scmp.eq.s32.totalorder %s19, 1
      %p105 = por %p103, %p104
      %p107 = scmp.ne.s32.totalorder %s92, %s106
      %p108 = scmp.eq.s32.totalorder %s19, 0
      %p109 = por %p107, %p108
      %s110 = ssub.s32 %s13, %s20
      %p111 = scmp.eq.s32.totalorder %s110, 0
      %s113 = sadd.s32 %s112, 1
      %s114 = scalar_select %p111, %s112, %s113
      %p117 = pneg %p111
      %p118 = scmp.eq.s32.totalorder %s13, 1
      %p119 = por %p117, %p118
      %p120 = scmp.ne.s32.totalorder %s112, %s115
      %p121 = scmp.eq.s32.totalorder %s13, 0
      %p122 = por %p120, %p121
      %p123 = scmp.ne.s32.totalorder %s112, %s115
      %p124 = scmp.eq.s32.totalorder %s18, 1
      %p125 = por %p123, %p124
      %p126 = scmp.ne.s32.totalorder %s115, %s116
      %p127 = scmp.eq.s32.totalorder %s18, 0
      %p128 = por %p126, %p127
      %p129 = scmp.ne.s32.totalorder %s115, %s116
      %p130 = scmp.eq.s32.totalorder %s19, 1
      %p131 = por %p129, %p130
      %p133 = scmp.ne.s32.totalorder %s116, %s132
      %p134 = scmp.eq.s32.totalorder %s19, 0
      %p135 = por %p133, %p134
      %p136 = scmp.le.s32.totalorder 1, %s13
      %p137 = scmp.lt.s32.totalorder %s13, 3
      %p138 = pnand %p136, %p137
      %p139 = pneg %p138
      // Predicated region
      $region9: #{latent_encoder_forward.1} parent=5 // pred_check
        _
      $region10: #{latent_encoder_forward.1} parent=5 // pred_check_branch
        %141 = sbr.rel (%p138) target = $region12
      $region11: #{latent_encoder_forward.1} parent=5 // pred_region
        %s142 = ssub.s32 %s13, 1
        // Predicated region
        $region13: #{latent_encoder_forward.1} parent=11 // pred_check
          %p143 = pneg %p60
        $region14: #{latent_encoder_forward.1} parent=11 // pred_check_branch
          %145 = sbr.rel (%p143) target = $region16
        $region15: #{latent_encoder_forward.1} parent=11 // pred_region
          _
        $region16: #{latent_encoder_forward.1} parent=11 // pred_fallthru
          _
        // Predicated region
        $region17: #{latent_encoder_forward.1} parent=11 // pred_check
          %p146 = pneg %p81
        $region18: #{latent_encoder_forward.1} parent=11 // pred_check_branch
          %148 = sbr.rel (%p146) target = $region20
        $region19: #{latent_encoder_forward.1} parent=11 // pred_region
          _
        $region20: #{latent_encoder_forward.1} parent=11 // pred_fallthru
          _
        // Predicated region
        $region21: #{latent_encoder_forward.1} parent=11 // pred_check
          %p149 = pneg %p102
        $region22: #{latent_encoder_forward.1} parent=11 // pred_check_branch
          %151 = sbr.rel (%p149) target = $region24
        $region23: #{latent_encoder_forward.1} parent=11 // pred_region
          _
        $region24: #{latent_encoder_forward.1} parent=11 // pred_fallthru
          _
      $region12: #{latent_encoder_forward.1} parent=5 // pred_fallthru
        _
      %p152 = scmp.lt.s32.totalorder %s13, 2
      // Predicated region
      $region25: #{latent_encoder_forward.1} parent=5 // pred_check
        %p153 = pneg %p152
      $region26: #{latent_encoder_forward.1} parent=5 // pred_check_branch
        %155 = sbr.rel (%p153) target = $region28
      $region27: #{latent_encoder_forward.1} parent=5 // pred_region
        // Predicated region
        $region29: #{latent_encoder_forward.1} parent=27 // pred_check
          %p156 = pneg %p33
        $region30: #{latent_encoder_forward.1} parent=27 // pred_check_branch
          %158 = sbr.rel (%p156) target = $region32
        $region31: #{latent_encoder_forward.1} parent=27 // pred_region
          %s159 = smul.u32 8, %s13
          %p160 = scmp.lt.s32.totalorder %s159, 15
          %s161 = scalar_select %p160, %s159, 15
          %s162 = smul.addr %s161, 2
          %s163 = smul.addr %s162, 4
          %s164 = scalar_lea.vmem %s0, %s163
          %s165 = smul.u32 8, %s13
        $region32: #{latent_encoder_forward.1} parent=27 // pred_fallthru
          _
      $region28: #{latent_encoder_forward.1} parent=5 // pred_fallthru
        _
      %p166 = scmp.le.s32.totalorder 1, %s13
      %p167 = scmp.lt.s32.totalorder %s13, 3
      %p168 = pnand %p166, %p167
      %p169 = pneg %p168
      // Predicated region
      $region33: #{latent_encoder_forward.1} parent=5 // pred_check
        _
      $region34: #{latent_encoder_forward.1} parent=5 // pred_check_branch
        %171 = sbr.rel (%p168) target = $region36
      $region35: #{latent_encoder_forward.1} parent=5 // pred_region
        %s172 = ssub.s32 %s13, 1
        %s173 = smul.u32 8, %s18
        %p174 = scmp.lt.s32.totalorder %s173, 15
        %s175 = scalar_select %p174, %s173, 15
        %s176 = smul.addr %s175, 2
        %s177 = smul.addr %s176, 4
        %s178 = scalar_lea.vmem %s0, %s177
        %p179 = pneg %p39
        %p180 = pneg %p36
        %p181 = pneg %p60
        %p182 = pneg %p57
        %p183 = pneg %p81
        %p184 = pneg %p78
        %p185 = pneg %p102
        %p186 = pneg %p99
        %p187 = pneg %p128
        %p188 = pneg %p125
        %s189 = sand.u32 %s115, 1
        %s190 = scalar_lea.sflag [#allocation3], %s189
        %s191 = sand.u32 %s115, 1
        %s192 = smul.addr %s191, 16
        %s193 = scalar_lea.vmem [#allocation2], %s192
        %s194 = smul.u32 8, %s18
        %p195 = scmp.lt.s32.totalorder %s194, 15
        %s196 = scalar_select %p195, %s194, 15
        %s197 = smul.addr %s196, 2
        %s198 = smul.addr %s197, 4
        %s199 = scalar_lea.vmem %s0, %s198
        %s200 = smul.u32 8, %s18
        %s201 = smul.u32 2, %s18
        %v203 = vlaneseq
        %v204 = vshrl.u32 %v203, 7
        %v205 = vadd.s32 %v204, 8
        %v206 = vadd.s32 %v204, 16
        %v207 = vadd.s32 %v204, 24
        %v208 = vadd.s32 %v204, 32
        %v209 = vadd.s32 %v204, 40
        %v210 = vadd.s32 %v204, 48
        %v211 = vadd.s32 %v204, 56
        %v212 = vshra.s32 %v204, 3
        %v213 = vshra.s32 %v205, 3
        %v214 = vshra.s32 %v206, 3
        %v215 = vshra.s32 %v207, 3
        %v216 = vshra.s32 %v208, 3
        %v217 = vshra.s32 %v209, 3
        %v218 = vshra.s32 %v210, 3
        %v219 = vshra.s32 %v211, 3
        %v220 = vand.u32 %v204, 7
        %v221 = vand.u32 %v205, 7
        %v222 = vand.u32 %v206, 7
        %v223 = vand.u32 %v207, 7
        %v224 = vand.u32 %v208, 7
        %v225 = vand.u32 %v209, 7
        %v226 = vand.u32 %v210, 7
        %v227 = vand.u32 %v211, 7
        %vm228 = vcmp.ge.s32.totalorder %v212, 1
        %vm229 = vcmp.ge.s32.totalorder %v213, 1
        %vm230 = vcmp.ge.s32.totalorder %v214, 1
        %vm231 = vcmp.ge.s32.totalorder %v215, 1
        %vm232 = vcmp.ge.s32.totalorder %v216, 1
        %vm233 = vcmp.ge.s32.totalorder %v217, 1
        %vm234 = vcmp.ge.s32.totalorder %v218, 1
        %vm235 = vcmp.ge.s32.totalorder %v219, 1
        %vm236 = vcmp.ge.s32.totalorder %v220, 1
        %vm237 = vcmp.ge.s32.totalorder %v221, 1
        %vm238 = vcmp.ge.s32.totalorder %v222, 1
        %vm239 = vcmp.ge.s32.totalorder %v223, 1
        %vm240 = vcmp.ge.s32.totalorder %v224, 1
        %vm241 = vcmp.ge.s32.totalorder %v225, 1
        %vm242 = vcmp.ge.s32.totalorder %v226, 1
        %vm243 = vcmp.ge.s32.totalorder %v227, 1
        %vm244 = vmand %vm228, %vm236
        %vm245 = vmand %vm229, %vm237
        %vm246 = vmand %vm230, %vm238
        %vm247 = vmand %vm231, %vm239
        %vm248 = vmand %vm232, %vm240
        %vm249 = vmand %vm233, %vm241
        %vm250 = vmand %vm234, %vm242
        %vm251 = vmand %vm235, %vm243
        %vm252 = vcmp.lt.s32.totalorder %v220, 7
        %vm253 = vcmp.lt.s32.totalorder %v221, 7
        %vm254 = vcmp.lt.s32.totalorder %v222, 7
        %vm255 = vcmp.lt.s32.totalorder %v223, 7
        %vm256 = vcmp.lt.s32.totalorder %v224, 7
        %vm257 = vcmp.lt.s32.totalorder %v225, 7
        %vm258 = vcmp.lt.s32.totalorder %v226, 7
        %vm259 = vcmp.lt.s32.totalorder %v227, 7
        %vm260 = vmand %vm228, %vm252
        %vm261 = vmand %vm229, %vm253
        %vm262 = vmand %vm230, %vm254
        %vm263 = vmand %vm231, %vm255
        %vm264 = vmand %vm232, %vm256
        %vm265 = vmand %vm233, %vm257
        %vm266 = vmand %vm234, %vm258
        %vm267 = vmand %vm235, %vm259
        %vm268 = vcmp.lt.s32.totalorder %v212, 7
        %vm269 = vcmp.lt.s32.totalorder %v213, 7
        %vm270 = vcmp.lt.s32.totalorder %v214, 7
        %vm271 = vcmp.lt.s32.totalorder %v215, 7
        %vm272 = vcmp.lt.s32.totalorder %v216, 7
        %vm273 = vcmp.lt.s32.totalorder %v217, 7
        %vm274 = vcmp.lt.s32.totalorder %v218, 7
        %vm275 = vcmp.lt.s32.totalorder %v219, 7
        %vm276 = vmand %vm268, %vm236
        %vm277 = vmand %vm269, %vm237
        %vm278 = vmand %vm270, %vm238
        %vm279 = vmand %vm271, %vm239
        %vm280 = vmand %vm272, %vm240
        %vm281 = vmand %vm273, %vm241
        %vm282 = vmand %vm274, %vm242
        %vm283 = vmand %vm275, %vm243
        %vm284 = vmand %vm268, %vm252
        %vm285 = vmand %vm269, %vm253
        %vm286 = vmand %vm270, %vm254
        %vm287 = vmand %vm271, %vm255
        %vm288 = vmand %vm272, %vm256
        %vm289 = vmand %vm273, %vm257
        %vm290 = vmand %vm274, %vm258
        %vm291 = vmand %vm275, %vm259
        %v292 = vld [vmem:[%s199] sm:$0xff]
        %v293 = vld [vmem:[%s199 + $0x8] sm:$0xff]
        %v294 = vld [vmem:[%s199 + $0x10] sm:$0xff]
        %v295 = vld [vmem:[%s199 + $0x18] sm:$0xff]
        %v296 = vld [vmem:[%s199 + $0x20] sm:$0xff]
        %v297 = vld [vmem:[%s199 + $0x28] sm:$0xff]
        %v298 = vld [vmem:[%s199 + $0x30] sm:$0xff]
        %v299 = vld [vmem:[%s199 + $0x38] sm:$0xff]
        %v300 = vld [vmem:[%s1] sm:$0xf]
        %v301 = vld [vmem:[%s1 + $0x4] sm:$0xf]
        %v302 = vld [vmem:[%s1 + $0x8] sm:$0xf]
        %v303 = vld [vmem:[%s1 + $0xc] sm:$0xf]
        %v304 = vld [vmem:[%s1 + $0x10] sm:$0xf]
        %v305 = vld [vmem:[%s1 + $0x14] sm:$0xf]
        %v306 = vld [vmem:[%s1 + $0x18] sm:$0xf]
        %v307 = vld [vmem:[%s1 + $0x1c] sm:$0xf]
        %v308 = vld [vmem:[%s1 + $0x20] sm:$0xf]
        %v309 = vld [vmem:[%s1 + $0x24] sm:$0xf]
        %v310 = vld [vmem:[%s1 + $0x28] sm:$0xf]
        %v311 = vld [vmem:[%s1 + $0x2c] sm:$0xf]
        %v312 = vld [vmem:[%s1 + $0x30] sm:$0xf]
        %v313 = vld [vmem:[%s1 + $0x34] sm:$0xf]
        %v314 = vld [vmem:[%s1 + $0x38] sm:$0xf]
        %v315 = vld [vmem:[%s1 + $0x3c] sm:$0xf]
        %v316 = vld [vmem:[%s1 + $0x40] sm:$0xf]
        %v317 = vld [vmem:[%s1 + $0x44] sm:$0xf]
        %v318 = vld [vmem:[%s3 + $0x10] sm:$0x1]
        %v319 = vlaneseq
        %v320 = vshrl.u32 %v319, 7
        %v321 = vsub.s32 0, %v320
        %v322 = vrot.slane %v318, %v321
        %v331 = vunpack.c.l.b16 %v292
        %v332 = vunpack.c.h.b16 %v292
        %v333 = vunpack.c.l.b16 %v293
        %v334 = vunpack.c.h.b16 %v293
        %v335 = vunpack.c.l.b16 %v294
        %v336 = vunpack.c.h.b16 %v294
        %v337 = vunpack.c.l.b16 %v295
        %v338 = vunpack.c.h.b16 %v295
        %v339 = vunpack.c.l.b16 %v296
        %v340 = vunpack.c.h.b16 %v296
        %v341 = vunpack.c.l.b16 %v297
        %v342 = vunpack.c.h.b16 %v297
        %v343 = vunpack.c.l.b16 %v298
        %v344 = vunpack.c.h.b16 %v298
        %v345 = vunpack.c.l.b16 %v299
        %v346 = vunpack.c.h.b16 %v299
        %v347 = vpack.c.b16 %v333, %v331
        %v348 = vpack.c.b16 %v334, %v332
        %v349 = vpack.c.b16 %v337, %v335
        %v350 = vpack.c.b16 %v338, %v336
        %v351 = vpack.c.b16 %v341, %v339
        %v352 = vpack.c.b16 %v342, %v340
        %v353 = vpack.c.b16 %v345, %v343
        %v354 = vpack.c.b16 %v346, %v344
        %v377 = vunpack.c.l.b16 %v300
        %v378 = vunpack.c.l.b16 %v301
        %v379 = vunpack.c.l.b16 %v302
        %v380 = vunpack.c.l.b16 %v303
        %v381 = vunpack.c.l.b16 %v304
        %v382 = vunpack.c.l.b16 %v305
        %v383 = vunpack.c.l.b16 %v306
        %v384 = vunpack.c.l.b16 %v307
        %v385 = vunpack.c.l.b16 %v308
        %v386 = vunpack.c.l.b16 %v309
        %v387 = vunpack.c.l.b16 %v310
        %v388 = vunpack.c.l.b16 %v311
        %v389 = vunpack.c.l.b16 %v312
        %v390 = vunpack.c.l.b16 %v313
        %v391 = vunpack.c.l.b16 %v314
        %v392 = vunpack.c.l.b16 %v315
        %v393 = vunpack.c.l.b16 %v316
        %v394 = vunpack.c.l.b16 %v317
        %v395 = vpack.c.b16 %v378, %v377
        %v396 = vpack.c.b16 %v380, %v379
        %v397 = vpack.c.b16 %v382, %v381
        %v398 = vpack.c.b16 %v384, %v383
        %v399 = vpack.c.b16 %v386, %v385
        %v400 = vpack.c.b16 %v388, %v387
        %v401 = vpack.c.b16 %v390, %v389
        %v402 = vpack.c.b16 %v392, %v391
        %v403 = vpack.c.b16 %v394, %v393
        %vm413 = vcmask 130048
        %v415 = vsel %vm413, %v348, 0
        %v418 = vsel %vm413, %v350, 0
        %v421 = vsel %vm413, %v352, 0
        %v424 = vsel %vm413, %v354, 0
        %426 = vmatprep.subr.bf16.mxu0 0
        %427 = vmatpush1.bf16.msra.mxu0 %v402
        %428 = vmatprep.subr.bf16.mxu0 0
        %429 = vmatpush1.bf16.msra.mxu0 %v401
        %430 = vmatprep.subr.bf16.mxu0 0
        %431 = vmatpush1.bf16.msra.mxu0 %v400
        %432 = vmatprep.subr.bf16.mxu0 0
        %433 = vmatpush1.bf16.msra.mxu0 %v399
        %434 = vmatprep.subr.bf16.mxu0 0
        %435 = vmatpush1.bf16.msra.mxu0 %v398
        %436 = vmatprep.subr.bf16.mxu0 0
        %437 = vmatpush1.bf16.msra.mxu0 %v397
        %438 = vmatprep.subr.bf16.mxu0 0
        %439 = vmatpush1.bf16.msra.mxu0 %v396
        %440 = vmatprep.subr.bf16.mxu0 0
        %441 = vmatpush1.bf16.msra.mxu0 %v395
        %442 = vmatprep.subr.bf16.mxu0 0
        %443 = vmatpush2.bf16.msra.mxu0 0
        %444 = vmatprep.subr.bf16.mxu0 0
        %445 = vmatpush2.bf16.msra.mxu0 0
        %446 = vmatprep.subr.bf16.mxu0 0
        %447 = vmatpush2.bf16.msra.mxu0 0
        %448 = vmatprep.subr.bf16.mxu0 0
        %449 = vmatpush2.bf16.msra.mxu0 0
        %450 = vmatprep.subr.bf16.mxu0 0
        %451 = vmatpush2.bf16.msra.mxu0 0
        %452 = vmatprep.subr.bf16.mxu0 0
        %453 = vmatpush2.bf16.msra.mxu0 0
        %454 = vmatprep.subr.bf16.mxu0 0
        %455 = vmatpush2.bf16.msra.mxu0 0
        %456 = vmatprep.subr.bf16.mxu0 0
        %457 = vmatpush2.bf16.msra.mxu0 %v403
        %458 = vmatprep.mubr.bf16.mxu0 %v415
        %459 = vmatmul.mubr.bf16.gmra.mxu0 %v347
        %v460 = vpop.f32.mrf.mxu0
        %v461 = vadd.f32 %v322, %v460
        %v462 = vpop.f32.mrf.mxu0
        %v463 = vpop.f32.mrf.mxu0
        %v464 = vadd.f32 %v322, %v463
        %v465 = vpop.f32.mrf.mxu0
        %466 = vmatprep.mubr.bf16.mxu0 %v418
        %467 = vmatmul.mubr.bf16.gmra.mxu0 %v349
        %v468 = vpop.f32.mrf.mxu0
        %v469 = vadd.f32 %v322, %v468
        %v470 = vpop.f32.mrf.mxu0
        %v471 = vpop.f32.mrf.mxu0
        %v472 = vadd.f32 %v322, %v471
        %v473 = vpop.f32.mrf.mxu0
        %474 = vmatprep.mubr.bf16.mxu0 %v421
        %475 = vmatmul.mubr.bf16.gmra.mxu0 %v351
        %v476 = vpop.f32.mrf.mxu0
        %v477 = vadd.f32 %v322, %v476
        %v478 = vpop.f32.mrf.mxu0
        %v479 = vpop.f32.mrf.mxu0
        %v480 = vadd.f32 %v322, %v479
        %v481 = vpop.f32.mrf.mxu0
        %482 = vmatprep.mubr.bf16.mxu0 %v424
        %483 = vmatmul.mubr.bf16.gmra.mxu0 %v353
        %v484 = vpop.f32.mrf.mxu0
        %v485 = vadd.f32 %v322, %v484
        %v486 = vpop.f32.mrf.mxu0
        %v487 = vpop.f32.mrf.mxu0
        %v488 = vadd.f32 %v322, %v487
        %v489 = vpop.f32.mrf.mxu0
        %490 = vdwg.mxu0
        %vm491 = vcmp.ge.f32.partialorder %v461, 0.0
        %vm492 = vcmp.ge.f32.partialorder %v464, 0.0
        %vm493 = vcmp.ge.f32.partialorder %v469, 0.0
        %vm494 = vcmp.ge.f32.partialorder %v472, 0.0
        %vm495 = vcmp.ge.f32.partialorder %v477, 0.0
        %vm496 = vcmp.ge.f32.partialorder %v480, 0.0
        %vm497 = vcmp.ge.f32.partialorder %v485, 0.0
        %vm498 = vcmp.ge.f32.partialorder %v488, 0.0
        %v499 = vmul.f32 %v461, 0.1
        %v500 = vmul.f32 %v464, 0.1
        %v501 = vmul.f32 %v469, 0.1
        %v502 = vmul.f32 %v472, 0.1
        %v503 = vmul.f32 %v477, 0.1
        %v504 = vmul.f32 %v480, 0.1
        %v505 = vmul.f32 %v485, 0.1
        %v506 = vmul.f32 %v488, 0.1
        %v507 = vsel %vm491, %v461, %v499
        %v508 = vsel %vm492, %v464, %v500
        %v509 = vsel %vm493, %v469, %v501
        %v510 = vsel %vm494, %v472, %v502
        %v511 = vsel %vm495, %v477, %v503
        %v512 = vsel %vm496, %v480, %v504
        %v513 = vsel %vm497, %v485, %v505
        %v514 = vsel %vm498, %v488, %v506
        %v515 = vrot.slane %v507, 7
        %v516 = vrot.slane %v508, 7
        %v517 = vrot.slane %v509, 7
        %v518 = vrot.slane %v510, 7
        %v519 = vrot.slane %v511, 7
        %v520 = vrot.slane %v512, 7
        %v521 = vrot.slane %v513, 7
        %v522 = vrot.slane %v514, 7
        %vm523 = vcmp.lt.s32.totalorder %v204, 1
        %v524 = vsel %vm523, %v521, %v522
        %v525 = vsel %vm523, %v520, %v521
        %v526 = vsel %vm523, %v519, %v520
        %v527 = vsel %vm523, %v518, %v519
        %v528 = vsel %vm523, %v517, %v518
        %v529 = vsel %vm523, %v516, %v517
        %v530 = vsel %vm523, %v515, %v516
        %v531 = vsel %vm523, %v522, %v515
        %v532 = vsel %vm244, %v524, 0.0
        %v533 = vsel %vm245, %v531, 0.0
        %v534 = vsel %vm246, %v530, 0.0
        %v535 = vsel %vm247, %v529, 0.0
        %v536 = vsel %vm248, %v528, 0.0
        %v537 = vsel %vm249, %v527, 0.0
        %v538 = vsel %vm250, %v526, 0.0
        %v539 = vsel %vm251, %v525, 0.0
        %v540 = vld [vmem:[%s1 + $0x48] sm:$0xf]
        %v541 = vld [vmem:[%s1 + $0x4c] sm:$0xf]
        %v542 = vld [vmem:[%s1 + $0x50] sm:$0xf]
        %v543 = vld [vmem:[%s1 + $0x54] sm:$0xf]
        %v544 = vpack.c.bf16 %v533, %v532
        %v545 = vpack.c.bf16 %v535, %v534
        %v546 = vpack.c.bf16 %v537, %v536
        %v547 = vpack.c.bf16 %v539, %v538
        %v548 = vsel %vm228, %v514, 0.0
        %v549 = vsel %vm229, %v507, 0.0
        %v550 = vsel %vm230, %v508, 0.0
        %v551 = vsel %vm231, %v509, 0.0
        %v552 = vsel %vm232, %v510, 0.0
        %v553 = vsel %vm233, %v511, 0.0
        %v554 = vsel %vm234, %v512, 0.0
        %v555 = vsel %vm235, %v513, 0.0
        %v556 = vld [vmem:[%s1 + $0x58] sm:$0xf]
        %v557 = vld [vmem:[%s1 + $0x5c] sm:$0xf]
        %v558 = vld [vmem:[%s1 + $0x60] sm:$0xf]
        %v559 = vld [vmem:[%s1 + $0x64] sm:$0xf]
        %v560 = vpack.c.bf16 %v549, %v548
        %v561 = vpack.c.bf16 %v551, %v550
        %v562 = vpack.c.bf16 %v553, %v552
        %v563 = vpack.c.bf16 %v555, %v554
        %v568 = vunpack.c.l.b16 %v556
        %v569 = vunpack.c.l.b16 %v557
        %v570 = vunpack.c.l.b16 %v558
        %v571 = vunpack.c.l.b16 %v559
        %v572 = vpack.c.b16 %v569, %v568
        %v573 = vpack.c.b16 %v571, %v570
        %vm576 = vcmask 261120
        %v578 = vsel %vm576, %v560, 0
        %v581 = vsel %vm576, %v561, 0
        %v584 = vsel %vm576, %v562, 0
        %v587 = vsel %vm576, %v563, 0
        %589 = vmatprep.subr.bf16.mxu0 0
        %590 = vmatpush1.bf16.msra.mxu0 0
        %591 = vmatprep.subr.bf16.mxu0 0
        %592 = vmatpush1.bf16.msra.mxu0 0
        %593 = vmatprep.subr.bf16.mxu0 0
        %594 = vmatpush1.bf16.msra.mxu0 0
        %595 = vmatprep.subr.bf16.mxu0 0
        %596 = vmatpush1.bf16.msra.mxu0 0
        %597 = vmatprep.subr.bf16.mxu0 0
        %598 = vmatpush1.bf16.msra.mxu0 0
        %599 = vmatprep.subr.bf16.mxu0 0
        %600 = vmatpush1.bf16.msra.mxu0 0
        %601 = vmatprep.subr.bf16.mxu0 0
        %602 = vmatpush1.bf16.msra.mxu0 %v573
        %603 = vmatprep.subr.bf16.mxu0 0
        %604 = vmatpush1.bf16.msra.mxu0 %v572
        %605 = vmatprep.subr.bf16.mxu0 0
        %606 = vmatpush2.bf16.msra.mxu0 0
        %607 = vmatprep.subr.bf16.mxu0 0
        %608 = vmatpush2.bf16.msra.mxu0 0
        %609 = vmatprep.subr.bf16.mxu0 0
        %610 = vmatpush2.bf16.msra.mxu0 0
        %611 = vmatprep.subr.bf16.mxu0 0
        %612 = vmatpush2.bf16.msra.mxu0 0
        %613 = vmatprep.subr.bf16.mxu0 0
        %614 = vmatpush2.bf16.msra.mxu0 0
        %615 = vmatprep.subr.bf16.mxu0 0
        %616 = vmatpush2.bf16.msra.mxu0 0
        %617 = vmatprep.subr.bf16.mxu0 0
        %618 = vmatpush2.bf16.msra.mxu0 0
        %619 = vmatprep.subr.bf16.mxu0 0
        %620 = vmatpush2.bf16.msra.mxu0 0
        %621 = vmatprep.mubr.bf16.mxu0 0
        %622 = vmatmul.mubr.bf16.gmra.mxu0 %v578
        %v623 = vpop.f32.mrf.mxu0
        %v624 = vadd.f32 0.0, %v623
        %v625 = vpop.f32.mrf.mxu0
        %v626 = vpop.f32.mrf.mxu0
        %v627 = vadd.f32 0.0, %v626
        %v628 = vpop.f32.mrf.mxu0
        %629 = vmatprep.mubr.bf16.mxu0 0
        %630 = vmatmul.mubr.bf16.gmra.mxu0 %v581
        %v631 = vpop.f32.mrf.mxu0
        %v632 = vadd.f32 0.0, %v631
        %v633 = vpop.f32.mrf.mxu0
        %v634 = vpop.f32.mrf.mxu0
        %v635 = vadd.f32 0.0, %v634
        %v636 = vpop.f32.mrf.mxu0
        %637 = vmatprep.mubr.bf16.mxu0 0
        %638 = vmatmul.mubr.bf16.gmra.mxu0 %v584
        %v639 = vpop.f32.mrf.mxu0
        %v640 = vadd.f32 0.0, %v639
        %v641 = vpop.f32.mrf.mxu0
        %v642 = vpop.f32.mrf.mxu0
        %v643 = vadd.f32 0.0, %v642
        %v644 = vpop.f32.mrf.mxu0
        %645 = vmatprep.mubr.bf16.mxu0 0
        %646 = vmatmul.mubr.bf16.gmra.mxu0 %v587
        %v647 = vpop.f32.mrf.mxu0
        %v648 = vadd.f32 0.0, %v647
        %v649 = vpop.f32.mrf.mxu0
        %v650 = vpop.f32.mrf.mxu0
        %v651 = vadd.f32 0.0, %v650
        %v652 = vpop.f32.mrf.mxu0
        %653 = vdwg.mxu0
        %v658 = vunpack.c.l.b16 %v540
        %v659 = vunpack.c.l.b16 %v541
        %v660 = vunpack.c.l.b16 %v542
        %v661 = vunpack.c.l.b16 %v543
        %v662 = vpack.c.b16 %v659, %v658
        %v663 = vpack.c.b16 %v661, %v660
        %v667 = vsel %vm576, %v544, 0
        %v670 = vsel %vm576, %v545, 0
        %v673 = vsel %vm576, %v546, 0
        %v676 = vsel %vm576, %v547, 0
        %678 = vmatprep.subr.bf16.mxu0 0
        %679 = vmatpush1.bf16.msra.mxu0 0
        %680 = vmatprep.subr.bf16.mxu0 0
        %681 = vmatpush1.bf16.msra.mxu0 0
        %682 = vmatprep.subr.bf16.mxu0 0
        %683 = vmatpush1.bf16.msra.mxu0 0
        %684 = vmatprep.subr.bf16.mxu0 0
        %685 = vmatpush1.bf16.msra.mxu0 0
        %686 = vmatprep.subr.bf16.mxu0 0
        %687 = vmatpush1.bf16.msra.mxu0 0
        %688 = vmatprep.subr.bf16.mxu0 0
        %689 = vmatpush1.bf16.msra.mxu0 0
        %690 = vmatprep.subr.bf16.mxu0 0
        %691 = vmatpush1.bf16.msra.mxu0 %v663
        %692 = vmatprep.subr.bf16.mxu0 0
        %693 = vmatpush1.bf16.msra.mxu0 %v662
        %694 = vmatprep.subr.bf16.mxu0 0
        %695 = vmatpush2.bf16.msra.mxu0 0
        %696 = vmatprep.subr.bf16.mxu0 0
        %697 = vmatpush2.bf16.msra.mxu0 0
        %698 = vmatprep.subr.bf16.mxu0 0
        %699 = vmatpush2.bf16.msra.mxu0 0
        %700 = vmatprep.subr.bf16.mxu0 0
        %701 = vmatpush2.bf16.msra.mxu0 0
        %702 = vmatprep.subr.bf16.mxu0 0
        %703 = vmatpush2.bf16.msra.mxu0 0
        %704 = vmatprep.subr.bf16.mxu0 0
        %705 = vmatpush2.bf16.msra.mxu0 0
        %706 = vmatprep.subr.bf16.mxu0 0
        %707 = vmatpush2.bf16.msra.mxu0 0
        %708 = vmatprep.subr.bf16.mxu0 0
        %709 = vmatpush2.bf16.msra.mxu0 0
        %710 = vmatprep.mubr.bf16.mxu0 0
        %711 = vmatmul.mubr.bf16.gmra.mxu0 %v667
        %v712 = vpop.f32.mrf.mxu0
        %v713 = vadd.f32 %v624, %v712
        %v714 = vpop.f32.mrf.mxu0
        %v715 = vpop.f32.mrf.mxu0
        %v716 = vadd.f32 %v627, %v715
        %v717 = vpop.f32.mrf.mxu0
        %718 = vmatprep.mubr.bf16.mxu0 0
        %719 = vmatmul.mubr.bf16.gmra.mxu0 %v670
        %v720 = vpop.f32.mrf.mxu0
        %v721 = vadd.f32 %v632, %v720
        %v722 = vpop.f32.mrf.mxu0
        %v723 = vpop.f32.mrf.mxu0
        %v724 = vadd.f32 %v635, %v723
        %v725 = vpop.f32.mrf.mxu0
        %726 = vmatprep.mubr.bf16.mxu0 0
        %727 = vmatmul.mubr.bf16.gmra.mxu0 %v673
        %v728 = vpop.f32.mrf.mxu0
        %v729 = vadd.f32 %v640, %v728
        %v730 = vpop.f32.mrf.mxu0
        %v731 = vpop.f32.mrf.mxu0
        %v732 = vadd.f32 %v643, %v731
        %v733 = vpop.f32.mrf.mxu0
        %734 = vmatprep.mubr.bf16.mxu0 0
        %735 = vmatmul.mubr.bf16.gmra.mxu0 %v676
        %v736 = vpop.f32.mrf.mxu0
        %v737 = vadd.f32 %v648, %v736
        %v738 = vpop.f32.mrf.mxu0
        %v739 = vpop.f32.mrf.mxu0
        %v740 = vadd.f32 %v651, %v739
        %v741 = vpop.f32.mrf.mxu0
        %742 = vdwg.mxu0
        %v743 = vrot.slane %v507, 1
        %v744 = vrot.slane %v508, 1
        %v745 = vrot.slane %v509, 1
        %v746 = vrot.slane %v510, 1
        %v747 = vrot.slane %v511, 1
        %v748 = vrot.slane %v512, 1
        %v749 = vrot.slane %v513, 1
        %v750 = vrot.slane %v514, 1
        %vm751 = vcmp.lt.s32.totalorder %v204, 7
        %v752 = vsel %vm751, %v749, %v750
        %v753 = vsel %vm751, %v748, %v749
        %v754 = vsel %vm751, %v747, %v748
        %v755 = vsel %vm751, %v746, %v747
        %v756 = vsel %vm751, %v745, %v746
        %v757 = vsel %vm751, %v744, %v745
        %v758 = vsel %vm751, %v743, %v744
        %v759 = vsel %vm751, %v750, %v743
        %v760 = vsel %vm260, %v759, 0.0
        %v761 = vsel %vm261, %v758, 0.0
        %v762 = vsel %vm262, %v757, 0.0
        %v763 = vsel %vm263, %v756, 0.0
        %v764 = vsel %vm264, %v755, 0.0
        %v765 = vsel %vm265, %v754, 0.0
        %v766 = vsel %vm266, %v753, 0.0
        %v767 = vsel %vm267, %v752, 0.0
        %v768 = vld [vmem:[%s1 + $0x68] sm:$0xf]
        %v769 = vld [vmem:[%s1 + $0x6c] sm:$0xf]
        %v770 = vld [vmem:[%s1 + $0x70] sm:$0xf]
        %v771 = vld [vmem:[%s1 + $0x74] sm:$0xf]
        %v772 = vpack.c.bf16 %v761, %v760
        %v773 = vpack.c.bf16 %v763, %v762
        %v774 = vpack.c.bf16 %v765, %v764
        %v775 = vpack.c.bf16 %v767, %v766
        %v780 = vunpack.c.l.b16 %v768
        %v781 = vunpack.c.l.b16 %v769
        %v782 = vunpack.c.l.b16 %v770
        %v783 = vunpack.c.l.b16 %v771
        %v784 = vpack.c.b16 %v781, %v780
        %v785 = vpack.c.b16 %v783, %v782
        %v789 = vsel %vm576, %v772, 0
        %v792 = vsel %vm576, %v773, 0
        %v795 = vsel %vm576, %v774, 0
        %v798 = vsel %vm576, %v775, 0
        %800 = vmatprep.subr.bf16.mxu0 0
        %801 = vmatpush1.bf16.msra.mxu0 0
        %802 = vmatprep.subr.bf16.mxu0 0
        %803 = vmatpush1.bf16.msra.mxu0 0
        %804 = vmatprep.subr.bf16.mxu0 0
        %805 = vmatpush1.bf16.msra.mxu0 0
        %806 = vmatprep.subr.bf16.mxu0 0
        %807 = vmatpush1.bf16.msra.mxu0 0
        %808 = vmatprep.subr.bf16.mxu0 0
        %809 = vmatpush1.bf16.msra.mxu0 0
        %810 = vmatprep.subr.bf16.mxu0 0
        %811 = vmatpush1.bf16.msra.mxu0 0
        %812 = vmatprep.subr.bf16.mxu0 0
        %813 = vmatpush1.bf16.msra.mxu0 %v785
        %814 = vmatprep.subr.bf16.mxu0 0
        %815 = vmatpush1.bf16.msra.mxu0 %v784
        %816 = vmatprep.subr.bf16.mxu0 0
        %817 = vmatpush2.bf16.msra.mxu0 0
        %818 = vmatprep.subr.bf16.mxu0 0
        %819 = vmatpush2.bf16.msra.mxu0 0
        %820 = vmatprep.subr.bf16.mxu0 0
        %821 = vmatpush2.bf16.msra.mxu0 0
        %822 = vmatprep.subr.bf16.mxu0 0
        %823 = vmatpush2.bf16.msra.mxu0 0
        %824 = vmatprep.subr.bf16.mxu0 0
        %825 = vmatpush2.bf16.msra.mxu0 0
        %826 = vmatprep.subr.bf16.mxu0 0
        %827 = vmatpush2.bf16.msra.mxu0 0
        %828 = vmatprep.subr.bf16.mxu0 0
        %829 = vmatpush2.bf16.msra.mxu0 0
        %830 = vmatprep.subr.bf16.mxu0 0
        %831 = vmatpush2.bf16.msra.mxu0 0
        %832 = vmatprep.mubr.bf16.mxu0 0
        %833 = vmatmul.mubr.bf16.gmra.mxu0 %v789
        %v834 = vpop.f32.mrf.mxu0
        %v835 = vadd.f32 0.0, %v834
        %v836 = vpop.f32.mrf.mxu0
        %v837 = vpop.f32.mrf.mxu0
        %v838 = vadd.f32 0.0, %v837
        %v839 = vpop.f32.mrf.mxu0
        %840 = vmatprep.mubr.bf16.mxu0 0
        %841 = vmatmul.mubr.bf16.gmra.mxu0 %v792
        %v842 = vpop.f32.mrf.mxu0
        %v843 = vadd.f32 0.0, %v842
        %v844 = vpop.f32.mrf.mxu0
        %v845 = vpop.f32.mrf.mxu0
        %v846 = vadd.f32 0.0, %v845
        %v847 = vpop.f32.mrf.mxu0
        %848 = vmatprep.mubr.bf16.mxu0 0
        %849 = vmatmul.mubr.bf16.gmra.mxu0 %v795
        %v850 = vpop.f32.mrf.mxu0
        %v851 = vadd.f32 0.0, %v850
        %v852 = vpop.f32.mrf.mxu0
        %v853 = vpop.f32.mrf.mxu0
        %v854 = vadd.f32 0.0, %v853
        %v855 = vpop.f32.mrf.mxu0
        %856 = vmatprep.mubr.bf16.mxu0 0
        %857 = vmatmul.mubr.bf16.gmra.mxu0 %v798
        %v858 = vpop.f32.mrf.mxu0
        %v859 = vadd.f32 0.0, %v858
        %v860 = vpop.f32.mrf.mxu0
        %v861 = vpop.f32.mrf.mxu0
        %v862 = vadd.f32 0.0, %v861
        %v863 = vpop.f32.mrf.mxu0
        %864 = vdwg.mxu0
        %v865 = vadd.f32 %v713, %v835
        %v866 = vadd.f32 %v716, %v838
        %v867 = vadd.f32 %v721, %v843
        %v868 = vadd.f32 %v724, %v846
        %v869 = vadd.f32 %v729, %v851
        %v870 = vadd.f32 %v732, %v854
        %v871 = vadd.f32 %v737, %v859
        %v872 = vadd.f32 %v740, %v862
        %v873 = vsel %vm236, %v531, 0.0
        %v874 = vsel %vm237, %v530, 0.0
        %v875 = vsel %vm238, %v529, 0.0
        %v876 = vsel %vm239, %v528, 0.0
        %v877 = vsel %vm240, %v527, 0.0
        %v878 = vsel %vm241, %v526, 0.0
        %v879 = vsel %vm242, %v525, 0.0
        %v880 = vsel %vm243, %v524, 0.0
        %v881 = vld [vmem:[%s1 + $0x78] sm:$0xf]
        %v882 = vld [vmem:[%s1 + $0x7c] sm:$0xf]
        %v883 = vld [vmem:[%s1 + $0x80] sm:$0xf]
        %v884 = vld [vmem:[%s1 + $0x84] sm:$0xf]
        %v885 = vpack.c.bf16 %v874, %v873
        %v886 = vpack.c.bf16 %v876, %v875
        %v887 = vpack.c.bf16 %v878, %v877
        %v888 = vpack.c.bf16 %v880, %v879
        %v893 = vunpack.c.l.b16 %v881
        %v894 = vunpack.c.l.b16 %v882
        %v895 = vunpack.c.l.b16 %v883
        %v896 = vunpack.c.l.b16 %v884
        %v897 = vpack.c.b16 %v894, %v893
        %v898 = vpack.c.b16 %v896, %v895
        %v902 = vsel %vm576, %v885, 0
        %v905 = vsel %vm576, %v886, 0
        %v908 = vsel %vm576, %v887, 0
        %v911 = vsel %vm576, %v888, 0
        %913 = vmatprep.subr.bf16.mxu0 0
        %914 = vmatpush1.bf16.msra.mxu0 0
        %915 = vmatprep.subr.bf16.mxu0 0
        %916 = vmatpush1.bf16.msra.mxu0 0
        %917 = vmatprep.subr.bf16.mxu0 0
        %918 = vmatpush1.bf16.msra.mxu0 0
        %919 = vmatprep.subr.bf16.mxu0 0
        %920 = vmatpush1.bf16.msra.mxu0 0
        %921 = vmatprep.subr.bf16.mxu0 0
        %922 = vmatpush1.bf16.msra.mxu0 0
        %923 = vmatprep.subr.bf16.mxu0 0
        %924 = vmatpush1.bf16.msra.mxu0 0
        %925 = vmatprep.subr.bf16.mxu0 0
        %926 = vmatpush1.bf16.msra.mxu0 %v898
        %927 = vmatprep.subr.bf16.mxu0 0
        %928 = vmatpush1.bf16.msra.mxu0 %v897
        %929 = vmatprep.subr.bf16.mxu0 0
        %930 = vmatpush2.bf16.msra.mxu0 0
        %931 = vmatprep.subr.bf16.mxu0 0
        %932 = vmatpush2.bf16.msra.mxu0 0
        %933 = vmatprep.subr.bf16.mxu0 0
        %934 = vmatpush2.bf16.msra.mxu0 0
        %935 = vmatprep.subr.bf16.mxu0 0
        %936 = vmatpush2.bf16.msra.mxu0 0
        %937 = vmatprep.subr.bf16.mxu0 0
        %938 = vmatpush2.bf16.msra.mxu0 0
        %939 = vmatprep.subr.bf16.mxu0 0
        %940 = vmatpush2.bf16.msra.mxu0 0
        %941 = vmatprep.subr.bf16.mxu0 0
        %942 = vmatpush2.bf16.msra.mxu0 0
        %943 = vmatprep.subr.bf16.mxu0 0
        %944 = vmatpush2.bf16.msra.mxu0 0
        %945 = vmatprep.mubr.bf16.mxu0 0
        %946 = vmatmul.mubr.bf16.gmra.mxu0 %v902
        %v947 = vpop.f32.mrf.mxu0
        %v948 = vadd.f32 0.0, %v947
        %v949 = vpop.f32.mrf.mxu0
        %v950 = vpop.f32.mrf.mxu0
        %v951 = vadd.f32 0.0, %v950
        %v952 = vpop.f32.mrf.mxu0
        %953 = vmatprep.mubr.bf16.mxu0 0
        %954 = vmatmul.mubr.bf16.gmra.mxu0 %v905
        %v955 = vpop.f32.mrf.mxu0
        %v956 = vadd.f32 0.0, %v955
        %v957 = vpop.f32.mrf.mxu0
        %v958 = vpop.f32.mrf.mxu0
        %v959 = vadd.f32 0.0, %v958
        %v960 = vpop.f32.mrf.mxu0
        %961 = vmatprep.mubr.bf16.mxu0 0
        %962 = vmatmul.mubr.bf16.gmra.mxu0 %v908
        %v963 = vpop.f32.mrf.mxu0
        %v964 = vadd.f32 0.0, %v963
        %v965 = vpop.f32.mrf.mxu0
        %v966 = vpop.f32.mrf.mxu0
        %v967 = vadd.f32 0.0, %v966
        %v968 = vpop.f32.mrf.mxu0
        %969 = vmatprep.mubr.bf16.mxu0 0
        %970 = vmatmul.mubr.bf16.gmra.mxu0 %v911
        %v971 = vpop.f32.mrf.mxu0
        %v972 = vadd.f32 0.0, %v971
        %v973 = vpop.f32.mrf.mxu0
        %v974 = vpop.f32.mrf.mxu0
        %v975 = vadd.f32 0.0, %v974
        %v976 = vpop.f32.mrf.mxu0
        %977 = vdwg.mxu0
        %v978 = vadd.f32 %v865, %v948
        %v979 = vadd.f32 %v866, %v951
        %v980 = vadd.f32 %v867, %v956
        %v981 = vadd.f32 %v868, %v959
        %v982 = vadd.f32 %v869, %v964
        %v983 = vadd.f32 %v870, %v967
        %v984 = vadd.f32 %v871, %v972
        %v985 = vadd.f32 %v872, %v975
        %v986 = vld [vmem:[%s1 + $0x88] sm:$0xf]
        %v987 = vld [vmem:[%s1 + $0x8c] sm:$0xf]
        %v988 = vld [vmem:[%s1 + $0x90] sm:$0xf]
        %v989 = vld [vmem:[%s1 + $0x94] sm:$0xf]
        %v990 = vpack.c.bf16 %v508, %v507
        %v991 = vpack.c.bf16 %v510, %v509
        %v992 = vpack.c.bf16 %v512, %v511
        %v993 = vpack.c.bf16 %v514, %v513
        %v998 = vunpack.c.l.b16 %v986
        %v999 = vunpack.c.l.b16 %v987
        %v1000 = vunpack.c.l.b16 %v988
        %v1001 = vunpack.c.l.b16 %v989
        %v1002 = vpack.c.b16 %v999, %v998
        %v1003 = vpack.c.b16 %v1001, %v1000
        %v1007 = vsel %vm576, %v990, 0
        %v1010 = vsel %vm576, %v991, 0
        %v1013 = vsel %vm576, %v992, 0
        %v1016 = vsel %vm576, %v993, 0
        %1018 = vmatprep.subr.bf16.mxu0 0
        %1019 = vmatpush1.bf16.msra.mxu0 0
        %1020 = vmatprep.subr.bf16.mxu0 0
        %1021 = vmatpush1.bf16.msra.mxu0 0
        %1022 = vmatprep.subr.bf16.mxu0 0
        %1023 = vmatpush1.bf16.msra.mxu0 0
        %1024 = vmatprep.subr.bf16.mxu0 0
        %1025 = vmatpush1.bf16.msra.mxu0 0
        %1026 = vmatprep.subr.bf16.mxu0 0
        %1027 = vmatpush1.bf16.msra.mxu0 0
        %1028 = vmatprep.subr.bf16.mxu0 0
        %1029 = vmatpush1.bf16.msra.mxu0 0
        %1030 = vmatprep.subr.bf16.mxu0 0
        %1031 = vmatpush1.bf16.msra.mxu0 %v1003
        %1032 = vmatprep.subr.bf16.mxu0 0
        %1033 = vmatpush1.bf16.msra.mxu0 %v1002
        %1034 = vmatprep.subr.bf16.mxu0 0
        %1035 = vmatpush2.bf16.msra.mxu0 0
        %1036 = vmatprep.subr.bf16.mxu0 0
        %1037 = vmatpush2.bf16.msra.mxu0 0
        %1038 = vmatprep.subr.bf16.mxu0 0
        %1039 = vmatpush2.bf16.msra.mxu0 0
        %1040 = vmatprep.subr.bf16.mxu0 0
        %1041 = vmatpush2.bf16.msra.mxu0 0
        %1042 = vmatprep.subr.bf16.mxu0 0
        %1043 = vmatpush2.bf16.msra.mxu0 0
        %1044 = vmatprep.subr.bf16.mxu0 0
        %1045 = vmatpush2.bf16.msra.mxu0 0
        %1046 = vmatprep.subr.bf16.mxu0 0
        %1047 = vmatpush2.bf16.msra.mxu0 0
        %1048 = vmatprep.subr.bf16.mxu0 0
        %1049 = vmatpush2.bf16.msra.mxu0 0
        %1050 = vmatprep.mubr.bf16.mxu0 0
        %1051 = vmatmul.mubr.bf16.gmra.mxu0 %v1007
        %v1052 = vpop.f32.mrf.mxu0
        %v1053 = vadd.f32 0.0, %v1052
        %v1054 = vpop.f32.mrf.mxu0
        %v1055 = vpop.f32.mrf.mxu0
        %v1056 = vadd.f32 0.0, %v1055
        %v1057 = vpop.f32.mrf.mxu0
        %1058 = vmatprep.mubr.bf16.mxu0 0
        %1059 = vmatmul.mubr.bf16.gmra.mxu0 %v1010
        %v1060 = vpop.f32.mrf.mxu0
        %v1061 = vadd.f32 0.0, %v1060
        %v1062 = vpop.f32.mrf.mxu0
        %v1063 = vpop.f32.mrf.mxu0
        %v1064 = vadd.f32 0.0, %v1063
        %v1065 = vpop.f32.mrf.mxu0
        %1066 = vmatprep.mubr.bf16.mxu0 0
        %1067 = vmatmul.mubr.bf16.gmra.mxu0 %v1013
        %v1068 = vpop.f32.mrf.mxu0
        %v1069 = vadd.f32 0.0, %v1068
        %v1070 = vpop.f32.mrf.mxu0
        %v1071 = vpop.f32.mrf.mxu0
        %v1072 = vadd.f32 0.0, %v1071
        %v1073 = vpop.f32.mrf.mxu0
        %1074 = vmatprep.mubr.bf16.mxu0 0
        %1075 = vmatmul.mubr.bf16.gmra.mxu0 %v1016
        %v1076 = vpop.f32.mrf.mxu0
        %v1077 = vadd.f32 0.0, %v1076
        %v1078 = vpop.f32.mrf.mxu0
        %v1079 = vpop.f32.mrf.mxu0
        %v1080 = vadd.f32 0.0, %v1079
        %v1081 = vpop.f32.mrf.mxu0
        %1082 = vdwg.mxu0
        %v1083 = vadd.f32 %v978, %v1053
        %v1084 = vadd.f32 %v979, %v1056
        %v1085 = vadd.f32 %v980, %v1061
        %v1086 = vadd.f32 %v981, %v1064
        %v1087 = vadd.f32 %v982, %v1069
        %v1088 = vadd.f32 %v983, %v1072
        %v1089 = vadd.f32 %v984, %v1077
        %v1090 = vadd.f32 %v985, %v1080
        %v1091 = vsel %vm252, %v758, 0.0
        %v1092 = vsel %vm253, %v757, 0.0
        %v1093 = vsel %vm254, %v756, 0.0
        %v1094 = vsel %vm255, %v755, 0.0
        %v1095 = vsel %vm256, %v754, 0.0
        %v1096 = vsel %vm257, %v753, 0.0
        %v1097 = vsel %vm258, %v752, 0.0
        %v1098 = vsel %vm259, %v759, 0.0
        %v1099 = vld [vmem:[%s1 + $0x98] sm:$0xf]
        %v1100 = vld [vmem:[%s1 + $0x9c] sm:$0xf]
        %v1101 = vld [vmem:[%s1 + $0xa0] sm:$0xf]
        %v1102 = vld [vmem:[%s1 + $0xa4] sm:$0xf]
        %v1103 = vpack.c.bf16 %v1092, %v1091
        %v1104 = vpack.c.bf16 %v1094, %v1093
        %v1105 = vpack.c.bf16 %v1096, %v1095
        %v1106 = vpack.c.bf16 %v1098, %v1097
        %v1111 = vunpack.c.l.b16 %v1099
        %v1112 = vunpack.c.l.b16 %v1100
        %v1113 = vunpack.c.l.b16 %v1101
        %v1114 = vunpack.c.l.b16 %v1102
        %v1115 = vpack.c.b16 %v1112, %v1111
        %v1116 = vpack.c.b16 %v1114, %v1113
        %v1120 = vsel %vm576, %v1103, 0
        %v1123 = vsel %vm576, %v1104, 0
        %v1126 = vsel %vm576, %v1105, 0
        %v1129 = vsel %vm576, %v1106, 0
        %1131 = vmatprep.subr.bf16.mxu0 0
        %1132 = vmatpush1.bf16.msra.mxu0 0
        %1133 = vmatprep.subr.bf16.mxu0 0
        %1134 = vmatpush1.bf16.msra.mxu0 0
        %1135 = vmatprep.subr.bf16.mxu0 0
        %1136 = vmatpush1.bf16.msra.mxu0 0
        %1137 = vmatprep.subr.bf16.mxu0 0
        %1138 = vmatpush1.bf16.msra.mxu0 0
        %1139 = vmatprep.subr.bf16.mxu0 0
        %1140 = vmatpush1.bf16.msra.mxu0 0
        %1141 = vmatprep.subr.bf16.mxu0 0
        %1142 = vmatpush1.bf16.msra.mxu0 0
        %1143 = vmatprep.subr.bf16.mxu0 0
        %1144 = vmatpush1.bf16.msra.mxu0 %v1116
        %1145 = vmatprep.subr.bf16.mxu0 0
        %1146 = vmatpush1.bf16.msra.mxu0 %v1115
        %1147 = vmatprep.subr.bf16.mxu0 0
        %1148 = vmatpush2.bf16.msra.mxu0 0
        %1149 = vmatprep.subr.bf16.mxu0 0
        %1150 = vmatpush2.bf16.msra.mxu0 0
        %1151 = vmatprep.subr.bf16.mxu0 0
        %1152 = vmatpush2.bf16.msra.mxu0 0
        %1153 = vmatprep.subr.bf16.mxu0 0
        %1154 = vmatpush2.bf16.msra.mxu0 0
        %1155 = vmatprep.subr.bf16.mxu0 0
        %1156 = vmatpush2.bf16.msra.mxu0 0
        %1157 = vmatprep.subr.bf16.mxu0 0
        %1158 = vmatpush2.bf16.msra.mxu0 0
        %1159 = vmatprep.subr.bf16.mxu0 0
        %1160 = vmatpush2.bf16.msra.mxu0 0
        %1161 = vmatprep.subr.bf16.mxu0 0
        %1162 = vmatpush2.bf16.msra.mxu0 0
        %1163 = vmatprep.mubr.bf16.mxu0 0
        %1164 = vmatmul.mubr.bf16.gmra.mxu0 %v1120
        %v1165 = vpop.f32.mrf.mxu0
        %v1166 = vadd.f32 0.0, %v1165
        %v1167 = vpop.f32.mrf.mxu0
        %v1168 = vpop.f32.mrf.mxu0
        %v1169 = vadd.f32 0.0, %v1168
        %v1170 = vpop.f32.mrf.mxu0
        %1171 = vmatprep.mubr.bf16.mxu0 0
        %1172 = vmatmul.mubr.bf16.gmra.mxu0 %v1123
        %v1173 = vpop.f32.mrf.mxu0
        %v1174 = vadd.f32 0.0, %v1173
        %v1175 = vpop.f32.mrf.mxu0
        %v1176 = vpop.f32.mrf.mxu0
        %v1177 = vadd.f32 0.0, %v1176
        %v1178 = vpop.f32.mrf.mxu0
        %1179 = vmatprep.mubr.bf16.mxu0 0
        %1180 = vmatmul.mubr.bf16.gmra.mxu0 %v1126
        %v1181 = vpop.f32.mrf.mxu0
        %v1182 = vadd.f32 0.0, %v1181
        %v1183 = vpop.f32.mrf.mxu0
        %v1184 = vpop.f32.mrf.mxu0
        %v1185 = vadd.f32 0.0, %v1184
        %v1186 = vpop.f32.mrf.mxu0
        %1187 = vmatprep.mubr.bf16.mxu0 0
        %1188 = vmatmul.mubr.bf16.gmra.mxu0 %v1129
        %v1189 = vpop.f32.mrf.mxu0
        %v1190 = vadd.f32 0.0, %v1189
        %v1191 = vpop.f32.mrf.mxu0
        %v1192 = vpop.f32.mrf.mxu0
        %v1193 = vadd.f32 0.0, %v1192
        %v1194 = vpop.f32.mrf.mxu0
        %1195 = vdwg.mxu0
        %v1196 = vadd.f32 %v1083, %v1166
        %v1197 = vadd.f32 %v1084, %v1169
        %v1198 = vadd.f32 %v1085, %v1174
        %v1199 = vadd.f32 %v1086, %v1177
        %v1200 = vadd.f32 %v1087, %v1182
        %v1201 = vadd.f32 %v1088, %v1185
        %v1202 = vadd.f32 %v1089, %v1190
        %v1203 = vadd.f32 %v1090, %v1193
        %v1204 = vsel %vm276, %v530, 0.0
        %v1205 = vsel %vm277, %v529, 0.0
        %v1206 = vsel %vm278, %v528, 0.0
        %v1207 = vsel %vm279, %v527, 0.0
        %v1208 = vsel %vm280, %v526, 0.0
        %v1209 = vsel %vm281, %v525, 0.0
        %v1210 = vsel %vm282, %v524, 0.0
        %v1211 = vsel %vm283, %v531, 0.0
        %v1212 = vld [vmem:[%s1 + $0xa8] sm:$0xf]
        %v1213 = vld [vmem:[%s1 + $0xac] sm:$0xf]
        %v1214 = vld [vmem:[%s1 + $0xb0] sm:$0xf]
        %v1215 = vld [vmem:[%s1 + $0xb4] sm:$0xf]
        %v1216 = vpack.c.bf16 %v1205, %v1204
        %v1217 = vpack.c.bf16 %v1207, %v1206
        %v1218 = vpack.c.bf16 %v1209, %v1208
        %v1219 = vpack.c.bf16 %v1211, %v1210
        %v1224 = vunpack.c.l.b16 %v1212
        %v1225 = vunpack.c.l.b16 %v1213
        %v1226 = vunpack.c.l.b16 %v1214
        %v1227 = vunpack.c.l.b16 %v1215
        %v1228 = vpack.c.b16 %v1225, %v1224
        %v1229 = vpack.c.b16 %v1227, %v1226
        %v1233 = vsel %vm576, %v1216, 0
        %v1236 = vsel %vm576, %v1217, 0
        %v1239 = vsel %vm576, %v1218, 0
        %v1242 = vsel %vm576, %v1219, 0
        %1244 = vmatprep.subr.bf16.mxu0 0
        %1245 = vmatpush1.bf16.msra.mxu0 0
        %1246 = vmatprep.subr.bf16.mxu0 0
        %1247 = vmatpush1.bf16.msra.mxu0 0
        %1248 = vmatprep.subr.bf16.mxu0 0
        %1249 = vmatpush1.bf16.msra.mxu0 0
        %1250 = vmatprep.subr.bf16.mxu0 0
        %1251 = vmatpush1.bf16.msra.mxu0 0
        %1252 = vmatprep.subr.bf16.mxu0 0
        %1253 = vmatpush1.bf16.msra.mxu0 0
        %1254 = vmatprep.subr.bf16.mxu0 0
        %1255 = vmatpush1.bf16.msra.mxu0 0
        %1256 = vmatprep.subr.bf16.mxu0 0
        %1257 = vmatpush1.bf16.msra.mxu0 %v1229
        %1258 = vmatprep.subr.bf16.mxu0 0
        %1259 = vmatpush1.bf16.msra.mxu0 %v1228
        %1260 = vmatprep.subr.bf16.mxu0 0
        %1261 = vmatpush2.bf16.msra.mxu0 0
        %1262 = vmatprep.subr.bf16.mxu0 0
        %1263 = vmatpush2.bf16.msra.mxu0 0
        %1264 = vmatprep.subr.bf16.mxu0 0
        %1265 = vmatpush2.bf16.msra.mxu0 0
        %1266 = vmatprep.subr.bf16.mxu0 0
        %1267 = vmatpush2.bf16.msra.mxu0 0
        %1268 = vmatprep.subr.bf16.mxu0 0
        %1269 = vmatpush2.bf16.msra.mxu0 0
        %1270 = vmatprep.subr.bf16.mxu0 0
        %1271 = vmatpush2.bf16.msra.mxu0 0
        %1272 = vmatprep.subr.bf16.mxu0 0
        %1273 = vmatpush2.bf16.msra.mxu0 0
        %1274 = vmatprep.subr.bf16.mxu0 0
        %1275 = vmatpush2.bf16.msra.mxu0 0
        %1276 = vmatprep.mubr.bf16.mxu0 0
        %1277 = vmatmul.mubr.bf16.gmra.mxu0 %v1233
        %v1278 = vpop.f32.mrf.mxu0
        %v1279 = vadd.f32 0.0, %v1278
        %v1280 = vpop.f32.mrf.mxu0
        %v1281 = vpop.f32.mrf.mxu0
        %v1282 = vadd.f32 0.0, %v1281
        %v1283 = vpop.f32.mrf.mxu0
        %1284 = vmatprep.mubr.bf16.mxu0 0
        %1285 = vmatmul.mubr.bf16.gmra.mxu0 %v1236
        %v1286 = vpop.f32.mrf.mxu0
        %v1287 = vadd.f32 0.0, %v1286
        %v1288 = vpop.f32.mrf.mxu0
        %v1289 = vpop.f32.mrf.mxu0
        %v1290 = vadd.f32 0.0, %v1289
        %v1291 = vpop.f32.mrf.mxu0
        %1292 = vmatprep.mubr.bf16.mxu0 0
        %1293 = vmatmul.mubr.bf16.gmra.mxu0 %v1239
        %v1294 = vpop.f32.mrf.mxu0
        %v1295 = vadd.f32 0.0, %v1294
        %v1296 = vpop.f32.mrf.mxu0
        %v1297 = vpop.f32.mrf.mxu0
        %v1298 = vadd.f32 0.0, %v1297
        %v1299 = vpop.f32.mrf.mxu0
        %1300 = vmatprep.mubr.bf16.mxu0 0
        %1301 = vmatmul.mubr.bf16.gmra.mxu0 %v1242
        %v1302 = vpop.f32.mrf.mxu0
        %v1303 = vadd.f32 0.0, %v1302
        %v1304 = vpop.f32.mrf.mxu0
        %v1305 = vpop.f32.mrf.mxu0
        %v1306 = vadd.f32 0.0, %v1305
        %v1307 = vpop.f32.mrf.mxu0
        %1308 = vdwg.mxu0
        %v1309 = vadd.f32 %v1196, %v1279
        %v1310 = vadd.f32 %v1197, %v1282
        %v1311 = vadd.f32 %v1198, %v1287
        %v1312 = vadd.f32 %v1199, %v1290
        %v1313 = vadd.f32 %v1200, %v1295
        %v1314 = vadd.f32 %v1201, %v1298
        %v1315 = vadd.f32 %v1202, %v1303
        %v1316 = vadd.f32 %v1203, %v1306
        %v1317 = vsel %vm268, %v508, 0.0
        %v1318 = vsel %vm269, %v509, 0.0
        %v1319 = vsel %vm270, %v510, 0.0
        %v1320 = vsel %vm271, %v511, 0.0
        %v1321 = vsel %vm272, %v512, 0.0
        %v1322 = vsel %vm273, %v513, 0.0
        %v1323 = vsel %vm274, %v514, 0.0
        %v1324 = vsel %vm275, %v507, 0.0
        %v1325 = vld [vmem:[%s1 + $0xb8] sm:$0xf]
        %v1326 = vld [vmem:[%s1 + $0xbc] sm:$0xf]
        %v1327 = vld [vmem:[%s1 + $0xc0] sm:$0xf]
        %v1328 = vld [vmem:[%s1 + $0xc4] sm:$0xf]
        %v1329 = vpack.c.bf16 %v1318, %v1317
        %v1330 = vpack.c.bf16 %v1320, %v1319
        %v1331 = vpack.c.bf16 %v1322, %v1321
        %v1332 = vpack.c.bf16 %v1324, %v1323
        %v1337 = vunpack.c.l.b16 %v1325
        %v1338 = vunpack.c.l.b16 %v1326
        %v1339 = vunpack.c.l.b16 %v1327
        %v1340 = vunpack.c.l.b16 %v1328
        %v1341 = vpack.c.b16 %v1338, %v1337
        %v1342 = vpack.c.b16 %v1340, %v1339
        %v1346 = vsel %vm576, %v1329, 0
        %v1349 = vsel %vm576, %v1330, 0
        %v1352 = vsel %vm576, %v1331, 0
        %v1355 = vsel %vm576, %v1332, 0
        %1357 = vmatprep.subr.bf16.mxu0 0
        %1358 = vmatpush1.bf16.msra.mxu0 0
        %1359 = vmatprep.subr.bf16.mxu0 0
        %1360 = vmatpush1.bf16.msra.mxu0 0
        %1361 = vmatprep.subr.bf16.mxu0 0
        %1362 = vmatpush1.bf16.msra.mxu0 0
        %1363 = vmatprep.subr.bf16.mxu0 0
        %1364 = vmatpush1.bf16.msra.mxu0 0
        %1365 = vmatprep.subr.bf16.mxu0 0
        %1366 = vmatpush1.bf16.msra.mxu0 0
        %1367 = vmatprep.subr.bf16.mxu0 0
        %1368 = vmatpush1.bf16.msra.mxu0 0
        %1369 = vmatprep.subr.bf16.mxu0 0
        %1370 = vmatpush1.bf16.msra.mxu0 %v1342
        %1371 = vmatprep.subr.bf16.mxu0 0
        %1372 = vmatpush1.bf16.msra.mxu0 %v1341
        %1373 = vmatprep.subr.bf16.mxu0 0
        %1374 = vmatpush2.bf16.msra.mxu0 0
        %1375 = vmatprep.subr.bf16.mxu0 0
        %1376 = vmatpush2.bf16.msra.mxu0 0
        %1377 = vmatprep.subr.bf16.mxu0 0
        %1378 = vmatpush2.bf16.msra.mxu0 0
        %1379 = vmatprep.subr.bf16.mxu0 0
        %1380 = vmatpush2.bf16.msra.mxu0 0
        %1381 = vmatprep.subr.bf16.mxu0 0
        %1382 = vmatpush2.bf16.msra.mxu0 0
        %1383 = vmatprep.subr.bf16.mxu0 0
        %1384 = vmatpush2.bf16.msra.mxu0 0
        %1385 = vmatprep.subr.bf16.mxu0 0
        %1386 = vmatpush2.bf16.msra.mxu0 0
        %1387 = vmatprep.subr.bf16.mxu0 0
        %1388 = vmatpush2.bf16.msra.mxu0 0
        %1389 = vmatprep.mubr.bf16.mxu0 0
        %1390 = vmatmul.mubr.bf16.gmra.mxu0 %v1346
        %v1391 = vpop.f32.mrf.mxu0
        %v1392 = vadd.f32 0.0, %v1391
        %v1393 = vpop.f32.mrf.mxu0
        %v1394 = vpop.f32.mrf.mxu0
        %v1395 = vadd.f32 0.0, %v1394
        %v1396 = vpop.f32.mrf.mxu0
        %1397 = vmatprep.mubr.bf16.mxu0 0
        %1398 = vmatmul.mubr.bf16.gmra.mxu0 %v1349
        %v1399 = vpop.f32.mrf.mxu0
        %v1400 = vadd.f32 0.0, %v1399
        %v1401 = vpop.f32.mrf.mxu0
        %v1402 = vpop.f32.mrf.mxu0
        %v1403 = vadd.f32 0.0, %v1402
        %v1404 = vpop.f32.mrf.mxu0
        %1405 = vmatprep.mubr.bf16.mxu0 0
        %1406 = vmatmul.mubr.bf16.gmra.mxu0 %v1352
        %v1407 = vpop.f32.mrf.mxu0
        %v1408 = vadd.f32 0.0, %v1407
        %v1409 = vpop.f32.mrf.mxu0
        %v1410 = vpop.f32.mrf.mxu0
        %v1411 = vadd.f32 0.0, %v1410
        %v1412 = vpop.f32.mrf.mxu0
        %1413 = vmatprep.mubr.bf16.mxu0 0
        %1414 = vmatmul.mubr.bf16.gmra.mxu0 %v1355
        %v1415 = vpop.f32.mrf.mxu0
        %v1416 = vadd.f32 0.0, %v1415
        %v1417 = vpop.f32.mrf.mxu0
        %v1418 = vpop.f32.mrf.mxu0
        %v1419 = vadd.f32 0.0, %v1418
        %v1420 = vpop.f32.mrf.mxu0
        %1421 = vdwg.mxu0
        %v1422 = vadd.f32 %v1309, %v1392
        %v1423 = vadd.f32 %v1310, %v1395
        %v1424 = vadd.f32 %v1311, %v1400
        %v1425 = vadd.f32 %v1312, %v1403
        %v1426 = vadd.f32 %v1313, %v1408
        %v1427 = vadd.f32 %v1314, %v1411
        %v1428 = vadd.f32 %v1315, %v1416
        %v1429 = vadd.f32 %v1316, %v1419
        %v1430 = vsel %vm284, %v757, 0.0
        %v1431 = vsel %vm285, %v756, 0.0
        %v1432 = vsel %vm286, %v755, 0.0
        %v1433 = vsel %vm287, %v754, 0.0
        %v1434 = vsel %vm288, %v753, 0.0
        %v1435 = vsel %vm289, %v752, 0.0
        %v1436 = vsel %vm290, %v759, 0.0
        %v1437 = vsel %vm291, %v758, 0.0
        %v1438 = vld [vmem:[%s1 + $0xc8] sm:$0xf]
        %v1439 = vld [vmem:[%s1 + $0xcc] sm:$0xf]
        %v1440 = vld [vmem:[%s1 + $0xd0] sm:$0xf]
        %v1441 = vld [vmem:[%s1 + $0xd4] sm:$0xf]
        %v1442 = vpack.c.bf16 %v1431, %v1430
        %v1443 = vpack.c.bf16 %v1433, %v1432
        %v1444 = vpack.c.bf16 %v1435, %v1434
        %v1445 = vpack.c.bf16 %v1437, %v1436
        %v1450 = vunpack.c.l.b16 %v1438
        %v1451 = vunpack.c.l.b16 %v1439
        %v1452 = vunpack.c.l.b16 %v1440
        %v1453 = vunpack.c.l.b16 %v1441
        %v1454 = vpack.c.b16 %v1451, %v1450
        %v1455 = vpack.c.b16 %v1453, %v1452
        %v1459 = vsel %vm576, %v1442, 0
        %v1462 = vsel %vm576, %v1443, 0
        %v1465 = vsel %vm576, %v1444, 0
        %v1468 = vsel %vm576, %v1445, 0
        %1470 = vmatprep.subr.bf16.mxu0 0
        %1471 = vmatpush1.bf16.msra.mxu0 0
        %1472 = vmatprep.subr.bf16.mxu0 0
        %1473 = vmatpush1.bf16.msra.mxu0 0
        %1474 = vmatprep.subr.bf16.mxu0 0
        %1475 = vmatpush1.bf16.msra.mxu0 0
        %1476 = vmatprep.subr.bf16.mxu0 0
        %1477 = vmatpush1.bf16.msra.mxu0 0
        %1478 = vmatprep.subr.bf16.mxu0 0
        %1479 = vmatpush1.bf16.msra.mxu0 0
        %1480 = vmatprep.subr.bf16.mxu0 0
        %1481 = vmatpush1.bf16.msra.mxu0 0
        %1482 = vmatprep.subr.bf16.mxu0 0
        %1483 = vmatpush1.bf16.msra.mxu0 %v1455
        %1484 = vmatprep.subr.bf16.mxu0 0
        %1485 = vmatpush1.bf16.msra.mxu0 %v1454
        %1486 = vmatprep.subr.bf16.mxu0 0
        %1487 = vmatpush2.bf16.msra.mxu0 0
        %1488 = vmatprep.subr.bf16.mxu0 0
        %1489 = vmatpush2.bf16.msra.mxu0 0
        %1490 = vmatprep.subr.bf16.mxu0 0
        %1491 = vmatpush2.bf16.msra.mxu0 0
        %1492 = vmatprep.subr.bf16.mxu0 0
        %1493 = vmatpush2.bf16.msra.mxu0 0
        %1494 = vmatprep.subr.bf16.mxu0 0
        %1495 = vmatpush2.bf16.msra.mxu0 0
        %1496 = vmatprep.subr.bf16.mxu0 0
        %1497 = vmatpush2.bf16.msra.mxu0 0
        %1498 = vmatprep.subr.bf16.mxu0 0
        %1499 = vmatpush2.bf16.msra.mxu0 0
        %1500 = vmatprep.subr.bf16.mxu0 0
        %1501 = vmatpush2.bf16.msra.mxu0 0
        %1502 = vmatprep.mubr.bf16.mxu0 0
        %1503 = vmatmul.mubr.bf16.gmra.mxu0 %v1459
        %v1504 = vpop.f32.mrf.mxu0
        %v1505 = vadd.f32 0.0, %v1504
        %v1506 = vpop.f32.mrf.mxu0
        %v1507 = vpop.f32.mrf.mxu0
        %v1508 = vadd.f32 0.0, %v1507
        %v1509 = vpop.f32.mrf.mxu0
        %1510 = vmatprep.mubr.bf16.mxu0 0
        %1511 = vmatmul.mubr.bf16.gmra.mxu0 %v1462
        %v1512 = vpop.f32.mrf.mxu0
        %v1513 = vadd.f32 0.0, %v1512
        %v1514 = vpop.f32.mrf.mxu0
        %v1515 = vpop.f32.mrf.mxu0
        %v1516 = vadd.f32 0.0, %v1515
        %v1517 = vpop.f32.mrf.mxu0
        %1518 = vmatprep.mubr.bf16.mxu0 0
        %1519 = vmatmul.mubr.bf16.gmra.mxu0 %v1465
        %v1520 = vpop.f32.mrf.mxu0
        %v1521 = vadd.f32 0.0, %v1520
        %v1522 = vpop.f32.mrf.mxu0
        %v1523 = vpop.f32.mrf.mxu0
        %v1524 = vadd.f32 0.0, %v1523
        %v1525 = vpop.f32.mrf.mxu0
        %1526 = vmatprep.mubr.bf16.mxu0 0
        %1527 = vmatmul.mubr.bf16.gmra.mxu0 %v1468
        %v1528 = vpop.f32.mrf.mxu0
        %v1529 = vadd.f32 0.0, %v1528
        %v1530 = vpop.f32.mrf.mxu0
        %v1531 = vpop.f32.mrf.mxu0
        %v1532 = vadd.f32 0.0, %v1531
        %v1533 = vpop.f32.mrf.mxu0
        %1534 = vdwg.mxu0
        %v1535 = vadd.f32 %v1422, %v1505
        %v1536 = vadd.f32 %v1423, %v1508
        %v1537 = vadd.f32 %v1424, %v1513
        %v1538 = vadd.f32 %v1425, %v1516
        %v1539 = vadd.f32 %v1426, %v1521
        %v1540 = vadd.f32 %v1427, %v1524
        %v1541 = vadd.f32 %v1428, %v1529
        %v1542 = vadd.f32 %v1429, %v1532
        %v1543 = vld [vmem:[%s3 + $0x18] sm:$0x1]
        %v1544 = vlaneseq
        %v1545 = vshrl.u32 %v1544, 7
        %v1546 = vsub.s32 0, %v1545
        %v1547 = vrot.slane %v1543, %v1546
        %v1548 = vadd.f32 %v1535, %v1547
        %v1549 = vadd.f32 %v1536, %v1547
        %v1550 = vadd.f32 %v1537, %v1547
        %v1551 = vadd.f32 %v1538, %v1547
        %v1552 = vadd.f32 %v1539, %v1547
        %v1553 = vadd.f32 %v1540, %v1547
        %v1554 = vadd.f32 %v1541, %v1547
        %v1555 = vadd.f32 %v1542, %v1547
        %vm1556 = vcmp.ge.f32.partialorder %v1548, 0.0
        %vm1557 = vcmp.ge.f32.partialorder %v1549, 0.0
        %vm1558 = vcmp.ge.f32.partialorder %v1550, 0.0
        %vm1559 = vcmp.ge.f32.partialorder %v1551, 0.0
        %vm1560 = vcmp.ge.f32.partialorder %v1552, 0.0
        %vm1561 = vcmp.ge.f32.partialorder %v1553, 0.0
        %vm1562 = vcmp.ge.f32.partialorder %v1554, 0.0
        %vm1563 = vcmp.ge.f32.partialorder %v1555, 0.0
        %v1564 = vmul.f32 %v1548, 0.1
        %v1565 = vmul.f32 %v1549, 0.1
        %v1566 = vmul.f32 %v1550, 0.1
        %v1567 = vmul.f32 %v1551, 0.1
        %v1568 = vmul.f32 %v1552, 0.1
        %v1569 = vmul.f32 %v1553, 0.1
        %v1570 = vmul.f32 %v1554, 0.1
        %v1571 = vmul.f32 %v1555, 0.1
        %v1572 = vsel %vm1556, %v1548, %v1564
        %v1573 = vsel %vm1557, %v1549, %v1565
        %v1574 = vsel %vm1558, %v1550, %v1566
        %v1575 = vsel %vm1559, %v1551, %v1567
        %v1576 = vsel %vm1560, %v1552, %v1568
        %v1577 = vsel %vm1561, %v1553, %v1569
        %v1578 = vsel %vm1562, %v1554, %v1570
        %v1579 = vsel %vm1563, %v1555, %v1571
        %v1580 = vrot.slane %v1572, 7
        %v1581 = vrot.slane %v1573, 7
        %v1582 = vrot.slane %v1574, 7
        %v1583 = vrot.slane %v1575, 7
        %v1584 = vrot.slane %v1576, 7
        %v1585 = vrot.slane %v1577, 7
        %v1586 = vrot.slane %v1578, 7
        %v1587 = vrot.slane %v1579, 7
        %v1588 = vsel %vm523, %v1586, %v1587
        %v1589 = vsel %vm523, %v1585, %v1586
        %v1590 = vsel %vm523, %v1584, %v1585
        %v1591 = vsel %vm523, %v1583, %v1584
        %v1592 = vsel %vm523, %v1582, %v1583
        %v1593 = vsel %vm523, %v1581, %v1582
        %v1594 = vsel %vm523, %v1580, %v1581
        %v1595 = vsel %vm523, %v1587, %v1580
        %v1596 = vsel %vm244, %v1588, 0.0
        %v1597 = vsel %vm245, %v1595, 0.0
        %v1598 = vsel %vm246, %v1594, 0.0
        %v1599 = vsel %vm247, %v1593, 0.0
        %v1600 = vsel %vm248, %v1592, 0.0
        %v1601 = vsel %vm249, %v1591, 0.0
        %v1602 = vsel %vm250, %v1590, 0.0
        %v1603 = vsel %vm251, %v1589, 0.0
        %v1604 = vld [vmem:[%s1 + $0xd8] sm:$0xf]
        %v1605 = vld [vmem:[%s1 + $0xdc] sm:$0xf]
        %v1606 = vld [vmem:[%s1 + $0xe0] sm:$0xf]
        %v1607 = vld [vmem:[%s1 + $0xe4] sm:$0xf]
        %v1608 = vpack.c.bf16 %v1597, %v1596
        %v1609 = vpack.c.bf16 %v1599, %v1598
        %v1610 = vpack.c.bf16 %v1601, %v1600
        %v1611 = vpack.c.bf16 %v1603, %v1602
        %v1612 = vsel %vm228, %v1579, 0.0
        %v1613 = vsel %vm229, %v1572, 0.0
        %v1614 = vsel %vm230, %v1573, 0.0
        %v1615 = vsel %vm231, %v1574, 0.0
        %v1616 = vsel %vm232, %v1575, 0.0
        %v1617 = vsel %vm233, %v1576, 0.0
        %v1618 = vsel %vm234, %v1577, 0.0
        %v1619 = vsel %vm235, %v1578, 0.0
        %v1620 = vld [vmem:[%s1 + $0xe8] sm:$0xf]
        %v1621 = vld [vmem:[%s1 + $0xec] sm:$0xf]
        %v1622 = vld [vmem:[%s1 + $0xf0] sm:$0xf]
        %v1623 = vld [vmem:[%s1 + $0xf4] sm:$0xf]
        %v1624 = vpack.c.bf16 %v1613, %v1612
        %v1625 = vpack.c.bf16 %v1615, %v1614
        %v1626 = vpack.c.bf16 %v1617, %v1616
        %v1627 = vpack.c.bf16 %v1619, %v1618
        %v1632 = vunpack.c.l.b16 %v1620
        %v1633 = vunpack.c.l.b16 %v1621
        %v1634 = vunpack.c.l.b16 %v1622
        %v1635 = vunpack.c.l.b16 %v1623
        %v1636 = vpack.c.b16 %v1633, %v1632
        %v1637 = vpack.c.b16 %v1635, %v1634
        %v1641 = vsel %vm576, %v1624, 0
        %v1644 = vsel %vm576, %v1625, 0
        %v1647 = vsel %vm576, %v1626, 0
        %v1650 = vsel %vm576, %v1627, 0
        %1652 = vmatprep.subr.bf16.mxu0 0
        %1653 = vmatpush1.bf16.msra.mxu0 0
        %1654 = vmatprep.subr.bf16.mxu0 0
        %1655 = vmatpush1.bf16.msra.mxu0 0
        %1656 = vmatprep.subr.bf16.mxu0 0
        %1657 = vmatpush1.bf16.msra.mxu0 0
        %1658 = vmatprep.subr.bf16.mxu0 0
        %1659 = vmatpush1.bf16.msra.mxu0 0
        %1660 = vmatprep.subr.bf16.mxu0 0
        %1661 = vmatpush1.bf16.msra.mxu0 0
        %1662 = vmatprep.subr.bf16.mxu0 0
        %1663 = vmatpush1.bf16.msra.mxu0 0
        %1664 = vmatprep.subr.bf16.mxu0 0
        %1665 = vmatpush1.bf16.msra.mxu0 %v1637
        %1666 = vmatprep.subr.bf16.mxu0 0
        %1667 = vmatpush1.bf16.msra.mxu0 %v1636
        %1668 = vmatprep.subr.bf16.mxu0 0
        %1669 = vmatpush2.bf16.msra.mxu0 0
        %1670 = vmatprep.subr.bf16.mxu0 0
        %1671 = vmatpush2.bf16.msra.mxu0 0
        %1672 = vmatprep.subr.bf16.mxu0 0
        %1673 = vmatpush2.bf16.msra.mxu0 0
        %1674 = vmatprep.subr.bf16.mxu0 0
        %1675 = vmatpush2.bf16.msra.mxu0 0
        %1676 = vmatprep.subr.bf16.mxu0 0
        %1677 = vmatpush2.bf16.msra.mxu0 0
        %1678 = vmatprep.subr.bf16.mxu0 0
        %1679 = vmatpush2.bf16.msra.mxu0 0
        %1680 = vmatprep.subr.bf16.mxu0 0
        %1681 = vmatpush2.bf16.msra.mxu0 0
        %1682 = vmatprep.subr.bf16.mxu0 0
        %1683 = vmatpush2.bf16.msra.mxu0 0
        %1684 = vmatprep.mubr.bf16.mxu0 0
        %1685 = vmatmul.mubr.bf16.gmra.mxu0 %v1641
        %v1686 = vpop.f32.mrf.mxu0
        %v1687 = vadd.f32 0.0, %v1686
        %v1688 = vpop.f32.mrf.mxu0
        %v1689 = vpop.f32.mrf.mxu0
        %v1690 = vadd.f32 0.0, %v1689
        %v1691 = vpop.f32.mrf.mxu0
        %1692 = vmatprep.mubr.bf16.mxu0 0
        %1693 = vmatmul.mubr.bf16.gmra.mxu0 %v1644
        %v1694 = vpop.f32.mrf.mxu0
        %v1695 = vadd.f32 0.0, %v1694
        %v1696 = vpop.f32.mrf.mxu0
        %v1697 = vpop.f32.mrf.mxu0
        %v1698 = vadd.f32 0.0, %v1697
        %v1699 = vpop.f32.mrf.mxu0
        %1700 = vmatprep.mubr.bf16.mxu0 0
        %1701 = vmatmul.mubr.bf16.gmra.mxu0 %v1647
        %v1702 = vpop.f32.mrf.mxu0
        %v1703 = vadd.f32 0.0, %v1702
        %v1704 = vpop.f32.mrf.mxu0
        %v1705 = vpop.f32.mrf.mxu0
        %v1706 = vadd.f32 0.0, %v1705
        %v1707 = vpop.f32.mrf.mxu0
        %1708 = vmatprep.mubr.bf16.mxu0 0
        %1709 = vmatmul.mubr.bf16.gmra.mxu0 %v1650
        %v1710 = vpop.f32.mrf.mxu0
        %v1711 = vadd.f32 0.0, %v1710
        %v1712 = vpop.f32.mrf.mxu0
        %v1713 = vpop.f32.mrf.mxu0
        %v1714 = vadd.f32 0.0, %v1713
        %v1715 = vpop.f32.mrf.mxu0
        %1716 = vdwg.mxu0
        %v1721 = vunpack.c.l.b16 %v1604
        %v1722 = vunpack.c.l.b16 %v1605
        %v1723 = vunpack.c.l.b16 %v1606
        %v1724 = vunpack.c.l.b16 %v1607
        %v1725 = vpack.c.b16 %v1722, %v1721
        %v1726 = vpack.c.b16 %v1724, %v1723
        %v1730 = vsel %vm576, %v1608, 0
        %v1733 = vsel %vm576, %v1609, 0
        %v1736 = vsel %vm576, %v1610, 0
        %v1739 = vsel %vm576, %v1611, 0
        %1741 = vmatprep.subr.bf16.mxu0 0
        %1742 = vmatpush1.bf16.msra.mxu0 0
        %1743 = vmatprep.subr.bf16.mxu0 0
        %1744 = vmatpush1.bf16.msra.mxu0 0
        %1745 = vmatprep.subr.bf16.mxu0 0
        %1746 = vmatpush1.bf16.msra.mxu0 0
        %1747 = vmatprep.subr.bf16.mxu0 0
        %1748 = vmatpush1.bf16.msra.mxu0 0
        %1749 = vmatprep.subr.bf16.mxu0 0
        %1750 = vmatpush1.bf16.msra.mxu0 0
        %1751 = vmatprep.subr.bf16.mxu0 0
        %1752 = vmatpush1.bf16.msra.mxu0 0
        %1753 = vmatprep.subr.bf16.mxu0 0
        %1754 = vmatpush1.bf16.msra.mxu0 %v1726
        %1755 = vmatprep.subr.bf16.mxu0 0
        %1756 = vmatpush1.bf16.msra.mxu0 %v1725
        %1757 = vmatprep.subr.bf16.mxu0 0
        %1758 = vmatpush2.bf16.msra.mxu0 0
        %1759 = vmatprep.subr.bf16.mxu0 0
        %1760 = vmatpush2.bf16.msra.mxu0 0
        %1761 = vmatprep.subr.bf16.mxu0 0
        %1762 = vmatpush2.bf16.msra.mxu0 0
        %1763 = vmatprep.subr.bf16.mxu0 0
        %1764 = vmatpush2.bf16.msra.mxu0 0
        %1765 = vmatprep.subr.bf16.mxu0 0
        %1766 = vmatpush2.bf16.msra.mxu0 0
        %1767 = vmatprep.subr.bf16.mxu0 0
        %1768 = vmatpush2.bf16.msra.mxu0 0
        %1769 = vmatprep.subr.bf16.mxu0 0
        %1770 = vmatpush2.bf16.msra.mxu0 0
        %1771 = vmatprep.subr.bf16.mxu0 0
        %1772 = vmatpush2.bf16.msra.mxu0 0
        %1773 = vmatprep.mubr.bf16.mxu0 0
        %1774 = vmatmul.mubr.bf16.gmra.mxu0 %v1730
        %v1775 = vpop.f32.mrf.mxu0
        %v1776 = vadd.f32 %v1687, %v1775
        %v1777 = vpop.f32.mrf.mxu0
        %v1778 = vpop.f32.mrf.mxu0
        %v1779 = vadd.f32 %v1690, %v1778
        %v1780 = vpop.f32.mrf.mxu0
        %1781 = vmatprep.mubr.bf16.mxu0 0
        %1782 = vmatmul.mubr.bf16.gmra.mxu0 %v1733
        %v1783 = vpop.f32.mrf.mxu0
        %v1784 = vadd.f32 %v1695, %v1783
        %v1785 = vpop.f32.mrf.mxu0
        %v1786 = vpop.f32.mrf.mxu0
        %v1787 = vadd.f32 %v1698, %v1786
        %v1788 = vpop.f32.mrf.mxu0
        %1789 = vmatprep.mubr.bf16.mxu0 0
        %1790 = vmatmul.mubr.bf16.gmra.mxu0 %v1736
        %v1791 = vpop.f32.mrf.mxu0
        %v1792 = vadd.f32 %v1703, %v1791
        %v1793 = vpop.f32.mrf.mxu0
        %v1794 = vpop.f32.mrf.mxu0
        %v1795 = vadd.f32 %v1706, %v1794
        %v1796 = vpop.f32.mrf.mxu0
        %1797 = vmatprep.mubr.bf16.mxu0 0
        %1798 = vmatmul.mubr.bf16.gmra.mxu0 %v1739
        %v1799 = vpop.f32.mrf.mxu0
        %v1800 = vadd.f32 %v1711, %v1799
        %v1801 = vpop.f32.mrf.mxu0
        %v1802 = vpop.f32.mrf.mxu0
        %v1803 = vadd.f32 %v1714, %v1802
        %v1804 = vpop.f32.mrf.mxu0
        %1805 = vdwg.mxu0
        %v1806 = vrot.slane %v1572, 1
        %v1807 = vrot.slane %v1573, 1
        %v1808 = vrot.slane %v1574, 1
        %v1809 = vrot.slane %v1575, 1
        %v1810 = vrot.slane %v1576, 1
        %v1811 = vrot.slane %v1577, 1
        %v1812 = vrot.slane %v1578, 1
        %v1813 = vrot.slane %v1579, 1
        %v1814 = vsel %vm751, %v1812, %v1813
        %v1815 = vsel %vm751, %v1811, %v1812
        %v1816 = vsel %vm751, %v1810, %v1811
        %v1817 = vsel %vm751, %v1809, %v1810
        %v1818 = vsel %vm751, %v1808, %v1809
        %v1819 = vsel %vm751, %v1807, %v1808
        %v1820 = vsel %vm751, %v1806, %v1807
        %v1821 = vsel %vm751, %v1813, %v1806
        %v1822 = vsel %vm260, %v1821, 0.0
        %v1823 = vsel %vm261, %v1820, 0.0
        %v1824 = vsel %vm262, %v1819, 0.0
        %v1825 = vsel %vm263, %v1818, 0.0
        %v1826 = vsel %vm264, %v1817, 0.0
        %v1827 = vsel %vm265, %v1816, 0.0
        %v1828 = vsel %vm266, %v1815, 0.0
        %v1829 = vsel %vm267, %v1814, 0.0
        %v1830 = vld [vmem:[%s1 + $0xf8] sm:$0xf]
        %v1831 = vld [vmem:[%s1 + $0xfc] sm:$0xf]
        %v1832 = vld [vmem:[%s1 + $0x100] sm:$0xf]
        %v1833 = vld [vmem:[%s1 + $0x104] sm:$0xf]
        %v1834 = vpack.c.bf16 %v1823, %v1822
        %v1835 = vpack.c.bf16 %v1825, %v1824
        %v1836 = vpack.c.bf16 %v1827, %v1826
        %v1837 = vpack.c.bf16 %v1829, %v1828
        %v1842 = vunpack.c.l.b16 %v1830
        %v1843 = vunpack.c.l.b16 %v1831
        %v1844 = vunpack.c.l.b16 %v1832
        %v1845 = vunpack.c.l.b16 %v1833
        %v1846 = vpack.c.b16 %v1843, %v1842
        %v1847 = vpack.c.b16 %v1845, %v1844
        %v1851 = vsel %vm576, %v1834, 0
        %v1854 = vsel %vm576, %v1835, 0
        %v1857 = vsel %vm576, %v1836, 0
        %v1860 = vsel %vm576, %v1837, 0
        %1862 = vmatprep.subr.bf16.mxu0 0
        %1863 = vmatpush1.bf16.msra.mxu0 0
        %1864 = vmatprep.subr.bf16.mxu0 0
        %1865 = vmatpush1.bf16.msra.mxu0 0
        %1866 = vmatprep.subr.bf16.mxu0 0
        %1867 = vmatpush1.bf16.msra.mxu0 0
        %1868 = vmatprep.subr.bf16.mxu0 0
        %1869 = vmatpush1.bf16.msra.mxu0 0
        %1870 = vmatprep.subr.bf16.mxu0 0
        %1871 = vmatpush1.bf16.msra.mxu0 0
        %1872 = vmatprep.subr.bf16.mxu0 0
        %1873 = vmatpush1.bf16.msra.mxu0 0
        %1874 = vmatprep.subr.bf16.mxu0 0
        %1875 = vmatpush1.bf16.msra.mxu0 %v1847
        %1876 = vmatprep.subr.bf16.mxu0 0
        %1877 = vmatpush1.bf16.msra.mxu0 %v1846
        %1878 = vmatprep.subr.bf16.mxu0 0
        %1879 = vmatpush2.bf16.msra.mxu0 0
        %1880 = vmatprep.subr.bf16.mxu0 0
        %1881 = vmatpush2.bf16.msra.mxu0 0
        %1882 = vmatprep.subr.bf16.mxu0 0
        %1883 = vmatpush2.bf16.msra.mxu0 0
        %1884 = vmatprep.subr.bf16.mxu0 0
        %1885 = vmatpush2.bf16.msra.mxu0 0
        %1886 = vmatprep.subr.bf16.mxu0 0
        %1887 = vmatpush2.bf16.msra.mxu0 0
        %1888 = vmatprep.subr.bf16.mxu0 0
        %1889 = vmatpush2.bf16.msra.mxu0 0
        %1890 = vmatprep.subr.bf16.mxu0 0
        %1891 = vmatpush2.bf16.msra.mxu0 0
        %1892 = vmatprep.subr.bf16.mxu0 0
        %1893 = vmatpush2.bf16.msra.mxu0 0
        %1894 = vmatprep.mubr.bf16.mxu0 0
        %1895 = vmatmul.mubr.bf16.gmra.mxu0 %v1851
        %v1896 = vpop.f32.mrf.mxu0
        %v1897 = vadd.f32 0.0, %v1896
        %v1898 = vpop.f32.mrf.mxu0
        %v1899 = vpop.f32.mrf.mxu0
        %v1900 = vadd.f32 0.0, %v1899
        %v1901 = vpop.f32.mrf.mxu0
        %1902 = vmatprep.mubr.bf16.mxu0 0
        %1903 = vmatmul.mubr.bf16.gmra.mxu0 %v1854
        %v1904 = vpop.f32.mrf.mxu0
        %v1905 = vadd.f32 0.0, %v1904
        %v1906 = vpop.f32.mrf.mxu0
        %v1907 = vpop.f32.mrf.mxu0
        %v1908 = vadd.f32 0.0, %v1907
        %v1909 = vpop.f32.mrf.mxu0
        %1910 = vmatprep.mubr.bf16.mxu0 0
        %1911 = vmatmul.mubr.bf16.gmra.mxu0 %v1857
        %v1912 = vpop.f32.mrf.mxu0
        %v1913 = vadd.f32 0.0, %v1912
        %v1914 = vpop.f32.mrf.mxu0
        %v1915 = vpop.f32.mrf.mxu0
        %v1916 = vadd.f32 0.0, %v1915
        %v1917 = vpop.f32.mrf.mxu0
        %1918 = vmatprep.mubr.bf16.mxu0 0
        %1919 = vmatmul.mubr.bf16.gmra.mxu0 %v1860
        %v1920 = vpop.f32.mrf.mxu0
        %v1921 = vadd.f32 0.0, %v1920
        %v1922 = vpop.f32.mrf.mxu0
        %v1923 = vpop.f32.mrf.mxu0
        %v1924 = vadd.f32 0.0, %v1923
        %v1925 = vpop.f32.mrf.mxu0
        %1926 = vdwg.mxu0
        %v1927 = vadd.f32 %v1776, %v1897
        %v1928 = vadd.f32 %v1779, %v1900
        %v1929 = vadd.f32 %v1784, %v1905
        %v1930 = vadd.f32 %v1787, %v1908
        %v1931 = vadd.f32 %v1792, %v1913
        %v1932 = vadd.f32 %v1795, %v1916
        %v1933 = vadd.f32 %v1800, %v1921
        %v1934 = vadd.f32 %v1803, %v1924
        %v1935 = vsel %vm236, %v1595, 0.0
        %v1936 = vsel %vm237, %v1594, 0.0
        %v1937 = vsel %vm238, %v1593, 0.0
        %v1938 = vsel %vm239, %v1592, 0.0
        %v1939 = vsel %vm240, %v1591, 0.0
        %v1940 = vsel %vm241, %v1590, 0.0
        %v1941 = vsel %vm242, %v1589, 0.0
        %v1942 = vsel %vm243, %v1588, 0.0
        %v1943 = vld [vmem:[%s1 + $0x108] sm:$0xf]
        %v1944 = vld [vmem:[%s1 + $0x10c] sm:$0xf]
        %v1945 = vld [vmem:[%s1 + $0x110] sm:$0xf]
        %v1946 = vld [vmem:[%s1 + $0x114] sm:$0xf]
        %v1947 = vpack.c.bf16 %v1936, %v1935
        %v1948 = vpack.c.bf16 %v1938, %v1937
        %v1949 = vpack.c.bf16 %v1940, %v1939
        %v1950 = vpack.c.bf16 %v1942, %v1941
        %v1955 = vunpack.c.l.b16 %v1943
        %v1956 = vunpack.c.l.b16 %v1944
        %v1957 = vunpack.c.l.b16 %v1945
        %v1958 = vunpack.c.l.b16 %v1946
        %v1959 = vpack.c.b16 %v1956, %v1955
        %v1960 = vpack.c.b16 %v1958, %v1957
        %v1964 = vsel %vm576, %v1947, 0
        %v1967 = vsel %vm576, %v1948, 0
        %v1970 = vsel %vm576, %v1949, 0
        %v1973 = vsel %vm576, %v1950, 0
        %1975 = vmatprep.subr.bf16.mxu0 0
        %1976 = vmatpush1.bf16.msra.mxu0 0
        %1977 = vmatprep.subr.bf16.mxu0 0
        %1978 = vmatpush1.bf16.msra.mxu0 0
        %1979 = vmatprep.subr.bf16.mxu0 0
        %1980 = vmatpush1.bf16.msra.mxu0 0
        %1981 = vmatprep.subr.bf16.mxu0 0
        %1982 = vmatpush1.bf16.msra.mxu0 0
        %1983 = vmatprep.subr.bf16.mxu0 0
        %1984 = vmatpush1.bf16.msra.mxu0 0
        %1985 = vmatprep.subr.bf16.mxu0 0
        %1986 = vmatpush1.bf16.msra.mxu0 0
        %1987 = vmatprep.subr.bf16.mxu0 0
        %1988 = vmatpush1.bf16.msra.mxu0 %v1960
        %1989 = vmatprep.subr.bf16.mxu0 0
        %1990 = vmatpush1.bf16.msra.mxu0 %v1959
        %1991 = vmatprep.subr.bf16.mxu0 0
        %1992 = vmatpush2.bf16.msra.mxu0 0
        %1993 = vmatprep.subr.bf16.mxu0 0
        %1994 = vmatpush2.bf16.msra.mxu0 0
        %1995 = vmatprep.subr.bf16.mxu0 0
        %1996 = vmatpush2.bf16.msra.mxu0 0
        %1997 = vmatprep.subr.bf16.mxu0 0
        %1998 = vmatpush2.bf16.msra.mxu0 0
        %1999 = vmatprep.subr.bf16.mxu0 0
        %2000 = vmatpush2.bf16.msra.mxu0 0
        %2001 = vmatprep.subr.bf16.mxu0 0
        %2002 = vmatpush2.bf16.msra.mxu0 0
        %2003 = vmatprep.subr.bf16.mxu0 0
        %2004 = vmatpush2.bf16.msra.mxu0 0
        %2005 = vmatprep.subr.bf16.mxu0 0
        %2006 = vmatpush2.bf16.msra.mxu0 0
        %2007 = vmatprep.mubr.bf16.mxu0 0
        %2008 = vmatmul.mubr.bf16.gmra.mxu0 %v1964
        %v2009 = vpop.f32.mrf.mxu0
        %v2010 = vadd.f32 0.0, %v2009
        %v2011 = vpop.f32.mrf.mxu0
        %v2012 = vpop.f32.mrf.mxu0
        %v2013 = vadd.f32 0.0, %v2012
        %v2014 = vpop.f32.mrf.mxu0
        %2015 = vmatprep.mubr.bf16.mxu0 0
        %2016 = vmatmul.mubr.bf16.gmra.mxu0 %v1967
        %v2017 = vpop.f32.mrf.mxu0
        %v2018 = vadd.f32 0.0, %v2017
        %v2019 = vpop.f32.mrf.mxu0
        %v2020 = vpop.f32.mrf.mxu0
        %v2021 = vadd.f32 0.0, %v2020
        %v2022 = vpop.f32.mrf.mxu0
        %2023 = vmatprep.mubr.bf16.mxu0 0
        %2024 = vmatmul.mubr.bf16.gmra.mxu0 %v1970
        %v2025 = vpop.f32.mrf.mxu0
        %v2026 = vadd.f32 0.0, %v2025
        %v2027 = vpop.f32.mrf.mxu0
        %v2028 = vpop.f32.mrf.mxu0
        %v2029 = vadd.f32 0.0, %v2028
        %v2030 = vpop.f32.mrf.mxu0
        %2031 = vmatprep.mubr.bf16.mxu0 0
        %2032 = vmatmul.mubr.bf16.gmra.mxu0 %v1973
        %v2033 = vpop.f32.mrf.mxu0
        %v2034 = vadd.f32 0.0, %v2033
        %v2035 = vpop.f32.mrf.mxu0
        %v2036 = vpop.f32.mrf.mxu0
        %v2037 = vadd.f32 0.0, %v2036
        %v2038 = vpop.f32.mrf.mxu0
        %2039 = vdwg.mxu0
        %v2040 = vadd.f32 %v1927, %v2010
        %v2041 = vadd.f32 %v1928, %v2013
        %v2042 = vadd.f32 %v1929, %v2018
        %v2043 = vadd.f32 %v1930, %v2021
        %v2044 = vadd.f32 %v1931, %v2026
        %v2045 = vadd.f32 %v1932, %v2029
        %v2046 = vadd.f32 %v1933, %v2034
        %v2047 = vadd.f32 %v1934, %v2037
        %v2048 = vld [vmem:[%s1 + $0x118] sm:$0xf]
        %v2049 = vld [vmem:[%s1 + $0x11c] sm:$0xf]
        %v2050 = vld [vmem:[%s1 + $0x120] sm:$0xf]
        %v2051 = vld [vmem:[%s1 + $0x124] sm:$0xf]
        %v2052 = vpack.c.bf16 %v1573, %v1572
        %v2053 = vpack.c.bf16 %v1575, %v1574
        %v2054 = vpack.c.bf16 %v1577, %v1576
        %v2055 = vpack.c.bf16 %v1579, %v1578
        %v2060 = vunpack.c.l.b16 %v2048
        %v2061 = vunpack.c.l.b16 %v2049
        %v2062 = vunpack.c.l.b16 %v2050
        %v2063 = vunpack.c.l.b16 %v2051
        %v2064 = vpack.c.b16 %v2061, %v2060
        %v2065 = vpack.c.b16 %v2063, %v2062
        %v2069 = vsel %vm576, %v2052, 0
        %v2072 = vsel %vm576, %v2053, 0
        %v2075 = vsel %vm576, %v2054, 0
        %v2078 = vsel %vm576, %v2055, 0
        %2080 = vmatprep.subr.bf16.mxu0 0
        %2081 = vmatpush1.bf16.msra.mxu0 0
        %2082 = vmatprep.subr.bf16.mxu0 0
        %2083 = vmatpush1.bf16.msra.mxu0 0
        %2084 = vmatprep.subr.bf16.mxu0 0
        %2085 = vmatpush1.bf16.msra.mxu0 0
        %2086 = vmatprep.subr.bf16.mxu0 0
        %2087 = vmatpush1.bf16.msra.mxu0 0
        %2088 = vmatprep.subr.bf16.mxu0 0
        %2089 = vmatpush1.bf16.msra.mxu0 0
        %2090 = vmatprep.subr.bf16.mxu0 0
        %2091 = vmatpush1.bf16.msra.mxu0 0
        %2092 = vmatprep.subr.bf16.mxu0 0
        %2093 = vmatpush1.bf16.msra.mxu0 %v2065
        %2094 = vmatprep.subr.bf16.mxu0 0
        %2095 = vmatpush1.bf16.msra.mxu0 %v2064
        %2096 = vmatprep.subr.bf16.mxu0 0
        %2097 = vmatpush2.bf16.msra.mxu0 0
        %2098 = vmatprep.subr.bf16.mxu0 0
        %2099 = vmatpush2.bf16.msra.mxu0 0
        %2100 = vmatprep.subr.bf16.mxu0 0
        %2101 = vmatpush2.bf16.msra.mxu0 0
        %2102 = vmatprep.subr.bf16.mxu0 0
        %2103 = vmatpush2.bf16.msra.mxu0 0
        %2104 = vmatprep.subr.bf16.mxu0 0
        %2105 = vmatpush2.bf16.msra.mxu0 0
        %2106 = vmatprep.subr.bf16.mxu0 0
        %2107 = vmatpush2.bf16.msra.mxu0 0
        %2108 = vmatprep.subr.bf16.mxu0 0
        %2109 = vmatpush2.bf16.msra.mxu0 0
        %2110 = vmatprep.subr.bf16.mxu0 0
        %2111 = vmatpush2.bf16.msra.mxu0 0
        %2112 = vmatprep.mubr.bf16.mxu0 0
        %2113 = vmatmul.mubr.bf16.gmra.mxu0 %v2069
        %v2114 = vpop.f32.mrf.mxu0
        %v2115 = vadd.f32 0.0, %v2114
        %v2116 = vpop.f32.mrf.mxu0
        %v2117 = vpop.f32.mrf.mxu0
        %v2118 = vadd.f32 0.0, %v2117
        %v2119 = vpop.f32.mrf.mxu0
        %2120 = vmatprep.mubr.bf16.mxu0 0
        %2121 = vmatmul.mubr.bf16.gmra.mxu0 %v2072
        %v2122 = vpop.f32.mrf.mxu0
        %v2123 = vadd.f32 0.0, %v2122
        %v2124 = vpop.f32.mrf.mxu0
        %v2125 = vpop.f32.mrf.mxu0
        %v2126 = vadd.f32 0.0, %v2125
        %v2127 = vpop.f32.mrf.mxu0
        %2128 = vmatprep.mubr.bf16.mxu0 0
        %2129 = vmatmul.mubr.bf16.gmra.mxu0 %v2075
        %v2130 = vpop.f32.mrf.mxu0
        %v2131 = vadd.f32 0.0, %v2130
        %v2132 = vpop.f32.mrf.mxu0
        %v2133 = vpop.f32.mrf.mxu0
        %v2134 = vadd.f32 0.0, %v2133
        %v2135 = vpop.f32.mrf.mxu0
        %2136 = vmatprep.mubr.bf16.mxu0 0
        %2137 = vmatmul.mubr.bf16.gmra.mxu0 %v2078
        %v2138 = vpop.f32.mrf.mxu0
        %v2139 = vadd.f32 0.0, %v2138
        %v2140 = vpop.f32.mrf.mxu0
        %v2141 = vpop.f32.mrf.mxu0
        %v2142 = vadd.f32 0.0, %v2141
        %v2143 = vpop.f32.mrf.mxu0
        %2144 = vdwg.mxu0
        %v2145 = vadd.f32 %v2040, %v2115
        %v2146 = vadd.f32 %v2041, %v2118
        %v2147 = vadd.f32 %v2042, %v2123
        %v2148 = vadd.f32 %v2043, %v2126
        %v2149 = vadd.f32 %v2044, %v2131
        %v2150 = vadd.f32 %v2045, %v2134
        %v2151 = vadd.f32 %v2046, %v2139
        %v2152 = vadd.f32 %v2047, %v2142
        %v2153 = vsel %vm252, %v1820, 0.0
        %v2154 = vsel %vm253, %v1819, 0.0
        %v2155 = vsel %vm254, %v1818, 0.0
        %v2156 = vsel %vm255, %v1817, 0.0
        %v2157 = vsel %vm256, %v1816, 0.0
        %v2158 = vsel %vm257, %v1815, 0.0
        %v2159 = vsel %vm258, %v1814, 0.0
        %v2160 = vsel %vm259, %v1821, 0.0
        %v2161 = vld [vmem:[%s1 + $0x128] sm:$0xf]
        %v2162 = vld [vmem:[%s1 + $0x12c] sm:$0xf]
        %v2163 = vld [vmem:[%s1 + $0x130] sm:$0xf]
        %v2164 = vld [vmem:[%s1 + $0x134] sm:$0xf]
        %v2165 = vpack.c.bf16 %v2154, %v2153
        %v2166 = vpack.c.bf16 %v2156, %v2155
        %v2167 = vpack.c.bf16 %v2158, %v2157
        %v2168 = vpack.c.bf16 %v2160, %v2159
        %v2173 = vunpack.c.l.b16 %v2161
        %v2174 = vunpack.c.l.b16 %v2162
        %v2175 = vunpack.c.l.b16 %v2163
        %v2176 = vunpack.c.l.b16 %v2164
        %v2177 = vpack.c.b16 %v2174, %v2173
        %v2178 = vpack.c.b16 %v2176, %v2175
        %v2182 = vsel %vm576, %v2165, 0
        %v2185 = vsel %vm576, %v2166, 0
        %v2188 = vsel %vm576, %v2167, 0
        %v2191 = vsel %vm576, %v2168, 0
        %2193 = vmatprep.subr.bf16.mxu0 0
        %2194 = vmatpush1.bf16.msra.mxu0 0
        %2195 = vmatprep.subr.bf16.mxu0 0
        %2196 = vmatpush1.bf16.msra.mxu0 0
        %2197 = vmatprep.subr.bf16.mxu0 0
        %2198 = vmatpush1.bf16.msra.mxu0 0
        %2199 = vmatprep.subr.bf16.mxu0 0
        %2200 = vmatpush1.bf16.msra.mxu0 0
        %2201 = vmatprep.subr.bf16.mxu0 0
        %2202 = vmatpush1.bf16.msra.mxu0 0
        %2203 = vmatprep.subr.bf16.mxu0 0
        %2204 = vmatpush1.bf16.msra.mxu0 0
        %2205 = vmatprep.subr.bf16.mxu0 0
        %2206 = vmatpush1.bf16.msra.mxu0 %v2178
        %2207 = vmatprep.subr.bf16.mxu0 0
        %2208 = vmatpush1.bf16.msra.mxu0 %v2177
        %2209 = vmatprep.subr.bf16.mxu0 0
        %2210 = vmatpush2.bf16.msra.mxu0 0
        %2211 = vmatprep.subr.bf16.mxu0 0
        %2212 = vmatpush2.bf16.msra.mxu0 0
        %2213 = vmatprep.subr.bf16.mxu0 0
        %2214 = vmatpush2.bf16.msra.mxu0 0
        %2215 = vmatprep.subr.bf16.mxu0 0
        %2216 = vmatpush2.bf16.msra.mxu0 0
        %2217 = vmatprep.subr.bf16.mxu0 0
        %2218 = vmatpush2.bf16.msra.mxu0 0
        %2219 = vmatprep.subr.bf16.mxu0 0
        %2220 = vmatpush2.bf16.msra.mxu0 0
        %2221 = vmatprep.subr.bf16.mxu0 0
        %2222 = vmatpush2.bf16.msra.mxu0 0
        %2223 = vmatprep.subr.bf16.mxu0 0
        %2224 = vmatpush2.bf16.msra.mxu0 0
        %2225 = vmatprep.mubr.bf16.mxu0 0
        %2226 = vmatmul.mubr.bf16.gmra.mxu0 %v2182
        %v2227 = vpop.f32.mrf.mxu0
        %v2228 = vadd.f32 0.0, %v2227
        %v2229 = vpop.f32.mrf.mxu0
        %v2230 = vpop.f32.mrf.mxu0
        %v2231 = vadd.f32 0.0, %v2230
        %v2232 = vpop.f32.mrf.mxu0
        %2233 = vmatprep.mubr.bf16.mxu0 0
        %2234 = vmatmul.mubr.bf16.gmra.mxu0 %v2185
        %v2235 = vpop.f32.mrf.mxu0
        %v2236 = vadd.f32 0.0, %v2235
        %v2237 = vpop.f32.mrf.mxu0
        %v2238 = vpop.f32.mrf.mxu0
        %v2239 = vadd.f32 0.0, %v2238
        %v2240 = vpop.f32.mrf.mxu0
        %2241 = vmatprep.mubr.bf16.mxu0 0
        %2242 = vmatmul.mubr.bf16.gmra.mxu0 %v2188
        %v2243 = vpop.f32.mrf.mxu0
        %v2244 = vadd.f32 0.0, %v2243
        %v2245 = vpop.f32.mrf.mxu0
        %v2246 = vpop.f32.mrf.mxu0
        %v2247 = vadd.f32 0.0, %v2246
        %v2248 = vpop.f32.mrf.mxu0
        %2249 = vmatprep.mubr.bf16.mxu0 0
        %2250 = vmatmul.mubr.bf16.gmra.mxu0 %v2191
        %v2251 = vpop.f32.mrf.mxu0
        %v2252 = vadd.f32 0.0, %v2251
        %v2253 = vpop.f32.mrf.mxu0
        %v2254 = vpop.f32.mrf.mxu0
        %v2255 = vadd.f32 0.0, %v2254
        %v2256 = vpop.f32.mrf.mxu0
        %2257 = vdwg.mxu0
        %v2258 = vadd.f32 %v2145, %v2228
        %v2259 = vadd.f32 %v2146, %v2231
        %v2260 = vadd.f32 %v2147, %v2236
        %v2261 = vadd.f32 %v2148, %v2239
        %v2262 = vadd.f32 %v2149, %v2244
        %v2263 = vadd.f32 %v2150, %v2247
        %v2264 = vadd.f32 %v2151, %v2252
        %v2265 = vadd.f32 %v2152, %v2255
        %v2266 = vsel %vm276, %v1594, 0.0
        %v2267 = vsel %vm277, %v1593, 0.0
        %v2268 = vsel %vm278, %v1592, 0.0
        %v2269 = vsel %vm279, %v1591, 0.0
        %v2270 = vsel %vm280, %v1590, 0.0
        %v2271 = vsel %vm281, %v1589, 0.0
        %v2272 = vsel %vm282, %v1588, 0.0
        %v2273 = vsel %vm283, %v1595, 0.0
        %v2274 = vld [vmem:[%s1 + $0x138] sm:$0xf]
        %v2275 = vld [vmem:[%s1 + $0x13c] sm:$0xf]
        %v2276 = vld [vmem:[%s1 + $0x140] sm:$0xf]
        %v2277 = vld [vmem:[%s1 + $0x144] sm:$0xf]
        %v2278 = vpack.c.bf16 %v2267, %v2266
        %v2279 = vpack.c.bf16 %v2269, %v2268
        %v2280 = vpack.c.bf16 %v2271, %v2270
        %v2281 = vpack.c.bf16 %v2273, %v2272
        %v2286 = vunpack.c.l.b16 %v2274
        %v2287 = vunpack.c.l.b16 %v2275
        %v2288 = vunpack.c.l.b16 %v2276
        %v2289 = vunpack.c.l.b16 %v2277
        %v2290 = vpack.c.b16 %v2287, %v2286
        %v2291 = vpack.c.b16 %v2289, %v2288
        %v2295 = vsel %vm576, %v2278, 0
        %v2298 = vsel %vm576, %v2279, 0
        %v2301 = vsel %vm576, %v2280, 0
        %v2304 = vsel %vm576, %v2281, 0
        %2306 = vmatprep.subr.bf16.mxu0 0
        %2307 = vmatpush1.bf16.msra.mxu0 0
        %2308 = vmatprep.subr.bf16.mxu0 0
        %2309 = vmatpush1.bf16.msra.mxu0 0
        %2310 = vmatprep.subr.bf16.mxu0 0
        %2311 = vmatpush1.bf16.msra.mxu0 0
        %2312 = vmatprep.subr.bf16.mxu0 0
        %2313 = vmatpush1.bf16.msra.mxu0 0
        %2314 = vmatprep.subr.bf16.mxu0 0
        %2315 = vmatpush1.bf16.msra.mxu0 0
        %2316 = vmatprep.subr.bf16.mxu0 0
        %2317 = vmatpush1.bf16.msra.mxu0 0
        %2318 = vmatprep.subr.bf16.mxu0 0
        %2319 = vmatpush1.bf16.msra.mxu0 %v2291
        %2320 = vmatprep.subr.bf16.mxu0 0
        %2321 = vmatpush1.bf16.msra.mxu0 %v2290
        %2322 = vmatprep.subr.bf16.mxu0 0
        %2323 = vmatpush2.bf16.msra.mxu0 0
        %2324 = vmatprep.subr.bf16.mxu0 0
        %2325 = vmatpush2.bf16.msra.mxu0 0
        %2326 = vmatprep.subr.bf16.mxu0 0
        %2327 = vmatpush2.bf16.msra.mxu0 0
        %2328 = vmatprep.subr.bf16.mxu0 0
        %2329 = vmatpush2.bf16.msra.mxu0 0
        %2330 = vmatprep.subr.bf16.mxu0 0
        %2331 = vmatpush2.bf16.msra.mxu0 0
        %2332 = vmatprep.subr.bf16.mxu0 0
        %2333 = vmatpush2.bf16.msra.mxu0 0
        %2334 = vmatprep.subr.bf16.mxu0 0
        %2335 = vmatpush2.bf16.msra.mxu0 0
        %2336 = vmatprep.subr.bf16.mxu0 0
        %2337 = vmatpush2.bf16.msra.mxu0 0
        %2338 = vmatprep.mubr.bf16.mxu0 0
        %2339 = vmatmul.mubr.bf16.gmra.mxu0 %v2295
        %v2340 = vpop.f32.mrf.mxu0
        %v2341 = vadd.f32 0.0, %v2340
        %v2342 = vpop.f32.mrf.mxu0
        %v2343 = vpop.f32.mrf.mxu0
        %v2344 = vadd.f32 0.0, %v2343
        %v2345 = vpop.f32.mrf.mxu0
        %2346 = vmatprep.mubr.bf16.mxu0 0
        %2347 = vmatmul.mubr.bf16.gmra.mxu0 %v2298
        %v2348 = vpop.f32.mrf.mxu0
        %v2349 = vadd.f32 0.0, %v2348
        %v2350 = vpop.f32.mrf.mxu0
        %v2351 = vpop.f32.mrf.mxu0
        %v2352 = vadd.f32 0.0, %v2351
        %v2353 = vpop.f32.mrf.mxu0
        %2354 = vmatprep.mubr.bf16.mxu0 0
        %2355 = vmatmul.mubr.bf16.gmra.mxu0 %v2301
        %v2356 = vpop.f32.mrf.mxu0
        %v2357 = vadd.f32 0.0, %v2356
        %v2358 = vpop.f32.mrf.mxu0
        %v2359 = vpop.f32.mrf.mxu0
        %v2360 = vadd.f32 0.0, %v2359
        %v2361 = vpop.f32.mrf.mxu0
        %2362 = vmatprep.mubr.bf16.mxu0 0
        %2363 = vmatmul.mubr.bf16.gmra.mxu0 %v2304
        %v2364 = vpop.f32.mrf.mxu0
        %v2365 = vadd.f32 0.0, %v2364
        %v2366 = vpop.f32.mrf.mxu0
        %v2367 = vpop.f32.mrf.mxu0
        %v2368 = vadd.f32 0.0, %v2367
        %v2369 = vpop.f32.mrf.mxu0
        %2370 = vdwg.mxu0
        %v2371 = vadd.f32 %v2258, %v2341
        %v2372 = vadd.f32 %v2259, %v2344
        %v2373 = vadd.f32 %v2260, %v2349
        %v2374 = vadd.f32 %v2261, %v2352
        %v2375 = vadd.f32 %v2262, %v2357
        %v2376 = vadd.f32 %v2263, %v2360
        %v2377 = vadd.f32 %v2264, %v2365
        %v2378 = vadd.f32 %v2265, %v2368
        %v2379 = vsel %vm268, %v1573, 0.0
        %v2380 = vsel %vm269, %v1574, 0.0
        %v2381 = vsel %vm270, %v1575, 0.0
        %v2382 = vsel %vm271, %v1576, 0.0
        %v2383 = vsel %vm272, %v1577, 0.0
        %v2384 = vsel %vm273, %v1578, 0.0
        %v2385 = vsel %vm274, %v1579, 0.0
        %v2386 = vsel %vm275, %v1572, 0.0
        %v2387 = vld [vmem:[%s1 + $0x148] sm:$0xf]
        %v2388 = vld [vmem:[%s1 + $0x14c] sm:$0xf]
        %v2389 = vld [vmem:[%s1 + $0x150] sm:$0xf]
        %v2390 = vld [vmem:[%s1 + $0x154] sm:$0xf]
        %v2391 = vpack.c.bf16 %v2380, %v2379
        %v2392 = vpack.c.bf16 %v2382, %v2381
        %v2393 = vpack.c.bf16 %v2384, %v2383
        %v2394 = vpack.c.bf16 %v2386, %v2385
        %v2399 = vunpack.c.l.b16 %v2387
        %v2400 = vunpack.c.l.b16 %v2388
        %v2401 = vunpack.c.l.b16 %v2389
        %v2402 = vunpack.c.l.b16 %v2390
        %v2403 = vpack.c.b16 %v2400, %v2399
        %v2404 = vpack.c.b16 %v2402, %v2401
        %v2408 = vsel %vm576, %v2391, 0
        %v2411 = vsel %vm576, %v2392, 0
        %v2414 = vsel %vm576, %v2393, 0
        %v2417 = vsel %vm576, %v2394, 0
        %2419 = vmatprep.subr.bf16.mxu0 0
        %2420 = vmatpush1.bf16.msra.mxu0 0
        %2421 = vmatprep.subr.bf16.mxu0 0
        %2422 = vmatpush1.bf16.msra.mxu0 0
        %2423 = vmatprep.subr.bf16.mxu0 0
        %2424 = vmatpush1.bf16.msra.mxu0 0
        %2425 = vmatprep.subr.bf16.mxu0 0
        %2426 = vmatpush1.bf16.msra.mxu0 0
        %2427 = vmatprep.subr.bf16.mxu0 0
        %2428 = vmatpush1.bf16.msra.mxu0 0
        %2429 = vmatprep.subr.bf16.mxu0 0
        %2430 = vmatpush1.bf16.msra.mxu0 0
        %2431 = vmatprep.subr.bf16.mxu0 0
        %2432 = vmatpush1.bf16.msra.mxu0 %v2404
        %2433 = vmatprep.subr.bf16.mxu0 0
        %2434 = vmatpush1.bf16.msra.mxu0 %v2403
        %2435 = vmatprep.subr.bf16.mxu0 0
        %2436 = vmatpush2.bf16.msra.mxu0 0
        %2437 = vmatprep.subr.bf16.mxu0 0
        %2438 = vmatpush2.bf16.msra.mxu0 0
        %2439 = vmatprep.subr.bf16.mxu0 0
        %2440 = vmatpush2.bf16.msra.mxu0 0
        %2441 = vmatprep.subr.bf16.mxu0 0
        %2442 = vmatpush2.bf16.msra.mxu0 0
        %2443 = vmatprep.subr.bf16.mxu0 0
        %2444 = vmatpush2.bf16.msra.mxu0 0
        %2445 = vmatprep.subr.bf16.mxu0 0
        %2446 = vmatpush2.bf16.msra.mxu0 0
        %2447 = vmatprep.subr.bf16.mxu0 0
        %2448 = vmatpush2.bf16.msra.mxu0 0
        %2449 = vmatprep.subr.bf16.mxu0 0
        %2450 = vmatpush2.bf16.msra.mxu0 0
        %2451 = vmatprep.mubr.bf16.mxu0 0
        %2452 = vmatmul.mubr.bf16.gmra.mxu0 %v2408
        %v2453 = vpop.f32.mrf.mxu0
        %v2454 = vadd.f32 0.0, %v2453
        %v2455 = vpop.f32.mrf.mxu0
        %v2456 = vpop.f32.mrf.mxu0
        %v2457 = vadd.f32 0.0, %v2456
        %v2458 = vpop.f32.mrf.mxu0
        %2459 = vmatprep.mubr.bf16.mxu0 0
        %2460 = vmatmul.mubr.bf16.gmra.mxu0 %v2411
        %v2461 = vpop.f32.mrf.mxu0
        %v2462 = vadd.f32 0.0, %v2461
        %v2463 = vpop.f32.mrf.mxu0
        %v2464 = vpop.f32.mrf.mxu0
        %v2465 = vadd.f32 0.0, %v2464
        %v2466 = vpop.f32.mrf.mxu0
        %2467 = vmatprep.mubr.bf16.mxu0 0
        %2468 = vmatmul.mubr.bf16.gmra.mxu0 %v2414
        %v2469 = vpop.f32.mrf.mxu0
        %v2470 = vadd.f32 0.0, %v2469
        %v2471 = vpop.f32.mrf.mxu0
        %v2472 = vpop.f32.mrf.mxu0
        %v2473 = vadd.f32 0.0, %v2472
        %v2474 = vpop.f32.mrf.mxu0
        %2475 = vmatprep.mubr.bf16.mxu0 0
        %2476 = vmatmul.mubr.bf16.gmra.mxu0 %v2417
        %v2477 = vpop.f32.mrf.mxu0
        %v2478 = vadd.f32 0.0, %v2477
        %v2479 = vpop.f32.mrf.mxu0
        %v2480 = vpop.f32.mrf.mxu0
        %v2481 = vadd.f32 0.0, %v2480
        %v2482 = vpop.f32.mrf.mxu0
        %2483 = vdwg.mxu0
        %v2484 = vadd.f32 %v2371, %v2454
        %v2485 = vadd.f32 %v2372, %v2457
        %v2486 = vadd.f32 %v2373, %v2462
        %v2487 = vadd.f32 %v2374, %v2465
        %v2488 = vadd.f32 %v2375, %v2470
        %v2489 = vadd.f32 %v2376, %v2473
        %v2490 = vadd.f32 %v2377, %v2478
        %v2491 = vadd.f32 %v2378, %v2481
        %v2492 = vsel %vm284, %v1819, 0.0
        %v2493 = vsel %vm285, %v1818, 0.0
        %v2494 = vsel %vm286, %v1817, 0.0
        %v2495 = vsel %vm287, %v1816, 0.0
        %v2496 = vsel %vm288, %v1815, 0.0
        %v2497 = vsel %vm289, %v1814, 0.0
        %v2498 = vsel %vm290, %v1821, 0.0
        %v2499 = vsel %vm291, %v1820, 0.0
        %v2500 = vld [vmem:[%s1 + $0x158] sm:$0xf]
        %v2501 = vld [vmem:[%s1 + $0x15c] sm:$0xf]
        %v2502 = vld [vmem:[%s1 + $0x160] sm:$0xf]
        %v2503 = vld [vmem:[%s1 + $0x164] sm:$0xf]
        %v2504 = vpack.c.bf16 %v2493, %v2492
        %v2505 = vpack.c.bf16 %v2495, %v2494
        %v2506 = vpack.c.bf16 %v2497, %v2496
        %v2507 = vpack.c.bf16 %v2499, %v2498
        %v2512 = vunpack.c.l.b16 %v2500
        %v2513 = vunpack.c.l.b16 %v2501
        %v2514 = vunpack.c.l.b16 %v2502
        %v2515 = vunpack.c.l.b16 %v2503
        %v2516 = vpack.c.b16 %v2513, %v2512
        %v2517 = vpack.c.b16 %v2515, %v2514
        %v2521 = vsel %vm576, %v2504, 0
        %v2524 = vsel %vm576, %v2505, 0
        %v2527 = vsel %vm576, %v2506, 0
        %v2530 = vsel %vm576, %v2507, 0
        %2532 = vmatprep.subr.bf16.mxu0 0
        %2533 = vmatpush1.bf16.msra.mxu0 0
        %2534 = vmatprep.subr.bf16.mxu0 0
        %2535 = vmatpush1.bf16.msra.mxu0 0
        %2536 = vmatprep.subr.bf16.mxu0 0
        %2537 = vmatpush1.bf16.msra.mxu0 0
        %2538 = vmatprep.subr.bf16.mxu0 0
        %2539 = vmatpush1.bf16.msra.mxu0 0
        %2540 = vmatprep.subr.bf16.mxu0 0
        %2541 = vmatpush1.bf16.msra.mxu0 0
        %2542 = vmatprep.subr.bf16.mxu0 0
        %2543 = vmatpush1.bf16.msra.mxu0 0
        %2544 = vmatprep.subr.bf16.mxu0 0
        %2545 = vmatpush1.bf16.msra.mxu0 %v2517
        %2546 = vmatprep.subr.bf16.mxu0 0
        %2547 = vmatpush1.bf16.msra.mxu0 %v2516
        %2548 = vmatprep.subr.bf16.mxu0 0
        %2549 = vmatpush2.bf16.msra.mxu0 0
        %2550 = vmatprep.subr.bf16.mxu0 0
        %2551 = vmatpush2.bf16.msra.mxu0 0
        %2552 = vmatprep.subr.bf16.mxu0 0
        %2553 = vmatpush2.bf16.msra.mxu0 0
        %2554 = vmatprep.subr.bf16.mxu0 0
        %2555 = vmatpush2.bf16.msra.mxu0 0
        %2556 = vmatprep.subr.bf16.mxu0 0
        %2557 = vmatpush2.bf16.msra.mxu0 0
        %2558 = vmatprep.subr.bf16.mxu0 0
        %2559 = vmatpush2.bf16.msra.mxu0 0
        %2560 = vmatprep.subr.bf16.mxu0 0
        %2561 = vmatpush2.bf16.msra.mxu0 0
        %2562 = vmatprep.subr.bf16.mxu0 0
        %2563 = vmatpush2.bf16.msra.mxu0 0
        %2564 = vmatprep.mubr.bf16.mxu0 0
        %2565 = vmatmul.mubr.bf16.gmra.mxu0 %v2521
        %v2566 = vpop.f32.mrf.mxu0
        %v2567 = vadd.f32 0.0, %v2566
        %v2568 = vpop.f32.mrf.mxu0
        %v2569 = vpop.f32.mrf.mxu0
        %v2570 = vadd.f32 0.0, %v2569
        %v2571 = vpop.f32.mrf.mxu0
        %2572 = vmatprep.mubr.bf16.mxu0 0
        %2573 = vmatmul.mubr.bf16.gmra.mxu0 %v2524
        %v2574 = vpop.f32.mrf.mxu0
        %v2575 = vadd.f32 0.0, %v2574
        %v2576 = vpop.f32.mrf.mxu0
        %v2577 = vpop.f32.mrf.mxu0
        %v2578 = vadd.f32 0.0, %v2577
        %v2579 = vpop.f32.mrf.mxu0
        %2580 = vmatprep.mubr.bf16.mxu0 0
        %2581 = vmatmul.mubr.bf16.gmra.mxu0 %v2527
        %v2582 = vpop.f32.mrf.mxu0
        %v2583 = vadd.f32 0.0, %v2582
        %v2584 = vpop.f32.mrf.mxu0
        %v2585 = vpop.f32.mrf.mxu0
        %v2586 = vadd.f32 0.0, %v2585
        %v2587 = vpop.f32.mrf.mxu0
        %2588 = vmatprep.mubr.bf16.mxu0 0
        %2589 = vmatmul.mubr.bf16.gmra.mxu0 %v2530
        %v2590 = vpop.f32.mrf.mxu0
        %v2591 = vadd.f32 0.0, %v2590
        %v2592 = vpop.f32.mrf.mxu0
        %v2593 = vpop.f32.mrf.mxu0
        %v2594 = vadd.f32 0.0, %v2593
        %v2595 = vpop.f32.mrf.mxu0
        %2596 = vdwg.mxu0
        %v2597 = vadd.f32 %v2484, %v2567
        %v2598 = vadd.f32 %v2485, %v2570
        %v2599 = vadd.f32 %v2486, %v2575
        %v2600 = vadd.f32 %v2487, %v2578
        %v2601 = vadd.f32 %v2488, %v2583
        %v2602 = vadd.f32 %v2489, %v2586
        %v2603 = vadd.f32 %v2490, %v2591
        %v2604 = vadd.f32 %v2491, %v2594
        %v2605 = vld [vmem:[%s3 + $0x20] sm:$0x1]
        %v2606 = vlaneseq
        %v2607 = vshrl.u32 %v2606, 7
        %v2608 = vsub.s32 0, %v2607
        %v2609 = vrot.slane %v2605, %v2608
        %v2610 = vadd.f32 %v2597, %v2609
        %v2611 = vadd.f32 %v2598, %v2609
        %v2612 = vadd.f32 %v2599, %v2609
        %v2613 = vadd.f32 %v2600, %v2609
        %v2614 = vadd.f32 %v2601, %v2609
        %v2615 = vadd.f32 %v2602, %v2609
        %v2616 = vadd.f32 %v2603, %v2609
        %v2617 = vadd.f32 %v2604, %v2609
        %v2618 = vadd.f32 %v507, %v2610
        %v2619 = vadd.f32 %v508, %v2611
        %v2620 = vadd.f32 %v509, %v2612
        %v2621 = vadd.f32 %v510, %v2613
        %v2622 = vadd.f32 %v511, %v2614
        %v2623 = vadd.f32 %v512, %v2615
        %v2624 = vadd.f32 %v513, %v2616
        %v2625 = vadd.f32 %v514, %v2617
        %v2626 = vrot.slane %v2618, 7
        %v2627 = vrot.slane %v2619, 7
        %v2628 = vrot.slane %v2620, 7
        %v2629 = vrot.slane %v2621, 7
        %v2630 = vrot.slane %v2622, 7
        %v2631 = vrot.slane %v2623, 7
        %v2632 = vrot.slane %v2624, 7
        %v2633 = vrot.slane %v2625, 7
        %v2634 = vsel %vm523, %v2632, %v2633
        %v2635 = vsel %vm523, %v2631, %v2632
        %v2636 = vsel %vm523, %v2630, %v2631
        %v2637 = vsel %vm523, %v2629, %v2630
        %v2638 = vsel %vm523, %v2628, %v2629
        %v2639 = vsel %vm523, %v2627, %v2628
        %v2640 = vsel %vm523, %v2626, %v2627
        %v2641 = vsel %vm523, %v2633, %v2626
        %v2642 = vsel %vm244, %v2634, 0.0
        %v2643 = vsel %vm245, %v2641, 0.0
        %v2644 = vsel %vm246, %v2640, 0.0
        %v2645 = vsel %vm247, %v2639, 0.0
        %v2646 = vsel %vm248, %v2638, 0.0
        %v2647 = vsel %vm249, %v2637, 0.0
        %v2648 = vsel %vm250, %v2636, 0.0
        %v2649 = vsel %vm251, %v2635, 0.0
        %v2650 = vld [vmem:[%s1 + $0x168] sm:$0xf]
        %v2651 = vld [vmem:[%s1 + $0x16c] sm:$0xf]
        %v2652 = vld [vmem:[%s1 + $0x170] sm:$0xf]
        %v2653 = vld [vmem:[%s1 + $0x174] sm:$0xf]
        %v2654 = vpack.c.bf16 %v2643, %v2642
        %v2655 = vpack.c.bf16 %v2645, %v2644
        %v2656 = vpack.c.bf16 %v2647, %v2646
        %v2657 = vpack.c.bf16 %v2649, %v2648
        %v2658 = vsel %vm228, %v2625, 0.0
        %v2659 = vsel %vm229, %v2618, 0.0
        %v2660 = vsel %vm230, %v2619, 0.0
        %v2661 = vsel %vm231, %v2620, 0.0
        %v2662 = vsel %vm232, %v2621, 0.0
        %v2663 = vsel %vm233, %v2622, 0.0
        %v2664 = vsel %vm234, %v2623, 0.0
        %v2665 = vsel %vm235, %v2624, 0.0
        %v2666 = vld [vmem:[%s1 + $0x178] sm:$0xf]
        %v2667 = vld [vmem:[%s1 + $0x17c] sm:$0xf]
        %v2668 = vld [vmem:[%s1 + $0x180] sm:$0xf]
        %v2669 = vld [vmem:[%s1 + $0x184] sm:$0xf]
        %v2670 = vpack.c.bf16 %v2659, %v2658
        %v2671 = vpack.c.bf16 %v2661, %v2660
        %v2672 = vpack.c.bf16 %v2663, %v2662
        %v2673 = vpack.c.bf16 %v2665, %v2664
        %v2678 = vunpack.c.l.b16 %v2666
        %v2679 = vunpack.c.l.b16 %v2667
        %v2680 = vunpack.c.l.b16 %v2668
        %v2681 = vunpack.c.l.b16 %v2669
        %v2682 = vpack.c.b16 %v2679, %v2678
        %v2683 = vpack.c.b16 %v2681, %v2680
        %v2687 = vsel %vm576, %v2670, 0
        %v2690 = vsel %vm576, %v2671, 0
        %v2693 = vsel %vm576, %v2672, 0
        %v2696 = vsel %vm576, %v2673, 0
        %2698 = vmatprep.subr.bf16.mxu0 0
        %2699 = vmatpush1.bf16.msra.mxu0 0
        %2700 = vmatprep.subr.bf16.mxu0 0
        %2701 = vmatpush1.bf16.msra.mxu0 0
        %2702 = vmatprep.subr.bf16.mxu0 0
        %2703 = vmatpush1.bf16.msra.mxu0 0
        %2704 = vmatprep.subr.bf16.mxu0 0
        %2705 = vmatpush1.bf16.msra.mxu0 0
        %2706 = vmatprep.subr.bf16.mxu0 0
        %2707 = vmatpush1.bf16.msra.mxu0 0
        %2708 = vmatprep.subr.bf16.mxu0 0
        %2709 = vmatpush1.bf16.msra.mxu0 0
        %2710 = vmatprep.subr.bf16.mxu0 0
        %2711 = vmatpush1.bf16.msra.mxu0 %v2683
        %2712 = vmatprep.subr.bf16.mxu0 0
        %2713 = vmatpush1.bf16.msra.mxu0 %v2682
        %2714 = vmatprep.subr.bf16.mxu0 0
        %2715 = vmatpush2.bf16.msra.mxu0 0
        %2716 = vmatprep.subr.bf16.mxu0 0
        %2717 = vmatpush2.bf16.msra.mxu0 0
        %2718 = vmatprep.subr.bf16.mxu0 0
        %2719 = vmatpush2.bf16.msra.mxu0 0
        %2720 = vmatprep.subr.bf16.mxu0 0
        %2721 = vmatpush2.bf16.msra.mxu0 0
        %2722 = vmatprep.subr.bf16.mxu0 0
        %2723 = vmatpush2.bf16.msra.mxu0 0
        %2724 = vmatprep.subr.bf16.mxu0 0
        %2725 = vmatpush2.bf16.msra.mxu0 0
        %2726 = vmatprep.subr.bf16.mxu0 0
        %2727 = vmatpush2.bf16.msra.mxu0 0
        %2728 = vmatprep.subr.bf16.mxu0 0
        %2729 = vmatpush2.bf16.msra.mxu0 0
        %2730 = vmatprep.mubr.bf16.mxu0 0
        %2731 = vmatmul.mubr.bf16.gmra.mxu0 %v2687
        %v2732 = vpop.f32.mrf.mxu0
        %v2733 = vadd.f32 0.0, %v2732
        %v2734 = vpop.f32.mrf.mxu0
        %v2735 = vpop.f32.mrf.mxu0
        %v2736 = vadd.f32 0.0, %v2735
        %v2737 = vpop.f32.mrf.mxu0
        %2738 = vmatprep.mubr.bf16.mxu0 0
        %2739 = vmatmul.mubr.bf16.gmra.mxu0 %v2690
        %v2740 = vpop.f32.mrf.mxu0
        %v2741 = vadd.f32 0.0, %v2740
        %v2742 = vpop.f32.mrf.mxu0
        %v2743 = vpop.f32.mrf.mxu0
        %v2744 = vadd.f32 0.0, %v2743
        %v2745 = vpop.f32.mrf.mxu0
        %2746 = vmatprep.mubr.bf16.mxu0 0
        %2747 = vmatmul.mubr.bf16.gmra.mxu0 %v2693
        %v2748 = vpop.f32.mrf.mxu0
        %v2749 = vadd.f32 0.0, %v2748
        %v2750 = vpop.f32.mrf.mxu0
        %v2751 = vpop.f32.mrf.mxu0
        %v2752 = vadd.f32 0.0, %v2751
        %v2753 = vpop.f32.mrf.mxu0
        %2754 = vmatprep.mubr.bf16.mxu0 0
        %2755 = vmatmul.mubr.bf16.gmra.mxu0 %v2696
        %v2756 = vpop.f32.mrf.mxu0
        %v2757 = vadd.f32 0.0, %v2756
        %v2758 = vpop.f32.mrf.mxu0
        %v2759 = vpop.f32.mrf.mxu0
        %v2760 = vadd.f32 0.0, %v2759
        %v2761 = vpop.f32.mrf.mxu0
        %2762 = vdwg.mxu0
        %v2767 = vunpack.c.l.b16 %v2650
        %v2768 = vunpack.c.l.b16 %v2651
        %v2769 = vunpack.c.l.b16 %v2652
        %v2770 = vunpack.c.l.b16 %v2653
        %v2771 = vpack.c.b16 %v2768, %v2767
        %v2772 = vpack.c.b16 %v2770, %v2769
        %v2776 = vsel %vm576, %v2654, 0
        %v2779 = vsel %vm576, %v2655, 0
        %v2782 = vsel %vm576, %v2656, 0
        %v2785 = vsel %vm576, %v2657, 0
        %2787 = vmatprep.subr.bf16.mxu0 0
        %2788 = vmatpush1.bf16.msra.mxu0 0
        %2789 = vmatprep.subr.bf16.mxu0 0
        %2790 = vmatpush1.bf16.msra.mxu0 0
        %2791 = vmatprep.subr.bf16.mxu0 0
        %2792 = vmatpush1.bf16.msra.mxu0 0
        %2793 = vmatprep.subr.bf16.mxu0 0
        %2794 = vmatpush1.bf16.msra.mxu0 0
        %2795 = vmatprep.subr.bf16.mxu0 0
        %2796 = vmatpush1.bf16.msra.mxu0 0
        %2797 = vmatprep.subr.bf16.mxu0 0
        %2798 = vmatpush1.bf16.msra.mxu0 0
        %2799 = vmatprep.subr.bf16.mxu0 0
        %2800 = vmatpush1.bf16.msra.mxu0 %v2772
        %2801 = vmatprep.subr.bf16.mxu0 0
        %2802 = vmatpush1.bf16.msra.mxu0 %v2771
        %2803 = vmatprep.subr.bf16.mxu0 0
        %2804 = vmatpush2.bf16.msra.mxu0 0
        %2805 = vmatprep.subr.bf16.mxu0 0
        %2806 = vmatpush2.bf16.msra.mxu0 0
        %2807 = vmatprep.subr.bf16.mxu0 0
        %2808 = vmatpush2.bf16.msra.mxu0 0
        %2809 = vmatprep.subr.bf16.mxu0 0
        %2810 = vmatpush2.bf16.msra.mxu0 0
        %2811 = vmatprep.subr.bf16.mxu0 0
        %2812 = vmatpush2.bf16.msra.mxu0 0
        %2813 = vmatprep.subr.bf16.mxu0 0
        %2814 = vmatpush2.bf16.msra.mxu0 0
        %2815 = vmatprep.subr.bf16.mxu0 0
        %2816 = vmatpush2.bf16.msra.mxu0 0
        %2817 = vmatprep.subr.bf16.mxu0 0
        %2818 = vmatpush2.bf16.msra.mxu0 0
        %2819 = vmatprep.mubr.bf16.mxu0 0
        %2820 = vmatmul.mubr.bf16.gmra.mxu0 %v2776
        %v2821 = vpop.f32.mrf.mxu0
        %v2822 = vadd.f32 %v2733, %v2821
        %v2823 = vpop.f32.mrf.mxu0
        %v2824 = vpop.f32.mrf.mxu0
        %v2825 = vadd.f32 %v2736, %v2824
        %v2826 = vpop.f32.mrf.mxu0
        %2827 = vmatprep.mubr.bf16.mxu0 0
        %2828 = vmatmul.mubr.bf16.gmra.mxu0 %v2779
        %v2829 = vpop.f32.mrf.mxu0
        %v2830 = vadd.f32 %v2741, %v2829
        %v2831 = vpop.f32.mrf.mxu0
        %v2832 = vpop.f32.mrf.mxu0
        %v2833 = vadd.f32 %v2744, %v2832
        %v2834 = vpop.f32.mrf.mxu0
        %2835 = vmatprep.mubr.bf16.mxu0 0
        %2836 = vmatmul.mubr.bf16.gmra.mxu0 %v2782
        %v2837 = vpop.f32.mrf.mxu0
        %v2838 = vadd.f32 %v2749, %v2837
        %v2839 = vpop.f32.mrf.mxu0
        %v2840 = vpop.f32.mrf.mxu0
        %v2841 = vadd.f32 %v2752, %v2840
        %v2842 = vpop.f32.mrf.mxu0
        %2843 = vmatprep.mubr.bf16.mxu0 0
        %2844 = vmatmul.mubr.bf16.gmra.mxu0 %v2785
        %v2845 = vpop.f32.mrf.mxu0
        %v2846 = vadd.f32 %v2757, %v2845
        %v2847 = vpop.f32.mrf.mxu0
        %v2848 = vpop.f32.mrf.mxu0
        %v2849 = vadd.f32 %v2760, %v2848
        %v2850 = vpop.f32.mrf.mxu0
        %2851 = vdwg.mxu0
        %v2852 = vrot.slane %v2618, 1
        %v2853 = vrot.slane %v2619, 1
        %v2854 = vrot.slane %v2620, 1
        %v2855 = vrot.slane %v2621, 1
        %v2856 = vrot.slane %v2622, 1
        %v2857 = vrot.slane %v2623, 1
        %v2858 = vrot.slane %v2624, 1
        %v2859 = vrot.slane %v2625, 1
        %v2860 = vsel %vm751, %v2858, %v2859
        %v2861 = vsel %vm751, %v2857, %v2858
        %v2862 = vsel %vm751, %v2856, %v2857
        %v2863 = vsel %vm751, %v2855, %v2856
        %v2864 = vsel %vm751, %v2854, %v2855
        %v2865 = vsel %vm751, %v2853, %v2854
        %v2866 = vsel %vm751, %v2852, %v2853
        %v2867 = vsel %vm751, %v2859, %v2852
        %v2868 = vsel %vm260, %v2867, 0.0
        %v2869 = vsel %vm261, %v2866, 0.0
        %v2870 = vsel %vm262, %v2865, 0.0
        %v2871 = vsel %vm263, %v2864, 0.0
        %v2872 = vsel %vm264, %v2863, 0.0
        %v2873 = vsel %vm265, %v2862, 0.0
        %v2874 = vsel %vm266, %v2861, 0.0
        %v2875 = vsel %vm267, %v2860, 0.0
        %v2876 = vld [vmem:[%s1 + $0x188] sm:$0xf]
        %v2877 = vld [vmem:[%s1 + $0x18c] sm:$0xf]
        %v2878 = vld [vmem:[%s1 + $0x190] sm:$0xf]
        %v2879 = vld [vmem:[%s1 + $0x194] sm:$0xf]
        %v2880 = vpack.c.bf16 %v2869, %v2868
        %v2881 = vpack.c.bf16 %v2871, %v2870
        %v2882 = vpack.c.bf16 %v2873, %v2872
        %v2883 = vpack.c.bf16 %v2875, %v2874
        %v2888 = vunpack.c.l.b16 %v2876
        %v2889 = vunpack.c.l.b16 %v2877
        %v2890 = vunpack.c.l.b16 %v2878
        %v2891 = vunpack.c.l.b16 %v2879
        %v2892 = vpack.c.b16 %v2889, %v2888
        %v2893 = vpack.c.b16 %v2891, %v2890
        %v2897 = vsel %vm576, %v2880, 0
        %v2900 = vsel %vm576, %v2881, 0
        %v2903 = vsel %vm576, %v2882, 0
        %v2906 = vsel %vm576, %v2883, 0
        %2908 = vmatprep.subr.bf16.mxu0 0
        %2909 = vmatpush1.bf16.msra.mxu0 0
        %2910 = vmatprep.subr.bf16.mxu0 0
        %2911 = vmatpush1.bf16.msra.mxu0 0
        %2912 = vmatprep.subr.bf16.mxu0 0
        %2913 = vmatpush1.bf16.msra.mxu0 0
        %2914 = vmatprep.subr.bf16.mxu0 0
        %2915 = vmatpush1.bf16.msra.mxu0 0
        %2916 = vmatprep.subr.bf16.mxu0 0
        %2917 = vmatpush1.bf16.msra.mxu0 0
        %2918 = vmatprep.subr.bf16.mxu0 0
        %2919 = vmatpush1.bf16.msra.mxu0 0
        %2920 = vmatprep.subr.bf16.mxu0 0
        %2921 = vmatpush1.bf16.msra.mxu0 %v2893
        %2922 = vmatprep.subr.bf16.mxu0 0
        %2923 = vmatpush1.bf16.msra.mxu0 %v2892
        %2924 = vmatprep.subr.bf16.mxu0 0
        %2925 = vmatpush2.bf16.msra.mxu0 0
        %2926 = vmatprep.subr.bf16.mxu0 0
        %2927 = vmatpush2.bf16.msra.mxu0 0
        %2928 = vmatprep.subr.bf16.mxu0 0
        %2929 = vmatpush2.bf16.msra.mxu0 0
        %2930 = vmatprep.subr.bf16.mxu0 0
        %2931 = vmatpush2.bf16.msra.mxu0 0
        %2932 = vmatprep.subr.bf16.mxu0 0
        %2933 = vmatpush2.bf16.msra.mxu0 0
        %2934 = vmatprep.subr.bf16.mxu0 0
        %2935 = vmatpush2.bf16.msra.mxu0 0
        %2936 = vmatprep.subr.bf16.mxu0 0
        %2937 = vmatpush2.bf16.msra.mxu0 0
        %2938 = vmatprep.subr.bf16.mxu0 0
        %2939 = vmatpush2.bf16.msra.mxu0 0
        %2940 = vmatprep.mubr.bf16.mxu0 0
        %2941 = vmatmul.mubr.bf16.gmra.mxu0 %v2897
        %v2942 = vpop.f32.mrf.mxu0
        %v2943 = vadd.f32 0.0, %v2942
        %v2944 = vpop.f32.mrf.mxu0
        %v2945 = vpop.f32.mrf.mxu0
        %v2946 = vadd.f32 0.0, %v2945
        %v2947 = vpop.f32.mrf.mxu0
        %2948 = vmatprep.mubr.bf16.mxu0 0
        %2949 = vmatmul.mubr.bf16.gmra.mxu0 %v2900
        %v2950 = vpop.f32.mrf.mxu0
        %v2951 = vadd.f32 0.0, %v2950
        %v2952 = vpop.f32.mrf.mxu0
        %v2953 = vpop.f32.mrf.mxu0
        %v2954 = vadd.f32 0.0, %v2953
        %v2955 = vpop.f32.mrf.mxu0
        %2956 = vmatprep.mubr.bf16.mxu0 0
        %2957 = vmatmul.mubr.bf16.gmra.mxu0 %v2903
        %v2958 = vpop.f32.mrf.mxu0
        %v2959 = vadd.f32 0.0, %v2958
        %v2960 = vpop.f32.mrf.mxu0
        %v2961 = vpop.f32.mrf.mxu0
        %v2962 = vadd.f32 0.0, %v2961
        %v2963 = vpop.f32.mrf.mxu0
        %2964 = vmatprep.mubr.bf16.mxu0 0
        %2965 = vmatmul.mubr.bf16.gmra.mxu0 %v2906
        %v2966 = vpop.f32.mrf.mxu0
        %v2967 = vadd.f32 0.0, %v2966
        %v2968 = vpop.f32.mrf.mxu0
        %v2969 = vpop.f32.mrf.mxu0
        %v2970 = vadd.f32 0.0, %v2969
        %v2971 = vpop.f32.mrf.mxu0
        %2972 = vdwg.mxu0
        %v2973 = vadd.f32 %v2822, %v2943
        %v2974 = vadd.f32 %v2825, %v2946
        %v2975 = vadd.f32 %v2830, %v2951
        %v2976 = vadd.f32 %v2833, %v2954
        %v2977 = vadd.f32 %v2838, %v2959
        %v2978 = vadd.f32 %v2841, %v2962
        %v2979 = vadd.f32 %v2846, %v2967
        %v2980 = vadd.f32 %v2849, %v2970
        %v2981 = vsel %vm236, %v2641, 0.0
        %v2982 = vsel %vm237, %v2640, 0.0
        %v2983 = vsel %vm238, %v2639, 0.0
        %v2984 = vsel %vm239, %v2638, 0.0
        %v2985 = vsel %vm240, %v2637, 0.0
        %v2986 = vsel %vm241, %v2636, 0.0
        %v2987 = vsel %vm242, %v2635, 0.0
        %v2988 = vsel %vm243, %v2634, 0.0
        %v2989 = vld [vmem:[%s1 + $0x198] sm:$0xf]
        %v2990 = vld [vmem:[%s1 + $0x19c] sm:$0xf]
        %v2991 = vld [vmem:[%s1 + $0x1a0] sm:$0xf]
        %v2992 = vld [vmem:[%s1 + $0x1a4] sm:$0xf]
        %v2993 = vpack.c.bf16 %v2982, %v2981
        %v2994 = vpack.c.bf16 %v2984, %v2983
        %v2995 = vpack.c.bf16 %v2986, %v2985
        %v2996 = vpack.c.bf16 %v2988, %v2987
        %v3001 = vunpack.c.l.b16 %v2989
        %v3002 = vunpack.c.l.b16 %v2990
        %v3003 = vunpack.c.l.b16 %v2991
        %v3004 = vunpack.c.l.b16 %v2992
        %v3005 = vpack.c.b16 %v3002, %v3001
        %v3006 = vpack.c.b16 %v3004, %v3003
        %v3010 = vsel %vm576, %v2993, 0
        %v3013 = vsel %vm576, %v2994, 0
        %v3016 = vsel %vm576, %v2995, 0
        %v3019 = vsel %vm576, %v2996, 0
        %3021 = vmatprep.subr.bf16.mxu0 0
        %3022 = vmatpush1.bf16.msra.mxu0 0
        %3023 = vmatprep.subr.bf16.mxu0 0
        %3024 = vmatpush1.bf16.msra.mxu0 0
        %3025 = vmatprep.subr.bf16.mxu0 0
        %3026 = vmatpush1.bf16.msra.mxu0 0
        %3027 = vmatprep.subr.bf16.mxu0 0
        %3028 = vmatpush1.bf16.msra.mxu0 0
        %3029 = vmatprep.subr.bf16.mxu0 0
        %3030 = vmatpush1.bf16.msra.mxu0 0
        %3031 = vmatprep.subr.bf16.mxu0 0
        %3032 = vmatpush1.bf16.msra.mxu0 0
        %3033 = vmatprep.subr.bf16.mxu0 0
        %3034 = vmatpush1.bf16.msra.mxu0 %v3006
        %3035 = vmatprep.subr.bf16.mxu0 0
        %3036 = vmatpush1.bf16.msra.mxu0 %v3005
        %3037 = vmatprep.subr.bf16.mxu0 0
        %3038 = vmatpush2.bf16.msra.mxu0 0
        %3039 = vmatprep.subr.bf16.mxu0 0
        %3040 = vmatpush2.bf16.msra.mxu0 0
        %3041 = vmatprep.subr.bf16.mxu0 0
        %3042 = vmatpush2.bf16.msra.mxu0 0
        %3043 = vmatprep.subr.bf16.mxu0 0
        %3044 = vmatpush2.bf16.msra.mxu0 0
        %3045 = vmatprep.subr.bf16.mxu0 0
        %3046 = vmatpush2.bf16.msra.mxu0 0
        %3047 = vmatprep.subr.bf16.mxu0 0
        %3048 = vmatpush2.bf16.msra.mxu0 0
        %3049 = vmatprep.subr.bf16.mxu0 0
        %3050 = vmatpush2.bf16.msra.mxu0 0
        %3051 = vmatprep.subr.bf16.mxu0 0
        %3052 = vmatpush2.bf16.msra.mxu0 0
        %3053 = vmatprep.mubr.bf16.mxu0 0
        %3054 = vmatmul.mubr.bf16.gmra.mxu0 %v3010
        %v3055 = vpop.f32.mrf.mxu0
        %v3056 = vadd.f32 0.0, %v3055
        %v3057 = vpop.f32.mrf.mxu0
        %v3058 = vpop.f32.mrf.mxu0
        %v3059 = vadd.f32 0.0, %v3058
        %v3060 = vpop.f32.mrf.mxu0
        %3061 = vmatprep.mubr.bf16.mxu0 0
        %3062 = vmatmul.mubr.bf16.gmra.mxu0 %v3013
        %v3063 = vpop.f32.mrf.mxu0
        %v3064 = vadd.f32 0.0, %v3063
        %v3065 = vpop.f32.mrf.mxu0
        %v3066 = vpop.f32.mrf.mxu0
        %v3067 = vadd.f32 0.0, %v3066
        %v3068 = vpop.f32.mrf.mxu0
        %3069 = vmatprep.mubr.bf16.mxu0 0
        %3070 = vmatmul.mubr.bf16.gmra.mxu0 %v3016
        %v3071 = vpop.f32.mrf.mxu0
        %v3072 = vadd.f32 0.0, %v3071
        %v3073 = vpop.f32.mrf.mxu0
        %v3074 = vpop.f32.mrf.mxu0
        %v3075 = vadd.f32 0.0, %v3074
        %v3076 = vpop.f32.mrf.mxu0
        %3077 = vmatprep.mubr.bf16.mxu0 0
        %3078 = vmatmul.mubr.bf16.gmra.mxu0 %v3019
        %v3079 = vpop.f32.mrf.mxu0
        %v3080 = vadd.f32 0.0, %v3079
        %v3081 = vpop.f32.mrf.mxu0
        %v3082 = vpop.f32.mrf.mxu0
        %v3083 = vadd.f32 0.0, %v3082
        %v3084 = vpop.f32.mrf.mxu0
        %3085 = vdwg.mxu0
        %v3086 = vadd.f32 %v2973, %v3056
        %v3087 = vadd.f32 %v2974, %v3059
        %v3088 = vadd.f32 %v2975, %v3064
        %v3089 = vadd.f32 %v2976, %v3067
        %v3090 = vadd.f32 %v2977, %v3072
        %v3091 = vadd.f32 %v2978, %v3075
        %v3092 = vadd.f32 %v2979, %v3080
        %v3093 = vadd.f32 %v2980, %v3083
        %v3094 = vld [vmem:[%s1 + $0x1a8] sm:$0xf]
        %v3095 = vld [vmem:[%s1 + $0x1ac] sm:$0xf]
        %v3096 = vld [vmem:[%s1 + $0x1b0] sm:$0xf]
        %v3097 = vld [vmem:[%s1 + $0x1b4] sm:$0xf]
        %v3098 = vpack.c.bf16 %v2619, %v2618
        %v3099 = vpack.c.bf16 %v2621, %v2620
        %v3100 = vpack.c.bf16 %v2623, %v2622
        %v3101 = vpack.c.bf16 %v2625, %v2624
        %v3106 = vunpack.c.l.b16 %v3094
        %v3107 = vunpack.c.l.b16 %v3095
        %v3108 = vunpack.c.l.b16 %v3096
        %v3109 = vunpack.c.l.b16 %v3097
        %v3110 = vpack.c.b16 %v3107, %v3106
        %v3111 = vpack.c.b16 %v3109, %v3108
        %v3115 = vsel %vm576, %v3098, 0
        %v3118 = vsel %vm576, %v3099, 0
        %v3121 = vsel %vm576, %v3100, 0
        %v3124 = vsel %vm576, %v3101, 0
        %3126 = vmatprep.subr.bf16.mxu0 0
        %3127 = vmatpush1.bf16.msra.mxu0 0
        %3128 = vmatprep.subr.bf16.mxu0 0
        %3129 = vmatpush1.bf16.msra.mxu0 0
        %3130 = vmatprep.subr.bf16.mxu0 0
        %3131 = vmatpush1.bf16.msra.mxu0 0
        %3132 = vmatprep.subr.bf16.mxu0 0
        %3133 = vmatpush1.bf16.msra.mxu0 0
        %3134 = vmatprep.subr.bf16.mxu0 0
        %3135 = vmatpush1.bf16.msra.mxu0 0
        %3136 = vmatprep.subr.bf16.mxu0 0
        %3137 = vmatpush1.bf16.msra.mxu0 0
        %3138 = vmatprep.subr.bf16.mxu0 0
        %3139 = vmatpush1.bf16.msra.mxu0 %v3111
        %3140 = vmatprep.subr.bf16.mxu0 0
        %3141 = vmatpush1.bf16.msra.mxu0 %v3110
        %3142 = vmatprep.subr.bf16.mxu0 0
        %3143 = vmatpush2.bf16.msra.mxu0 0
        %3144 = vmatprep.subr.bf16.mxu0 0
        %3145 = vmatpush2.bf16.msra.mxu0 0
        %3146 = vmatprep.subr.bf16.mxu0 0
        %3147 = vmatpush2.bf16.msra.mxu0 0
        %3148 = vmatprep.subr.bf16.mxu0 0
        %3149 = vmatpush2.bf16.msra.mxu0 0
        %3150 = vmatprep.subr.bf16.mxu0 0
        %3151 = vmatpush2.bf16.msra.mxu0 0
        %3152 = vmatprep.subr.bf16.mxu0 0
        %3153 = vmatpush2.bf16.msra.mxu0 0
        %3154 = vmatprep.subr.bf16.mxu0 0
        %3155 = vmatpush2.bf16.msra.mxu0 0
        %3156 = vmatprep.subr.bf16.mxu0 0
        %3157 = vmatpush2.bf16.msra.mxu0 0
        %3158 = vmatprep.mubr.bf16.mxu0 0
        %3159 = vmatmul.mubr.bf16.gmra.mxu0 %v3115
        %v3160 = vpop.f32.mrf.mxu0
        %v3161 = vadd.f32 0.0, %v3160
        %v3162 = vpop.f32.mrf.mxu0
        %v3163 = vpop.f32.mrf.mxu0
        %v3164 = vadd.f32 0.0, %v3163
        %v3165 = vpop.f32.mrf.mxu0
        %3166 = vmatprep.mubr.bf16.mxu0 0
        %3167 = vmatmul.mubr.bf16.gmra.mxu0 %v3118
        %v3168 = vpop.f32.mrf.mxu0
        %v3169 = vadd.f32 0.0, %v3168
        %v3170 = vpop.f32.mrf.mxu0
        %v3171 = vpop.f32.mrf.mxu0
        %v3172 = vadd.f32 0.0, %v3171
        %v3173 = vpop.f32.mrf.mxu0
        %3174 = vmatprep.mubr.bf16.mxu0 0
        %3175 = vmatmul.mubr.bf16.gmra.mxu0 %v3121
        %v3176 = vpop.f32.mrf.mxu0
        %v3177 = vadd.f32 0.0, %v3176
        %v3178 = vpop.f32.mrf.mxu0
        %v3179 = vpop.f32.mrf.mxu0
        %v3180 = vadd.f32 0.0, %v3179
        %v3181 = vpop.f32.mrf.mxu0
        %3182 = vmatprep.mubr.bf16.mxu0 0
        %3183 = vmatmul.mubr.bf16.gmra.mxu0 %v3124
        %v3184 = vpop.f32.mrf.mxu0
        %v3185 = vadd.f32 0.0, %v3184
        %v3186 = vpop.f32.mrf.mxu0
        %v3187 = vpop.f32.mrf.mxu0
        %v3188 = vadd.f32 0.0, %v3187
        %v3189 = vpop.f32.mrf.mxu0
        %3190 = vdwg.mxu0
        %v3191 = vadd.f32 %v3086, %v3161
        %v3192 = vadd.f32 %v3087, %v3164
        %v3193 = vadd.f32 %v3088, %v3169
        %v3194 = vadd.f32 %v3089, %v3172
        %v3195 = vadd.f32 %v3090, %v3177
        %v3196 = vadd.f32 %v3091, %v3180
        %v3197 = vadd.f32 %v3092, %v3185
        %v3198 = vadd.f32 %v3093, %v3188
        %v3199 = vsel %vm252, %v2866, 0.0
        %v3200 = vsel %vm253, %v2865, 0.0
        %v3201 = vsel %vm254, %v2864, 0.0
        %v3202 = vsel %vm255, %v2863, 0.0
        %v3203 = vsel %vm256, %v2862, 0.0
        %v3204 = vsel %vm257, %v2861, 0.0
        %v3205 = vsel %vm258, %v2860, 0.0
        %v3206 = vsel %vm259, %v2867, 0.0
        %v3207 = vld [vmem:[%s1 + $0x1b8] sm:$0xf]
        %v3208 = vld [vmem:[%s1 + $0x1bc] sm:$0xf]
        %v3209 = vld [vmem:[%s1 + $0x1c0] sm:$0xf]
        %v3210 = vld [vmem:[%s1 + $0x1c4] sm:$0xf]
        %v3211 = vpack.c.bf16 %v3200, %v3199
        %v3212 = vpack.c.bf16 %v3202, %v3201
        %v3213 = vpack.c.bf16 %v3204, %v3203
        %v3214 = vpack.c.bf16 %v3206, %v3205
        %v3219 = vunpack.c.l.b16 %v3207
        %v3220 = vunpack.c.l.b16 %v3208
        %v3221 = vunpack.c.l.b16 %v3209
        %v3222 = vunpack.c.l.b16 %v3210
        %v3223 = vpack.c.b16 %v3220, %v3219
        %v3224 = vpack.c.b16 %v3222, %v3221
        %v3228 = vsel %vm576, %v3211, 0
        %v3231 = vsel %vm576, %v3212, 0
        %v3234 = vsel %vm576, %v3213, 0
        %v3237 = vsel %vm576, %v3214, 0
        %3239 = vmatprep.subr.bf16.mxu0 0
        %3240 = vmatpush1.bf16.msra.mxu0 0
        %3241 = vmatprep.subr.bf16.mxu0 0
        %3242 = vmatpush1.bf16.msra.mxu0 0
        %3243 = vmatprep.subr.bf16.mxu0 0
        %3244 = vmatpush1.bf16.msra.mxu0 0
        %3245 = vmatprep.subr.bf16.mxu0 0
        %3246 = vmatpush1.bf16.msra.mxu0 0
        %3247 = vmatprep.subr.bf16.mxu0 0
        %3248 = vmatpush1.bf16.msra.mxu0 0
        %3249 = vmatprep.subr.bf16.mxu0 0
        %3250 = vmatpush1.bf16.msra.mxu0 0
        %3251 = vmatprep.subr.bf16.mxu0 0
        %3252 = vmatpush1.bf16.msra.mxu0 %v3224
        %3253 = vmatprep.subr.bf16.mxu0 0
        %3254 = vmatpush1.bf16.msra.mxu0 %v3223
        %3255 = vmatprep.subr.bf16.mxu0 0
        %3256 = vmatpush2.bf16.msra.mxu0 0
        %3257 = vmatprep.subr.bf16.mxu0 0
        %3258 = vmatpush2.bf16.msra.mxu0 0
        %3259 = vmatprep.subr.bf16.mxu0 0
        %3260 = vmatpush2.bf16.msra.mxu0 0
        %3261 = vmatprep.subr.bf16.mxu0 0
        %3262 = vmatpush2.bf16.msra.mxu0 0
        %3263 = vmatprep.subr.bf16.mxu0 0
        %3264 = vmatpush2.bf16.msra.mxu0 0
        %3265 = vmatprep.subr.bf16.mxu0 0
        %3266 = vmatpush2.bf16.msra.mxu0 0
        %3267 = vmatprep.subr.bf16.mxu0 0
        %3268 = vmatpush2.bf16.msra.mxu0 0
        %3269 = vmatprep.subr.bf16.mxu0 0
        %3270 = vmatpush2.bf16.msra.mxu0 0
        %3271 = vmatprep.mubr.bf16.mxu0 0
        %3272 = vmatmul.mubr.bf16.gmra.mxu0 %v3228
        %v3273 = vpop.f32.mrf.mxu0
        %v3274 = vadd.f32 0.0, %v3273
        %v3275 = vpop.f32.mrf.mxu0
        %v3276 = vpop.f32.mrf.mxu0
        %v3277 = vadd.f32 0.0, %v3276
        %v3278 = vpop.f32.mrf.mxu0
        %3279 = vmatprep.mubr.bf16.mxu0 0
        %3280 = vmatmul.mubr.bf16.gmra.mxu0 %v3231
        %v3281 = vpop.f32.mrf.mxu0
        %v3282 = vadd.f32 0.0, %v3281
        %v3283 = vpop.f32.mrf.mxu0
        %v3284 = vpop.f32.mrf.mxu0
        %v3285 = vadd.f32 0.0, %v3284
        %v3286 = vpop.f32.mrf.mxu0
        %3287 = vmatprep.mubr.bf16.mxu0 0
        %3288 = vmatmul.mubr.bf16.gmra.mxu0 %v3234
        %v3289 = vpop.f32.mrf.mxu0
        %v3290 = vadd.f32 0.0, %v3289
        %v3291 = vpop.f32.mrf.mxu0
        %v3292 = vpop.f32.mrf.mxu0
        %v3293 = vadd.f32 0.0, %v3292
        %v3294 = vpop.f32.mrf.mxu0
        %3295 = vmatprep.mubr.bf16.mxu0 0
        %3296 = vmatmul.mubr.bf16.gmra.mxu0 %v3237
        %v3297 = vpop.f32.mrf.mxu0
        %v3298 = vadd.f32 0.0, %v3297
        %v3299 = vpop.f32.mrf.mxu0
        %v3300 = vpop.f32.mrf.mxu0
        %v3301 = vadd.f32 0.0, %v3300
        %v3302 = vpop.f32.mrf.mxu0
        %3303 = vdwg.mxu0
        %v3304 = vadd.f32 %v3191, %v3274
        %v3305 = vadd.f32 %v3192, %v3277
        %v3306 = vadd.f32 %v3193, %v3282
        %v3307 = vadd.f32 %v3194, %v3285
        %v3308 = vadd.f32 %v3195, %v3290
        %v3309 = vadd.f32 %v3196, %v3293
        %v3310 = vadd.f32 %v3197, %v3298
        %v3311 = vadd.f32 %v3198, %v3301
        %v3312 = vsel %vm276, %v2640, 0.0
        %v3313 = vsel %vm277, %v2639, 0.0
        %v3314 = vsel %vm278, %v2638, 0.0
        %v3315 = vsel %vm279, %v2637, 0.0
        %v3316 = vsel %vm280, %v2636, 0.0
        %v3317 = vsel %vm281, %v2635, 0.0
        %v3318 = vsel %vm282, %v2634, 0.0
        %v3319 = vsel %vm283, %v2641, 0.0
        %v3320 = vld [vmem:[%s1 + $0x1c8] sm:$0xf]
        %v3321 = vld [vmem:[%s1 + $0x1cc] sm:$0xf]
        %v3322 = vld [vmem:[%s1 + $0x1d0] sm:$0xf]
        %v3323 = vld [vmem:[%s1 + $0x1d4] sm:$0xf]
        %v3324 = vpack.c.bf16 %v3313, %v3312
        %v3325 = vpack.c.bf16 %v3315, %v3314
        %v3326 = vpack.c.bf16 %v3317, %v3316
        %v3327 = vpack.c.bf16 %v3319, %v3318
        %v3332 = vunpack.c.l.b16 %v3320
        %v3333 = vunpack.c.l.b16 %v3321
        %v3334 = vunpack.c.l.b16 %v3322
        %v3335 = vunpack.c.l.b16 %v3323
        %v3336 = vpack.c.b16 %v3333, %v3332
        %v3337 = vpack.c.b16 %v3335, %v3334
        %v3341 = vsel %vm576, %v3324, 0
        %v3344 = vsel %vm576, %v3325, 0
        %v3347 = vsel %vm576, %v3326, 0
        %v3350 = vsel %vm576, %v3327, 0
        %3352 = vmatprep.subr.bf16.mxu0 0
        %3353 = vmatpush1.bf16.msra.mxu0 0
        %3354 = vmatprep.subr.bf16.mxu0 0
        %3355 = vmatpush1.bf16.msra.mxu0 0
        %3356 = vmatprep.subr.bf16.mxu0 0
        %3357 = vmatpush1.bf16.msra.mxu0 0
        %3358 = vmatprep.subr.bf16.mxu0 0
        %3359 = vmatpush1.bf16.msra.mxu0 0
        %3360 = vmatprep.subr.bf16.mxu0 0
        %3361 = vmatpush1.bf16.msra.mxu0 0
        %3362 = vmatprep.subr.bf16.mxu0 0
        %3363 = vmatpush1.bf16.msra.mxu0 0
        %3364 = vmatprep.subr.bf16.mxu0 0
        %3365 = vmatpush1.bf16.msra.mxu0 %v3337
        %3366 = vmatprep.subr.bf16.mxu0 0
        %3367 = vmatpush1.bf16.msra.mxu0 %v3336
        %3368 = vmatprep.subr.bf16.mxu0 0
        %3369 = vmatpush2.bf16.msra.mxu0 0
        %3370 = vmatprep.subr.bf16.mxu0 0
        %3371 = vmatpush2.bf16.msra.mxu0 0
        %3372 = vmatprep.subr.bf16.mxu0 0
        %3373 = vmatpush2.bf16.msra.mxu0 0
        %3374 = vmatprep.subr.bf16.mxu0 0
        %3375 = vmatpush2.bf16.msra.mxu0 0
        %3376 = vmatprep.subr.bf16.mxu0 0
        %3377 = vmatpush2.bf16.msra.mxu0 0
        %3378 = vmatprep.subr.bf16.mxu0 0
        %3379 = vmatpush2.bf16.msra.mxu0 0
        %3380 = vmatprep.subr.bf16.mxu0 0
        %3381 = vmatpush2.bf16.msra.mxu0 0
        %3382 = vmatprep.subr.bf16.mxu0 0
        %3383 = vmatpush2.bf16.msra.mxu0 0
        %3384 = vmatprep.mubr.bf16.mxu0 0
        %3385 = vmatmul.mubr.bf16.gmra.mxu0 %v3341
        %v3386 = vpop.f32.mrf.mxu0
        %v3387 = vadd.f32 0.0, %v3386
        %v3388 = vpop.f32.mrf.mxu0
        %v3389 = vpop.f32.mrf.mxu0
        %v3390 = vadd.f32 0.0, %v3389
        %v3391 = vpop.f32.mrf.mxu0
        %3392 = vmatprep.mubr.bf16.mxu0 0
        %3393 = vmatmul.mubr.bf16.gmra.mxu0 %v3344
        %v3394 = vpop.f32.mrf.mxu0
        %v3395 = vadd.f32 0.0, %v3394
        %v3396 = vpop.f32.mrf.mxu0
        %v3397 = vpop.f32.mrf.mxu0
        %v3398 = vadd.f32 0.0, %v3397
        %v3399 = vpop.f32.mrf.mxu0
        %3400 = vmatprep.mubr.bf16.mxu0 0
        %3401 = vmatmul.mubr.bf16.gmra.mxu0 %v3347
        %v3402 = vpop.f32.mrf.mxu0
        %v3403 = vadd.f32 0.0, %v3402
        %v3404 = vpop.f32.mrf.mxu0
        %v3405 = vpop.f32.mrf.mxu0
        %v3406 = vadd.f32 0.0, %v3405
        %v3407 = vpop.f32.mrf.mxu0
        %3408 = vmatprep.mubr.bf16.mxu0 0
        %3409 = vmatmul.mubr.bf16.gmra.mxu0 %v3350
        %v3410 = vpop.f32.mrf.mxu0
        %v3411 = vadd.f32 0.0, %v3410
        %v3412 = vpop.f32.mrf.mxu0
        %v3413 = vpop.f32.mrf.mxu0
        %v3414 = vadd.f32 0.0, %v3413
        %v3415 = vpop.f32.mrf.mxu0
        %3416 = vdwg.mxu0
        %v3417 = vadd.f32 %v3304, %v3387
        %v3418 = vadd.f32 %v3305, %v3390
        %v3419 = vadd.f32 %v3306, %v3395
        %v3420 = vadd.f32 %v3307, %v3398
        %v3421 = vadd.f32 %v3308, %v3403
        %v3422 = vadd.f32 %v3309, %v3406
        %v3423 = vadd.f32 %v3310, %v3411
        %v3424 = vadd.f32 %v3311, %v3414
        %v3425 = vsel %vm268, %v2619, 0.0
        %v3426 = vsel %vm269, %v2620, 0.0
        %v3427 = vsel %vm270, %v2621, 0.0
        %v3428 = vsel %vm271, %v2622, 0.0
        %v3429 = vsel %vm272, %v2623, 0.0
        %v3430 = vsel %vm273, %v2624, 0.0
        %v3431 = vsel %vm274, %v2625, 0.0
        %v3432 = vsel %vm275, %v2618, 0.0
        %v3433 = vld [vmem:[%s1 + $0x1d8] sm:$0xf]
        %v3434 = vld [vmem:[%s1 + $0x1dc] sm:$0xf]
        %v3435 = vld [vmem:[%s1 + $0x1e0] sm:$0xf]
        %v3436 = vld [vmem:[%s1 + $0x1e4] sm:$0xf]
        %v3437 = vpack.c.bf16 %v3426, %v3425
        %v3438 = vpack.c.bf16 %v3428, %v3427
        %v3439 = vpack.c.bf16 %v3430, %v3429
        %v3440 = vpack.c.bf16 %v3432, %v3431
        %v3445 = vunpack.c.l.b16 %v3433
        %v3446 = vunpack.c.l.b16 %v3434
        %v3447 = vunpack.c.l.b16 %v3435
        %v3448 = vunpack.c.l.b16 %v3436
        %v3449 = vpack.c.b16 %v3446, %v3445
        %v3450 = vpack.c.b16 %v3448, %v3447
        %v3454 = vsel %vm576, %v3437, 0
        %v3457 = vsel %vm576, %v3438, 0
        %v3460 = vsel %vm576, %v3439, 0
        %v3463 = vsel %vm576, %v3440, 0
        %3465 = vmatprep.subr.bf16.mxu0 0
        %3466 = vmatpush1.bf16.msra.mxu0 0
        %3467 = vmatprep.subr.bf16.mxu0 0
        %3468 = vmatpush1.bf16.msra.mxu0 0
        %3469 = vmatprep.subr.bf16.mxu0 0
        %3470 = vmatpush1.bf16.msra.mxu0 0
        %3471 = vmatprep.subr.bf16.mxu0 0
        %3472 = vmatpush1.bf16.msra.mxu0 0
        %3473 = vmatprep.subr.bf16.mxu0 0
        %3474 = vmatpush1.bf16.msra.mxu0 0
        %3475 = vmatprep.subr.bf16.mxu0 0
        %3476 = vmatpush1.bf16.msra.mxu0 0
        %3477 = vmatprep.subr.bf16.mxu0 0
        %3478 = vmatpush1.bf16.msra.mxu0 %v3450
        %3479 = vmatprep.subr.bf16.mxu0 0
        %3480 = vmatpush1.bf16.msra.mxu0 %v3449
        %3481 = vmatprep.subr.bf16.mxu0 0
        %3482 = vmatpush2.bf16.msra.mxu0 0
        %3483 = vmatprep.subr.bf16.mxu0 0
        %3484 = vmatpush2.bf16.msra.mxu0 0
        %3485 = vmatprep.subr.bf16.mxu0 0
        %3486 = vmatpush2.bf16.msra.mxu0 0
        %3487 = vmatprep.subr.bf16.mxu0 0
        %3488 = vmatpush2.bf16.msra.mxu0 0
        %3489 = vmatprep.subr.bf16.mxu0 0
        %3490 = vmatpush2.bf16.msra.mxu0 0
        %3491 = vmatprep.subr.bf16.mxu0 0
        %3492 = vmatpush2.bf16.msra.mxu0 0
        %3493 = vmatprep.subr.bf16.mxu0 0
        %3494 = vmatpush2.bf16.msra.mxu0 0
        %3495 = vmatprep.subr.bf16.mxu0 0
        %3496 = vmatpush2.bf16.msra.mxu0 0
        %3497 = vmatprep.mubr.bf16.mxu0 0
        %3498 = vmatmul.mubr.bf16.gmra.mxu0 %v3454
        %v3499 = vpop.f32.mrf.mxu0
        %v3500 = vadd.f32 0.0, %v3499
        %v3501 = vpop.f32.mrf.mxu0
        %v3502 = vpop.f32.mrf.mxu0
        %v3503 = vadd.f32 0.0, %v3502
        %v3504 = vpop.f32.mrf.mxu0
        %3505 = vmatprep.mubr.bf16.mxu0 0
        %3506 = vmatmul.mubr.bf16.gmra.mxu0 %v3457
        %v3507 = vpop.f32.mrf.mxu0
        %v3508 = vadd.f32 0.0, %v3507
        %v3509 = vpop.f32.mrf.mxu0
        %v3510 = vpop.f32.mrf.mxu0
        %v3511 = vadd.f32 0.0, %v3510
        %v3512 = vpop.f32.mrf.mxu0
        %3513 = vmatprep.mubr.bf16.mxu0 0
        %3514 = vmatmul.mubr.bf16.gmra.mxu0 %v3460
        %v3515 = vpop.f32.mrf.mxu0
        %v3516 = vadd.f32 0.0, %v3515
        %v3517 = vpop.f32.mrf.mxu0
        %v3518 = vpop.f32.mrf.mxu0
        %v3519 = vadd.f32 0.0, %v3518
        %v3520 = vpop.f32.mrf.mxu0
        %3521 = vmatprep.mubr.bf16.mxu0 0
        %3522 = vmatmul.mubr.bf16.gmra.mxu0 %v3463
        %v3523 = vpop.f32.mrf.mxu0
        %v3524 = vadd.f32 0.0, %v3523
        %v3525 = vpop.f32.mrf.mxu0
        %v3526 = vpop.f32.mrf.mxu0
        %v3527 = vadd.f32 0.0, %v3526
        %v3528 = vpop.f32.mrf.mxu0
        %3529 = vdwg.mxu0
        %v3530 = vadd.f32 %v3417, %v3500
        %v3531 = vadd.f32 %v3418, %v3503
        %v3532 = vadd.f32 %v3419, %v3508
        %v3533 = vadd.f32 %v3420, %v3511
        %v3534 = vadd.f32 %v3421, %v3516
        %v3535 = vadd.f32 %v3422, %v3519
        %v3536 = vadd.f32 %v3423, %v3524
        %v3537 = vadd.f32 %v3424, %v3527
        %v3538 = vsel %vm284, %v2865, 0.0
        %v3539 = vsel %vm285, %v2864, 0.0
        %v3540 = vsel %vm286, %v2863, 0.0
        %v3541 = vsel %vm287, %v2862, 0.0
        %v3542 = vsel %vm288, %v2861, 0.0
        %v3543 = vsel %vm289, %v2860, 0.0
        %v3544 = vsel %vm290, %v2867, 0.0
        %v3545 = vsel %vm291, %v2866, 0.0
        %v3546 = vld [vmem:[%s1 + $0x1e8] sm:$0xf]
        %v3547 = vld [vmem:[%s1 + $0x1ec] sm:$0xf]
        %v3548 = vld [vmem:[%s1 + $0x1f0] sm:$0xf]
        %v3549 = vld [vmem:[%s1 + $0x1f4] sm:$0xf]
        %v3550 = vpack.c.bf16 %v3539, %v3538
        %v3551 = vpack.c.bf16 %v3541, %v3540
        %v3552 = vpack.c.bf16 %v3543, %v3542
        %v3553 = vpack.c.bf16 %v3545, %v3544
        %v3558 = vunpack.c.l.b16 %v3546
        %v3559 = vunpack.c.l.b16 %v3547
        %v3560 = vunpack.c.l.b16 %v3548
        %v3561 = vunpack.c.l.b16 %v3549
        %v3562 = vpack.c.b16 %v3559, %v3558
        %v3563 = vpack.c.b16 %v3561, %v3560
        %v3567 = vsel %vm576, %v3550, 0
        %v3570 = vsel %vm576, %v3551, 0
        %v3573 = vsel %vm576, %v3552, 0
        %v3576 = vsel %vm576, %v3553, 0
        %3578 = vmatprep.subr.bf16.mxu0 0
        %3579 = vmatpush1.bf16.msra.mxu0 0
        %3580 = vmatprep.subr.bf16.mxu0 0
        %3581 = vmatpush1.bf16.msra.mxu0 0
        %3582 = vmatprep.subr.bf16.mxu0 0
        %3583 = vmatpush1.bf16.msra.mxu0 0
        %3584 = vmatprep.subr.bf16.mxu0 0
        %3585 = vmatpush1.bf16.msra.mxu0 0
        %3586 = vmatprep.subr.bf16.mxu0 0
        %3587 = vmatpush1.bf16.msra.mxu0 0
        %3588 = vmatprep.subr.bf16.mxu0 0
        %3589 = vmatpush1.bf16.msra.mxu0 0
        %3590 = vmatprep.subr.bf16.mxu0 0
        %3591 = vmatpush1.bf16.msra.mxu0 %v3563
        %3592 = vmatprep.subr.bf16.mxu0 0
        %3593 = vmatpush1.bf16.msra.mxu0 %v3562
        %3594 = vmatprep.subr.bf16.mxu0 0
        %3595 = vmatpush2.bf16.msra.mxu0 0
        %3596 = vmatprep.subr.bf16.mxu0 0
        %3597 = vmatpush2.bf16.msra.mxu0 0
        %3598 = vmatprep.subr.bf16.mxu0 0
        %3599 = vmatpush2.bf16.msra.mxu0 0
        %3600 = vmatprep.subr.bf16.mxu0 0
        %3601 = vmatpush2.bf16.msra.mxu0 0
        %3602 = vmatprep.subr.bf16.mxu0 0
        %3603 = vmatpush2.bf16.msra.mxu0 0
        %3604 = vmatprep.subr.bf16.mxu0 0
        %3605 = vmatpush2.bf16.msra.mxu0 0
        %3606 = vmatprep.subr.bf16.mxu0 0
        %3607 = vmatpush2.bf16.msra.mxu0 0
        %3608 = vmatprep.subr.bf16.mxu0 0
        %3609 = vmatpush2.bf16.msra.mxu0 0
        %3610 = vmatprep.mubr.bf16.mxu0 0
        %3611 = vmatmul.mubr.bf16.gmra.mxu0 %v3567
        %v3612 = vpop.f32.mrf.mxu0
        %v3613 = vadd.f32 0.0, %v3612
        %v3614 = vpop.f32.mrf.mxu0
        %v3615 = vpop.f32.mrf.mxu0
        %v3616 = vadd.f32 0.0, %v3615
        %v3617 = vpop.f32.mrf.mxu0
        %3618 = vmatprep.mubr.bf16.mxu0 0
        %3619 = vmatmul.mubr.bf16.gmra.mxu0 %v3570
        %v3620 = vpop.f32.mrf.mxu0
        %v3621 = vadd.f32 0.0, %v3620
        %v3622 = vpop.f32.mrf.mxu0
        %v3623 = vpop.f32.mrf.mxu0
        %v3624 = vadd.f32 0.0, %v3623
        %v3625 = vpop.f32.mrf.mxu0
        %3626 = vmatprep.mubr.bf16.mxu0 0
        %3627 = vmatmul.mubr.bf16.gmra.mxu0 %v3573
        %v3628 = vpop.f32.mrf.mxu0
        %v3629 = vadd.f32 0.0, %v3628
        %v3630 = vpop.f32.mrf.mxu0
        %v3631 = vpop.f32.mrf.mxu0
        %v3632 = vadd.f32 0.0, %v3631
        %v3633 = vpop.f32.mrf.mxu0
        %3634 = vmatprep.mubr.bf16.mxu0 0
        %3635 = vmatmul.mubr.bf16.gmra.mxu0 %v3576
        %v3636 = vpop.f32.mrf.mxu0
        %v3637 = vadd.f32 0.0, %v3636
        %v3638 = vpop.f32.mrf.mxu0
        %v3639 = vpop.f32.mrf.mxu0
        %v3640 = vadd.f32 0.0, %v3639
        %v3641 = vpop.f32.mrf.mxu0
        %3642 = vdwg.mxu0
        %v3643 = vadd.f32 %v3530, %v3613
        %v3644 = vadd.f32 %v3531, %v3616
        %v3645 = vadd.f32 %v3532, %v3621
        %v3646 = vadd.f32 %v3533, %v3624
        %v3647 = vadd.f32 %v3534, %v3629
        %v3648 = vadd.f32 %v3535, %v3632
        %v3649 = vadd.f32 %v3536, %v3637
        %v3650 = vadd.f32 %v3537, %v3640
        %v3651 = vld [vmem:[%s3 + $0x28] sm:$0x1]
        %v3652 = vlaneseq
        %v3653 = vshrl.u32 %v3652, 7
        %v3654 = vsub.s32 0, %v3653
        %v3655 = vrot.slane %v3651, %v3654
        %v3656 = vadd.f32 %v3643, %v3655
        %v3657 = vadd.f32 %v3644, %v3655
        %v3658 = vadd.f32 %v3645, %v3655
        %v3659 = vadd.f32 %v3646, %v3655
        %v3660 = vadd.f32 %v3647, %v3655
        %v3661 = vadd.f32 %v3648, %v3655
        %v3662 = vadd.f32 %v3649, %v3655
        %v3663 = vadd.f32 %v3650, %v3655
        %vm3664 = vcmp.ge.f32.partialorder %v3656, 0.0
        %vm3665 = vcmp.ge.f32.partialorder %v3657, 0.0
        %vm3666 = vcmp.ge.f32.partialorder %v3658, 0.0
        %vm3667 = vcmp.ge.f32.partialorder %v3659, 0.0
        %vm3668 = vcmp.ge.f32.partialorder %v3660, 0.0
        %vm3669 = vcmp.ge.f32.partialorder %v3661, 0.0
        %vm3670 = vcmp.ge.f32.partialorder %v3662, 0.0
        %vm3671 = vcmp.ge.f32.partialorder %v3663, 0.0
        %v3672 = vmul.f32 %v3656, 0.1
        %v3673 = vmul.f32 %v3657, 0.1
        %v3674 = vmul.f32 %v3658, 0.1
        %v3675 = vmul.f32 %v3659, 0.1
        %v3676 = vmul.f32 %v3660, 0.1
        %v3677 = vmul.f32 %v3661, 0.1
        %v3678 = vmul.f32 %v3662, 0.1
        %v3679 = vmul.f32 %v3663, 0.1
        %v3680 = vsel %vm3664, %v3656, %v3672
        %v3681 = vsel %vm3665, %v3657, %v3673
        %v3682 = vsel %vm3666, %v3658, %v3674
        %v3683 = vsel %vm3667, %v3659, %v3675
        %v3684 = vsel %vm3668, %v3660, %v3676
        %v3685 = vsel %vm3669, %v3661, %v3677
        %v3686 = vsel %vm3670, %v3662, %v3678
        %v3687 = vsel %vm3671, %v3663, %v3679
        %v3688 = vrot.slane %v3680, 7
        %v3689 = vrot.slane %v3681, 7
        %v3690 = vrot.slane %v3682, 7
        %v3691 = vrot.slane %v3683, 7
        %v3692 = vrot.slane %v3684, 7
        %v3693 = vrot.slane %v3685, 7
        %v3694 = vrot.slane %v3686, 7
        %v3695 = vrot.slane %v3687, 7
        %v3696 = vsel %vm523, %v3694, %v3695
        %v3697 = vsel %vm523, %v3693, %v3694
        %v3698 = vsel %vm523, %v3692, %v3693
        %v3699 = vsel %vm523, %v3691, %v3692
        %v3700 = vsel %vm523, %v3690, %v3691
        %v3701 = vsel %vm523, %v3689, %v3690
        %v3702 = vsel %vm523, %v3688, %v3689
        %v3703 = vsel %vm523, %v3695, %v3688
        %v3704 = vsel %vm244, %v3696, 0.0
        %v3705 = vsel %vm245, %v3703, 0.0
        %v3706 = vsel %vm246, %v3702, 0.0
        %v3707 = vsel %vm247, %v3701, 0.0
        %v3708 = vsel %vm248, %v3700, 0.0
        %v3709 = vsel %vm249, %v3699, 0.0
        %v3710 = vsel %vm250, %v3698, 0.0
        %v3711 = vsel %vm251, %v3697, 0.0
        %v3712 = vld [vmem:[%s1 + $0x1f8] sm:$0xf]
        %v3713 = vld [vmem:[%s1 + $0x1fc] sm:$0xf]
        %v3714 = vld [vmem:[%s1 + $0x200] sm:$0xf]
        %v3715 = vld [vmem:[%s1 + $0x204] sm:$0xf]
        %v3716 = vpack.c.bf16 %v3705, %v3704
        %v3717 = vpack.c.bf16 %v3707, %v3706
        %v3718 = vpack.c.bf16 %v3709, %v3708
        %v3719 = vpack.c.bf16 %v3711, %v3710
        %v3720 = vsel %vm228, %v3687, 0.0
        %v3721 = vsel %vm229, %v3680, 0.0
        %v3722 = vsel %vm230, %v3681, 0.0
        %v3723 = vsel %vm231, %v3682, 0.0
        %v3724 = vsel %vm232, %v3683, 0.0
        %v3725 = vsel %vm233, %v3684, 0.0
        %v3726 = vsel %vm234, %v3685, 0.0
        %v3727 = vsel %vm235, %v3686, 0.0
        %v3728 = vld [vmem:[%s1 + $0x208] sm:$0xf]
        %v3729 = vld [vmem:[%s1 + $0x20c] sm:$0xf]
        %v3730 = vld [vmem:[%s1 + $0x210] sm:$0xf]
        %v3731 = vld [vmem:[%s1 + $0x214] sm:$0xf]
        %v3732 = vpack.c.bf16 %v3721, %v3720
        %v3733 = vpack.c.bf16 %v3723, %v3722
        %v3734 = vpack.c.bf16 %v3725, %v3724
        %v3735 = vpack.c.bf16 %v3727, %v3726
        %v3740 = vunpack.c.l.b16 %v3728
        %v3741 = vunpack.c.l.b16 %v3729
        %v3742 = vunpack.c.l.b16 %v3730
        %v3743 = vunpack.c.l.b16 %v3731
        %v3744 = vpack.c.b16 %v3741, %v3740
        %v3745 = vpack.c.b16 %v3743, %v3742
        %v3749 = vsel %vm576, %v3732, 0
        %v3752 = vsel %vm576, %v3733, 0
        %v3755 = vsel %vm576, %v3734, 0
        %v3758 = vsel %vm576, %v3735, 0
        %3760 = vmatprep.subr.bf16.mxu0 0
        %3761 = vmatpush1.bf16.msra.mxu0 0
        %3762 = vmatprep.subr.bf16.mxu0 0
        %3763 = vmatpush1.bf16.msra.mxu0 0
        %3764 = vmatprep.subr.bf16.mxu0 0
        %3765 = vmatpush1.bf16.msra.mxu0 0
        %3766 = vmatprep.subr.bf16.mxu0 0
        %3767 = vmatpush1.bf16.msra.mxu0 0
        %3768 = vmatprep.subr.bf16.mxu0 0
        %3769 = vmatpush1.bf16.msra.mxu0 0
        %3770 = vmatprep.subr.bf16.mxu0 0
        %3771 = vmatpush1.bf16.msra.mxu0 0
        %3772 = vmatprep.subr.bf16.mxu0 0
        %3773 = vmatpush1.bf16.msra.mxu0 %v3745
        %3774 = vmatprep.subr.bf16.mxu0 0
        %3775 = vmatpush1.bf16.msra.mxu0 %v3744
        %3776 = vmatprep.subr.bf16.mxu0 0
        %3777 = vmatpush2.bf16.msra.mxu0 0
        %3778 = vmatprep.subr.bf16.mxu0 0
        %3779 = vmatpush2.bf16.msra.mxu0 0
        %3780 = vmatprep.subr.bf16.mxu0 0
        %3781 = vmatpush2.bf16.msra.mxu0 0
        %3782 = vmatprep.subr.bf16.mxu0 0
        %3783 = vmatpush2.bf16.msra.mxu0 0
        %3784 = vmatprep.subr.bf16.mxu0 0
        %3785 = vmatpush2.bf16.msra.mxu0 0
        %3786 = vmatprep.subr.bf16.mxu0 0
        %3787 = vmatpush2.bf16.msra.mxu0 0
        %3788 = vmatprep.subr.bf16.mxu0 0
        %3789 = vmatpush2.bf16.msra.mxu0 0
        %3790 = vmatprep.subr.bf16.mxu0 0
        %3791 = vmatpush2.bf16.msra.mxu0 0
        %3792 = vmatprep.mubr.bf16.mxu0 0
        %3793 = vmatmul.mubr.bf16.gmra.mxu0 %v3749
        %v3794 = vpop.f32.mrf.mxu0
        %v3795 = vadd.f32 0.0, %v3794
        %v3796 = vpop.f32.mrf.mxu0
        %v3797 = vpop.f32.mrf.mxu0
        %v3798 = vadd.f32 0.0, %v3797
        %v3799 = vpop.f32.mrf.mxu0
        %3800 = vmatprep.mubr.bf16.mxu0 0
        %3801 = vmatmul.mubr.bf16.gmra.mxu0 %v3752
        %v3802 = vpop.f32.mrf.mxu0
        %v3803 = vadd.f32 0.0, %v3802
        %v3804 = vpop.f32.mrf.mxu0
        %v3805 = vpop.f32.mrf.mxu0
        %v3806 = vadd.f32 0.0, %v3805
        %v3807 = vpop.f32.mrf.mxu0
        %3808 = vmatprep.mubr.bf16.mxu0 0
        %3809 = vmatmul.mubr.bf16.gmra.mxu0 %v3755
        %v3810 = vpop.f32.mrf.mxu0
        %v3811 = vadd.f32 0.0, %v3810
        %v3812 = vpop.f32.mrf.mxu0
        %v3813 = vpop.f32.mrf.mxu0
        %v3814 = vadd.f32 0.0, %v3813
        %v3815 = vpop.f32.mrf.mxu0
        %3816 = vmatprep.mubr.bf16.mxu0 0
        %3817 = vmatmul.mubr.bf16.gmra.mxu0 %v3758
        %v3818 = vpop.f32.mrf.mxu0
        %v3819 = vadd.f32 0.0, %v3818
        %v3820 = vpop.f32.mrf.mxu0
        %v3821 = vpop.f32.mrf.mxu0
        %v3822 = vadd.f32 0.0, %v3821
        %v3823 = vpop.f32.mrf.mxu0
        %3824 = vdwg.mxu0
        %v3829 = vunpack.c.l.b16 %v3712
        %v3830 = vunpack.c.l.b16 %v3713
        %v3831 = vunpack.c.l.b16 %v3714
        %v3832 = vunpack.c.l.b16 %v3715
        %v3833 = vpack.c.b16 %v3830, %v3829
        %v3834 = vpack.c.b16 %v3832, %v3831
        %v3838 = vsel %vm576, %v3716, 0
        %v3841 = vsel %vm576, %v3717, 0
        %v3844 = vsel %vm576, %v3718, 0
        %v3847 = vsel %vm576, %v3719, 0
        %3849 = vmatprep.subr.bf16.mxu0 0
        %3850 = vmatpush1.bf16.msra.mxu0 0
        %3851 = vmatprep.subr.bf16.mxu0 0
        %3852 = vmatpush1.bf16.msra.mxu0 0
        %3853 = vmatprep.subr.bf16.mxu0 0
        %3854 = vmatpush1.bf16.msra.mxu0 0
        %3855 = vmatprep.subr.bf16.mxu0 0
        %3856 = vmatpush1.bf16.msra.mxu0 0
        %3857 = vmatprep.subr.bf16.mxu0 0
        %3858 = vmatpush1.bf16.msra.mxu0 0
        %3859 = vmatprep.subr.bf16.mxu0 0
        %3860 = vmatpush1.bf16.msra.mxu0 0
        %3861 = vmatprep.subr.bf16.mxu0 0
        %3862 = vmatpush1.bf16.msra.mxu0 %v3834
        %3863 = vmatprep.subr.bf16.mxu0 0
        %3864 = vmatpush1.bf16.msra.mxu0 %v3833
        %3865 = vmatprep.subr.bf16.mxu0 0
        %3866 = vmatpush2.bf16.msra.mxu0 0
        %3867 = vmatprep.subr.bf16.mxu0 0
        %3868 = vmatpush2.bf16.msra.mxu0 0
        %3869 = vmatprep.subr.bf16.mxu0 0
        %3870 = vmatpush2.bf16.msra.mxu0 0
        %3871 = vmatprep.subr.bf16.mxu0 0
        %3872 = vmatpush2.bf16.msra.mxu0 0
        %3873 = vmatprep.subr.bf16.mxu0 0
        %3874 = vmatpush2.bf16.msra.mxu0 0
        %3875 = vmatprep.subr.bf16.mxu0 0
        %3876 = vmatpush2.bf16.msra.mxu0 0
        %3877 = vmatprep.subr.bf16.mxu0 0
        %3878 = vmatpush2.bf16.msra.mxu0 0
        %3879 = vmatprep.subr.bf16.mxu0 0
        %3880 = vmatpush2.bf16.msra.mxu0 0
        %3881 = vmatprep.mubr.bf16.mxu0 0
        %3882 = vmatmul.mubr.bf16.gmra.mxu0 %v3838
        %v3883 = vpop.f32.mrf.mxu0
        %v3884 = vadd.f32 %v3795, %v3883
        %v3885 = vpop.f32.mrf.mxu0
        %v3886 = vpop.f32.mrf.mxu0
        %v3887 = vadd.f32 %v3798, %v3886
        %v3888 = vpop.f32.mrf.mxu0
        %3889 = vmatprep.mubr.bf16.mxu0 0
        %3890 = vmatmul.mubr.bf16.gmra.mxu0 %v3841
        %v3891 = vpop.f32.mrf.mxu0
        %v3892 = vadd.f32 %v3803, %v3891
        %v3893 = vpop.f32.mrf.mxu0
        %v3894 = vpop.f32.mrf.mxu0
        %v3895 = vadd.f32 %v3806, %v3894
        %v3896 = vpop.f32.mrf.mxu0
        %3897 = vmatprep.mubr.bf16.mxu0 0
        %3898 = vmatmul.mubr.bf16.gmra.mxu0 %v3844
        %v3899 = vpop.f32.mrf.mxu0
        %v3900 = vadd.f32 %v3811, %v3899
        %v3901 = vpop.f32.mrf.mxu0
        %v3902 = vpop.f32.mrf.mxu0
        %v3903 = vadd.f32 %v3814, %v3902
        %v3904 = vpop.f32.mrf.mxu0
        %3905 = vmatprep.mubr.bf16.mxu0 0
        %3906 = vmatmul.mubr.bf16.gmra.mxu0 %v3847
        %v3907 = vpop.f32.mrf.mxu0
        %v3908 = vadd.f32 %v3819, %v3907
        %v3909 = vpop.f32.mrf.mxu0
        %v3910 = vpop.f32.mrf.mxu0
        %v3911 = vadd.f32 %v3822, %v3910
        %v3912 = vpop.f32.mrf.mxu0
        %3913 = vdwg.mxu0
        %v3914 = vrot.slane %v3680, 1
        %v3915 = vrot.slane %v3681, 1
        %v3916 = vrot.slane %v3682, 1
        %v3917 = vrot.slane %v3683, 1
        %v3918 = vrot.slane %v3684, 1
        %v3919 = vrot.slane %v3685, 1
        %v3920 = vrot.slane %v3686, 1
        %v3921 = vrot.slane %v3687, 1
        %v3922 = vsel %vm751, %v3920, %v3921
        %v3923 = vsel %vm751, %v3919, %v3920
        %v3924 = vsel %vm751, %v3918, %v3919
        %v3925 = vsel %vm751, %v3917, %v3918
        %v3926 = vsel %vm751, %v3916, %v3917
        %v3927 = vsel %vm751, %v3915, %v3916
        %v3928 = vsel %vm751, %v3914, %v3915
        %v3929 = vsel %vm751, %v3921, %v3914
        %v3930 = vsel %vm260, %v3929, 0.0
        %v3931 = vsel %vm261, %v3928, 0.0
        %v3932 = vsel %vm262, %v3927, 0.0
        %v3933 = vsel %vm263, %v3926, 0.0
        %v3934 = vsel %vm264, %v3925, 0.0
        %v3935 = vsel %vm265, %v3924, 0.0
        %v3936 = vsel %vm266, %v3923, 0.0
        %v3937 = vsel %vm267, %v3922, 0.0
        %v3938 = vld [vmem:[%s1 + $0x218] sm:$0xf]
        %v3939 = vld [vmem:[%s1 + $0x21c] sm:$0xf]
        %v3940 = vld [vmem:[%s1 + $0x220] sm:$0xf]
        %v3941 = vld [vmem:[%s1 + $0x224] sm:$0xf]
        %v3942 = vpack.c.bf16 %v3931, %v3930
        %v3943 = vpack.c.bf16 %v3933, %v3932
        %v3944 = vpack.c.bf16 %v3935, %v3934
        %v3945 = vpack.c.bf16 %v3937, %v3936
        %v3950 = vunpack.c.l.b16 %v3938
        %v3951 = vunpack.c.l.b16 %v3939
        %v3952 = vunpack.c.l.b16 %v3940
        %v3953 = vunpack.c.l.b16 %v3941
        %v3954 = vpack.c.b16 %v3951, %v3950
        %v3955 = vpack.c.b16 %v3953, %v3952
        %v3959 = vsel %vm576, %v3942, 0
        %v3962 = vsel %vm576, %v3943, 0
        %v3965 = vsel %vm576, %v3944, 0
        %v3968 = vsel %vm576, %v3945, 0
        %3970 = vmatprep.subr.bf16.mxu0 0
        %3971 = vmatpush1.bf16.msra.mxu0 0
        %3972 = vmatprep.subr.bf16.mxu0 0
        %3973 = vmatpush1.bf16.msra.mxu0 0
        %3974 = vmatprep.subr.bf16.mxu0 0
        %3975 = vmatpush1.bf16.msra.mxu0 0
        %3976 = vmatprep.subr.bf16.mxu0 0
        %3977 = vmatpush1.bf16.msra.mxu0 0
        %3978 = vmatprep.subr.bf16.mxu0 0
        %3979 = vmatpush1.bf16.msra.mxu0 0
        %3980 = vmatprep.subr.bf16.mxu0 0
        %3981 = vmatpush1.bf16.msra.mxu0 0
        %3982 = vmatprep.subr.bf16.mxu0 0
        %3983 = vmatpush1.bf16.msra.mxu0 %v3955
        %3984 = vmatprep.subr.bf16.mxu0 0
        %3985 = vmatpush1.bf16.msra.mxu0 %v3954
        %3986 = vmatprep.subr.bf16.mxu0 0
        %3987 = vmatpush2.bf16.msra.mxu0 0
        %3988 = vmatprep.subr.bf16.mxu0 0
        %3989 = vmatpush2.bf16.msra.mxu0 0
        %3990 = vmatprep.subr.bf16.mxu0 0
        %3991 = vmatpush2.bf16.msra.mxu0 0
        %3992 = vmatprep.subr.bf16.mxu0 0
        %3993 = vmatpush2.bf16.msra.mxu0 0
        %3994 = vmatprep.subr.bf16.mxu0 0
        %3995 = vmatpush2.bf16.msra.mxu0 0
        %3996 = vmatprep.subr.bf16.mxu0 0
        %3997 = vmatpush2.bf16.msra.mxu0 0
        %3998 = vmatprep.subr.bf16.mxu0 0
        %3999 = vmatpush2.bf16.msra.mxu0 0
        %4000 = vmatprep.subr.bf16.mxu0 0
        %4001 = vmatpush2.bf16.msra.mxu0 0
        %4002 = vmatprep.mubr.bf16.mxu0 0
        %4003 = vmatmul.mubr.bf16.gmra.mxu0 %v3959
        %v4004 = vpop.f32.mrf.mxu0
        %v4005 = vadd.f32 0.0, %v4004
        %v4006 = vpop.f32.mrf.mxu0
        %v4007 = vpop.f32.mrf.mxu0
        %v4008 = vadd.f32 0.0, %v4007
        %v4009 = vpop.f32.mrf.mxu0
        %4010 = vmatprep.mubr.bf16.mxu0 0
        %4011 = vmatmul.mubr.bf16.gmra.mxu0 %v3962
        %v4012 = vpop.f32.mrf.mxu0
        %v4013 = vadd.f32 0.0, %v4012
        %v4014 = vpop.f32.mrf.mxu0
        %v4015 = vpop.f32.mrf.mxu0
        %v4016 = vadd.f32 0.0, %v4015
        %v4017 = vpop.f32.mrf.mxu0
        %4018 = vmatprep.mubr.bf16.mxu0 0
        %4019 = vmatmul.mubr.bf16.gmra.mxu0 %v3965
        %v4020 = vpop.f32.mrf.mxu0
        %v4021 = vadd.f32 0.0, %v4020
        %v4022 = vpop.f32.mrf.mxu0
        %v4023 = vpop.f32.mrf.mxu0
        %v4024 = vadd.f32 0.0, %v4023
        %v4025 = vpop.f32.mrf.mxu0
        %4026 = vmatprep.mubr.bf16.mxu0 0
        %4027 = vmatmul.mubr.bf16.gmra.mxu0 %v3968
        %v4028 = vpop.f32.mrf.mxu0
        %v4029 = vadd.f32 0.0, %v4028
        %v4030 = vpop.f32.mrf.mxu0
        %v4031 = vpop.f32.mrf.mxu0
        %v4032 = vadd.f32 0.0, %v4031
        %v4033 = vpop.f32.mrf.mxu0
        %4034 = vdwg.mxu0
        %v4035 = vadd.f32 %v3884, %v4005
        %v4036 = vadd.f32 %v3887, %v4008
        %v4037 = vadd.f32 %v3892, %v4013
        %v4038 = vadd.f32 %v3895, %v4016
        %v4039 = vadd.f32 %v3900, %v4021
        %v4040 = vadd.f32 %v3903, %v4024
        %v4041 = vadd.f32 %v3908, %v4029
        %v4042 = vadd.f32 %v3911, %v4032
        %v4043 = vsel %vm236, %v3703, 0.0
        %v4044 = vsel %vm237, %v3702, 0.0
        %v4045 = vsel %vm238, %v3701, 0.0
        %v4046 = vsel %vm239, %v3700, 0.0
        %v4047 = vsel %vm240, %v3699, 0.0
        %v4048 = vsel %vm241, %v3698, 0.0
        %v4049 = vsel %vm242, %v3697, 0.0
        %v4050 = vsel %vm243, %v3696, 0.0
        %v4051 = vld [vmem:[%s1 + $0x228] sm:$0xf]
        %v4052 = vld [vmem:[%s1 + $0x22c] sm:$0xf]
        %v4053 = vld [vmem:[%s1 + $0x230] sm:$0xf]
        %v4054 = vld [vmem:[%s1 + $0x234] sm:$0xf]
        %v4055 = vpack.c.bf16 %v4044, %v4043
        %v4056 = vpack.c.bf16 %v4046, %v4045
        %v4057 = vpack.c.bf16 %v4048, %v4047
        %v4058 = vpack.c.bf16 %v4050, %v4049
        %v4063 = vunpack.c.l.b16 %v4051
        %v4064 = vunpack.c.l.b16 %v4052
        %v4065 = vunpack.c.l.b16 %v4053
        %v4066 = vunpack.c.l.b16 %v4054
        %v4067 = vpack.c.b16 %v4064, %v4063
        %v4068 = vpack.c.b16 %v4066, %v4065
        %v4072 = vsel %vm576, %v4055, 0
        %v4075 = vsel %vm576, %v4056, 0
        %v4078 = vsel %vm576, %v4057, 0
        %v4081 = vsel %vm576, %v4058, 0
        %4083 = vmatprep.subr.bf16.mxu0 0
        %4084 = vmatpush1.bf16.msra.mxu0 0
        %4085 = vmatprep.subr.bf16.mxu0 0
        %4086 = vmatpush1.bf16.msra.mxu0 0
        %4087 = vmatprep.subr.bf16.mxu0 0
        %4088 = vmatpush1.bf16.msra.mxu0 0
        %4089 = vmatprep.subr.bf16.mxu0 0
        %4090 = vmatpush1.bf16.msra.mxu0 0
        %4091 = vmatprep.subr.bf16.mxu0 0
        %4092 = vmatpush1.bf16.msra.mxu0 0
        %4093 = vmatprep.subr.bf16.mxu0 0
        %4094 = vmatpush1.bf16.msra.mxu0 0
        %4095 = vmatprep.subr.bf16.mxu0 0
        %4096 = vmatpush1.bf16.msra.mxu0 %v4068
        %4097 = vmatprep.subr.bf16.mxu0 0
        %4098 = vmatpush1.bf16.msra.mxu0 %v4067
        %4099 = vmatprep.subr.bf16.mxu0 0
        %4100 = vmatpush2.bf16.msra.mxu0 0
        %4101 = vmatprep.subr.bf16.mxu0 0
        %4102 = vmatpush2.bf16.msra.mxu0 0
        %4103 = vmatprep.subr.bf16.mxu0 0
        %4104 = vmatpush2.bf16.msra.mxu0 0
        %4105 = vmatprep.subr.bf16.mxu0 0
        %4106 = vmatpush2.bf16.msra.mxu0 0
        %4107 = vmatprep.subr.bf16.mxu0 0
        %4108 = vmatpush2.bf16.msra.mxu0 0
        %4109 = vmatprep.subr.bf16.mxu0 0
        %4110 = vmatpush2.bf16.msra.mxu0 0
        %4111 = vmatprep.subr.bf16.mxu0 0
        %4112 = vmatpush2.bf16.msra.mxu0 0
        %4113 = vmatprep.subr.bf16.mxu0 0
        %4114 = vmatpush2.bf16.msra.mxu0 0
        %4115 = vmatprep.mubr.bf16.mxu0 0
        %4116 = vmatmul.mubr.bf16.gmra.mxu0 %v4072
        %v4117 = vpop.f32.mrf.mxu0
        %v4118 = vadd.f32 0.0, %v4117
        %v4119 = vpop.f32.mrf.mxu0
        %v4120 = vpop.f32.mrf.mxu0
        %v4121 = vadd.f32 0.0, %v4120
        %v4122 = vpop.f32.mrf.mxu0
        %4123 = vmatprep.mubr.bf16.mxu0 0
        %4124 = vmatmul.mubr.bf16.gmra.mxu0 %v4075
        %v4125 = vpop.f32.mrf.mxu0
        %v4126 = vadd.f32 0.0, %v4125
        %v4127 = vpop.f32.mrf.mxu0
        %v4128 = vpop.f32.mrf.mxu0
        %v4129 = vadd.f32 0.0, %v4128
        %v4130 = vpop.f32.mrf.mxu0
        %4131 = vmatprep.mubr.bf16.mxu0 0
        %4132 = vmatmul.mubr.bf16.gmra.mxu0 %v4078
        %v4133 = vpop.f32.mrf.mxu0
        %v4134 = vadd.f32 0.0, %v4133
        %v4135 = vpop.f32.mrf.mxu0
        %v4136 = vpop.f32.mrf.mxu0
        %v4137 = vadd.f32 0.0, %v4136
        %v4138 = vpop.f32.mrf.mxu0
        %4139 = vmatprep.mubr.bf16.mxu0 0
        %4140 = vmatmul.mubr.bf16.gmra.mxu0 %v4081
        %v4141 = vpop.f32.mrf.mxu0
        %v4142 = vadd.f32 0.0, %v4141
        %v4143 = vpop.f32.mrf.mxu0
        %v4144 = vpop.f32.mrf.mxu0
        %v4145 = vadd.f32 0.0, %v4144
        %v4146 = vpop.f32.mrf.mxu0
        %4147 = vdwg.mxu0
        %v4148 = vadd.f32 %v4035, %v4118
        %v4149 = vadd.f32 %v4036, %v4121
        %v4150 = vadd.f32 %v4037, %v4126
        %v4151 = vadd.f32 %v4038, %v4129
        %v4152 = vadd.f32 %v4039, %v4134
        %v4153 = vadd.f32 %v4040, %v4137
        %v4154 = vadd.f32 %v4041, %v4142
        %v4155 = vadd.f32 %v4042, %v4145
        %v4156 = vld [vmem:[%s1 + $0x238] sm:$0xf]
        %v4157 = vld [vmem:[%s1 + $0x23c] sm:$0xf]
        %v4158 = vld [vmem:[%s1 + $0x240] sm:$0xf]
        %v4159 = vld [vmem:[%s1 + $0x244] sm:$0xf]
        %v4160 = vpack.c.bf16 %v3681, %v3680
        %v4161 = vpack.c.bf16 %v3683, %v3682
        %v4162 = vpack.c.bf16 %v3685, %v3684
        %v4163 = vpack.c.bf16 %v3687, %v3686
        %v4168 = vunpack.c.l.b16 %v4156
        %v4169 = vunpack.c.l.b16 %v4157
        %v4170 = vunpack.c.l.b16 %v4158
        %v4171 = vunpack.c.l.b16 %v4159
        %v4172 = vpack.c.b16 %v4169, %v4168
        %v4173 = vpack.c.b16 %v4171, %v4170
        %v4177 = vsel %vm576, %v4160, 0
        %v4180 = vsel %vm576, %v4161, 0
        %v4183 = vsel %vm576, %v4162, 0
        %v4186 = vsel %vm576, %v4163, 0
        %4188 = vmatprep.subr.bf16.mxu0 0
        %4189 = vmatpush1.bf16.msra.mxu0 0
        %4190 = vmatprep.subr.bf16.mxu0 0
        %4191 = vmatpush1.bf16.msra.mxu0 0
        %4192 = vmatprep.subr.bf16.mxu0 0
        %4193 = vmatpush1.bf16.msra.mxu0 0
        %4194 = vmatprep.subr.bf16.mxu0 0
        %4195 = vmatpush1.bf16.msra.mxu0 0
        %4196 = vmatprep.subr.bf16.mxu0 0
        %4197 = vmatpush1.bf16.msra.mxu0 0
        %4198 = vmatprep.subr.bf16.mxu0 0
        %4199 = vmatpush1.bf16.msra.mxu0 0
        %4200 = vmatprep.subr.bf16.mxu0 0
        %4201 = vmatpush1.bf16.msra.mxu0 %v4173
        %4202 = vmatprep.subr.bf16.mxu0 0
        %4203 = vmatpush1.bf16.msra.mxu0 %v4172
        %4204 = vmatprep.subr.bf16.mxu0 0
        %4205 = vmatpush2.bf16.msra.mxu0 0
        %4206 = vmatprep.subr.bf16.mxu0 0
        %4207 = vmatpush2.bf16.msra.mxu0 0
        %4208 = vmatprep.subr.bf16.mxu0 0
        %4209 = vmatpush2.bf16.msra.mxu0 0
        %4210 = vmatprep.subr.bf16.mxu0 0
        %4211 = vmatpush2.bf16.msra.mxu0 0
        %4212 = vmatprep.subr.bf16.mxu0 0
        %4213 = vmatpush2.bf16.msra.mxu0 0
        %4214 = vmatprep.subr.bf16.mxu0 0
        %4215 = vmatpush2.bf16.msra.mxu0 0
        %4216 = vmatprep.subr.bf16.mxu0 0
        %4217 = vmatpush2.bf16.msra.mxu0 0
        %4218 = vmatprep.subr.bf16.mxu0 0
        %4219 = vmatpush2.bf16.msra.mxu0 0
        %4220 = vmatprep.mubr.bf16.mxu0 0
        %4221 = vmatmul.mubr.bf16.gmra.mxu0 %v4177
        %v4222 = vpop.f32.mrf.mxu0
        %v4223 = vadd.f32 0.0, %v4222
        %v4224 = vpop.f32.mrf.mxu0
        %v4225 = vpop.f32.mrf.mxu0
        %v4226 = vadd.f32 0.0, %v4225
        %v4227 = vpop.f32.mrf.mxu0
        %4228 = vmatprep.mubr.bf16.mxu0 0
        %4229 = vmatmul.mubr.bf16.gmra.mxu0 %v4180
        %v4230 = vpop.f32.mrf.mxu0
        %v4231 = vadd.f32 0.0, %v4230
        %v4232 = vpop.f32.mrf.mxu0
        %v4233 = vpop.f32.mrf.mxu0
        %v4234 = vadd.f32 0.0, %v4233
        %v4235 = vpop.f32.mrf.mxu0
        %4236 = vmatprep.mubr.bf16.mxu0 0
        %4237 = vmatmul.mubr.bf16.gmra.mxu0 %v4183
        %v4238 = vpop.f32.mrf.mxu0
        %v4239 = vadd.f32 0.0, %v4238
        %v4240 = vpop.f32.mrf.mxu0
        %v4241 = vpop.f32.mrf.mxu0
        %v4242 = vadd.f32 0.0, %v4241
        %v4243 = vpop.f32.mrf.mxu0
        %4244 = vmatprep.mubr.bf16.mxu0 0
        %4245 = vmatmul.mubr.bf16.gmra.mxu0 %v4186
        %v4246 = vpop.f32.mrf.mxu0
        %v4247 = vadd.f32 0.0, %v4246
        %v4248 = vpop.f32.mrf.mxu0
        %v4249 = vpop.f32.mrf.mxu0
        %v4250 = vadd.f32 0.0, %v4249
        %v4251 = vpop.f32.mrf.mxu0
        %4252 = vdwg.mxu0
        %v4253 = vadd.f32 %v4148, %v4223
        %v4254 = vadd.f32 %v4149, %v4226
        %v4255 = vadd.f32 %v4150, %v4231
        %v4256 = vadd.f32 %v4151, %v4234
        %v4257 = vadd.f32 %v4152, %v4239
        %v4258 = vadd.f32 %v4153, %v4242
        %v4259 = vadd.f32 %v4154, %v4247
        %v4260 = vadd.f32 %v4155, %v4250
        %v4261 = vsel %vm252, %v3928, 0.0
        %v4262 = vsel %vm253, %v3927, 0.0
        %v4263 = vsel %vm254, %v3926, 0.0
        %v4264 = vsel %vm255, %v3925, 0.0
        %v4265 = vsel %vm256, %v3924, 0.0
        %v4266 = vsel %vm257, %v3923, 0.0
        %v4267 = vsel %vm258, %v3922, 0.0
        %v4268 = vsel %vm259, %v3929, 0.0
        %v4269 = vld [vmem:[%s1 + $0x248] sm:$0xf]
        %v4270 = vld [vmem:[%s1 + $0x24c] sm:$0xf]
        %v4271 = vld [vmem:[%s1 + $0x250] sm:$0xf]
        %v4272 = vld [vmem:[%s1 + $0x254] sm:$0xf]
        %v4273 = vpack.c.bf16 %v4262, %v4261
        %v4274 = vpack.c.bf16 %v4264, %v4263
        %v4275 = vpack.c.bf16 %v4266, %v4265
        %v4276 = vpack.c.bf16 %v4268, %v4267
        %v4281 = vunpack.c.l.b16 %v4269
        %v4282 = vunpack.c.l.b16 %v4270
        %v4283 = vunpack.c.l.b16 %v4271
        %v4284 = vunpack.c.l.b16 %v4272
        %v4285 = vpack.c.b16 %v4282, %v4281
        %v4286 = vpack.c.b16 %v4284, %v4283
        %v4290 = vsel %vm576, %v4273, 0
        %v4293 = vsel %vm576, %v4274, 0
        %v4296 = vsel %vm576, %v4275, 0
        %v4299 = vsel %vm576, %v4276, 0
        %4301 = vmatprep.subr.bf16.mxu0 0
        %4302 = vmatpush1.bf16.msra.mxu0 0
        %4303 = vmatprep.subr.bf16.mxu0 0
        %4304 = vmatpush1.bf16.msra.mxu0 0
        %4305 = vmatprep.subr.bf16.mxu0 0
        %4306 = vmatpush1.bf16.msra.mxu0 0
        %4307 = vmatprep.subr.bf16.mxu0 0
        %4308 = vmatpush1.bf16.msra.mxu0 0
        %4309 = vmatprep.subr.bf16.mxu0 0
        %4310 = vmatpush1.bf16.msra.mxu0 0
        %4311 = vmatprep.subr.bf16.mxu0 0
        %4312 = vmatpush1.bf16.msra.mxu0 0
        %4313 = vmatprep.subr.bf16.mxu0 0
        %4314 = vmatpush1.bf16.msra.mxu0 %v4286
        %4315 = vmatprep.subr.bf16.mxu0 0
        %4316 = vmatpush1.bf16.msra.mxu0 %v4285
        %4317 = vmatprep.subr.bf16.mxu0 0
        %4318 = vmatpush2.bf16.msra.mxu0 0
        %4319 = vmatprep.subr.bf16.mxu0 0
        %4320 = vmatpush2.bf16.msra.mxu0 0
        %4321 = vmatprep.subr.bf16.mxu0 0
        %4322 = vmatpush2.bf16.msra.mxu0 0
        %4323 = vmatprep.subr.bf16.mxu0 0
        %4324 = vmatpush2.bf16.msra.mxu0 0
        %4325 = vmatprep.subr.bf16.mxu0 0
        %4326 = vmatpush2.bf16.msra.mxu0 0
        %4327 = vmatprep.subr.bf16.mxu0 0
        %4328 = vmatpush2.bf16.msra.mxu0 0
        %4329 = vmatprep.subr.bf16.mxu0 0
        %4330 = vmatpush2.bf16.msra.mxu0 0
        %4331 = vmatprep.subr.bf16.mxu0 0
        %4332 = vmatpush2.bf16.msra.mxu0 0
        %4333 = vmatprep.mubr.bf16.mxu0 0
        %4334 = vmatmul.mubr.bf16.gmra.mxu0 %v4290
        %v4335 = vpop.f32.mrf.mxu0
        %v4336 = vadd.f32 0.0, %v4335
        %v4337 = vpop.f32.mrf.mxu0
        %v4338 = vpop.f32.mrf.mxu0
        %v4339 = vadd.f32 0.0, %v4338
        %v4340 = vpop.f32.mrf.mxu0
        %4341 = vmatprep.mubr.bf16.mxu0 0
        %4342 = vmatmul.mubr.bf16.gmra.mxu0 %v4293
        %v4343 = vpop.f32.mrf.mxu0
        %v4344 = vadd.f32 0.0, %v4343
        %v4345 = vpop.f32.mrf.mxu0
        %v4346 = vpop.f32.mrf.mxu0
        %v4347 = vadd.f32 0.0, %v4346
        %v4348 = vpop.f32.mrf.mxu0
        %4349 = vmatprep.mubr.bf16.mxu0 0
        %4350 = vmatmul.mubr.bf16.gmra.mxu0 %v4296
        %v4351 = vpop.f32.mrf.mxu0
        %v4352 = vadd.f32 0.0, %v4351
        %v4353 = vpop.f32.mrf.mxu0
        %v4354 = vpop.f32.mrf.mxu0
        %v4355 = vadd.f32 0.0, %v4354
        %v4356 = vpop.f32.mrf.mxu0
        %4357 = vmatprep.mubr.bf16.mxu0 0
        %4358 = vmatmul.mubr.bf16.gmra.mxu0 %v4299
        %v4359 = vpop.f32.mrf.mxu0
        %v4360 = vadd.f32 0.0, %v4359
        %v4361 = vpop.f32.mrf.mxu0
        %v4362 = vpop.f32.mrf.mxu0
        %v4363 = vadd.f32 0.0, %v4362
        %v4364 = vpop.f32.mrf.mxu0
        %4365 = vdwg.mxu0
        %v4366 = vadd.f32 %v4253, %v4336
        %v4367 = vadd.f32 %v4254, %v4339
        %v4368 = vadd.f32 %v4255, %v4344
        %v4369 = vadd.f32 %v4256, %v4347
        %v4370 = vadd.f32 %v4257, %v4352
        %v4371 = vadd.f32 %v4258, %v4355
        %v4372 = vadd.f32 %v4259, %v4360
        %v4373 = vadd.f32 %v4260, %v4363
        %v4374 = vsel %vm276, %v3702, 0.0
        %v4375 = vsel %vm277, %v3701, 0.0
        %v4376 = vsel %vm278, %v3700, 0.0
        %v4377 = vsel %vm279, %v3699, 0.0
        %v4378 = vsel %vm280, %v3698, 0.0
        %v4379 = vsel %vm281, %v3697, 0.0
        %v4380 = vsel %vm282, %v3696, 0.0
        %v4381 = vsel %vm283, %v3703, 0.0
        %v4382 = vld [vmem:[%s1 + $0x258] sm:$0xf]
        %v4383 = vld [vmem:[%s1 + $0x25c] sm:$0xf]
        %v4384 = vld [vmem:[%s1 + $0x260] sm:$0xf]
        %v4385 = vld [vmem:[%s1 + $0x264] sm:$0xf]
        %v4386 = vpack.c.bf16 %v4375, %v4374
        %v4387 = vpack.c.bf16 %v4377, %v4376
        %v4388 = vpack.c.bf16 %v4379, %v4378
        %v4389 = vpack.c.bf16 %v4381, %v4380
        %v4394 = vunpack.c.l.b16 %v4382
        %v4395 = vunpack.c.l.b16 %v4383
        %v4396 = vunpack.c.l.b16 %v4384
        %v4397 = vunpack.c.l.b16 %v4385
        %v4398 = vpack.c.b16 %v4395, %v4394
        %v4399 = vpack.c.b16 %v4397, %v4396
        %v4403 = vsel %vm576, %v4386, 0
        %v4406 = vsel %vm576, %v4387, 0
        %v4409 = vsel %vm576, %v4388, 0
        %v4412 = vsel %vm576, %v4389, 0
        %4414 = vmatprep.subr.bf16.mxu0 0
        %4415 = vmatpush1.bf16.msra.mxu0 0
        %4416 = vmatprep.subr.bf16.mxu0 0
        %4417 = vmatpush1.bf16.msra.mxu0 0
        %4418 = vmatprep.subr.bf16.mxu0 0
        %4419 = vmatpush1.bf16.msra.mxu0 0
        %4420 = vmatprep.subr.bf16.mxu0 0
        %4421 = vmatpush1.bf16.msra.mxu0 0
        %4422 = vmatprep.subr.bf16.mxu0 0
        %4423 = vmatpush1.bf16.msra.mxu0 0
        %4424 = vmatprep.subr.bf16.mxu0 0
        %4425 = vmatpush1.bf16.msra.mxu0 0
        %4426 = vmatprep.subr.bf16.mxu0 0
        %4427 = vmatpush1.bf16.msra.mxu0 %v4399
        %4428 = vmatprep.subr.bf16.mxu0 0
        %4429 = vmatpush1.bf16.msra.mxu0 %v4398
        %4430 = vmatprep.subr.bf16.mxu0 0
        %4431 = vmatpush2.bf16.msra.mxu0 0
        %4432 = vmatprep.subr.bf16.mxu0 0
        %4433 = vmatpush2.bf16.msra.mxu0 0
        %4434 = vmatprep.subr.bf16.mxu0 0
        %4435 = vmatpush2.bf16.msra.mxu0 0
        %4436 = vmatprep.subr.bf16.mxu0 0
        %4437 = vmatpush2.bf16.msra.mxu0 0
        %4438 = vmatprep.subr.bf16.mxu0 0
        %4439 = vmatpush2.bf16.msra.mxu0 0
        %4440 = vmatprep.subr.bf16.mxu0 0
        %4441 = vmatpush2.bf16.msra.mxu0 0
        %4442 = vmatprep.subr.bf16.mxu0 0
        %4443 = vmatpush2.bf16.msra.mxu0 0
        %4444 = vmatprep.subr.bf16.mxu0 0
        %4445 = vmatpush2.bf16.msra.mxu0 0
        %4446 = vmatprep.mubr.bf16.mxu0 0
        %4447 = vmatmul.mubr.bf16.gmra.mxu0 %v4403
        %v4448 = vpop.f32.mrf.mxu0
        %v4449 = vadd.f32 0.0, %v4448
        %v4450 = vpop.f32.mrf.mxu0
        %v4451 = vpop.f32.mrf.mxu0
        %v4452 = vadd.f32 0.0, %v4451
        %v4453 = vpop.f32.mrf.mxu0
        %4454 = vmatprep.mubr.bf16.mxu0 0
        %4455 = vmatmul.mubr.bf16.gmra.mxu0 %v4406
        %v4456 = vpop.f32.mrf.mxu0
        %v4457 = vadd.f32 0.0, %v4456
        %v4458 = vpop.f32.mrf.mxu0
        %v4459 = vpop.f32.mrf.mxu0
        %v4460 = vadd.f32 0.0, %v4459
        %v4461 = vpop.f32.mrf.mxu0
        %4462 = vmatprep.mubr.bf16.mxu0 0
        %4463 = vmatmul.mubr.bf16.gmra.mxu0 %v4409
        %v4464 = vpop.f32.mrf.mxu0
        %v4465 = vadd.f32 0.0, %v4464
        %v4466 = vpop.f32.mrf.mxu0
        %v4467 = vpop.f32.mrf.mxu0
        %v4468 = vadd.f32 0.0, %v4467
        %v4469 = vpop.f32.mrf.mxu0
        %4470 = vmatprep.mubr.bf16.mxu0 0
        %4471 = vmatmul.mubr.bf16.gmra.mxu0 %v4412
        %v4472 = vpop.f32.mrf.mxu0
        %v4473 = vadd.f32 0.0, %v4472
        %v4474 = vpop.f32.mrf.mxu0
        %v4475 = vpop.f32.mrf.mxu0
        %v4476 = vadd.f32 0.0, %v4475
        %v4477 = vpop.f32.mrf.mxu0
        %4478 = vdwg.mxu0
        %v4479 = vadd.f32 %v4366, %v4449
        %v4480 = vadd.f32 %v4367, %v4452
        %v4481 = vadd.f32 %v4368, %v4457
        %v4482 = vadd.f32 %v4369, %v4460
        %v4483 = vadd.f32 %v4370, %v4465
        %v4484 = vadd.f32 %v4371, %v4468
        %v4485 = vadd.f32 %v4372, %v4473
        %v4486 = vadd.f32 %v4373, %v4476
        %v4487 = vsel %vm268, %v3681, 0.0
        %v4488 = vsel %vm269, %v3682, 0.0
        %v4489 = vsel %vm270, %v3683, 0.0
        %v4490 = vsel %vm271, %v3684, 0.0
        %v4491 = vsel %vm272, %v3685, 0.0
        %v4492 = vsel %vm273, %v3686, 0.0
        %v4493 = vsel %vm274, %v3687, 0.0
        %v4494 = vsel %vm275, %v3680, 0.0
        %v4495 = vld [vmem:[%s1 + $0x268] sm:$0xf]
        %v4496 = vld [vmem:[%s1 + $0x26c] sm:$0xf]
        %v4497 = vld [vmem:[%s1 + $0x270] sm:$0xf]
        %v4498 = vld [vmem:[%s1 + $0x274] sm:$0xf]
        %v4499 = vpack.c.bf16 %v4488, %v4487
        %v4500 = vpack.c.bf16 %v4490, %v4489
        %v4501 = vpack.c.bf16 %v4492, %v4491
        %v4502 = vpack.c.bf16 %v4494, %v4493
        %v4507 = vunpack.c.l.b16 %v4495
        %v4508 = vunpack.c.l.b16 %v4496
        %v4509 = vunpack.c.l.b16 %v4497
        %v4510 = vunpack.c.l.b16 %v4498
        %v4511 = vpack.c.b16 %v4508, %v4507
        %v4512 = vpack.c.b16 %v4510, %v4509
        %v4516 = vsel %vm576, %v4499, 0
        %v4519 = vsel %vm576, %v4500, 0
        %v4522 = vsel %vm576, %v4501, 0
        %v4525 = vsel %vm576, %v4502, 0
        %4527 = vmatprep.subr.bf16.mxu0 0
        %4528 = vmatpush1.bf16.msra.mxu0 0
        %4529 = vmatprep.subr.bf16.mxu0 0
        %4530 = vmatpush1.bf16.msra.mxu0 0
        %4531 = vmatprep.subr.bf16.mxu0 0
        %4532 = vmatpush1.bf16.msra.mxu0 0
        %4533 = vmatprep.subr.bf16.mxu0 0
        %4534 = vmatpush1.bf16.msra.mxu0 0
        %4535 = vmatprep.subr.bf16.mxu0 0
        %4536 = vmatpush1.bf16.msra.mxu0 0
        %4537 = vmatprep.subr.bf16.mxu0 0
        %4538 = vmatpush1.bf16.msra.mxu0 0
        %4539 = vmatprep.subr.bf16.mxu0 0
        %4540 = vmatpush1.bf16.msra.mxu0 %v4512
        %4541 = vmatprep.subr.bf16.mxu0 0
        %4542 = vmatpush1.bf16.msra.mxu0 %v4511
        %4543 = vmatprep.subr.bf16.mxu0 0
        %4544 = vmatpush2.bf16.msra.mxu0 0
        %4545 = vmatprep.subr.bf16.mxu0 0
        %4546 = vmatpush2.bf16.msra.mxu0 0
        %4547 = vmatprep.subr.bf16.mxu0 0
        %4548 = vmatpush2.bf16.msra.mxu0 0
        %4549 = vmatprep.subr.bf16.mxu0 0
        %4550 = vmatpush2.bf16.msra.mxu0 0
        %4551 = vmatprep.subr.bf16.mxu0 0
        %4552 = vmatpush2.bf16.msra.mxu0 0
        %4553 = vmatprep.subr.bf16.mxu0 0
        %4554 = vmatpush2.bf16.msra.mxu0 0
        %4555 = vmatprep.subr.bf16.mxu0 0
        %4556 = vmatpush2.bf16.msra.mxu0 0
        %4557 = vmatprep.subr.bf16.mxu0 0
        %4558 = vmatpush2.bf16.msra.mxu0 0
        %4559 = vmatprep.mubr.bf16.mxu0 0
        %4560 = vmatmul.mubr.bf16.gmra.mxu0 %v4516
        %v4561 = vpop.f32.mrf.mxu0
        %v4562 = vadd.f32 0.0, %v4561
        %v4563 = vpop.f32.mrf.mxu0
        %v4564 = vpop.f32.mrf.mxu0
        %v4565 = vadd.f32 0.0, %v4564
        %v4566 = vpop.f32.mrf.mxu0
        %4567 = vmatprep.mubr.bf16.mxu0 0
        %4568 = vmatmul.mubr.bf16.gmra.mxu0 %v4519
        %v4569 = vpop.f32.mrf.mxu0
        %v4570 = vadd.f32 0.0, %v4569
        %v4571 = vpop.f32.mrf.mxu0
        %v4572 = vpop.f32.mrf.mxu0
        %v4573 = vadd.f32 0.0, %v4572
        %v4574 = vpop.f32.mrf.mxu0
        %4575 = vmatprep.mubr.bf16.mxu0 0
        %4576 = vmatmul.mubr.bf16.gmra.mxu0 %v4522
        %v4577 = vpop.f32.mrf.mxu0
        %v4578 = vadd.f32 0.0, %v4577
        %v4579 = vpop.f32.mrf.mxu0
        %v4580 = vpop.f32.mrf.mxu0
        %v4581 = vadd.f32 0.0, %v4580
        %v4582 = vpop.f32.mrf.mxu0
        %4583 = vmatprep.mubr.bf16.mxu0 0
        %4584 = vmatmul.mubr.bf16.gmra.mxu0 %v4525
        %v4585 = vpop.f32.mrf.mxu0
        %v4586 = vadd.f32 0.0, %v4585
        %v4587 = vpop.f32.mrf.mxu0
        %v4588 = vpop.f32.mrf.mxu0
        %v4589 = vadd.f32 0.0, %v4588
        %v4590 = vpop.f32.mrf.mxu0
        %4591 = vdwg.mxu0
        %v4592 = vadd.f32 %v4479, %v4562
        %v4593 = vadd.f32 %v4480, %v4565
        %v4594 = vadd.f32 %v4481, %v4570
        %v4595 = vadd.f32 %v4482, %v4573
        %v4596 = vadd.f32 %v4483, %v4578
        %v4597 = vadd.f32 %v4484, %v4581
        %v4598 = vadd.f32 %v4485, %v4586
        %v4599 = vadd.f32 %v4486, %v4589
        %v4600 = vsel %vm284, %v3927, 0.0
        %v4601 = vsel %vm285, %v3926, 0.0
        %v4602 = vsel %vm286, %v3925, 0.0
        %v4603 = vsel %vm287, %v3924, 0.0
        %v4604 = vsel %vm288, %v3923, 0.0
        %v4605 = vsel %vm289, %v3922, 0.0
        %v4606 = vsel %vm290, %v3929, 0.0
        %v4607 = vsel %vm291, %v3928, 0.0
        %v4608 = vld [vmem:[%s1 + $0x278] sm:$0xf]
        %v4609 = vld [vmem:[%s1 + $0x27c] sm:$0xf]
        %v4610 = vld [vmem:[%s1 + $0x280] sm:$0xf]
        %v4611 = vld [vmem:[%s1 + $0x284] sm:$0xf]
        %v4612 = vpack.c.bf16 %v4601, %v4600
        %v4613 = vpack.c.bf16 %v4603, %v4602
        %v4614 = vpack.c.bf16 %v4605, %v4604
        %v4615 = vpack.c.bf16 %v4607, %v4606
        %v4620 = vunpack.c.l.b16 %v4608
        %v4621 = vunpack.c.l.b16 %v4609
        %v4622 = vunpack.c.l.b16 %v4610
        %v4623 = vunpack.c.l.b16 %v4611
        %v4624 = vpack.c.b16 %v4621, %v4620
        %v4625 = vpack.c.b16 %v4623, %v4622
        %v4629 = vsel %vm576, %v4612, 0
        %v4632 = vsel %vm576, %v4613, 0
        %v4635 = vsel %vm576, %v4614, 0
        %v4638 = vsel %vm576, %v4615, 0
        %4640 = vmatprep.subr.bf16.mxu0 0
        %4641 = vmatpush1.bf16.msra.mxu0 0
        %4642 = vmatprep.subr.bf16.mxu0 0
        %4643 = vmatpush1.bf16.msra.mxu0 0
        %4644 = vmatprep.subr.bf16.mxu0 0
        %4645 = vmatpush1.bf16.msra.mxu0 0
        %4646 = vmatprep.subr.bf16.mxu0 0
        %4647 = vmatpush1.bf16.msra.mxu0 0
        %4648 = vmatprep.subr.bf16.mxu0 0
        %4649 = vmatpush1.bf16.msra.mxu0 0
        %4650 = vmatprep.subr.bf16.mxu0 0
        %4651 = vmatpush1.bf16.msra.mxu0 0
        %4652 = vmatprep.subr.bf16.mxu0 0
        %4653 = vmatpush1.bf16.msra.mxu0 %v4625
        %4654 = vmatprep.subr.bf16.mxu0 0
        %4655 = vmatpush1.bf16.msra.mxu0 %v4624
        %4656 = vmatprep.subr.bf16.mxu0 0
        %4657 = vmatpush2.bf16.msra.mxu0 0
        %4658 = vmatprep.subr.bf16.mxu0 0
        %4659 = vmatpush2.bf16.msra.mxu0 0
        %4660 = vmatprep.subr.bf16.mxu0 0
        %4661 = vmatpush2.bf16.msra.mxu0 0
        %4662 = vmatprep.subr.bf16.mxu0 0
        %4663 = vmatpush2.bf16.msra.mxu0 0
        %4664 = vmatprep.subr.bf16.mxu0 0
        %4665 = vmatpush2.bf16.msra.mxu0 0
        %4666 = vmatprep.subr.bf16.mxu0 0
        %4667 = vmatpush2.bf16.msra.mxu0 0
        %4668 = vmatprep.subr.bf16.mxu0 0
        %4669 = vmatpush2.bf16.msra.mxu0 0
        %4670 = vmatprep.subr.bf16.mxu0 0
        %4671 = vmatpush2.bf16.msra.mxu0 0
        %4672 = vmatprep.mubr.bf16.mxu0 0
        %4673 = vmatmul.mubr.bf16.gmra.mxu0 %v4629
        %v4674 = vpop.f32.mrf.mxu0
        %v4675 = vadd.f32 0.0, %v4674
        %v4676 = vpop.f32.mrf.mxu0
        %v4677 = vpop.f32.mrf.mxu0
        %v4678 = vadd.f32 0.0, %v4677
        %v4679 = vpop.f32.mrf.mxu0
        %4680 = vmatprep.mubr.bf16.mxu0 0
        %4681 = vmatmul.mubr.bf16.gmra.mxu0 %v4632
        %v4682 = vpop.f32.mrf.mxu0
        %v4683 = vadd.f32 0.0, %v4682
        %v4684 = vpop.f32.mrf.mxu0
        %v4685 = vpop.f32.mrf.mxu0
        %v4686 = vadd.f32 0.0, %v4685
        %v4687 = vpop.f32.mrf.mxu0
        %4688 = vmatprep.mubr.bf16.mxu0 0
        %4689 = vmatmul.mubr.bf16.gmra.mxu0 %v4635
        %v4690 = vpop.f32.mrf.mxu0
        %v4691 = vadd.f32 0.0, %v4690
        %v4692 = vpop.f32.mrf.mxu0
        %v4693 = vpop.f32.mrf.mxu0
        %v4694 = vadd.f32 0.0, %v4693
        %v4695 = vpop.f32.mrf.mxu0
        %4696 = vmatprep.mubr.bf16.mxu0 0
        %4697 = vmatmul.mubr.bf16.gmra.mxu0 %v4638
        %v4698 = vpop.f32.mrf.mxu0
        %v4699 = vadd.f32 0.0, %v4698
        %v4700 = vpop.f32.mrf.mxu0
        %v4701 = vpop.f32.mrf.mxu0
        %v4702 = vadd.f32 0.0, %v4701
        %v4703 = vpop.f32.mrf.mxu0
        %4704 = vdwg.mxu0
        %v4705 = vadd.f32 %v4592, %v4675
        %v4706 = vadd.f32 %v4593, %v4678
        %v4707 = vadd.f32 %v4594, %v4683
        %v4708 = vadd.f32 %v4595, %v4686
        %v4709 = vadd.f32 %v4596, %v4691
        %v4710 = vadd.f32 %v4597, %v4694
        %v4711 = vadd.f32 %v4598, %v4699
        %v4712 = vadd.f32 %v4599, %v4702
        %v4713 = vld [vmem:[%s3 + $0x30] sm:$0x1]
        %v4714 = vlaneseq
        %v4715 = vshrl.u32 %v4714, 7
        %v4716 = vsub.s32 0, %v4715
        %v4717 = vrot.slane %v4713, %v4716
        %v4718 = vadd.f32 %v4705, %v4717
        %v4719 = vadd.f32 %v4706, %v4717
        %v4720 = vadd.f32 %v4707, %v4717
        %v4721 = vadd.f32 %v4708, %v4717
        %v4722 = vadd.f32 %v4709, %v4717
        %v4723 = vadd.f32 %v4710, %v4717
        %v4724 = vadd.f32 %v4711, %v4717
        %v4725 = vadd.f32 %v4712, %v4717
        %v4726 = vadd.f32 %v2618, %v4718
        %v4727 = vadd.f32 %v2619, %v4719
        %v4728 = vadd.f32 %v2620, %v4720
        %v4729 = vadd.f32 %v2621, %v4721
        %v4730 = vadd.f32 %v2622, %v4722
        %v4731 = vadd.f32 %v2623, %v4723
        %v4732 = vadd.f32 %v2624, %v4724
        %v4733 = vadd.f32 %v2625, %v4725
        %v4734 = vrot.slane %v4726, 7
        %v4735 = vrot.slane %v4727, 7
        %v4736 = vrot.slane %v4728, 7
        %v4737 = vrot.slane %v4729, 7
        %v4738 = vrot.slane %v4730, 7
        %v4739 = vrot.slane %v4731, 7
        %v4740 = vrot.slane %v4732, 7
        %v4741 = vrot.slane %v4733, 7
        %v4742 = vsel %vm523, %v4740, %v4741
        %v4743 = vsel %vm523, %v4739, %v4740
        %v4744 = vsel %vm523, %v4738, %v4739
        %v4745 = vsel %vm523, %v4737, %v4738
        %v4746 = vsel %vm523, %v4736, %v4737
        %v4747 = vsel %vm523, %v4735, %v4736
        %v4748 = vsel %vm523, %v4734, %v4735
        %v4749 = vsel %vm523, %v4741, %v4734
        %v4750 = vsel %vm244, %v4742, 0.0
        %v4751 = vsel %vm245, %v4749, 0.0
        %v4752 = vsel %vm246, %v4748, 0.0
        %v4753 = vsel %vm247, %v4747, 0.0
        %v4754 = vsel %vm248, %v4746, 0.0
        %v4755 = vsel %vm249, %v4745, 0.0
        %v4756 = vsel %vm250, %v4744, 0.0
        %v4757 = vsel %vm251, %v4743, 0.0
        %v4758 = vld [vmem:[%s1 + $0x288] sm:$0xf]
        %v4759 = vld [vmem:[%s1 + $0x28c] sm:$0xf]
        %v4760 = vld [vmem:[%s1 + $0x290] sm:$0xf]
        %v4761 = vld [vmem:[%s1 + $0x294] sm:$0xf]
        %v4762 = vpack.c.bf16 %v4751, %v4750
        %v4763 = vpack.c.bf16 %v4753, %v4752
        %v4764 = vpack.c.bf16 %v4755, %v4754
        %v4765 = vpack.c.bf16 %v4757, %v4756
        %v4766 = vsel %vm228, %v4733, 0.0
        %v4767 = vsel %vm229, %v4726, 0.0
        %v4768 = vsel %vm230, %v4727, 0.0
        %v4769 = vsel %vm231, %v4728, 0.0
        %v4770 = vsel %vm232, %v4729, 0.0
        %v4771 = vsel %vm233, %v4730, 0.0
        %v4772 = vsel %vm234, %v4731, 0.0
        %v4773 = vsel %vm235, %v4732, 0.0
        %v4774 = vld [vmem:[%s1 + $0x298] sm:$0xf]
        %v4775 = vld [vmem:[%s1 + $0x29c] sm:$0xf]
        %v4776 = vld [vmem:[%s1 + $0x2a0] sm:$0xf]
        %v4777 = vld [vmem:[%s1 + $0x2a4] sm:$0xf]
        %v4778 = vpack.c.bf16 %v4767, %v4766
        %v4779 = vpack.c.bf16 %v4769, %v4768
        %v4780 = vpack.c.bf16 %v4771, %v4770
        %v4781 = vpack.c.bf16 %v4773, %v4772
        %v4786 = vunpack.c.l.b16 %v4774
        %v4787 = vunpack.c.l.b16 %v4775
        %v4788 = vunpack.c.l.b16 %v4776
        %v4789 = vunpack.c.l.b16 %v4777
        %v4790 = vpack.c.b16 %v4787, %v4786
        %v4791 = vpack.c.b16 %v4789, %v4788
        %v4795 = vsel %vm576, %v4778, 0
        %v4798 = vsel %vm576, %v4779, 0
        %v4801 = vsel %vm576, %v4780, 0
        %v4804 = vsel %vm576, %v4781, 0
        %4806 = vmatprep.subr.bf16.mxu0 0
        %4807 = vmatpush1.bf16.msra.mxu0 0
        %4808 = vmatprep.subr.bf16.mxu0 0
        %4809 = vmatpush1.bf16.msra.mxu0 0
        %4810 = vmatprep.subr.bf16.mxu0 0
        %4811 = vmatpush1.bf16.msra.mxu0 0
        %4812 = vmatprep.subr.bf16.mxu0 0
        %4813 = vmatpush1.bf16.msra.mxu0 0
        %4814 = vmatprep.subr.bf16.mxu0 0
        %4815 = vmatpush1.bf16.msra.mxu0 0
        %4816 = vmatprep.subr.bf16.mxu0 0
        %4817 = vmatpush1.bf16.msra.mxu0 0
        %4818 = vmatprep.subr.bf16.mxu0 0
        %4819 = vmatpush1.bf16.msra.mxu0 %v4791
        %4820 = vmatprep.subr.bf16.mxu0 0
        %4821 = vmatpush1.bf16.msra.mxu0 %v4790
        %4822 = vmatprep.subr.bf16.mxu0 0
        %4823 = vmatpush2.bf16.msra.mxu0 0
        %4824 = vmatprep.subr.bf16.mxu0 0
        %4825 = vmatpush2.bf16.msra.mxu0 0
        %4826 = vmatprep.subr.bf16.mxu0 0
        %4827 = vmatpush2.bf16.msra.mxu0 0
        %4828 = vmatprep.subr.bf16.mxu0 0
        %4829 = vmatpush2.bf16.msra.mxu0 0
        %4830 = vmatprep.subr.bf16.mxu0 0
        %4831 = vmatpush2.bf16.msra.mxu0 0
        %4832 = vmatprep.subr.bf16.mxu0 0
        %4833 = vmatpush2.bf16.msra.mxu0 0
        %4834 = vmatprep.subr.bf16.mxu0 0
        %4835 = vmatpush2.bf16.msra.mxu0 0
        %4836 = vmatprep.subr.bf16.mxu0 0
        %4837 = vmatpush2.bf16.msra.mxu0 0
        %4838 = vmatprep.mubr.bf16.mxu0 0
        %4839 = vmatmul.mubr.bf16.gmra.mxu0 %v4795
        %v4840 = vpop.f32.mrf.mxu0
        %v4841 = vadd.f32 0.0, %v4840
        %v4842 = vpop.f32.mrf.mxu0
        %v4843 = vpop.f32.mrf.mxu0
        %v4844 = vadd.f32 0.0, %v4843
        %v4845 = vpop.f32.mrf.mxu0
        %4846 = vmatprep.mubr.bf16.mxu0 0
        %4847 = vmatmul.mubr.bf16.gmra.mxu0 %v4798
        %v4848 = vpop.f32.mrf.mxu0
        %v4849 = vadd.f32 0.0, %v4848
        %v4850 = vpop.f32.mrf.mxu0
        %v4851 = vpop.f32.mrf.mxu0
        %v4852 = vadd.f32 0.0, %v4851
        %v4853 = vpop.f32.mrf.mxu0
        %4854 = vmatprep.mubr.bf16.mxu0 0
        %4855 = vmatmul.mubr.bf16.gmra.mxu0 %v4801
        %v4856 = vpop.f32.mrf.mxu0
        %v4857 = vadd.f32 0.0, %v4856
        %v4858 = vpop.f32.mrf.mxu0
        %v4859 = vpop.f32.mrf.mxu0
        %v4860 = vadd.f32 0.0, %v4859
        %v4861 = vpop.f32.mrf.mxu0
        %4862 = vmatprep.mubr.bf16.mxu0 0
        %4863 = vmatmul.mubr.bf16.gmra.mxu0 %v4804
        %v4864 = vpop.f32.mrf.mxu0
        %v4865 = vadd.f32 0.0, %v4864
        %v4866 = vpop.f32.mrf.mxu0
        %v4867 = vpop.f32.mrf.mxu0
        %v4868 = vadd.f32 0.0, %v4867
        %v4869 = vpop.f32.mrf.mxu0
        %4870 = vdwg.mxu0
        %v4875 = vunpack.c.l.b16 %v4758
        %v4876 = vunpack.c.l.b16 %v4759
        %v4877 = vunpack.c.l.b16 %v4760
        %v4878 = vunpack.c.l.b16 %v4761
        %v4879 = vpack.c.b16 %v4876, %v4875
        %v4880 = vpack.c.b16 %v4878, %v4877
        %v4884 = vsel %vm576, %v4762, 0
        %v4887 = vsel %vm576, %v4763, 0
        %v4890 = vsel %vm576, %v4764, 0
        %v4893 = vsel %vm576, %v4765, 0
        %4895 = vmatprep.subr.bf16.mxu0 0
        %4896 = vmatpush1.bf16.msra.mxu0 0
        %4897 = vmatprep.subr.bf16.mxu0 0
        %4898 = vmatpush1.bf16.msra.mxu0 0
        %4899 = vmatprep.subr.bf16.mxu0 0
        %4900 = vmatpush1.bf16.msra.mxu0 0
        %4901 = vmatprep.subr.bf16.mxu0 0
        %4902 = vmatpush1.bf16.msra.mxu0 0
        %4903 = vmatprep.subr.bf16.mxu0 0
        %4904 = vmatpush1.bf16.msra.mxu0 0
        %4905 = vmatprep.subr.bf16.mxu0 0
        %4906 = vmatpush1.bf16.msra.mxu0 0
        %4907 = vmatprep.subr.bf16.mxu0 0
        %4908 = vmatpush1.bf16.msra.mxu0 %v4880
        %4909 = vmatprep.subr.bf16.mxu0 0
        %4910 = vmatpush1.bf16.msra.mxu0 %v4879
        %4911 = vmatprep.subr.bf16.mxu0 0
        %4912 = vmatpush2.bf16.msra.mxu0 0
        %4913 = vmatprep.subr.bf16.mxu0 0
        %4914 = vmatpush2.bf16.msra.mxu0 0
        %4915 = vmatprep.subr.bf16.mxu0 0
        %4916 = vmatpush2.bf16.msra.mxu0 0
        %4917 = vmatprep.subr.bf16.mxu0 0
        %4918 = vmatpush2.bf16.msra.mxu0 0
        %4919 = vmatprep.subr.bf16.mxu0 0
        %4920 = vmatpush2.bf16.msra.mxu0 0
        %4921 = vmatprep.subr.bf16.mxu0 0
        %4922 = vmatpush2.bf16.msra.mxu0 0
        %4923 = vmatprep.subr.bf16.mxu0 0
        %4924 = vmatpush2.bf16.msra.mxu0 0
        %4925 = vmatprep.subr.bf16.mxu0 0
        %4926 = vmatpush2.bf16.msra.mxu0 0
        %4927 = vmatprep.mubr.bf16.mxu0 0
        %4928 = vmatmul.mubr.bf16.gmra.mxu0 %v4884
        %v4929 = vpop.f32.mrf.mxu0
        %v4930 = vadd.f32 %v4841, %v4929
        %v4931 = vpop.f32.mrf.mxu0
        %v4932 = vpop.f32.mrf.mxu0
        %v4933 = vadd.f32 %v4844, %v4932
        %v4934 = vpop.f32.mrf.mxu0
        %4935 = vmatprep.mubr.bf16.mxu0 0
        %4936 = vmatmul.mubr.bf16.gmra.mxu0 %v4887
        %v4937 = vpop.f32.mrf.mxu0
        %v4938 = vadd.f32 %v4849, %v4937
        %v4939 = vpop.f32.mrf.mxu0
        %v4940 = vpop.f32.mrf.mxu0
        %v4941 = vadd.f32 %v4852, %v4940
        %v4942 = vpop.f32.mrf.mxu0
        %4943 = vmatprep.mubr.bf16.mxu0 0
        %4944 = vmatmul.mubr.bf16.gmra.mxu0 %v4890
        %v4945 = vpop.f32.mrf.mxu0
        %v4946 = vadd.f32 %v4857, %v4945
        %v4947 = vpop.f32.mrf.mxu0
        %v4948 = vpop.f32.mrf.mxu0
        %v4949 = vadd.f32 %v4860, %v4948
        %v4950 = vpop.f32.mrf.mxu0
        %4951 = vmatprep.mubr.bf16.mxu0 0
        %4952 = vmatmul.mubr.bf16.gmra.mxu0 %v4893
        %v4953 = vpop.f32.mrf.mxu0
        %v4954 = vadd.f32 %v4865, %v4953
        %v4955 = vpop.f32.mrf.mxu0
        %v4956 = vpop.f32.mrf.mxu0
        %v4957 = vadd.f32 %v4868, %v4956
        %v4958 = vpop.f32.mrf.mxu0
        %4959 = vdwg.mxu0
        %v4960 = vrot.slane %v4726, 1
        %v4961 = vrot.slane %v4727, 1
        %v4962 = vrot.slane %v4728, 1
        %v4963 = vrot.slane %v4729, 1
        %v4964 = vrot.slane %v4730, 1
        %v4965 = vrot.slane %v4731, 1
        %v4966 = vrot.slane %v4732, 1
        %v4967 = vrot.slane %v4733, 1
        %v4968 = vsel %vm751, %v4966, %v4967
        %v4969 = vsel %vm751, %v4965, %v4966
        %v4970 = vsel %vm751, %v4964, %v4965
        %v4971 = vsel %vm751, %v4963, %v4964
        %v4972 = vsel %vm751, %v4962, %v4963
        %v4973 = vsel %vm751, %v4961, %v4962
        %v4974 = vsel %vm751, %v4960, %v4961
        %v4975 = vsel %vm751, %v4967, %v4960
        %v4976 = vsel %vm260, %v4975, 0.0
        %v4977 = vsel %vm261, %v4974, 0.0
        %v4978 = vsel %vm262, %v4973, 0.0
        %v4979 = vsel %vm263, %v4972, 0.0
        %v4980 = vsel %vm264, %v4971, 0.0
        %v4981 = vsel %vm265, %v4970, 0.0
        %v4982 = vsel %vm266, %v4969, 0.0
        %v4983 = vsel %vm267, %v4968, 0.0
        %v4984 = vld [vmem:[%s1 + $0x2a8] sm:$0xf]
        %v4985 = vld [vmem:[%s1 + $0x2ac] sm:$0xf]
        %v4986 = vld [vmem:[%s1 + $0x2b0] sm:$0xf]
        %v4987 = vld [vmem:[%s1 + $0x2b4] sm:$0xf]
        %v4988 = vpack.c.bf16 %v4977, %v4976
        %v4989 = vpack.c.bf16 %v4979, %v4978
        %v4990 = vpack.c.bf16 %v4981, %v4980
        %v4991 = vpack.c.bf16 %v4983, %v4982
        %v4996 = vunpack.c.l.b16 %v4984
        %v4997 = vunpack.c.l.b16 %v4985
        %v4998 = vunpack.c.l.b16 %v4986
        %v4999 = vunpack.c.l.b16 %v4987
        %v5000 = vpack.c.b16 %v4997, %v4996
        %v5001 = vpack.c.b16 %v4999, %v4998
        %v5005 = vsel %vm576, %v4988, 0
        %v5008 = vsel %vm576, %v4989, 0
        %v5011 = vsel %vm576, %v4990, 0
        %v5014 = vsel %vm576, %v4991, 0
        %5016 = vmatprep.subr.bf16.mxu0 0
        %5017 = vmatpush1.bf16.msra.mxu0 0
        %5018 = vmatprep.subr.bf16.mxu0 0
        %5019 = vmatpush1.bf16.msra.mxu0 0
        %5020 = vmatprep.subr.bf16.mxu0 0
        %5021 = vmatpush1.bf16.msra.mxu0 0
        %5022 = vmatprep.subr.bf16.mxu0 0
        %5023 = vmatpush1.bf16.msra.mxu0 0
        %5024 = vmatprep.subr.bf16.mxu0 0
        %5025 = vmatpush1.bf16.msra.mxu0 0
        %5026 = vmatprep.subr.bf16.mxu0 0
        %5027 = vmatpush1.bf16.msra.mxu0 0
        %5028 = vmatprep.subr.bf16.mxu0 0
        %5029 = vmatpush1.bf16.msra.mxu0 %v5001
        %5030 = vmatprep.subr.bf16.mxu0 0
        %5031 = vmatpush1.bf16.msra.mxu0 %v5000
        %5032 = vmatprep.subr.bf16.mxu0 0
        %5033 = vmatpush2.bf16.msra.mxu0 0
        %5034 = vmatprep.subr.bf16.mxu0 0
        %5035 = vmatpush2.bf16.msra.mxu0 0
        %5036 = vmatprep.subr.bf16.mxu0 0
        %5037 = vmatpush2.bf16.msra.mxu0 0
        %5038 = vmatprep.subr.bf16.mxu0 0
        %5039 = vmatpush2.bf16.msra.mxu0 0
        %5040 = vmatprep.subr.bf16.mxu0 0
        %5041 = vmatpush2.bf16.msra.mxu0 0
        %5042 = vmatprep.subr.bf16.mxu0 0
        %5043 = vmatpush2.bf16.msra.mxu0 0
        %5044 = vmatprep.subr.bf16.mxu0 0
        %5045 = vmatpush2.bf16.msra.mxu0 0
        %5046 = vmatprep.subr.bf16.mxu0 0
        %5047 = vmatpush2.bf16.msra.mxu0 0
        %5048 = vmatprep.mubr.bf16.mxu0 0
        %5049 = vmatmul.mubr.bf16.gmra.mxu0 %v5005
        %v5050 = vpop.f32.mrf.mxu0
        %v5051 = vadd.f32 0.0, %v5050
        %v5052 = vpop.f32.mrf.mxu0
        %v5053 = vpop.f32.mrf.mxu0
        %v5054 = vadd.f32 0.0, %v5053
        %v5055 = vpop.f32.mrf.mxu0
        %5056 = vmatprep.mubr.bf16.mxu0 0
        %5057 = vmatmul.mubr.bf16.gmra.mxu0 %v5008
        %v5058 = vpop.f32.mrf.mxu0
        %v5059 = vadd.f32 0.0, %v5058
        %v5060 = vpop.f32.mrf.mxu0
        %v5061 = vpop.f32.mrf.mxu0
        %v5062 = vadd.f32 0.0, %v5061
        %v5063 = vpop.f32.mrf.mxu0
        %5064 = vmatprep.mubr.bf16.mxu0 0
        %5065 = vmatmul.mubr.bf16.gmra.mxu0 %v5011
        %v5066 = vpop.f32.mrf.mxu0
        %v5067 = vadd.f32 0.0, %v5066
        %v5068 = vpop.f32.mrf.mxu0
        %v5069 = vpop.f32.mrf.mxu0
        %v5070 = vadd.f32 0.0, %v5069
        %v5071 = vpop.f32.mrf.mxu0
        %5072 = vmatprep.mubr.bf16.mxu0 0
        %5073 = vmatmul.mubr.bf16.gmra.mxu0 %v5014
        %v5074 = vpop.f32.mrf.mxu0
        %v5075 = vadd.f32 0.0, %v5074
        %v5076 = vpop.f32.mrf.mxu0
        %v5077 = vpop.f32.mrf.mxu0
        %v5078 = vadd.f32 0.0, %v5077
        %v5079 = vpop.f32.mrf.mxu0
        %5080 = vdwg.mxu0
        %v5081 = vadd.f32 %v4930, %v5051
        %v5082 = vadd.f32 %v4933, %v5054
        %v5083 = vadd.f32 %v4938, %v5059
        %v5084 = vadd.f32 %v4941, %v5062
        %v5085 = vadd.f32 %v4946, %v5067
        %v5086 = vadd.f32 %v4949, %v5070
        %v5087 = vadd.f32 %v4954, %v5075
        %v5088 = vadd.f32 %v4957, %v5078
        %v5089 = vsel %vm236, %v4749, 0.0
        %v5090 = vsel %vm237, %v4748, 0.0
        %v5091 = vsel %vm238, %v4747, 0.0
        %v5092 = vsel %vm239, %v4746, 0.0
        %v5093 = vsel %vm240, %v4745, 0.0
        %v5094 = vsel %vm241, %v4744, 0.0
        %v5095 = vsel %vm242, %v4743, 0.0
        %v5096 = vsel %vm243, %v4742, 0.0
        %v5097 = vld [vmem:[%s1 + $0x2b8] sm:$0xf]
        %v5098 = vld [vmem:[%s1 + $0x2bc] sm:$0xf]
        %v5099 = vld [vmem:[%s1 + $0x2c0] sm:$0xf]
        %v5100 = vld [vmem:[%s1 + $0x2c4] sm:$0xf]
        %v5101 = vpack.c.bf16 %v5090, %v5089
        %v5102 = vpack.c.bf16 %v5092, %v5091
        %v5103 = vpack.c.bf16 %v5094, %v5093
        %v5104 = vpack.c.bf16 %v5096, %v5095
        %v5109 = vunpack.c.l.b16 %v5097
        %v5110 = vunpack.c.l.b16 %v5098
        %v5111 = vunpack.c.l.b16 %v5099
        %v5112 = vunpack.c.l.b16 %v5100
        %v5113 = vpack.c.b16 %v5110, %v5109
        %v5114 = vpack.c.b16 %v5112, %v5111
        %v5118 = vsel %vm576, %v5101, 0
        %v5121 = vsel %vm576, %v5102, 0
        %v5124 = vsel %vm576, %v5103, 0
        %v5127 = vsel %vm576, %v5104, 0
        %5129 = vmatprep.subr.bf16.mxu0 0
        %5130 = vmatpush1.bf16.msra.mxu0 0
        %5131 = vmatprep.subr.bf16.mxu0 0
        %5132 = vmatpush1.bf16.msra.mxu0 0
        %5133 = vmatprep.subr.bf16.mxu0 0
        %5134 = vmatpush1.bf16.msra.mxu0 0
        %5135 = vmatprep.subr.bf16.mxu0 0
        %5136 = vmatpush1.bf16.msra.mxu0 0
        %5137 = vmatprep.subr.bf16.mxu0 0
        %5138 = vmatpush1.bf16.msra.mxu0 0
        %5139 = vmatprep.subr.bf16.mxu0 0
        %5140 = vmatpush1.bf16.msra.mxu0 0
        %5141 = vmatprep.subr.bf16.mxu0 0
        %5142 = vmatpush1.bf16.msra.mxu0 %v5114
        %5143 = vmatprep.subr.bf16.mxu0 0
        %5144 = vmatpush1.bf16.msra.mxu0 %v5113
        %5145 = vmatprep.subr.bf16.mxu0 0
        %5146 = vmatpush2.bf16.msra.mxu0 0
        %5147 = vmatprep.subr.bf16.mxu0 0
        %5148 = vmatpush2.bf16.msra.mxu0 0
        %5149 = vmatprep.subr.bf16.mxu0 0
        %5150 = vmatpush2.bf16.msra.mxu0 0
        %5151 = vmatprep.subr.bf16.mxu0 0
        %5152 = vmatpush2.bf16.msra.mxu0 0
        %5153 = vmatprep.subr.bf16.mxu0 0
        %5154 = vmatpush2.bf16.msra.mxu0 0
        %5155 = vmatprep.subr.bf16.mxu0 0
        %5156 = vmatpush2.bf16.msra.mxu0 0
        %5157 = vmatprep.subr.bf16.mxu0 0
        %5158 = vmatpush2.bf16.msra.mxu0 0
        %5159 = vmatprep.subr.bf16.mxu0 0
        %5160 = vmatpush2.bf16.msra.mxu0 0
        %5161 = vmatprep.mubr.bf16.mxu0 0
        %5162 = vmatmul.mubr.bf16.gmra.mxu0 %v5118
        %v5163 = vpop.f32.mrf.mxu0
        %v5164 = vadd.f32 0.0, %v5163
        %v5165 = vpop.f32.mrf.mxu0
        %v5166 = vpop.f32.mrf.mxu0
        %v5167 = vadd.f32 0.0, %v5166
        %v5168 = vpop.f32.mrf.mxu0
        %5169 = vmatprep.mubr.bf16.mxu0 0
        %5170 = vmatmul.mubr.bf16.gmra.mxu0 %v5121
        %v5171 = vpop.f32.mrf.mxu0
        %v5172 = vadd.f32 0.0, %v5171
        %v5173 = vpop.f32.mrf.mxu0
        %v5174 = vpop.f32.mrf.mxu0
        %v5175 = vadd.f32 0.0, %v5174
        %v5176 = vpop.f32.mrf.mxu0
        %5177 = vmatprep.mubr.bf16.mxu0 0
        %5178 = vmatmul.mubr.bf16.gmra.mxu0 %v5124
        %v5179 = vpop.f32.mrf.mxu0
        %v5180 = vadd.f32 0.0, %v5179
        %v5181 = vpop.f32.mrf.mxu0
        %v5182 = vpop.f32.mrf.mxu0
        %v5183 = vadd.f32 0.0, %v5182
        %v5184 = vpop.f32.mrf.mxu0
        %5185 = vmatprep.mubr.bf16.mxu0 0
        %5186 = vmatmul.mubr.bf16.gmra.mxu0 %v5127
        %v5187 = vpop.f32.mrf.mxu0
        %v5188 = vadd.f32 0.0, %v5187
        %v5189 = vpop.f32.mrf.mxu0
        %v5190 = vpop.f32.mrf.mxu0
        %v5191 = vadd.f32 0.0, %v5190
        %v5192 = vpop.f32.mrf.mxu0
        %5193 = vdwg.mxu0
        %v5194 = vadd.f32 %v5081, %v5164
        %v5195 = vadd.f32 %v5082, %v5167
        %v5196 = vadd.f32 %v5083, %v5172
        %v5197 = vadd.f32 %v5084, %v5175
        %v5198 = vadd.f32 %v5085, %v5180
        %v5199 = vadd.f32 %v5086, %v5183
        %v5200 = vadd.f32 %v5087, %v5188
        %v5201 = vadd.f32 %v5088, %v5191
        %v5202 = vld [vmem:[%s1 + $0x2c8] sm:$0xf]
        %v5203 = vld [vmem:[%s1 + $0x2cc] sm:$0xf]
        %v5204 = vld [vmem:[%s1 + $0x2d0] sm:$0xf]
        %v5205 = vld [vmem:[%s1 + $0x2d4] sm:$0xf]
        %v5206 = vpack.c.bf16 %v4727, %v4726
        %v5207 = vpack.c.bf16 %v4729, %v4728
        %v5208 = vpack.c.bf16 %v4731, %v4730
        %v5209 = vpack.c.bf16 %v4733, %v4732
        %v5214 = vunpack.c.l.b16 %v5202
        %v5215 = vunpack.c.l.b16 %v5203
        %v5216 = vunpack.c.l.b16 %v5204
        %v5217 = vunpack.c.l.b16 %v5205
        %v5218 = vpack.c.b16 %v5215, %v5214
        %v5219 = vpack.c.b16 %v5217, %v5216
        %v5223 = vsel %vm576, %v5206, 0
        %v5226 = vsel %vm576, %v5207, 0
        %v5229 = vsel %vm576, %v5208, 0
        %v5232 = vsel %vm576, %v5209, 0
        %5234 = vmatprep.subr.bf16.mxu0 0
        %5235 = vmatpush1.bf16.msra.mxu0 0
        %5236 = vmatprep.subr.bf16.mxu0 0
        %5237 = vmatpush1.bf16.msra.mxu0 0
        %5238 = vmatprep.subr.bf16.mxu0 0
        %5239 = vmatpush1.bf16.msra.mxu0 0
        %5240 = vmatprep.subr.bf16.mxu0 0
        %5241 = vmatpush1.bf16.msra.mxu0 0
        %5242 = vmatprep.subr.bf16.mxu0 0
        %5243 = vmatpush1.bf16.msra.mxu0 0
        %5244 = vmatprep.subr.bf16.mxu0 0
        %5245 = vmatpush1.bf16.msra.mxu0 0
        %5246 = vmatprep.subr.bf16.mxu0 0
        %5247 = vmatpush1.bf16.msra.mxu0 %v5219
        %5248 = vmatprep.subr.bf16.mxu0 0
        %5249 = vmatpush1.bf16.msra.mxu0 %v5218
        %5250 = vmatprep.subr.bf16.mxu0 0
        %5251 = vmatpush2.bf16.msra.mxu0 0
        %5252 = vmatprep.subr.bf16.mxu0 0
        %5253 = vmatpush2.bf16.msra.mxu0 0
        %5254 = vmatprep.subr.bf16.mxu0 0
        %5255 = vmatpush2.bf16.msra.mxu0 0
        %5256 = vmatprep.subr.bf16.mxu0 0
        %5257 = vmatpush2.bf16.msra.mxu0 0
        %5258 = vmatprep.subr.bf16.mxu0 0
        %5259 = vmatpush2.bf16.msra.mxu0 0
        %5260 = vmatprep.subr.bf16.mxu0 0
        %5261 = vmatpush2.bf16.msra.mxu0 0
        %5262 = vmatprep.subr.bf16.mxu0 0
        %5263 = vmatpush2.bf16.msra.mxu0 0
        %5264 = vmatprep.subr.bf16.mxu0 0
        %5265 = vmatpush2.bf16.msra.mxu0 0
        %5266 = vmatprep.mubr.bf16.mxu0 0
        %5267 = vmatmul.mubr.bf16.gmra.mxu0 %v5223
        %v5268 = vpop.f32.mrf.mxu0
        %v5269 = vadd.f32 0.0, %v5268
        %v5270 = vpop.f32.mrf.mxu0
        %v5271 = vpop.f32.mrf.mxu0
        %v5272 = vadd.f32 0.0, %v5271
        %v5273 = vpop.f32.mrf.mxu0
        %5274 = vmatprep.mubr.bf16.mxu0 0
        %5275 = vmatmul.mubr.bf16.gmra.mxu0 %v5226
        %v5276 = vpop.f32.mrf.mxu0
        %v5277 = vadd.f32 0.0, %v5276
        %v5278 = vpop.f32.mrf.mxu0
        %v5279 = vpop.f32.mrf.mxu0
        %v5280 = vadd.f32 0.0, %v5279
        %v5281 = vpop.f32.mrf.mxu0
        %5282 = vmatprep.mubr.bf16.mxu0 0
        %5283 = vmatmul.mubr.bf16.gmra.mxu0 %v5229
        %v5284 = vpop.f32.mrf.mxu0
        %v5285 = vadd.f32 0.0, %v5284
        %v5286 = vpop.f32.mrf.mxu0
        %v5287 = vpop.f32.mrf.mxu0
        %v5288 = vadd.f32 0.0, %v5287
        %v5289 = vpop.f32.mrf.mxu0
        %5290 = vmatprep.mubr.bf16.mxu0 0
        %5291 = vmatmul.mubr.bf16.gmra.mxu0 %v5232
        %v5292 = vpop.f32.mrf.mxu0
        %v5293 = vadd.f32 0.0, %v5292
        %v5294 = vpop.f32.mrf.mxu0
        %v5295 = vpop.f32.mrf.mxu0
        %v5296 = vadd.f32 0.0, %v5295
        %v5297 = vpop.f32.mrf.mxu0
        %5298 = vdwg.mxu0
        %v5299 = vadd.f32 %v5194, %v5269
        %v5300 = vadd.f32 %v5195, %v5272
        %v5301 = vadd.f32 %v5196, %v5277
        %v5302 = vadd.f32 %v5197, %v5280
        %v5303 = vadd.f32 %v5198, %v5285
        %v5304 = vadd.f32 %v5199, %v5288
        %v5305 = vadd.f32 %v5200, %v5293
        %v5306 = vadd.f32 %v5201, %v5296
        %v5307 = vsel %vm252, %v4974, 0.0
        %v5308 = vsel %vm253, %v4973, 0.0
        %v5309 = vsel %vm254, %v4972, 0.0
        %v5310 = vsel %vm255, %v4971, 0.0
        %v5311 = vsel %vm256, %v4970, 0.0
        %v5312 = vsel %vm257, %v4969, 0.0
        %v5313 = vsel %vm258, %v4968, 0.0
        %v5314 = vsel %vm259, %v4975, 0.0
        %v5315 = vld [vmem:[%s1 + $0x2d8] sm:$0xf]
        %v5316 = vld [vmem:[%s1 + $0x2dc] sm:$0xf]
        %v5317 = vld [vmem:[%s1 + $0x2e0] sm:$0xf]
        %v5318 = vld [vmem:[%s1 + $0x2e4] sm:$0xf]
        %v5319 = vpack.c.bf16 %v5308, %v5307
        %v5320 = vpack.c.bf16 %v5310, %v5309
        %v5321 = vpack.c.bf16 %v5312, %v5311
        %v5322 = vpack.c.bf16 %v5314, %v5313
        %v5327 = vunpack.c.l.b16 %v5315
        %v5328 = vunpack.c.l.b16 %v5316
        %v5329 = vunpack.c.l.b16 %v5317
        %v5330 = vunpack.c.l.b16 %v5318
        %v5331 = vpack.c.b16 %v5328, %v5327
        %v5332 = vpack.c.b16 %v5330, %v5329
        %v5336 = vsel %vm576, %v5319, 0
        %v5339 = vsel %vm576, %v5320, 0
        %v5342 = vsel %vm576, %v5321, 0
        %v5345 = vsel %vm576, %v5322, 0
        %5347 = vmatprep.subr.bf16.mxu0 0
        %5348 = vmatpush1.bf16.msra.mxu0 0
        %5349 = vmatprep.subr.bf16.mxu0 0
        %5350 = vmatpush1.bf16.msra.mxu0 0
        %5351 = vmatprep.subr.bf16.mxu0 0
        %5352 = vmatpush1.bf16.msra.mxu0 0
        %5353 = vmatprep.subr.bf16.mxu0 0
        %5354 = vmatpush1.bf16.msra.mxu0 0
        %5355 = vmatprep.subr.bf16.mxu0 0
        %5356 = vmatpush1.bf16.msra.mxu0 0
        %5357 = vmatprep.subr.bf16.mxu0 0
        %5358 = vmatpush1.bf16.msra.mxu0 0
        %5359 = vmatprep.subr.bf16.mxu0 0
        %5360 = vmatpush1.bf16.msra.mxu0 %v5332
        %5361 = vmatprep.subr.bf16.mxu0 0
        %5362 = vmatpush1.bf16.msra.mxu0 %v5331
        %5363 = vmatprep.subr.bf16.mxu0 0
        %5364 = vmatpush2.bf16.msra.mxu0 0
        %5365 = vmatprep.subr.bf16.mxu0 0
        %5366 = vmatpush2.bf16.msra.mxu0 0
        %5367 = vmatprep.subr.bf16.mxu0 0
        %5368 = vmatpush2.bf16.msra.mxu0 0
        %5369 = vmatprep.subr.bf16.mxu0 0
        %5370 = vmatpush2.bf16.msra.mxu0 0
        %5371 = vmatprep.subr.bf16.mxu0 0
        %5372 = vmatpush2.bf16.msra.mxu0 0
        %5373 = vmatprep.subr.bf16.mxu0 0
        %5374 = vmatpush2.bf16.msra.mxu0 0
        %5375 = vmatprep.subr.bf16.mxu0 0
        %5376 = vmatpush2.bf16.msra.mxu0 0
        %5377 = vmatprep.subr.bf16.mxu0 0
        %5378 = vmatpush2.bf16.msra.mxu0 0
        %5379 = vmatprep.mubr.bf16.mxu0 0
        %5380 = vmatmul.mubr.bf16.gmra.mxu0 %v5336
        %v5381 = vpop.f32.mrf.mxu0
        %v5382 = vadd.f32 0.0, %v5381
        %v5383 = vpop.f32.mrf.mxu0
        %v5384 = vpop.f32.mrf.mxu0
        %v5385 = vadd.f32 0.0, %v5384
        %v5386 = vpop.f32.mrf.mxu0
        %5387 = vmatprep.mubr.bf16.mxu0 0
        %5388 = vmatmul.mubr.bf16.gmra.mxu0 %v5339
        %v5389 = vpop.f32.mrf.mxu0
        %v5390 = vadd.f32 0.0, %v5389
        %v5391 = vpop.f32.mrf.mxu0
        %v5392 = vpop.f32.mrf.mxu0
        %v5393 = vadd.f32 0.0, %v5392
        %v5394 = vpop.f32.mrf.mxu0
        %5395 = vmatprep.mubr.bf16.mxu0 0
        %5396 = vmatmul.mubr.bf16.gmra.mxu0 %v5342
        %v5397 = vpop.f32.mrf.mxu0
        %v5398 = vadd.f32 0.0, %v5397
        %v5399 = vpop.f32.mrf.mxu0
        %v5400 = vpop.f32.mrf.mxu0
        %v5401 = vadd.f32 0.0, %v5400
        %v5402 = vpop.f32.mrf.mxu0
        %5403 = vmatprep.mubr.bf16.mxu0 0
        %5404 = vmatmul.mubr.bf16.gmra.mxu0 %v5345
        %v5405 = vpop.f32.mrf.mxu0
        %v5406 = vadd.f32 0.0, %v5405
        %v5407 = vpop.f32.mrf.mxu0
        %v5408 = vpop.f32.mrf.mxu0
        %v5409 = vadd.f32 0.0, %v5408
        %v5410 = vpop.f32.mrf.mxu0
        %5411 = vdwg.mxu0
        %v5412 = vadd.f32 %v5299, %v5382
        %v5413 = vadd.f32 %v5300, %v5385
        %v5414 = vadd.f32 %v5301, %v5390
        %v5415 = vadd.f32 %v5302, %v5393
        %v5416 = vadd.f32 %v5303, %v5398
        %v5417 = vadd.f32 %v5304, %v5401
        %v5418 = vadd.f32 %v5305, %v5406
        %v5419 = vadd.f32 %v5306, %v5409
        %v5420 = vsel %vm276, %v4748, 0.0
        %v5421 = vsel %vm277, %v4747, 0.0
        %v5422 = vsel %vm278, %v4746, 0.0
        %v5423 = vsel %vm279, %v4745, 0.0
        %v5424 = vsel %vm280, %v4744, 0.0
        %v5425 = vsel %vm281, %v4743, 0.0
        %v5426 = vsel %vm282, %v4742, 0.0
        %v5427 = vsel %vm283, %v4749, 0.0
        %v5428 = vld [vmem:[%s1 + $0x2e8] sm:$0xf]
        %v5429 = vld [vmem:[%s1 + $0x2ec] sm:$0xf]
        %v5430 = vld [vmem:[%s1 + $0x2f0] sm:$0xf]
        %v5431 = vld [vmem:[%s1 + $0x2f4] sm:$0xf]
        %v5432 = vpack.c.bf16 %v5421, %v5420
        %v5433 = vpack.c.bf16 %v5423, %v5422
        %v5434 = vpack.c.bf16 %v5425, %v5424
        %v5435 = vpack.c.bf16 %v5427, %v5426
        %v5440 = vunpack.c.l.b16 %v5428
        %v5441 = vunpack.c.l.b16 %v5429
        %v5442 = vunpack.c.l.b16 %v5430
        %v5443 = vunpack.c.l.b16 %v5431
        %v5444 = vpack.c.b16 %v5441, %v5440
        %v5445 = vpack.c.b16 %v5443, %v5442
        %v5449 = vsel %vm576, %v5432, 0
        %v5452 = vsel %vm576, %v5433, 0
        %v5455 = vsel %vm576, %v5434, 0
        %v5458 = vsel %vm576, %v5435, 0
        %5460 = vmatprep.subr.bf16.mxu0 0
        %5461 = vmatpush1.bf16.msra.mxu0 0
        %5462 = vmatprep.subr.bf16.mxu0 0
        %5463 = vmatpush1.bf16.msra.mxu0 0
        %5464 = vmatprep.subr.bf16.mxu0 0
        %5465 = vmatpush1.bf16.msra.mxu0 0
        %5466 = vmatprep.subr.bf16.mxu0 0
        %5467 = vmatpush1.bf16.msra.mxu0 0
        %5468 = vmatprep.subr.bf16.mxu0 0
        %5469 = vmatpush1.bf16.msra.mxu0 0
        %5470 = vmatprep.subr.bf16.mxu0 0
        %5471 = vmatpush1.bf16.msra.mxu0 0
        %5472 = vmatprep.subr.bf16.mxu0 0
        %5473 = vmatpush1.bf16.msra.mxu0 %v5445
        %5474 = vmatprep.subr.bf16.mxu0 0
        %5475 = vmatpush1.bf16.msra.mxu0 %v5444
        %5476 = vmatprep.subr.bf16.mxu0 0
        %5477 = vmatpush2.bf16.msra.mxu0 0
        %5478 = vmatprep.subr.bf16.mxu0 0
        %5479 = vmatpush2.bf16.msra.mxu0 0
        %5480 = vmatprep.subr.bf16.mxu0 0
        %5481 = vmatpush2.bf16.msra.mxu0 0
        %5482 = vmatprep.subr.bf16.mxu0 0
        %5483 = vmatpush2.bf16.msra.mxu0 0
        %5484 = vmatprep.subr.bf16.mxu0 0
        %5485 = vmatpush2.bf16.msra.mxu0 0
        %5486 = vmatprep.subr.bf16.mxu0 0
        %5487 = vmatpush2.bf16.msra.mxu0 0
        %5488 = vmatprep.subr.bf16.mxu0 0
        %5489 = vmatpush2.bf16.msra.mxu0 0
        %5490 = vmatprep.subr.bf16.mxu0 0
        %5491 = vmatpush2.bf16.msra.mxu0 0
        %5492 = vmatprep.mubr.bf16.mxu0 0
        %5493 = vmatmul.mubr.bf16.gmra.mxu0 %v5449
        %v5494 = vpop.f32.mrf.mxu0
        %v5495 = vadd.f32 0.0, %v5494
        %v5496 = vpop.f32.mrf.mxu0
        %v5497 = vpop.f32.mrf.mxu0
        %v5498 = vadd.f32 0.0, %v5497
        %v5499 = vpop.f32.mrf.mxu0
        %5500 = vmatprep.mubr.bf16.mxu0 0
        %5501 = vmatmul.mubr.bf16.gmra.mxu0 %v5452
        %v5502 = vpop.f32.mrf.mxu0
        %v5503 = vadd.f32 0.0, %v5502
        %v5504 = vpop.f32.mrf.mxu0
        %v5505 = vpop.f32.mrf.mxu0
        %v5506 = vadd.f32 0.0, %v5505
        %v5507 = vpop.f32.mrf.mxu0
        %5508 = vmatprep.mubr.bf16.mxu0 0
        %5509 = vmatmul.mubr.bf16.gmra.mxu0 %v5455
        %v5510 = vpop.f32.mrf.mxu0
        %v5511 = vadd.f32 0.0, %v5510
        %v5512 = vpop.f32.mrf.mxu0
        %v5513 = vpop.f32.mrf.mxu0
        %v5514 = vadd.f32 0.0, %v5513
        %v5515 = vpop.f32.mrf.mxu0
        %5516 = vmatprep.mubr.bf16.mxu0 0
        %5517 = vmatmul.mubr.bf16.gmra.mxu0 %v5458
        %v5518 = vpop.f32.mrf.mxu0
        %v5519 = vadd.f32 0.0, %v5518
        %v5520 = vpop.f32.mrf.mxu0
        %v5521 = vpop.f32.mrf.mxu0
        %v5522 = vadd.f32 0.0, %v5521
        %v5523 = vpop.f32.mrf.mxu0
        %5524 = vdwg.mxu0
        %v5525 = vadd.f32 %v5412, %v5495
        %v5526 = vadd.f32 %v5413, %v5498
        %v5527 = vadd.f32 %v5414, %v5503
        %v5528 = vadd.f32 %v5415, %v5506
        %v5529 = vadd.f32 %v5416, %v5511
        %v5530 = vadd.f32 %v5417, %v5514
        %v5531 = vadd.f32 %v5418, %v5519
        %v5532 = vadd.f32 %v5419, %v5522
        %v5533 = vsel %vm268, %v4727, 0.0
        %v5534 = vsel %vm269, %v4728, 0.0
        %v5535 = vsel %vm270, %v4729, 0.0
        %v5536 = vsel %vm271, %v4730, 0.0
        %v5537 = vsel %vm272, %v4731, 0.0
        %v5538 = vsel %vm273, %v4732, 0.0
        %v5539 = vsel %vm274, %v4733, 0.0
        %v5540 = vsel %vm275, %v4726, 0.0
        %v5541 = vld [vmem:[%s1 + $0x2f8] sm:$0xf]
        %v5542 = vld [vmem:[%s1 + $0x2fc] sm:$0xf]
        %v5543 = vld [vmem:[%s1 + $0x300] sm:$0xf]
        %v5544 = vld [vmem:[%s1 + $0x304] sm:$0xf]
        %v5545 = vpack.c.bf16 %v5534, %v5533
        %v5546 = vpack.c.bf16 %v5536, %v5535
        %v5547 = vpack.c.bf16 %v5538, %v5537
        %v5548 = vpack.c.bf16 %v5540, %v5539
        %v5553 = vunpack.c.l.b16 %v5541
        %v5554 = vunpack.c.l.b16 %v5542
        %v5555 = vunpack.c.l.b16 %v5543
        %v5556 = vunpack.c.l.b16 %v5544
        %v5557 = vpack.c.b16 %v5554, %v5553
        %v5558 = vpack.c.b16 %v5556, %v5555
        %v5562 = vsel %vm576, %v5545, 0
        %v5565 = vsel %vm576, %v5546, 0
        %v5568 = vsel %vm576, %v5547, 0
        %v5571 = vsel %vm576, %v5548, 0
        %5573 = vmatprep.subr.bf16.mxu0 0
        %5574 = vmatpush1.bf16.msra.mxu0 0
        %5575 = vmatprep.subr.bf16.mxu0 0
        %5576 = vmatpush1.bf16.msra.mxu0 0
        %5577 = vmatprep.subr.bf16.mxu0 0
        %5578 = vmatpush1.bf16.msra.mxu0 0
        %5579 = vmatprep.subr.bf16.mxu0 0
        %5580 = vmatpush1.bf16.msra.mxu0 0
        %5581 = vmatprep.subr.bf16.mxu0 0
        %5582 = vmatpush1.bf16.msra.mxu0 0
        %5583 = vmatprep.subr.bf16.mxu0 0
        %5584 = vmatpush1.bf16.msra.mxu0 0
        %5585 = vmatprep.subr.bf16.mxu0 0
        %5586 = vmatpush1.bf16.msra.mxu0 %v5558
        %5587 = vmatprep.subr.bf16.mxu0 0
        %5588 = vmatpush1.bf16.msra.mxu0 %v5557
        %5589 = vmatprep.subr.bf16.mxu0 0
        %5590 = vmatpush2.bf16.msra.mxu0 0
        %5591 = vmatprep.subr.bf16.mxu0 0
        %5592 = vmatpush2.bf16.msra.mxu0 0
        %5593 = vmatprep.subr.bf16.mxu0 0
        %5594 = vmatpush2.bf16.msra.mxu0 0
        %5595 = vmatprep.subr.bf16.mxu0 0
        %5596 = vmatpush2.bf16.msra.mxu0 0
        %5597 = vmatprep.subr.bf16.mxu0 0
        %5598 = vmatpush2.bf16.msra.mxu0 0
        %5599 = vmatprep.subr.bf16.mxu0 0
        %5600 = vmatpush2.bf16.msra.mxu0 0
        %5601 = vmatprep.subr.bf16.mxu0 0
        %5602 = vmatpush2.bf16.msra.mxu0 0
        %5603 = vmatprep.subr.bf16.mxu0 0
        %5604 = vmatpush2.bf16.msra.mxu0 0
        %5605 = vmatprep.mubr.bf16.mxu0 0
        %5606 = vmatmul.mubr.bf16.gmra.mxu0 %v5562
        %v5607 = vpop.f32.mrf.mxu0
        %v5608 = vadd.f32 0.0, %v5607
        %v5609 = vpop.f32.mrf.mxu0
        %v5610 = vpop.f32.mrf.mxu0
        %v5611 = vadd.f32 0.0, %v5610
        %v5612 = vpop.f32.mrf.mxu0
        %5613 = vmatprep.mubr.bf16.mxu0 0
        %5614 = vmatmul.mubr.bf16.gmra.mxu0 %v5565
        %v5615 = vpop.f32.mrf.mxu0
        %v5616 = vadd.f32 0.0, %v5615
        %v5617 = vpop.f32.mrf.mxu0
        %v5618 = vpop.f32.mrf.mxu0
        %v5619 = vadd.f32 0.0, %v5618
        %v5620 = vpop.f32.mrf.mxu0
        %5621 = vmatprep.mubr.bf16.mxu0 0
        %5622 = vmatmul.mubr.bf16.gmra.mxu0 %v5568
        %v5623 = vpop.f32.mrf.mxu0
        %v5624 = vadd.f32 0.0, %v5623
        %v5625 = vpop.f32.mrf.mxu0
        %v5626 = vpop.f32.mrf.mxu0
        %v5627 = vadd.f32 0.0, %v5626
        %v5628 = vpop.f32.mrf.mxu0
        %5629 = vmatprep.mubr.bf16.mxu0 0
        %5630 = vmatmul.mubr.bf16.gmra.mxu0 %v5571
        %v5631 = vpop.f32.mrf.mxu0
        %v5632 = vadd.f32 0.0, %v5631
        %v5633 = vpop.f32.mrf.mxu0
        %v5634 = vpop.f32.mrf.mxu0
        %v5635 = vadd.f32 0.0, %v5634
        %v5636 = vpop.f32.mrf.mxu0
        %5637 = vdwg.mxu0
        %v5638 = vadd.f32 %v5525, %v5608
        %v5639 = vadd.f32 %v5526, %v5611
        %v5640 = vadd.f32 %v5527, %v5616
        %v5641 = vadd.f32 %v5528, %v5619
        %v5642 = vadd.f32 %v5529, %v5624
        %v5643 = vadd.f32 %v5530, %v5627
        %v5644 = vadd.f32 %v5531, %v5632
        %v5645 = vadd.f32 %v5532, %v5635
        %v5646 = vsel %vm284, %v4973, 0.0
        %v5647 = vsel %vm285, %v4972, 0.0
        %v5648 = vsel %vm286, %v4971, 0.0
        %v5649 = vsel %vm287, %v4970, 0.0
        %v5650 = vsel %vm288, %v4969, 0.0
        %v5651 = vsel %vm289, %v4968, 0.0
        %v5652 = vsel %vm290, %v4975, 0.0
        %v5653 = vsel %vm291, %v4974, 0.0
        %v5654 = vld [vmem:[%s1 + $0x308] sm:$0xf]
        %v5655 = vld [vmem:[%s1 + $0x30c] sm:$0xf]
        %v5656 = vld [vmem:[%s1 + $0x310] sm:$0xf]
        %v5657 = vld [vmem:[%s1 + $0x314] sm:$0xf]
        %v5658 = vpack.c.bf16 %v5647, %v5646
        %v5659 = vpack.c.bf16 %v5649, %v5648
        %v5660 = vpack.c.bf16 %v5651, %v5650
        %v5661 = vpack.c.bf16 %v5653, %v5652
        %v5666 = vunpack.c.l.b16 %v5654
        %v5667 = vunpack.c.l.b16 %v5655
        %v5668 = vunpack.c.l.b16 %v5656
        %v5669 = vunpack.c.l.b16 %v5657
        %v5670 = vpack.c.b16 %v5667, %v5666
        %v5671 = vpack.c.b16 %v5669, %v5668
        %v5675 = vsel %vm576, %v5658, 0
        %v5678 = vsel %vm576, %v5659, 0
        %v5681 = vsel %vm576, %v5660, 0
        %v5684 = vsel %vm576, %v5661, 0
        %5686 = vmatprep.subr.bf16.mxu0 0
        %5687 = vmatpush1.bf16.msra.mxu0 0
        %5688 = vmatprep.subr.bf16.mxu0 0
        %5689 = vmatpush1.bf16.msra.mxu0 0
        %5690 = vmatprep.subr.bf16.mxu0 0
        %5691 = vmatpush1.bf16.msra.mxu0 0
        %5692 = vmatprep.subr.bf16.mxu0 0
        %5693 = vmatpush1.bf16.msra.mxu0 0
        %5694 = vmatprep.subr.bf16.mxu0 0
        %5695 = vmatpush1.bf16.msra.mxu0 0
        %5696 = vmatprep.subr.bf16.mxu0 0
        %5697 = vmatpush1.bf16.msra.mxu0 0
        %5698 = vmatprep.subr.bf16.mxu0 0
        %5699 = vmatpush1.bf16.msra.mxu0 %v5671
        %5700 = vmatprep.subr.bf16.mxu0 0
        %5701 = vmatpush1.bf16.msra.mxu0 %v5670
        %5702 = vmatprep.subr.bf16.mxu0 0
        %5703 = vmatpush2.bf16.msra.mxu0 0
        %5704 = vmatprep.subr.bf16.mxu0 0
        %5705 = vmatpush2.bf16.msra.mxu0 0
        %5706 = vmatprep.subr.bf16.mxu0 0
        %5707 = vmatpush2.bf16.msra.mxu0 0
        %5708 = vmatprep.subr.bf16.mxu0 0
        %5709 = vmatpush2.bf16.msra.mxu0 0
        %5710 = vmatprep.subr.bf16.mxu0 0
        %5711 = vmatpush2.bf16.msra.mxu0 0
        %5712 = vmatprep.subr.bf16.mxu0 0
        %5713 = vmatpush2.bf16.msra.mxu0 0
        %5714 = vmatprep.subr.bf16.mxu0 0
        %5715 = vmatpush2.bf16.msra.mxu0 0
        %5716 = vmatprep.subr.bf16.mxu0 0
        %5717 = vmatpush2.bf16.msra.mxu0 0
        %5718 = vmatprep.mubr.bf16.mxu0 0
        %5719 = vmatmul.mubr.bf16.gmra.mxu0 %v5675
        %v5720 = vpop.f32.mrf.mxu0
        %v5721 = vadd.f32 0.0, %v5720
        %v5722 = vpop.f32.mrf.mxu0
        %v5723 = vpop.f32.mrf.mxu0
        %v5724 = vadd.f32 0.0, %v5723
        %v5725 = vpop.f32.mrf.mxu0
        %5726 = vmatprep.mubr.bf16.mxu0 0
        %5727 = vmatmul.mubr.bf16.gmra.mxu0 %v5678
        %v5728 = vpop.f32.mrf.mxu0
        %v5729 = vadd.f32 0.0, %v5728
        %v5730 = vpop.f32.mrf.mxu0
        %v5731 = vpop.f32.mrf.mxu0
        %v5732 = vadd.f32 0.0, %v5731
        %v5733 = vpop.f32.mrf.mxu0
        %5734 = vmatprep.mubr.bf16.mxu0 0
        %5735 = vmatmul.mubr.bf16.gmra.mxu0 %v5681
        %v5736 = vpop.f32.mrf.mxu0
        %v5737 = vadd.f32 0.0, %v5736
        %v5738 = vpop.f32.mrf.mxu0
        %v5739 = vpop.f32.mrf.mxu0
        %v5740 = vadd.f32 0.0, %v5739
        %v5741 = vpop.f32.mrf.mxu0
        %5742 = vmatprep.mubr.bf16.mxu0 0
        %5743 = vmatmul.mubr.bf16.gmra.mxu0 %v5684
        %v5744 = vpop.f32.mrf.mxu0
        %v5745 = vadd.f32 0.0, %v5744
        %v5746 = vpop.f32.mrf.mxu0
        %v5747 = vpop.f32.mrf.mxu0
        %v5748 = vadd.f32 0.0, %v5747
        %v5749 = vpop.f32.mrf.mxu0
        %5750 = vdwg.mxu0
        %v5751 = vadd.f32 %v5638, %v5721
        %v5752 = vadd.f32 %v5639, %v5724
        %v5753 = vadd.f32 %v5640, %v5729
        %v5754 = vadd.f32 %v5641, %v5732
        %v5755 = vadd.f32 %v5642, %v5737
        %v5756 = vadd.f32 %v5643, %v5740
        %v5757 = vadd.f32 %v5644, %v5745
        %v5758 = vadd.f32 %v5645, %v5748
        %v5759 = vld [vmem:[%s3 + $0x38] sm:$0x1]
        %v5760 = vlaneseq
        %v5761 = vshrl.u32 %v5760, 7
        %v5762 = vsub.s32 0, %v5761
        %v5763 = vrot.slane %v5759, %v5762
        %v5764 = vadd.f32 %v5751, %v5763
        %v5765 = vadd.f32 %v5752, %v5763
        %v5766 = vadd.f32 %v5753, %v5763
        %v5767 = vadd.f32 %v5754, %v5763
        %v5768 = vadd.f32 %v5755, %v5763
        %v5769 = vadd.f32 %v5756, %v5763
        %v5770 = vadd.f32 %v5757, %v5763
        %v5771 = vadd.f32 %v5758, %v5763
        %v5772 = vld [vmem:[%s3] sm:$0xff]
        %v5773 = vld [vmem:[%s3 + $0x8] sm:$0xff]
        %vm5774 = vcmask 523264
        %v5776 = vsel %vm5774, %v5772, 0
        %v5779 = vsel %vm5774, %v5773, 0
        %5781 = vmatprep.subr.mxu0 0.0
        %5782 = vmatpush1.msra.mxu0 0.0
        %5783 = vmatprep.subr.mxu0 0.0
        %5784 = vmatpush1.msra.mxu0 0.0
        %5785 = vmatprep.subr.mxu0 0.0
        %5786 = vmatpush1.msra.mxu0 0.0
        %5787 = vmatprep.subr.mxu0 0.0
        %5788 = vmatpush1.msra.mxu0 0.0
        %5789 = vmatprep.subr.mxu0 0.0
        %5790 = vmatpush1.msra.mxu0 0.0
        %5791 = vmatprep.subr.mxu0 0.0
        %5792 = vmatpush1.msra.mxu0 0.0
        %5793 = vmatprep.subr.mxu0 0.0
        %5794 = vmatpush1.msra.mxu0 0.0
        %5795 = vmatprep.subr.mxu0 0.0
        %5796 = vmatpush1.msra.mxu0 0.0
        %5797 = vmatprep.subr.mxu0 0.0
        %5798 = vmatpush1.msra.mxu0 %v5771
        %5799 = vmatprep.subr.mxu0 0.0
        %5800 = vmatpush1.msra.mxu0 %v5770
        %5801 = vmatprep.subr.mxu0 0.0
        %5802 = vmatpush1.msra.mxu0 %v5769
        %5803 = vmatprep.subr.mxu0 0.0
        %5804 = vmatpush1.msra.mxu0 %v5768
        %5805 = vmatprep.subr.mxu0 0.0
        %5806 = vmatpush1.msra.mxu0 %v5767
        %5807 = vmatprep.subr.mxu0 0.0
        %5808 = vmatpush1.msra.mxu0 %v5766
        %5809 = vmatprep.subr.mxu0 0.0
        %5810 = vmatpush1.msra.mxu0 %v5765
        %5811 = vmatprep.subr.mxu0 0.0
        %5812 = vmatpush1.msra.mxu0 %v5764
        %5813 = vmatprep.subr.mxu0 0.0
        %5814 = vmatpush2.msra.mxu0 0.0
        %5815 = vmatprep.subr.mxu0 0.0
        %5816 = vmatpush2.msra.mxu0 0.0
        %5817 = vmatprep.subr.mxu0 0.0
        %5818 = vmatpush2.msra.mxu0 0.0
        %5819 = vmatprep.subr.mxu0 0.0
        %5820 = vmatpush2.msra.mxu0 0.0
        %5821 = vmatprep.subr.mxu0 0.0
        %5822 = vmatpush2.msra.mxu0 0.0
        %5823 = vmatprep.subr.mxu0 0.0
        %5824 = vmatpush2.msra.mxu0 0.0
        %5825 = vmatprep.subr.mxu0 0.0
        %5826 = vmatpush2.msra.mxu0 0.0
        %5827 = vmatprep.subr.mxu0 0.0
        %5828 = vmatpush2.msra.mxu0 0.0
        %5829 = vmatprep.subr.mxu0 0.0
        %5830 = vmatpush2.msra.mxu0 0.0
        %5831 = vmatprep.subr.mxu0 0.0
        %5832 = vmatpush2.msra.mxu0 0.0
        %5833 = vmatprep.subr.mxu0 0.0
        %5834 = vmatpush2.msra.mxu0 0.0
        %5835 = vmatprep.subr.mxu0 0.0
        %5836 = vmatpush2.msra.mxu0 0.0
        %5837 = vmatprep.subr.mxu0 0.0
        %5838 = vmatpush2.msra.mxu0 0.0
        %5839 = vmatprep.subr.mxu0 0.0
        %5840 = vmatpush2.msra.mxu0 0.0
        %5841 = vmatprep.subr.mxu0 0.0
        %5842 = vmatpush2.msra.mxu0 0.0
        %5843 = vmatprep.subr.mxu0 0.0
        %5844 = vmatpush2.msra.mxu0 0.0
        %5845 = vmatprep.mubr.f32.mxu0 0.0
        %5846 = vmatmul.mubr.f32.gmra.mxu0 %v5776
        %v5847 = vpop.f32.mrf.mxu0
        %v5848 = vadd.f32 0.0, %v5847
        %v5849 = vpop.f32.mrf.mxu0
        %5850 = vmatprep.mubr.f32.mxu0 0.0
        %5851 = vmatmul.mubr.f32.gmra.mxu0 %v5779
        %v5852 = vpop.f32.mrf.mxu0
        %v5853 = vadd.f32 0.0, %v5852
        %v5854 = vpop.f32.mrf.mxu0
        %5855 = vdwg.mxu0
        %v5856 = vld [vmem:[%s3 + $0x40] sm:$0x1]
        %v5857 = vld [vmem:[%s3 + $0x48] sm:$0x1]
        %v5858 = vsel %vm576, %v5848, 0.0
        %5859 = vadd.xlane.f32.xlu0 %v5858
        %v5860 = vpop.xlane.xlu0 %5859
        %v5861 = vsel %vm576, %v5853, 0.0
        %5862 = vadd.xlane.f32.xlu0 %v5861
        %v5863 = vpop.xlane.xlu0 %5862
        %v5864 = vrcp.pop 32.0
        %v5865 = vmul.f32 %v5860, %v5864
        %v5866 = vmul.f32 %v5863, %v5864
        %v5867 = vsub.f32 %v5848, %v5865
        %v5868 = vsub.f32 %v5853, %v5866
        %v5869 = vmul.f32 %v5867, %v5867
        %v5870 = vmul.f32 %v5868, %v5868
        %v5871 = vsel %vm576, %v5869, 0.0
        %5872 = vadd.xlane.f32.xlu0 %v5871
        %v5873 = vpop.xlane.xlu0 %5872
        %v5874 = vsel %vm576, %v5870, 0.0
        %5875 = vadd.xlane.f32.xlu0 %v5874
        %v5876 = vpop.xlane.xlu0 %5875
        %v5877 = vmul.f32 %v5873, %v5864
        %v5878 = vmul.f32 %v5876, %v5864
        %v5879 = vadd.f32 %v5877, 1e-05
        %v5880 = vadd.f32 %v5878, 1e-05
        %v5881 = vrsqrt.pop %v5879
        %v5882 = vrsqrt.pop %v5880
        %v5883 = vmul.f32 %v5867, %v5881
        %v5884 = vmul.f32 %v5868, %v5882
        %v5885 = vlaneseq
        %v5886 = vshrl.u32 %v5885, 7
        %v5887 = vsub.s32 0, %v5886
        %v5888 = vrot.slane %v5856, %v5887
        %v5889 = vmul.f32 %v5883, %v5888
        %v5890 = vmul.f32 %v5884, %v5888
        %v5891 = vlaneseq
        %v5892 = vshrl.u32 %v5891, 7
        %v5893 = vsub.s32 0, %v5892
        %v5894 = vrot.slane %v5857, %v5893
        %v5895 = vadd.f32 %v5889, %v5894
        %v5896 = vadd.f32 %v5890, %v5894
        %v5897 = vld [vmem:[%s2] sm:$0xf]
        %v5898 = vpack.c.bf16 %v5896, %v5895
        %v5899 = vld [vmem:[%s3 + $0x60] sm:$0xff]
        %v5901 = vsel %vm413, %v5897, 0
        %5903 = vmatprep.subr.bf16.mxu0 0
        %5904 = vmatpush1.bf16.msra.mxu0 0
        %5905 = vmatprep.subr.bf16.mxu0 0
        %5906 = vmatpush1.bf16.msra.mxu0 0
        %5907 = vmatprep.subr.bf16.mxu0 0
        %5908 = vmatpush1.bf16.msra.mxu0 0
        %5909 = vmatprep.subr.bf16.mxu0 0
        %5910 = vmatpush1.bf16.msra.mxu0 0
        %5911 = vmatprep.subr.bf16.mxu0 0
        %5912 = vmatpush1.bf16.msra.mxu0 0
        %5913 = vmatprep.subr.bf16.mxu0 0
        %5914 = vmatpush1.bf16.msra.mxu0 0
        %5915 = vmatprep.subr.bf16.mxu0 0
        %5916 = vmatpush1.bf16.msra.mxu0 0
        %5917 = vmatprep.subr.bf16.mxu0 0
        %5918 = vmatpush1.bf16.msra.mxu0 %v5898
        %5919 = vmatprep.subr.bf16.mxu0 0
        %5920 = vmatpush2.bf16.msra.mxu0 0
        %5921 = vmatprep.subr.bf16.mxu0 0
        %5922 = vmatpush2.bf16.msra.mxu0 0
        %5923 = vmatprep.subr.bf16.mxu0 0
        %5924 = vmatpush2.bf16.msra.mxu0 0
        %5925 = vmatprep.subr.bf16.mxu0 0
        %5926 = vmatpush2.bf16.msra.mxu0 0
        %5927 = vmatprep.subr.bf16.mxu0 0
        %5928 = vmatpush2.bf16.msra.mxu0 0
        %5929 = vmatprep.subr.bf16.mxu0 0
        %5930 = vmatpush2.bf16.msra.mxu0 0
        %5931 = vmatprep.subr.bf16.mxu0 0
        %5932 = vmatpush2.bf16.msra.mxu0 0
        %5933 = vmatprep.subr.bf16.mxu0 0
        %5934 = vmatpush2.bf16.msra.mxu0 0
        %5935 = vmatprep.mubr.bf16.mxu0 0
        %5936 = vmatmul.mubr.bf16.gmra.mxu0 %v5901
        %v5937 = vpop.f32.mrf.mxu0
        %v5938 = vadd.f32 %v5899, %v5937
        %v5939 = vpop.f32.mrf.mxu0
        %v5940 = vpop.f32.mrf.mxu0
        %v5941 = vpop.f32.mrf.mxu0
        %5942 = vdwg.mxu0
        %v5943 = vld [vmem:[%s2 + $0x8] sm:$0xf]
        %v5944 = vld [vmem:[%s2 + $0xc] sm:$0xf]
        %v5945 = vmul.f32 %v5938, 0.70710677
        %v5946 = vand.u32 2147483647, %v5945
        %v5947 = vmul.f32 %v5946, 0.3275911
        %v5948 = vadd.f32 %v5947, 1.0
        %v5949 = vrcp.pop %v5948
        %v5950 = vmul.f32 %v5949, 1.0614054
        %v5951 = vadd.f32 %v5950, -1.4531521
        %v5952 = vmul.f32 %v5949, %v5951
        %v5953 = vadd.f32 %v5952, 1.4214138
        %v5954 = vmul.f32 %v5949, %v5953
        %v5955 = vadd.f32 %v5954, -0.28449672
        %v5956 = vmul.f32 %v5949, %v5955
        %v5957 = vadd.f32 %v5956, 0.2548296
        %v5958 = vmul.f32 %v5949, %v5957
        %vm5959 = vcmp.ge.f32.partialorder %v5945, 0.0
        %v5960 = vsel %vm5959, 1.0, -1.0
        %v5961 = vsub.f32 0.0, %v5946
        %v5962 = vmul.f32 %v5961, %v5946
        %v5963 = vmul.f32 %v5962, 1.442695
        %v5964 = vpow.pop %v5963
        %v5965 = vmul.f32 %v5958, %v5964
        %v5966 = vsub.f32 1.0, %v5965
        %v5967 = vmul.f32 %v5960, %v5966
        %v5968 = vmul.f32 %v5938, 0.5
        %v5969 = vadd.f32 %v5967, 1.0
        %v5970 = vmul.f32 %v5968, %v5969
        %v5971 = vpack.c.bf16 %v5970, %v5970
        %v5972 = vld [vmem:[%s3 + $0x68] sm:$0xff]
        %v5973 = vld [vmem:[%s3 + $0x70] sm:$0xff]
        %v5976 = vunpack.c.l.b16 %v5943
        %v5977 = vunpack.c.l.b16 %v5944
        %v5978 = vpack.c.b16 %v5977, %v5976
        %vm5979 = vcmask 64512
        %v5981 = vsel %vm5979, %v5978, 0
        %vm5983 = vcmask 1043456
        %v5985 = vsel %vm5983, %v5971, 0
        %5987 = vmatprep.subr.bf16.mxu0 0
        %5988 = vmatpush1.bf16.msra.mxu0 0
        %5989 = vmatprep.subr.bf16.mxu0 0
        %5990 = vmatpush1.bf16.msra.mxu0 0
        %5991 = vmatprep.subr.bf16.mxu0 0
        %5992 = vmatpush1.bf16.msra.mxu0 0
        %5993 = vmatprep.subr.bf16.mxu0 0
        %5994 = vmatpush1.bf16.msra.mxu0 0
        %5995 = vmatprep.subr.bf16.mxu0 0
        %5996 = vmatpush1.bf16.msra.mxu0 0
        %5997 = vmatprep.subr.bf16.mxu0 0
        %5998 = vmatpush1.bf16.msra.mxu0 0
        %5999 = vmatprep.subr.bf16.mxu0 0
        %6000 = vmatpush1.bf16.msra.mxu0 0
        %6001 = vmatprep.subr.bf16.mxu0 0
        %6002 = vmatpush1.bf16.msra.mxu0 %v5985
        %6003 = vmatprep.subr.bf16.mxu0 0
        %6004 = vmatpush2.bf16.msra.mxu0 0
        %6005 = vmatprep.subr.bf16.mxu0 0
        %6006 = vmatpush2.bf16.msra.mxu0 0
        %6007 = vmatprep.subr.bf16.mxu0 0
        %6008 = vmatpush2.bf16.msra.mxu0 0
        %6009 = vmatprep.subr.bf16.mxu0 0
        %6010 = vmatpush2.bf16.msra.mxu0 0
        %6011 = vmatprep.subr.bf16.mxu0 0
        %6012 = vmatpush2.bf16.msra.mxu0 0
        %6013 = vmatprep.subr.bf16.mxu0 0
        %6014 = vmatpush2.bf16.msra.mxu0 0
        %6015 = vmatprep.subr.bf16.mxu0 0
        %6016 = vmatpush2.bf16.msra.mxu0 0
        %6017 = vmatprep.subr.bf16.mxu0 0
        %6018 = vmatpush2.bf16.msra.mxu0 0
        %6019 = vmatprep.mubr.bf16.mxu0 0
        %6020 = vmatmul.mubr.bf16.gmra.mxu0 %v5981
        %v6021 = vpop.f32.mrf.mxu0
        %v6022 = vadd.f32 %v5972, %v6021
        %v6023 = vpop.f32.mrf.mxu0
        %v6024 = vpop.f32.mrf.mxu0
        %v6025 = vadd.f32 %v5973, %v6024
        %v6026 = vpop.f32.mrf.mxu0
        %6027 = vdwg.mxu0
        %v6028 = vadd.f32 %v5848, %v6022
        %v6029 = vadd.f32 %v5853, %v6025
        %v6030 = vld [vmem:[%s3 + $0x50] sm:$0x1]
        %v6031 = vld [vmem:[%s3 + $0x58] sm:$0x1]
        %v6032 = vsel %vm576, %v6028, 0.0
        %6033 = vadd.xlane.f32.xlu0 %v6032
        %v6034 = vpop.xlane.xlu0 %6033
        %v6035 = vsel %vm576, %v6029, 0.0
        %6036 = vadd.xlane.f32.xlu0 %v6035
        %v6037 = vpop.xlane.xlu0 %6036
        %v6038 = vmul.f32 %v6034, %v5864
        %v6039 = vmul.f32 %v6037, %v5864
        %v6040 = vsub.f32 %v6028, %v6038
        %v6041 = vsub.f32 %v6029, %v6039
        %v6042 = vmul.f32 %v6040, %v6040
        %v6043 = vmul.f32 %v6041, %v6041
        %v6044 = vsel %vm576, %v6042, 0.0
        %6045 = vadd.xlane.f32.xlu0 %v6044
        %v6046 = vpop.xlane.xlu0 %6045
        %v6047 = vsel %vm576, %v6043, 0.0
        %6048 = vadd.xlane.f32.xlu0 %v6047
        %v6049 = vpop.xlane.xlu0 %6048
        %v6050 = vmul.f32 %v6046, %v5864
        %v6051 = vmul.f32 %v6049, %v5864
        %v6052 = vadd.f32 %v6050, 1e-05
        %v6053 = vadd.f32 %v6051, 1e-05
        %v6054 = vrsqrt.pop %v6052
        %v6055 = vrsqrt.pop %v6053
        %v6056 = vmul.f32 %v6040, %v6054
        %v6057 = vmul.f32 %v6041, %v6055
        %v6058 = vlaneseq
        %v6059 = vshrl.u32 %v6058, 7
        %v6060 = vsub.s32 0, %v6059
        %v6061 = vrot.slane %v6030, %v6060
        %v6062 = vmul.f32 %v6056, %v6061
        %v6063 = vmul.f32 %v6057, %v6061
        %v6064 = vlaneseq
        %v6065 = vshrl.u32 %v6064, 7
        %v6066 = vsub.s32 0, %v6065
        %v6067 = vrot.slane %v6031, %v6066
        %v6068 = vadd.f32 %v6062, %v6067
        %v6069 = vadd.f32 %v6063, %v6067
        %v6070 = vpack.c.bf16 %v6069, %v6068
        %v6071 = vld [vmem:[%s2 + $0x10] sm:$0xf]
        %v6072 = vld [vmem:[%s2 + $0x14] sm:$0xf]
        %v6073 = vld [vmem:[%s2 + $0x18] sm:$0xf]
        %v6074 = vld [vmem:[%s2 + $0x1c] sm:$0xf]
        %v6075 = vld [vmem:[%s3 + $0x78] sm:$0x1]
        %v6076 = vlaneseq
        %v6077 = vshrl.u32 %v6076, 7
        %v6078 = vsub.s32 0, %v6077
        %v6079 = vrot.slane %v6075, %v6078
        %v6084 = vunpack.c.l.b16 %v6071
        %v6085 = vunpack.c.l.b16 %v6072
        %v6086 = vunpack.c.l.b16 %v6073
        %v6087 = vunpack.c.l.b16 %v6074
        %v6088 = vpack.c.b16 %v6085, %v6084
        %v6089 = vpack.c.b16 %v6087, %v6086
        %v6093 = vsel %vm576, %v6070, 0
        %6095 = vmatprep.subr.bf16.mxu0 0
        %6096 = vmatpush1.bf16.msra.mxu0 0
        %6097 = vmatprep.subr.bf16.mxu0 0
        %6098 = vmatpush1.bf16.msra.mxu0 0
        %6099 = vmatprep.subr.bf16.mxu0 0
        %6100 = vmatpush1.bf16.msra.mxu0 0
        %6101 = vmatprep.subr.bf16.mxu0 0
        %6102 = vmatpush1.bf16.msra.mxu0 0
        %6103 = vmatprep.subr.bf16.mxu0 0
        %6104 = vmatpush1.bf16.msra.mxu0 0
        %6105 = vmatprep.subr.bf16.mxu0 0
        %6106 = vmatpush1.bf16.msra.mxu0 0
        %6107 = vmatprep.subr.bf16.mxu0 0
        %6108 = vmatpush1.bf16.msra.mxu0 %v6089
        %6109 = vmatprep.subr.bf16.mxu0 0
        %6110 = vmatpush1.bf16.msra.mxu0 %v6088
        %6111 = vmatprep.subr.bf16.mxu0 0
        %6112 = vmatpush2.bf16.msra.mxu0 0
        %6113 = vmatprep.subr.bf16.mxu0 0
        %6114 = vmatpush2.bf16.msra.mxu0 0
        %6115 = vmatprep.subr.bf16.mxu0 0
        %6116 = vmatpush2.bf16.msra.mxu0 0
        %6117 = vmatprep.subr.bf16.mxu0 0
        %6118 = vmatpush2.bf16.msra.mxu0 0
        %6119 = vmatprep.subr.bf16.mxu0 0
        %6120 = vmatpush2.bf16.msra.mxu0 0
        %6121 = vmatprep.subr.bf16.mxu0 0
        %6122 = vmatpush2.bf16.msra.mxu0 0
        %6123 = vmatprep.subr.bf16.mxu0 0
        %6124 = vmatpush2.bf16.msra.mxu0 0
        %6125 = vmatprep.subr.bf16.mxu0 0
        %6126 = vmatpush2.bf16.msra.mxu0 0
        %6127 = vmatprep.mubr.bf16.mxu0 0
        %6128 = vmatmul.mubr.bf16.gmra.mxu0 %v6093
        %v6129 = vpop.f32.mrf.mxu0
        %v6130 = vadd.f32 %v6079, %v6129
        %v6131 = vpop.f32.mrf.mxu0
        %v6132 = vpop.f32.mrf.mxu0
        %v6133 = vadd.f32 %v6079, %v6132
        %v6134 = vpop.f32.mrf.mxu0
        %6135 = vdwg.mxu0
        %v6136 = vmul.f32 %v6130, 0.70710677
        %v6137 = vmul.f32 %v6133, 0.70710677
        %v6138 = vand.u32 2147483647, %v6136
        %v6139 = vand.u32 2147483647, %v6137
        %v6140 = vmul.f32 %v6138, 0.3275911
        %v6141 = vmul.f32 %v6139, 0.3275911
        %v6142 = vadd.f32 %v6140, 1.0
        %v6143 = vadd.f32 %v6141, 1.0
        %v6144 = vrcp.pop %v6142
        %v6145 = vrcp.pop %v6143
        %v6146 = vmul.f32 %v6144, 1.0614054
        %v6147 = vmul.f32 %v6145, 1.0614054
        %v6148 = vadd.f32 %v6146, -1.4531521
        %v6149 = vadd.f32 %v6147, -1.4531521
        %v6150 = vmul.f32 %v6144, %v6148
        %v6151 = vmul.f32 %v6145, %v6149
        %v6152 = vadd.f32 %v6150, 1.4214138
        %v6153 = vadd.f32 %v6151, 1.4214138
        %v6154 = vmul.f32 %v6144, %v6152
        %v6155 = vmul.f32 %v6145, %v6153
        %v6156 = vadd.f32 %v6154, -0.28449672
        %v6157 = vadd.f32 %v6155, -0.28449672
        %v6158 = vmul.f32 %v6144, %v6156
        %v6159 = vmul.f32 %v6145, %v6157
        %v6160 = vadd.f32 %v6158, 0.2548296
        %v6161 = vadd.f32 %v6159, 0.2548296
        %v6162 = vmul.f32 %v6144, %v6160
        %v6163 = vmul.f32 %v6145, %v6161
        %vm6164 = vcmp.ge.f32.partialorder %v6136, 0.0
        %vm6165 = vcmp.ge.f32.partialorder %v6137, 0.0
        %v6166 = vsel %vm6164, 1.0, -1.0
        %v6167 = vsel %vm6165, 1.0, -1.0
        %v6168 = vsub.f32 0.0, %v6138
        %v6169 = vsub.f32 0.0, %v6139
        %v6170 = vmul.f32 %v6168, %v6138
        %v6171 = vmul.f32 %v6169, %v6139
        %v6172 = vmul.f32 %v6170, 1.442695
        %v6173 = vpow.pop %v6172
        %v6174 = vmul.f32 %v6171, 1.442695
        %v6175 = vpow.pop %v6174
        %v6176 = vmul.f32 %v6162, %v6173
        %v6177 = vmul.f32 %v6163, %v6175
        %v6178 = vsub.f32 1.0, %v6176
        %v6179 = vsub.f32 1.0, %v6177
        %v6180 = vmul.f32 %v6166, %v6178
        %v6181 = vmul.f32 %v6167, %v6179
        %v6182 = vmul.f32 %v6130, 0.5
        %v6183 = vmul.f32 %v6133, 0.5
        %v6184 = vadd.f32 %v6180, 1.0
        %v6185 = vadd.f32 %v6181, 1.0
        %v6186 = vmul.f32 %v6182, %v6184
        %v6187 = vmul.f32 %v6183, %v6185
        %v6188 = vpack.c.bf16 %v6187, %v6186
        %v6189 = vld [vmem:[%s2 + $0x20] sm:$0xf]
        %v6190 = vld [vmem:[%s2 + $0x24] sm:$0xf]
        %v6191 = vld [vmem:[%s2 + $0x28] sm:$0xf]
        %v6192 = vld [vmem:[%s2 + $0x2c] sm:$0xf]
        %v6193 = vld [vmem:[%s2 + $0x30] sm:$0xf]
        %v6194 = vld [vmem:[%s2 + $0x34] sm:$0xf]
        %v6195 = vld [vmem:[%s2 + $0x38] sm:$0xf]
        %v6196 = vld [vmem:[%s2 + $0x3c] sm:$0xf]
        %v6197 = vld [vmem:[%s3 + $0x80] sm:$0x1]
        %v6198 = vlaneseq
        %v6199 = vshrl.u32 %v6198, 7
        %v6200 = vsub.s32 0, %v6199
        %v6201 = vrot.slane %v6197, %v6200
        %v6210 = vunpack.c.l.b16 %v6189
        %v6211 = vunpack.c.l.b16 %v6190
        %v6212 = vunpack.c.l.b16 %v6191
        %v6213 = vunpack.c.l.b16 %v6192
        %v6214 = vunpack.c.l.b16 %v6193
        %v6215 = vunpack.c.l.b16 %v6194
        %v6216 = vunpack.c.l.b16 %v6195
        %v6217 = vunpack.c.l.b16 %v6196
        %v6218 = vpack.c.b16 %v6211, %v6210
        %v6219 = vpack.c.b16 %v6213, %v6212
        %v6220 = vpack.c.b16 %v6215, %v6214
        %v6221 = vpack.c.b16 %v6217, %v6216
        %v6227 = vsel %vm5774, %v6188, 0
        %6229 = vmatprep.subr.bf16.mxu0 0
        %6230 = vmatpush1.bf16.msra.mxu0 0
        %6231 = vmatprep.subr.bf16.mxu0 0
        %6232 = vmatpush1.bf16.msra.mxu0 0
        %6233 = vmatprep.subr.bf16.mxu0 0
        %6234 = vmatpush1.bf16.msra.mxu0 0
        %6235 = vmatprep.subr.bf16.mxu0 0
        %6236 = vmatpush1.bf16.msra.mxu0 0
        %6237 = vmatprep.subr.bf16.mxu0 0
        %6238 = vmatpush1.bf16.msra.mxu0 %v6221
        %6239 = vmatprep.subr.bf16.mxu0 0
        %6240 = vmatpush1.bf16.msra.mxu0 %v6220
        %6241 = vmatprep.subr.bf16.mxu0 0
        %6242 = vmatpush1.bf16.msra.mxu0 %v6219
        %6243 = vmatprep.subr.bf16.mxu0 0
        %6244 = vmatpush1.bf16.msra.mxu0 %v6218
        %6245 = vmatprep.subr.bf16.mxu0 0
        %6246 = vmatpush2.bf16.msra.mxu0 0
        %6247 = vmatprep.subr.bf16.mxu0 0
        %6248 = vmatpush2.bf16.msra.mxu0 0
        %6249 = vmatprep.subr.bf16.mxu0 0
        %6250 = vmatpush2.bf16.msra.mxu0 0
        %6251 = vmatprep.subr.bf16.mxu0 0
        %6252 = vmatpush2.bf16.msra.mxu0 0
        %6253 = vmatprep.subr.bf16.mxu0 0
        %6254 = vmatpush2.bf16.msra.mxu0 0
        %6255 = vmatprep.subr.bf16.mxu0 0
        %6256 = vmatpush2.bf16.msra.mxu0 0
        %6257 = vmatprep.subr.bf16.mxu0 0
        %6258 = vmatpush2.bf16.msra.mxu0 0
        %6259 = vmatprep.subr.bf16.mxu0 0
        %6260 = vmatpush2.bf16.msra.mxu0 0
        %6261 = vmatprep.mubr.bf16.mxu0 0
        %6262 = vmatmul.mubr.bf16.gmra.mxu0 %v6227
        %v6263 = vpop.f32.mrf.mxu0
        %v6264 = vadd.f32 %v6201, %v6263
        %v6265 = vpop.f32.mrf.mxu0
        %v6266 = vpop.f32.mrf.mxu0
        %v6267 = vadd.f32 %v6201, %v6266
        %v6268 = vpop.f32.mrf.mxu0
        %6269 = vdwg.mxu0
        %v6270 = vadd.f32 %v6028, %v6264
        %v6271 = vadd.f32 %v6029, %v6267
        %v6272 = vpack.c.bf16 %v6271, %v6270
        %v6273 = vld [vmem:[%s2 + $0x40] sm:$0xf]
        %v6274 = vld [vmem:[%s2 + $0x44] sm:$0xf]
        %v6275 = vld [vmem:[%s2 + $0x48] sm:$0xf]
        %v6276 = vld [vmem:[%s2 + $0x4c] sm:$0xf]
        %v6277 = vld [vmem:[%s3 + $0x88] sm:$0x1]
        %v6278 = vlaneseq
        %v6279 = vshrl.u32 %v6278, 7
        %v6280 = vsub.s32 0, %v6279
        %v6281 = vrot.slane %v6277, %v6280
        %v6286 = vunpack.c.l.b16 %v6273
        %v6287 = vunpack.c.l.b16 %v6274
        %v6288 = vunpack.c.l.b16 %v6275
        %v6289 = vunpack.c.l.b16 %v6276
        %v6290 = vpack.c.b16 %v6287, %v6286
        %v6291 = vpack.c.b16 %v6289, %v6288
        %v6295 = vsel %vm576, %v6272, 0
        %6297 = vmatprep.subr.bf16.mxu0 0
        %6298 = vmatpush1.bf16.msra.mxu0 0
        %6299 = vmatprep.subr.bf16.mxu0 0
        %6300 = vmatpush1.bf16.msra.mxu0 0
        %6301 = vmatprep.subr.bf16.mxu0 0
        %6302 = vmatpush1.bf16.msra.mxu0 0
        %6303 = vmatprep.subr.bf16.mxu0 0
        %6304 = vmatpush1.bf16.msra.mxu0 0
        %6305 = vmatprep.subr.bf16.mxu0 0
        %6306 = vmatpush1.bf16.msra.mxu0 0
        %6307 = vmatprep.subr.bf16.mxu0 0
        %6308 = vmatpush1.bf16.msra.mxu0 0
        %6309 = vmatprep.subr.bf16.mxu0 0
        %6310 = vmatpush1.bf16.msra.mxu0 %v6291
        %6311 = vmatprep.subr.bf16.mxu0 0
        %6312 = vmatpush1.bf16.msra.mxu0 %v6290
        %6313 = vmatprep.subr.bf16.mxu0 0
        %6314 = vmatpush2.bf16.msra.mxu0 0
        %6315 = vmatprep.subr.bf16.mxu0 0
        %6316 = vmatpush2.bf16.msra.mxu0 0
        %6317 = vmatprep.subr.bf16.mxu0 0
        %6318 = vmatpush2.bf16.msra.mxu0 0
        %6319 = vmatprep.subr.bf16.mxu0 0
        %6320 = vmatpush2.bf16.msra.mxu0 0
        %6321 = vmatprep.subr.bf16.mxu0 0
        %6322 = vmatpush2.bf16.msra.mxu0 0
        %6323 = vmatprep.subr.bf16.mxu0 0
        %6324 = vmatpush2.bf16.msra.mxu0 0
        %6325 = vmatprep.subr.bf16.mxu0 0
        %6326 = vmatpush2.bf16.msra.mxu0 0
        %6327 = vmatprep.subr.bf16.mxu0 0
        %6328 = vmatpush2.bf16.msra.mxu0 0
        %6329 = vmatprep.mubr.bf16.mxu0 0
        %6330 = vmatmul.mubr.bf16.gmra.mxu0 %v6295
        %v6331 = vpop.f32.mrf.mxu0
        %v6332 = vadd.f32 %v6281, %v6331
        %v6333 = vpop.f32.mrf.mxu0
        %v6334 = vpop.f32.mrf.mxu0
        %v6335 = vadd.f32 %v6281, %v6334
        %v6336 = vpop.f32.mrf.mxu0
        %6337 = vdwg.mxu0
        %vm6338 = vcmp.ge.f32.partialorder %v6332, 0.0
        %vm6339 = vcmp.ge.f32.partialorder %v6335, 0.0
        %v6340 = vmul.f32 %v6332, 0.1
        %v6341 = vmul.f32 %v6335, 0.1
        %v6342 = vsel %vm6338, %v6332, %v6340
        %v6343 = vsel %vm6339, %v6335, %v6341
        %6344 = vst.msk [vmem:[%s193] sm:$0xff] %vm5774, %v6342
        %6345 = vst.msk [vmem:[%s193 + $0x8] sm:$0xff] %vm5774, %v6343
        %s6346 = sand.u32 %s115, 1
        %s6347 = scalar_lea.sflag [#allocation3], %s6346
        %s6348 = sand.u32 %s115, 1
        %s6349 = smul.addr %s6348, 16
        %s6350 = scalar_lea.vmem [#allocation2], %s6349
        // Predicated region
        $region37: #{latent_encoder_forward.1} parent=35 // pred_check
          %p6351 = pneg %p125
        $region38: #{latent_encoder_forward.1} parent=35 // pred_check_branch
          %6353 = sbr.rel (%p6351) target = $region40
        $region39: #{latent_encoder_forward.1} parent=35 // pred_region
          %s6354 = smul.u32 2, %s18
          %s6356 = ssub.s32 256, 256
          %6357 = vsyncadd %s6347, %s6356
          %s6358 = smul.addr %s6354, 128
          %s6359 = scalar_lea.hbm %s4, %s6358
          %s6360 = sshll.u32 %s6350, 4
          %s6361 = int_to_ptr.vmem [resolvable:$true] %s6360
          %6366 = dma.vmem_to_hbm [thread:$0]  %s6361, 256, %s6359, %s6347, 128, 128, 8
        $region40: #{latent_encoder_forward.1} parent=35 // pred_fallthru
          _
      $region36: #{latent_encoder_forward.1} parent=5 // pred_fallthru
        _
      %p6367 = scmp.le.s32.totalorder 2, %s13
      // Predicated region
      $region41: #{latent_encoder_forward.1} parent=5 // pred_check
        %p6368 = pneg %p6367
      $region42: #{latent_encoder_forward.1} parent=5 // pred_check_branch
        %6370 = sbr.rel (%p6368) target = $region44
      $region43: #{latent_encoder_forward.1} parent=5 // pred_region
        %s6371 = ssub.s32 %s13, 2
        // Predicated region
        $region45: #{latent_encoder_forward.1} parent=43 // pred_check
          %p6372 = pneg %p131
        $region46: #{latent_encoder_forward.1} parent=43 // pred_check_branch
          %6374 = sbr.rel (%p6372) target = $region48
        $region47: #{latent_encoder_forward.1} parent=43 // pred_region
          %s6375 = sand.u32 %s116, 1
          %s6376 = scalar_lea.sflag [#allocation3], %s6375
          %s6377 = sand.u32 %s116, 1
          %s6378 = smul.addr %s6377, 16
          %s6379 = scalar_lea.vmem [#allocation2], %s6378
          %6380 = dma.done %s6376, 256
        $region48: #{latent_encoder_forward.1} parent=43 // pred_fallthru
          _
      $region44: #{latent_encoder_forward.1} parent=5 // pred_fallthru
        _
    $region6: #{latent_encoder_forward.1} parent=1 // loop_footer
      %s17 = sadd.s32 1, %s13
    $region7: #{latent_encoder_forward.1} parent=1 // loop_footer_branch
      %12 = sbr.rel target = $region3
    $region8: #{latent_encoder_forward.1} parent=1 // loop_exit
      _
    %6381 = vsyncpa [#allocation3], 1
    %s6382 = scalar_lea.sflag [#allocation3], 1
    %6383 = vsyncpa %s6382, 1

</llo_original>
